<compile_context>
chip_gen: v7x
topology: tpu7x:2x2x1
jax: 0.10.0
libtpu: 0.0.40
codegen_flags: <defaults>
</compile_context>

<pallas_src>
import math

import jax
import jax.numpy as jnp
from jax.experimental import pallas as pl
from jax.experimental.pallas import tpu as pltpu

# ---- module hyper-parameters (MHSA case: n_kv_head=None, head_dim=None) ----
N_FEAT = 32
N_HEAD = 4
D_K = N_FEAT // N_HEAD
DROPOUT_RATE = 0.0  # eval mode -> dropout is identity
# TODO(synk): dropout on attention weights is skipped (eval-mode identity).
MASK_BIAS = -1e30   # finite "minus infinity": masked lanes underflow to exactly 0, no NaNs


def fused_mha_kernel(xq_ref, xk_ref, xv_ref, mask_ref,
                     wq_ref, bq_ref, wk_ref, bk_ref, wv_ref, bv_ref,
                     wo_ref, bo_ref,
                     out_ref, kc_ref, vc_ref):
    """One batch element: QKV projection, masked softmax attention, output projection."""
    # --- Q/K/V projections as lane-dense (rows, F) @ (F, F) matmuls.
    # wq/bq are pre-scaled by 1/sqrt(d_k) on the host, so scores need no rescale.
    q = jnp.dot(xq_ref[...], wq_ref[...], preferred_element_type=jnp.float32) + bq_ref[...]
    k = jnp.dot(xk_ref[...], wk_ref[...], preferred_element_type=jnp.float32) + bk_ref[...]
    v = jnp.dot(xv_ref[...], wv_ref[...], preferred_element_type=jnp.float32) + bv_ref[...]

    # K/V cache outputs, stored lane-dense as (T2, F); the head-first caller view is a
    # free wrapper reshape and is never read back here.
    kc_ref[...] = k.astype(kc_ref.dtype)
    vc_ref[...] = v.astype(vc_ref.dtype)

    # --- mask -> one additive bias, reused for the post-softmax zeroing.
    masked = mask_ref[0] == 0                                   # (Tm, T2), Tm in {1, T1}
    bias = jnp.where(masked, MASK_BIAS, 0.0).astype(jnp.float32)

    wo = wo_ref[...]                                            # (F, F), pre-transposed
    acc = None
    # Heads split via static lane slices (d_k = 8 within the 32 resident lanes); H = 4 is
    # static so this unrolls into head-sliced MXU passes with no relayout.
    for h in range(N_HEAD):
        lo, hi = h * D_K, (h + 1) * D_K
        qh = q[:, lo:hi]                                        # (T1, d_k)
        kh = k[:, lo:hi]                                        # (T2, d_k)
        vh = v[:, lo:hi]                                        # (T2, d_k)

        # scores = qh @ kh^T (q already scaled by 1/sqrt(d_k))
        s = jax.lax.dot_general(qh, kh, (((1,), (1,)), ((), ())),
                                preferred_element_type=jnp.float32)     # (T1, T2)
        s = s + bias                                            # broadcasts over rows if Tm == 1

        # Softmax over keys in f32; masked entries underflow to exactly 0.
        smax = jnp.max(s, axis=-1, keepdims=True)
        e = jnp.exp(s - smax)
        denom = jnp.sum(e, axis=-1, keepdims=True)
        attn = e * pl.reciprocal(denom, approx=True)            # EUP reciprocal (free slot)
        # torch: attn.masked_fill(mask, 0.0) -> fully-masked query rows become exactly 0.
        attn = jnp.where(masked, 0.0, attn)

        ctx = jnp.dot(attn, vh, preferred_element_type=jnp.float32)      # (T1, d_k)
        # Fold the output projection per head and accumulate (no head-merge relayout).
        ph = jnp.dot(ctx, wo[lo:hi, :], preferred_element_type=jnp.float32)  # (T1, F)
        acc = ph if acc is None else acc + ph

    out_ref[...] = (acc + bo_ref[...]).astype(out_ref.dtype)
    # TODO(synk): for long sequences tile T1/T2 with extra grid axes + an online (flash)
    # softmax instead of materializing (T1, T2) scores; size those tiles against 64 MiB
    # VMEM on v7x vs 128 MiB on v5e/v6e, and consider bf16 MXU operands on v6e/v7x.
    # TODO(synk): the main output store is 32 lanes wide (masked vst); a lane-dense
    # (rows*F/128, 128) slab store needs a minor-dim reshape that is left out here for
    # lowering safety.


def multi_headed_attention(query, key, value, mask, params):
    """Pallas-backed MultiHeadedAttention.forward (MHSA, use_sdpa=False, eval, empty cache)."""
    B, T1, F = query.shape
    T2 = key.shape[1]
    assert F == N_FEAT
    assert B == 1 or (T1 % 8 == 0 and T2 % 8 == 0), \
        "row blocks must be 8-aligned (pad T1/T2 to a multiple of 8)"

    if mask.shape[-1] == 0:
        mask = jnp.ones((B, 1, T2), dtype=jnp.int32)   # torch: empty mask == no masking
    else:
        mask = mask[..., :T2].astype(jnp.int32)
    Tm = mask.shape[-2]
    assert Tm in (1, T1), "mask must be (B, 1, T2) or (B, T1, T2)"

    wq, bq, wk, bk, wv, bv, wo, bo = params
    scale = 1.0 / math.sqrt(D_K)
    # Pre-transpose weights (kernel computes x @ W_t) and fold the score scale into Wq/bq
    # so the kernel never transposes or rescales anything.
    wq_t = wq.T * scale
    bq_s = (bq * scale).reshape(1, F)
    wk_t, wv_t, wo_t = wk.T, wv.T, wo.T
    bk2, bv2, bo2 = bk.reshape(1, F), bv.reshape(1, F), bo.reshape(1, F)

    xq = query.reshape(B * T1, F)
    xk = key.reshape(B * T2, F)
    xv = value.reshape(B * T2, F)

    row_q = pl.BlockSpec((T1, F), lambda b: (b, 0))
    row_kv = pl.BlockSpec((T2, F), lambda b: (b, 0))
    full_w = pl.BlockSpec((F, F), lambda b: (0, 0))
    bias_spec = pl.BlockSpec((1, F), lambda b: (0, 0))
    mask_spec = pl.BlockSpec((1, Tm, T2), lambda b: (b, 0, 0))

    out_flat, kc_flat, vc_flat = pl.pallas_call(
        fused_mha_kernel,
        grid=(B,),
        in_specs=[row_q, row_kv, row_kv, mask_spec,
                  full_w, bias_spec, full_w, bias_spec, full_w, bias_spec,
                  full_w, bias_spec],
        out_specs=[row_q, row_kv, row_kv],
        out_shape=[jax.ShapeDtypeStruct((B * T1, F), query.dtype),
                   jax.ShapeDtypeStruct((B * T2, F), query.dtype),
                   jax.ShapeDtypeStruct((B * T2, F), query.dtype)],
        compiler_params=pltpu.CompilerParams(dimension_semantics=("parallel",)),
    )(xq, xk, xv, mask, wq_t, bq_s, wk_t, bk2, wv_t, bv2, wo_t, bo2)

    out = out_flat.reshape(B, T1, F)
    # Caller-visible cache in the torch (B, n_head, T2, d_k) layout. This single XLA
    # transpose is the only head-first relayout left; the kernel never reads it.
    k_cache = kc_flat.reshape(B, T2, N_HEAD, D_K).transpose(0, 2, 1, 3)
    v_cache = vc_flat.reshape(B, T2, N_HEAD, D_K).transpose(0, 2, 1, 3)
    # TODO(synk): non-empty incoming KV cache (streaming-decode concat) is not handled.
    return out, (k_cache, v_cache)


def reference(query, key, value, mask, params):
    """Plain-JAX reference mirroring the PyTorch forward (use_sdpa=False, eval)."""
    wq, bq, wk, bk, wv, bv, wo, bo = params
    B, T1, F = query.shape
    T2 = key.shape[1]

    def proj(x, w, b):
        y = x @ w.T + b
        y = y.reshape(x.shape[0], x.shape[1], N_HEAD, D_K)
        return jnp.transpose(y, (0, 2, 1, 3))  # (B, H, T, d_k)

    q = proj(query, wq, bq)
    k = proj(key, wk, bk)
    v = proj(value, wv, bv)

    scores = jnp.einsum("bhtd,bhsd->bhts", q, k) / math.sqrt(D_K)
    if mask.shape[-1] > 0:
        m = (mask[..., :T2] == 0)[:, None, :, :]            # (B,1,1|T1,T2)
        scores = jnp.where(m, -jnp.inf, scores)
        attn = jax.nn.softmax(scores.astype(jnp.float32), axis=-1)
        attn = jnp.where(m, 0.0, attn)
    else:
        attn = jax.nn.softmax(scores.astype(jnp.float32), axis=-1)
    x = jnp.einsum("bhts,bhsd->bhtd", attn, v)
    x = jnp.transpose(x, (0, 2, 1, 3)).reshape(B, T1, F)
    return x @ wo.T + bo, (k, v)


def init_params(key):
    """Deterministic init matching torch nn.Linear shapes (uniform +/- 1/sqrt(fan_in))."""
    bound = 1.0 / math.sqrt(N_FEAT)
    keys = jax.random.split(key, 8)
    mk_w = lambda k: jax.random.uniform(k, (N_FEAT, N_FEAT), jnp.float32, -bound, bound)
    mk_b = lambda k: jax.random.uniform(k, (N_FEAT,), jnp.float32, -bound, bound)
    return (mk_w(keys[0]), mk_b(keys[1]),   # Wq, bq
            mk_w(keys[2]), mk_b(keys[3]),   # Wk, bk
            mk_w(keys[4]), mk_b(keys[5]),   # Wv, bv
            mk_w(keys[6]), mk_b(keys[7]))   # Wo, bo


if __name__ == "__main__":
    # Full-f32 matmuls in the XLA reference so it matches the kernel's f32 MXU math.
    jax.config.update("jax_default_matmul_precision", "highest")

    B, T1, T2 = 2, 8, 8
    root = jax.random.PRNGKey(0)
    kq, kk, kv, kp = jax.random.split(root, 4)

    query = jax.random.normal(kq, (B, T1, N_FEAT), jnp.float32)
    key_t = jax.random.normal(kk, (B, T2, N_FEAT), jnp.float32)
    value = jax.random.normal(kv, (B, T2, N_FEAT), jnp.float32)

    # Padding mask (B, 1, T2): batch 0 sees 6 valid keys, batch 1 sees all 8.
    lengths = jnp.array([6, 8], dtype=jnp.int32)
    mask = (jnp.arange(T2)[None, None, :] < lengths[:, None, None]).astype(jnp.bool_)

    params = init_params(kp)

    out, (k_cache, v_cache) = multi_headed_attention(query, key_t, value, mask, params)
    out = jax.block_until_ready(out)

    ref_out, (ref_k, ref_v) = reference(query, key_t, value, mask, params)
    # Output tolerance covers the approximate EUP reciprocal (~2^-12 relative error).
    assert jnp.allclose(out, ref_out, atol=2e-3, rtol=2e-3), "output mismatch"
    assert jnp.allclose(k_cache, ref_k, atol=1e-4, rtol=1e-4), "k cache mismatch"
    assert jnp.allclose(v_cache, ref_v, atol=1e-4, rtol=1e-4), "v cache mismatch"

    print("KERNEL_OK")
</pallas_src>

<mosaic_0001>
module attributes {stable_mosaic.version = 11 : i64} {
  func.func @fused_mha_kernel(%arg0: i32, %arg1: memref<8x32xf32, #tpu.memory_space<vmem>>, %arg2: memref<8x32xf32, #tpu.memory_space<vmem>>, %arg3: memref<8x32xf32, #tpu.memory_space<vmem>>, %arg4: memref<1x1x8xi32, #tpu.memory_space<vmem>>, %arg5: memref<32x32xf32, #tpu.memory_space<vmem>>, %arg6: memref<1x32xf32, #tpu.memory_space<vmem>>, %arg7: memref<32x32xf32, #tpu.memory_space<vmem>>, %arg8: memref<1x32xf32, #tpu.memory_space<vmem>>, %arg9: memref<32x32xf32, #tpu.memory_space<vmem>>, %arg10: memref<1x32xf32, #tpu.memory_space<vmem>>, %arg11: memref<32x32xf32, #tpu.memory_space<vmem>>, %arg12: memref<1x32xf32, #tpu.memory_space<vmem>>, %arg13: memref<8x32xf32, #tpu.memory_space<vmem>>, %arg14: memref<8x32xf32, #tpu.memory_space<vmem>>, %arg15: memref<8x32xf32, #tpu.memory_space<vmem>>) attributes {dimension_semantics = [#tpu.dimension_semantics<parallel>], iteration_bounds = array<i64: 2>, scalar_prefetch = 0 : i64, scratch_operands = 0 : i64, tpu.core_type = #tpu.core_type<tc>, window_params = [{transform_indices = @transform_0, window_bounds = array<i64: 8, 32>}, {transform_indices = @transform_1, window_bounds = array<i64: 8, 32>}, {transform_indices = @transform_2, window_bounds = array<i64: 8, 32>}, {transform_indices = @transform_3, window_bounds = array<i64: 1, 1, 8>}, {pipeline_mode = #tpu.pipeline_mode<synchronous>, transform_indices = @transform_4, window_bounds = array<i64: 32, 32>}, {pipeline_mode = #tpu.pipeline_mode<synchronous>, transform_indices = @transform_5, window_bounds = array<i64: 1, 32>}, {pipeline_mode = #tpu.pipeline_mode<synchronous>, transform_indices = @transform_6, window_bounds = array<i64: 32, 32>}, {pipeline_mode = #tpu.pipeline_mode<synchronous>, transform_indices = @transform_7, window_bounds = array<i64: 1, 32>}, {pipeline_mode = #tpu.pipeline_mode<synchronous>, transform_indices = @transform_8, window_bounds = array<i64: 32, 32>}, {pipeline_mode = #tpu.pipeline_mode<synchronous>, transform_indices = @transform_9, window_bounds = array<i64: 1, 32>}, {pipeline_mode = #tpu.pipeline_mode<synchronous>, transform_indices = @transform_10, window_bounds = array<i64: 32, 32>}, {pipeline_mode = #tpu.pipeline_mode<synchronous>, transform_indices = @transform_11, window_bounds = array<i64: 1, 32>}, {transform_indices = @transform_12, window_bounds = array<i64: 8, 32>}, {transform_indices = @transform_13, window_bounds = array<i64: 8, 32>}, {transform_indices = @transform_14, window_bounds = array<i64: 8, 32>}]} {
    %c0 = arith.constant 0 : index
    %c0_0 = arith.constant 0 : index
    %0 = vector.load %arg1[%c0, %c0_0] : memref<8x32xf32, #tpu.memory_space<vmem>>, vector<8x32xf32>
    %c0_1 = arith.constant 0 : index
    %c0_2 = arith.constant 0 : index
    %1 = vector.load %arg5[%c0_1, %c0_2] : memref<32x32xf32, #tpu.memory_space<vmem>>, vector<32x32xf32>
    %cst = arith.constant dense<0.000000e+00> : vector<8x32xf32>
    %2 = tpu.matmul %0, %1, %cst {dimension_numbers = #tpu.dot_dimension_numbers<[1], [0], [0], [1], [0, 0, 1, 1], [], []>, precision = #tpu.contract_precision<fp32>} : vector<8x32xf32>, vector<32x32xf32>, vector<8x32xf32> -> vector<8x32xf32>
    %c0_3 = arith.constant 0 : index
    %c0_4 = arith.constant 0 : index
    %3 = vector.load %arg6[%c0_3, %c0_4] : memref<1x32xf32, #tpu.memory_space<vmem>>, vector<1x32xf32>
    %4 = vector.broadcast %3 : vector<1x32xf32> to vector<8x32xf32>
    %5 = arith.addf %2, %4 : vector<8x32xf32>
    %c0_5 = arith.constant 0 : index
    %c0_6 = arith.constant 0 : index
    %6 = vector.load %arg2[%c0_5, %c0_6] : memref<8x32xf32, #tpu.memory_space<vmem>>, vector<8x32xf32>
    %c0_7 = arith.constant 0 : index
    %c0_8 = arith.constant 0 : index
    %7 = vector.load %arg7[%c0_7, %c0_8] : memref<32x32xf32, #tpu.memory_space<vmem>>, vector<32x32xf32>
    %cst_9 = arith.constant dense<0.000000e+00> : vector<8x32xf32>
    %8 = tpu.matmul %6, %7, %cst_9 {dimension_numbers = #tpu.dot_dimension_numbers<[1], [0], [0], [1], [0, 0, 1, 1], [], []>, precision = #tpu.contract_precision<fp32>} : vector<8x32xf32>, vector<32x32xf32>, vector<8x32xf32> -> vector<8x32xf32>
    %c0_10 = arith.constant 0 : index
    %c0_11 = arith.constant 0 : index
    %9 = vector.load %arg8[%c0_10, %c0_11] : memref<1x32xf32, #tpu.memory_space<vmem>>, vector<1x32xf32>
    %10 = vector.broadcast %9 : vector<1x32xf32> to vector<8x32xf32>
    %11 = arith.addf %8, %10 : vector<8x32xf32>
    %c0_12 = arith.constant 0 : index
    %c0_13 = arith.constant 0 : index
    %12 = vector.load %arg3[%c0_12, %c0_13] : memref<8x32xf32, #tpu.memory_space<vmem>>, vector<8x32xf32>
    %c0_14 = arith.constant 0 : index
    %c0_15 = arith.constant 0 : index
    %13 = vector.load %arg9[%c0_14, %c0_15] : memref<32x32xf32, #tpu.memory_space<vmem>>, vector<32x32xf32>
    %cst_16 = arith.constant dense<0.000000e+00> : vector<8x32xf32>
    %14 = tpu.matmul %12, %13, %cst_16 {dimension_numbers = #tpu.dot_dimension_numbers<[1], [0], [0], [1], [0, 0, 1, 1], [], []>, precision = #tpu.contract_precision<fp32>} : vector<8x32xf32>, vector<32x32xf32>, vector<8x32xf32> -> vector<8x32xf32>
    %c0_17 = arith.constant 0 : index
    %c0_18 = arith.constant 0 : index
    %15 = vector.load %arg10[%c0_17, %c0_18] : memref<1x32xf32, #tpu.memory_space<vmem>>, vector<1x32xf32>
    %16 = vector.broadcast %15 : vector<1x32xf32> to vector<8x32xf32>
    %17 = arith.addf %14, %16 : vector<8x32xf32>
    %c0_19 = arith.constant 0 : index
    %c0_20 = arith.constant 0 : index
    %18 = vector.load %arg14[%c0_19, %c0_20] : memref<8x32xf32, #tpu.memory_space<vmem>>, vector<8x32xf32>
    tpu.vector_store %arg14[%c0_19, %c0_20], %11 {strides = array<i32>} : memref<8x32xf32, #tpu.memory_space<vmem>>, vector<8x32xf32>,
    %c0_21 = arith.constant 0 : index
    %c0_22 = arith.constant 0 : index
    %19 = vector.load %arg15[%c0_21, %c0_22] : memref<8x32xf32, #tpu.memory_space<vmem>>, vector<8x32xf32>
    tpu.vector_store %arg15[%c0_21, %c0_22], %17 {strides = array<i32>} : memref<8x32xf32, #tpu.memory_space<vmem>>, vector<8x32xf32>,
    %c0_23 = arith.constant 0 : index
    %c0_24 = arith.constant 0 : index
    %c0_25 = arith.constant 0 : index
    %20 = vector.load %arg4[%c0_23, %c0_24, %c0_25] : memref<1x1x8xi32, #tpu.memory_space<vmem>>, vector<1x1x8xi32>
    %21 = vector.shape_cast %20 : vector<1x1x8xi32> to vector<1x8xi32>
    %c0_i32 = arith.constant 0 : i32
    %22 = vector.broadcast %c0_i32 : i32 to vector<1x8xi32>
    %23 = arith.cmpi eq, %21, %22 : vector<1x8xi32>
    %cst_26 = arith.constant -1.000000e+30 : f32
    %cst_27 = arith.constant 0.000000e+00 : f32
    %24 = vector.broadcast %cst_26 : f32 to vector<1x8xf32>
    %25 = vector.broadcast %cst_27 : f32 to vector<1x8xf32>
    %26 = arith.select %23, %24, %25 : vector<1x8xi1>, vector<1x8xf32>
    %c0_28 = arith.constant 0 : index
    %c0_29 = arith.constant 0 : index
    %27 = vector.load %arg11[%c0_28, %c0_29] : memref<32x32xf32, #tpu.memory_space<vmem>>, vector<32x32xf32>
    %28 = vector.extract_strided_slice %5 {offsets = [0, 0], sizes = [8, 8], strides = [1, 1]} : vector<8x32xf32> to vector<8x8xf32>
    %29 = vector.extract_strided_slice %11 {offsets = [0, 0], sizes = [8, 8], strides = [1, 1]} : vector<8x32xf32> to vector<8x8xf32>
    %30 = vector.extract_strided_slice %17 {offsets = [0, 0], sizes = [8, 8], strides = [1, 1]} : vector<8x32xf32> to vector<8x8xf32>
    %cst_30 = arith.constant dense<0.000000e+00> : vector<8x8xf32>
    %31 = tpu.matmul %28, %29, %cst_30 {dimension_numbers = #tpu.dot_dimension_numbers<[1], [1], [0], [0], [0, 0, 1, 0], [], []>, precision = #tpu.contract_precision<fp32>} : vector<8x8xf32>, vector<8x8xf32>, vector<8x8xf32> -> vector<8x8xf32>
    %32 = vector.broadcast %26 : vector<1x8xf32> to vector<8x8xf32>
    %33 = arith.addf %31, %32 : vector<8x8xf32>
    %cst_31 = arith.constant dense<0xFF800000> : vector<8xf32>
    %34 = vector.multi_reduction <maximumf>, %33, %cst_31 [1] : vector<8x8xf32> to vector<8xf32>
    %35 = vector.shape_cast %34 : vector<8xf32> to vector<8x1xf32>
    %36 = vector.broadcast %35 : vector<8x1xf32> to vector<8x8xf32>
    %37 = arith.subf %33, %36 : vector<8x8xf32>
    %38 = math.exp %37 : vector<8x8xf32>
    %cst_32 = arith.constant dense<0.000000e+00> : vector<8xf32>
    %39 = vector.multi_reduction <add>, %38, %cst_32 [1] : vector<8x8xf32> to vector<8xf32>
    %40 = vector.shape_cast %39 : vector<8xf32> to vector<8x1xf32>
    %41 = tpu.reciprocal %40 {approx = true} : vector<8x1xf32> -> vector<8x1xf32>
    %42 = vector.broadcast %41 : vector<8x1xf32> to vector<8x8xf32>
    %43 = arith.mulf %38, %42 : vector<8x8xf32>
    %cst_33 = arith.constant 0.000000e+00 : f32
    %44 = vector.shape_cast %23 : vector<1x8xi1> to vector<1x8xi1>
    %45 = vector.broadcast %44 : vector<1x8xi1> to vector<8x8xi1>
    %46 = vector.broadcast %cst_33 : f32 to vector<8x8xf32>
    %47 = arith.select %45, %46, %43 : vector<8x8xi1>, vector<8x8xf32>
    %cst_34 = arith.constant dense<0.000000e+00> : vector<8x8xf32>
    %48 = tpu.matmul %47, %30, %cst_34 {dimension_numbers = #tpu.dot_dimension_numbers<[1], [0], [0], [1], [0, 0, 1, 1], [], []>, precision = #tpu.contract_precision<fp32>} : vector<8x8xf32>, vector<8x8xf32>, vector<8x8xf32> -> vector<8x8xf32>
    %49 = vector.extract_strided_slice %27 {offsets = [0, 0], sizes = [8, 32], strides = [1, 1]} : vector<32x32xf32> to vector<8x32xf32>
    %cst_35 = arith.constant dense<0.000000e+00> : vector<8x32xf32>
    %50 = tpu.matmul %48, %49, %cst_35 {dimension_numbers = #tpu.dot_dimension_numbers<[1], [0], [0], [1], [0, 0, 1, 1], [], []>, precision = #tpu.contract_precision<fp32>} : vector<8x8xf32>, vector<8x32xf32>, vector<8x32xf32> -> vector<8x32xf32>
    %51 = vector.extract_strided_slice %5 {offsets = [0, 8], sizes = [8, 8], strides = [1, 1]} : vector<8x32xf32> to vector<8x8xf32>
    %52 = vector.extract_strided_slice %11 {offsets = [0, 8], sizes = [8, 8], strides = [1, 1]} : vector<8x32xf32> to vector<8x8xf32>
    %53 = vector.extract_strided_slice %17 {offsets = [0, 8], sizes = [8, 8], strides = [1, 1]} : vector<8x32xf32> to vector<8x8xf32>
    %cst_36 = arith.constant dense<0.000000e+00> : vector<8x8xf32>
    %54 = tpu.matmul %51, %52, %cst_36 {dimension_numbers = #tpu.dot_dimension_numbers<[1], [1], [0], [0], [0, 0, 1, 0], [], []>, precision = #tpu.contract_precision<fp32>} : vector<8x8xf32>, vector<8x8xf32>, vector<8x8xf32> -> vector<8x8xf32>
    %55 = vector.broadcast %26 : vector<1x8xf32> to vector<8x8xf32>
    %56 = arith.addf %54, %55 : vector<8x8xf32>
    %cst_37 = arith.constant dense<0xFF800000> : vector<8xf32>
    %57 = vector.multi_reduction <maximumf>, %56, %cst_37 [1] : vector<8x8xf32> to vector<8xf32>
    %58 = vector.shape_cast %57 : vector<8xf32> to vector<8x1xf32>
    %59 = vector.broadcast %58 : vector<8x1xf32> to vector<8x8xf32>
    %60 = arith.subf %56, %59 : vector<8x8xf32>
    %61 = math.exp %60 : vector<8x8xf32>
    %cst_38 = arith.constant dense<0.000000e+00> : vector<8xf32>
    %62 = vector.multi_reduction <add>, %61, %cst_38 [1] : vector<8x8xf32> to vector<8xf32>
    %63 = vector.shape_cast %62 : vector<8xf32> to vector<8x1xf32>
    %64 = tpu.reciprocal %63 {approx = true} : vector<8x1xf32> -> vector<8x1xf32>
    %65 = vector.broadcast %64 : vector<8x1xf32> to vector<8x8xf32>
    %66 = arith.mulf %61, %65 : vector<8x8xf32>
    %cst_39 = arith.constant 0.000000e+00 : f32
    %67 = vector.shape_cast %23 : vector<1x8xi1> to vector<1x8xi1>
    %68 = vector.broadcast %67 : vector<1x8xi1> to vector<8x8xi1>
    %69 = vector.broadcast %cst_39 : f32 to vector<8x8xf32>
    %70 = arith.select %68, %69, %66 : vector<8x8xi1>, vector<8x8xf32>
    %cst_40 = arith.constant dense<0.000000e+00> : vector<8x8xf32>
    %71 = tpu.matmul %70, %53, %cst_40 {dimension_numbers = #tpu.dot_dimension_numbers<[1], [0], [0], [1], [0, 0, 1, 1], [], []>, precision = #tpu.contract_precision<fp32>} : vector<8x8xf32>, vector<8x8xf32>, vector<8x8xf32> -> vector<8x8xf32>
    %72 = vector.extract_strided_slice %27 {offsets = [8, 0], sizes = [8, 32], strides = [1, 1]} : vector<32x32xf32> to vector<8x32xf32>
    %cst_41 = arith.constant dense<0.000000e+00> : vector<8x32xf32>
    %73 = tpu.matmul %71, %72, %cst_41 {dimension_numbers = #tpu.dot_dimension_numbers<[1], [0], [0], [1], [0, 0, 1, 1], [], []>, precision = #tpu.contract_precision<fp32>} : vector<8x8xf32>, vector<8x32xf32>, vector<8x32xf32> -> vector<8x32xf32>
    %74 = arith.addf %50, %73 : vector<8x32xf32>
    %75 = vector.extract_strided_slice %5 {offsets = [0, 16], sizes = [8, 8], strides = [1, 1]} : vector<8x32xf32> to vector<8x8xf32>
    %76 = vector.extract_strided_slice %11 {offsets = [0, 16], sizes = [8, 8], strides = [1, 1]} : vector<8x32xf32> to vector<8x8xf32>
    %77 = vector.extract_strided_slice %17 {offsets = [0, 16], sizes = [8, 8], strides = [1, 1]} : vector<8x32xf32> to vector<8x8xf32>
    %cst_42 = arith.constant dense<0.000000e+00> : vector<8x8xf32>
    %78 = tpu.matmul %75, %76, %cst_42 {dimension_numbers = #tpu.dot_dimension_numbers<[1], [1], [0], [0], [0, 0, 1, 0], [], []>, precision = #tpu.contract_precision<fp32>} : vector<8x8xf32>, vector<8x8xf32>, vector<8x8xf32> -> vector<8x8xf32>
    %79 = vector.broadcast %26 : vector<1x8xf32> to vector<8x8xf32>
    %80 = arith.addf %78, %79 : vector<8x8xf32>
    %cst_43 = arith.constant dense<0xFF800000> : vector<8xf32>
    %81 = vector.multi_reduction <maximumf>, %80, %cst_43 [1] : vector<8x8xf32> to vector<8xf32>
    %82 = vector.shape_cast %81 : vector<8xf32> to vector<8x1xf32>
    %83 = vector.broadcast %82 : vector<8x1xf32> to vector<8x8xf32>
    %84 = arith.subf %80, %83 : vector<8x8xf32>
    %85 = math.exp %84 : vector<8x8xf32>
    %cst_44 = arith.constant dense<0.000000e+00> : vector<8xf32>
    %86 = vector.multi_reduction <add>, %85, %cst_44 [1] : vector<8x8xf32> to vector<8xf32>
    %87 = vector.shape_cast %86 : vector<8xf32> to vector<8x1xf32>
    %88 = tpu.reciprocal %87 {approx = true} : vector<8x1xf32> -> vector<8x1xf32>
    %89 = vector.broadcast %88 : vector<8x1xf32> to vector<8x8xf32>
    %90 = arith.mulf %85, %89 : vector<8x8xf32>
    %cst_45 = arith.constant 0.000000e+00 : f32
    %91 = vector.shape_cast %23 : vector<1x8xi1> to vector<1x8xi1>
    %92 = vector.broadcast %91 : vector<1x8xi1> to vector<8x8xi1>
    %93 = vector.broadcast %cst_45 : f32 to vector<8x8xf32>
    %94 = arith.select %92, %93, %90 : vector<8x8xi1>, vector<8x8xf32>
    %cst_46 = arith.constant dense<0.000000e+00> : vector<8x8xf32>
    %95 = tpu.matmul %94, %77, %cst_46 {dimension_numbers = #tpu.dot_dimension_numbers<[1], [0], [0], [1], [0, 0, 1, 1], [], []>, precision = #tpu.contract_precision<fp32>} : vector<8x8xf32>, vector<8x8xf32>, vector<8x8xf32> -> vector<8x8xf32>
    %96 = vector.extract_strided_slice %27 {offsets = [16, 0], sizes = [8, 32], strides = [1, 1]} : vector<32x32xf32> to vector<8x32xf32>
    %cst_47 = arith.constant dense<0.000000e+00> : vector<8x32xf32>
    %97 = tpu.matmul %95, %96, %cst_47 {dimension_numbers = #tpu.dot_dimension_numbers<[1], [0], [0], [1], [0, 0, 1, 1], [], []>, precision = #tpu.contract_precision<fp32>} : vector<8x8xf32>, vector<8x32xf32>, vector<8x32xf32> -> vector<8x32xf32>
    %98 = arith.addf %74, %97 : vector<8x32xf32>
    %99 = vector.extract_strided_slice %5 {offsets = [0, 24], sizes = [8, 8], strides = [1, 1]} : vector<8x32xf32> to vector<8x8xf32>
    %100 = vector.extract_strided_slice %11 {offsets = [0, 24], sizes = [8, 8], strides = [1, 1]} : vector<8x32xf32> to vector<8x8xf32>
    %101 = vector.extract_strided_slice %17 {offsets = [0, 24], sizes = [8, 8], strides = [1, 1]} : vector<8x32xf32> to vector<8x8xf32>
    %cst_48 = arith.constant dense<0.000000e+00> : vector<8x8xf32>
    %102 = tpu.matmul %99, %100, %cst_48 {dimension_numbers = #tpu.dot_dimension_numbers<[1], [1], [0], [0], [0, 0, 1, 0], [], []>, precision = #tpu.contract_precision<fp32>} : vector<8x8xf32>, vector<8x8xf32>, vector<8x8xf32> -> vector<8x8xf32>
    %103 = vector.broadcast %26 : vector<1x8xf32> to vector<8x8xf32>
    %104 = arith.addf %102, %103 : vector<8x8xf32>
    %cst_49 = arith.constant dense<0xFF800000> : vector<8xf32>
    %105 = vector.multi_reduction <maximumf>, %104, %cst_49 [1] : vector<8x8xf32> to vector<8xf32>
    %106 = vector.shape_cast %105 : vector<8xf32> to vector<8x1xf32>
    %107 = vector.broadcast %106 : vector<8x1xf32> to vector<8x8xf32>
    %108 = arith.subf %104, %107 : vector<8x8xf32>
    %109 = math.exp %108 : vector<8x8xf32>
    %cst_50 = arith.constant dense<0.000000e+00> : vector<8xf32>
    %110 = vector.multi_reduction <add>, %109, %cst_50 [1] : vector<8x8xf32> to vector<8xf32>
    %111 = vector.shape_cast %110 : vector<8xf32> to vector<8x1xf32>
    %112 = tpu.reciprocal %111 {approx = true} : vector<8x1xf32> -> vector<8x1xf32>
    %113 = vector.broadcast %112 : vector<8x1xf32> to vector<8x8xf32>
    %114 = arith.mulf %109, %113 : vector<8x8xf32>
    %cst_51 = arith.constant 0.000000e+00 : f32
    %115 = vector.shape_cast %23 : vector<1x8xi1> to vector<1x8xi1>
    %116 = vector.broadcast %115 : vector<1x8xi1> to vector<8x8xi1>
    %117 = vector.broadcast %cst_51 : f32 to vector<8x8xf32>
    %118 = arith.select %116, %117, %114 : vector<8x8xi1>, vector<8x8xf32>
    %cst_52 = arith.constant dense<0.000000e+00> : vector<8x8xf32>
    %119 = tpu.matmul %118, %101, %cst_52 {dimension_numbers = #tpu.dot_dimension_numbers<[1], [0], [0], [1], [0, 0, 1, 1], [], []>, precision = #tpu.contract_precision<fp32>} : vector<8x8xf32>, vector<8x8xf32>, vector<8x8xf32> -> vector<8x8xf32>
    %120 = vector.extract_strided_slice %27 {offsets = [24, 0], sizes = [8, 32], strides = [1, 1]} : vector<32x32xf32> to vector<8x32xf32>
    %cst_53 = arith.constant dense<0.000000e+00> : vector<8x32xf32>
    %121 = tpu.matmul %119, %120, %cst_53 {dimension_numbers = #tpu.dot_dimension_numbers<[1], [0], [0], [1], [0, 0, 1, 1], [], []>, precision = #tpu.contract_precision<fp32>} : vector<8x8xf32>, vector<8x32xf32>, vector<8x32xf32> -> vector<8x32xf32>
    %122 = arith.addf %98, %121 : vector<8x32xf32>
    %c0_54 = arith.constant 0 : index
    %c0_55 = arith.constant 0 : index
    %123 = vector.load %arg12[%c0_54, %c0_55] : memref<1x32xf32, #tpu.memory_space<vmem>>, vector<1x32xf32>
    %124 = vector.broadcast %123 : vector<1x32xf32> to vector<8x32xf32>
    %125 = arith.addf %122, %124 : vector<8x32xf32>
    %c0_56 = arith.constant 0 : index
    %c0_57 = arith.constant 0 : index
    %126 = vector.load %arg13[%c0_56, %c0_57] : memref<8x32xf32, #tpu.memory_space<vmem>>, vector<8x32xf32>
    tpu.vector_store %arg13[%c0_56, %c0_57], %125 {strides = array<i32>} : memref<8x32xf32, #tpu.memory_space<vmem>>, vector<8x32xf32>,
    return
  }
  func.func @transform_0(%arg0: i32) -> (i32, i32) {
    %c0_i32 = arith.constant 0 : i32
    %c0_i32_0 = arith.constant 0 : i32
    return %arg0, %c0_i32 : i32, i32
  }
  func.func @transform_1(%arg0: i32) -> (i32, i32) {
    %c0_i32 = arith.constant 0 : i32
    %c0_i32_0 = arith.constant 0 : i32
    return %arg0, %c0_i32 : i32, i32
  }
  func.func @transform_2(%arg0: i32) -> (i32, i32) {
    %c0_i32 = arith.constant 0 : i32
    %c0_i32_0 = arith.constant 0 : i32
    return %arg0, %c0_i32 : i32, i32
  }
  func.func @transform_3(%arg0: i32) -> (i32, i32, i32) {
    %c0_i32 = arith.constant 0 : i32
    %c0_i32_0 = arith.constant 0 : i32
    %c0_i32_1 = arith.constant 0 : i32
    return %arg0, %c0_i32, %c0_i32_0 : i32, i32, i32
  }
  func.func @transform_4(%arg0: i32) -> (i32, i32) {
    %c0_i32 = arith.constant 0 : i32
    %c0_i32_0 = arith.constant 0 : i32
    %c0_i32_1 = arith.constant 0 : i32
    return %c0_i32, %c0_i32_0 : i32, i32
  }
  func.func @transform_5(%arg0: i32) -> (i32, i32) {
    %c0_i32 = arith.constant 0 : i32
    %c0_i32_0 = arith.constant 0 : i32
    %c0_i32_1 = arith.constant 0 : i32
    return %c0_i32, %c0_i32_0 : i32, i32
  }
  func.func @transform_6(%arg0: i32) -> (i32, i32) {
    %c0_i32 = arith.constant 0 : i32
    %c0_i32_0 = arith.constant 0 : i32
    %c0_i32_1 = arith.constant 0 : i32
    return %c0_i32, %c0_i32_0 : i32, i32
  }
  func.func @transform_7(%arg0: i32) -> (i32, i32) {
    %c0_i32 = arith.constant 0 : i32
    %c0_i32_0 = arith.constant 0 : i32
    %c0_i32_1 = arith.constant 0 : i32
    return %c0_i32, %c0_i32_0 : i32, i32
  }
  func.func @transform_8(%arg0: i32) -> (i32, i32) {
    %c0_i32 = arith.constant 0 : i32
    %c0_i32_0 = arith.constant 0 : i32
    %c0_i32_1 = arith.constant 0 : i32
    return %c0_i32, %c0_i32_0 : i32, i32
  }
  func.func @transform_9(%arg0: i32) -> (i32, i32) {
    %c0_i32 = arith.constant 0 : i32
    %c0_i32_0 = arith.constant 0 : i32
    %c0_i32_1 = arith.constant 0 : i32
    return %c0_i32, %c0_i32_0 : i32, i32
  }
  func.func @transform_10(%arg0: i32) -> (i32, i32) {
    %c0_i32 = arith.constant 0 : i32
    %c0_i32_0 = arith.constant 0 : i32
    %c0_i32_1 = arith.constant 0 : i32
    return %c0_i32, %c0_i32_0 : i32, i32
  }
  func.func @transform_11(%arg0: i32) -> (i32, i32) {
    %c0_i32 = arith.constant 0 : i32
    %c0_i32_0 = arith.constant 0 : i32
    %c0_i32_1 = arith.constant 0 : i32
    return %c0_i32, %c0_i32_0 : i32, i32
  }
  func.func @transform_12(%arg0: i32) -> (i32, i32) {
    %c0_i32 = arith.constant 0 : i32
    %c0_i32_0 = arith.constant 0 : i32
    return %arg0, %c0_i32 : i32, i32
  }
  func.func @transform_13(%arg0: i32) -> (i32, i32) {
    %c0_i32 = arith.constant 0 : i32
    %c0_i32_0 = arith.constant 0 : i32
    return %arg0, %c0_i32 : i32, i32
  }
  func.func @transform_14(%arg0: i32) -> (i32, i32) {
    %c0_i32 = arith.constant 0 : i32
    %c0_i32_0 = arith.constant 0 : i32
    return %arg0, %c0_i32 : i32, i32
  }
}

</mosaic_0001>

<llo_original>
// kernel: tpu_custom_call.1
$region0: #{tpu_custom_call.1}
  #allocation0 [shape = 'u32[]', space=smem, size = 0x4, offset = 0x4, fixed_abs, tag = 'smem constant byte address 0x4 - core index']
  #allocation1 [shape = 'u32[144,128]{1,0:T(1,128)}', space=vmem, size = 0x12000, scoped, tag = 'internal scratch']
  %s0 = inlined_call_operand.hbm [shape: f32[16,32], index: 0, kind: input, shape index: {}]
  %s1 = inlined_call_operand.hbm [shape: f32[16,32], index: 1, kind: input, shape index: {}]
  %s2 = inlined_call_operand.hbm [shape: f32[16,32], index: 2, kind: input, shape index: {}]
  %s3 = inlined_call_operand.vmem [shape: s32[2,1,8], index: 3, kind: input, shape index: {}]
  %s4 = inlined_call_operand.hbm [shape: f32[32,32], index: 4, kind: input, shape index: {}]
  %s5 = inlined_call_operand.vmem [shape: f32[1,32], index: 5, kind: input, shape index: {}]
  %s6 = inlined_call_operand.hbm [shape: f32[32,32], index: 6, kind: input, shape index: {}]
  %s7 = inlined_call_operand.vmem [shape: f32[1,32], index: 7, kind: input, shape index: {}]
  %s8 = inlined_call_operand.hbm [shape: f32[32,32], index: 8, kind: input, shape index: {}]
  %s9 = inlined_call_operand.vmem [shape: f32[1,32], index: 9, kind: input, shape index: {}]
  %s10 = inlined_call_operand.vmem [shape: f32[32,32], index: 10, kind: input, shape index: {}]
  %s11 = inlined_call_operand.vmem [shape: f32[1,32], index: 11, kind: input, shape index: {}]
  %s12 = inlined_call_operand.hbm [shape: f32[16,32], index: 12, kind: output, shape index: {0}]
  %s13 = inlined_call_operand.hbm [shape: f32[16,32], index: 13, kind: output, shape index: {1}]
  %s14 = inlined_call_operand.hbm [shape: f32[16,32], index: 14, kind: output, shape index: {2}]
  %15 = xla_tuple %s12, %s13, %s14
  %s16 = sld [smem:[#allocation0]]
  $region121: #{tpu_custom_call.1} parent=0
    _
  %s18 = ssub.s32 1, %s16
  %s19 = scalar_select 0, %s18, %s16
  $region1: #{tpu_custom_call.1} parent=0
    #allocation2 [shape = 'u8[8192]{0}', space=vmem, size = 0x2000, scoped, tag = 'input window, operand 0']
    #allocation3 [shape = 's32[2]{0}', space=sflag, size = 0x8, scoped, tag = 'scoped memory for tpu_custom_call.1']
    #allocation4 [shape = 's32[2]{0}', space=sflag, size = 0x8, scoped, tag = 'scoped memory for tpu_custom_call.1']
    #allocation5 [shape = 'u8[8192]{0}', space=vmem, size = 0x2000, scoped, tag = 'input window, operand 1']
    #allocation6 [shape = 's32[2]{0}', space=sflag, size = 0x8, scoped, tag = 'scoped memory for tpu_custom_call.1']
    #allocation7 [shape = 'u8[8192]{0}', space=vmem, size = 0x2000, scoped, tag = 'input window, operand 2']
    #allocation8 [shape = 'u8[16384]{0}', space=vmem, size = 0x4000, scoped, tag = 'input window, operand 4, single buffered']
    #allocation9 [shape = 's32[1]{0}', space=sflag, size = 0x4, scoped, tag = 'scoped memory for tpu_custom_call.1']
    #allocation10 [shape = 'u8[16384]{0}', space=vmem, size = 0x4000, scoped, tag = 'input window, operand 6, single buffered']
    #allocation11 [shape = 'u8[16384]{0}', space=vmem, size = 0x4000, scoped, tag = 'input window, operand 8, single buffered']
    #allocation12 [shape = 's32[1]{0}', space=sflag, size = 0x4, scoped, tag = 'scoped memory for tpu_custom_call.1']
    #allocation13 [shape = 'u8[8192]{0}', space=vmem, size = 0x2000, scoped, tag = 'output window, operand 0']
    #allocation14 [shape = 'u8[8192]{0}', space=vmem, size = 0x2000, scoped, tag = 'output window, operand 1']
    #allocation15 [shape = 's32[2]{0}', space=sflag, size = 0x8, scoped, tag = 'scoped memory for tpu_custom_call.1']
    #allocation16 [shape = 'u8[8192]{0}', space=vmem, size = 0x2000, scoped, tag = 'output window, operand 2']
    %20 = vsyncpa [#allocation3], 0
    %s21 = scalar_lea.sflag [#allocation3], 1
    %22 = vsyncpa %s21, 0
    %23 = vsyncpa [#allocation6], 0
    %s24 = scalar_lea.sflag [#allocation6], 1
    %25 = vsyncpa %s24, 0
    %26 = vsyncpa [#allocation9], 0
    %27 = vsyncpa [#allocation12], 0
    %28 = vsyncpa [#allocation4], 0
    %s29 = scalar_lea.sflag [#allocation4], 1
    %30 = vsyncpa %s29, 0
    %31 = vsyncpa [#allocation15], 0
    %s32 = scalar_lea.sflag [#allocation15], 1
    %33 = vsyncpa %s32, 0
    loop: start=0, step=1, limit=4
    $region2: #{tpu_custom_call.1} parent=1 // loop_pre_header
      _
    $region3: #{tpu_custom_call.1} parent=1 // loop_header
      %s35 = sphi 0, %s39
      %p36 = scmp.ge.s32.totalorder %s35, 4
      %s45 = sphi 0, %s47
      %s48 = sphi 0, %s45
      %s49 = sphi 0, %s48
      %s65 = sphi 0, %s49
      %s71 = sphi 0, %s73
      %s74 = sphi 0, %s71
      %s75 = sphi 0, %s74
      %s91 = sphi 0, %s75
      %s97 = sphi 0, %s99
      %s100 = sphi 0, %s97
      %s101 = sphi 0, %s100
      %s117 = sphi 0, %s101
      %s123 = sphi 0, %s125
      %s126 = sphi 0, %s123
      %s127 = sphi 0, %s126
      %s143 = sphi 0, %s127
      %s147 = sphi 0, %s147
      %s149 = sphi 0, %s147
      %s150 = sphi 0, %s149
      %s164 = sphi 0, %s150
      %s168 = sphi 0, %s168
      %s170 = sphi 0, %s168
      %s171 = sphi 0, %s170
      %s185 = sphi 0, %s171
      %s189 = sphi 0, %s189
      %s191 = sphi 0, %s189
      %s192 = sphi 0, %s191
      %s206 = sphi 0, %s192
      %s210 = sphi 0, %s210
      %s212 = sphi 0, %s210
      %s213 = sphi 0, %s212
      %s227 = sphi 0, %s213
      %s231 = sphi 0, %s231
      %s233 = sphi 0, %s231
      %s234 = sphi 0, %s233
      %s248 = sphi 0, %s234
      %s252 = sphi 0, %s252
      %s254 = sphi 0, %s252
      %s255 = sphi 0, %s254
      %s269 = sphi 0, %s255
      %s273 = sphi 0, %s273
      %s275 = sphi 0, %s273
      %s276 = sphi 0, %s275
      %s290 = sphi 0, %s276
      %s294 = sphi 0, %s294
      %s296 = sphi 0, %s294
      %s297 = sphi 0, %s296
      %s311 = sphi 0, %s297
      %s317 = sphi 0, %s319
      %s320 = sphi 0, %s317
      %s321 = sphi 0, %s320
      %s337 = sphi 0, %s321
      %s343 = sphi 0, %s345
      %s346 = sphi 0, %s343
      %s347 = sphi 0, %s346
      %s363 = sphi 0, %s347
      %s369 = sphi 0, %s371
      %s372 = sphi 0, %s369
      %s373 = sphi 0, %s372
      %s389 = sphi 0, %s373
    $region4: #{tpu_custom_call.1} parent=1 // loop_header_branch
      %38 = sbr.rel (%p36) target = $region8
    $region5: #{tpu_custom_call.1} parent=1 // loop_body
      %s40 = ssub.s32 %s35, 1
      %s41 = ssub.s32 %s35, 2
      %s42 = sadd.s32 %s35, 1
      %s43 = ssub.s32 %s35, %s42
      %p44 = scmp.eq.s32.totalorder %s43, 0
      %s46 = sadd.s32 %s45, 1
      %s47 = scalar_select %p44, %s45, %s46
      %p50 = pneg %p44
      %p51 = scmp.eq.s32.totalorder %s35, 1
      %p52 = por %p50, %p51
      %p53 = scmp.ne.s32.totalorder %s45, %s48
      %p54 = scmp.eq.s32.totalorder %s35, 0
      %p55 = por %p53, %p54
      %p56 = scmp.ne.s32.totalorder %s45, %s48
      %p57 = scmp.eq.s32.totalorder %s40, 1
      %p58 = por %p56, %p57
      %p59 = scmp.ne.s32.totalorder %s48, %s49
      %p60 = scmp.eq.s32.totalorder %s40, 0
      %p61 = por %p59, %p60
      %p62 = scmp.ne.s32.totalorder %s48, %s49
      %p63 = scmp.eq.s32.totalorder %s41, 1
      %p64 = por %p62, %p63
      %p66 = scmp.ne.s32.totalorder %s49, %s65
      %p67 = scmp.eq.s32.totalorder %s41, 0
      %p68 = por %p66, %p67
      %s69 = ssub.s32 %s35, %s42
      %p70 = scmp.eq.s32.totalorder %s69, 0
      %s72 = sadd.s32 %s71, 1
      %s73 = scalar_select %p70, %s71, %s72
      %p76 = pneg %p70
      %p77 = scmp.eq.s32.totalorder %s35, 1
      %p78 = por %p76, %p77
      %p79 = scmp.ne.s32.totalorder %s71, %s74
      %p80 = scmp.eq.s32.totalorder %s35, 0
      %p81 = por %p79, %p80
      %p82 = scmp.ne.s32.totalorder %s71, %s74
      %p83 = scmp.eq.s32.totalorder %s40, 1
      %p84 = por %p82, %p83
      %p85 = scmp.ne.s32.totalorder %s74, %s75
      %p86 = scmp.eq.s32.totalorder %s40, 0
      %p87 = por %p85, %p86
      %p88 = scmp.ne.s32.totalorder %s74, %s75
      %p89 = scmp.eq.s32.totalorder %s41, 1
      %p90 = por %p88, %p89
      %p92 = scmp.ne.s32.totalorder %s75, %s91
      %p93 = scmp.eq.s32.totalorder %s41, 0
      %p94 = por %p92, %p93
      %s95 = ssub.s32 %s35, %s42
      %p96 = scmp.eq.s32.totalorder %s95, 0
      %s98 = sadd.s32 %s97, 1
      %s99 = scalar_select %p96, %s97, %s98
      %p102 = pneg %p96
      %p103 = scmp.eq.s32.totalorder %s35, 1
      %p104 = por %p102, %p103
      %p105 = scmp.ne.s32.totalorder %s97, %s100
      %p106 = scmp.eq.s32.totalorder %s35, 0
      %p107 = por %p105, %p106
      %p108 = scmp.ne.s32.totalorder %s97, %s100
      %p109 = scmp.eq.s32.totalorder %s40, 1
      %p110 = por %p108, %p109
      %p111 = scmp.ne.s32.totalorder %s100, %s101
      %p112 = scmp.eq.s32.totalorder %s40, 0
      %p113 = por %p111, %p112
      %p114 = scmp.ne.s32.totalorder %s100, %s101
      %p115 = scmp.eq.s32.totalorder %s41, 1
      %p116 = por %p114, %p115
      %p118 = scmp.ne.s32.totalorder %s101, %s117
      %p119 = scmp.eq.s32.totalorder %s41, 0
      %p120 = por %p118, %p119
      %s121 = ssub.s32 %s35, %s42
      %p122 = scmp.eq.s32.totalorder %s121, 0
      %s124 = sadd.s32 %s123, 1
      %s125 = scalar_select %p122, %s123, %s124
      %p128 = pneg %p122
      %p129 = scmp.eq.s32.totalorder %s35, 1
      %p130 = por %p128, %p129
      %p131 = scmp.ne.s32.totalorder %s123, %s126
      %p132 = scmp.eq.s32.totalorder %s35, 0
      %p133 = por %p131, %p132
      %p134 = scmp.ne.s32.totalorder %s123, %s126
      %p135 = scmp.eq.s32.totalorder %s40, 1
      %p136 = por %p134, %p135
      %p137 = scmp.ne.s32.totalorder %s126, %s127
      %p138 = scmp.eq.s32.totalorder %s40, 0
      %p139 = por %p137, %p138
      %p140 = scmp.ne.s32.totalorder %s126, %s127
      %p141 = scmp.eq.s32.totalorder %s41, 1
      %p142 = por %p140, %p141
      %p144 = scmp.ne.s32.totalorder %s127, %s143
      %p145 = scmp.eq.s32.totalorder %s41, 0
      %p146 = por %p144, %p145
      %s148 = sadd.s32 %s147, 1
      %p151 = scmp.eq.s32.totalorder %s35, 1
      %p152 = scmp.ne.s32.totalorder %s147, %s149
      %p153 = scmp.eq.s32.totalorder %s35, 0
      %p154 = por %p152, %p153
      %p155 = scmp.ne.s32.totalorder %s147, %s149
      %p156 = scmp.eq.s32.totalorder %s40, 1
      %p157 = por %p155, %p156
      %p158 = scmp.ne.s32.totalorder %s149, %s150
      %p159 = scmp.eq.s32.totalorder %s40, 0
      %p160 = por %p158, %p159
      %p161 = scmp.ne.s32.totalorder %s149, %s150
      %p162 = scmp.eq.s32.totalorder %s41, 1
      %p163 = por %p161, %p162
      %p165 = scmp.ne.s32.totalorder %s150, %s164
      %p166 = scmp.eq.s32.totalorder %s41, 0
      %p167 = por %p165, %p166
      %s169 = sadd.s32 %s168, 1
      %p172 = scmp.eq.s32.totalorder %s35, 1
      %p173 = scmp.ne.s32.totalorder %s168, %s170
      %p174 = scmp.eq.s32.totalorder %s35, 0
      %p175 = por %p173, %p174
      %p176 = scmp.ne.s32.totalorder %s168, %s170
      %p177 = scmp.eq.s32.totalorder %s40, 1
      %p178 = por %p176, %p177
      %p179 = scmp.ne.s32.totalorder %s170, %s171
      %p180 = scmp.eq.s32.totalorder %s40, 0
      %p181 = por %p179, %p180
      %p182 = scmp.ne.s32.totalorder %s170, %s171
      %p183 = scmp.eq.s32.totalorder %s41, 1
      %p184 = por %p182, %p183
      %p186 = scmp.ne.s32.totalorder %s171, %s185
      %p187 = scmp.eq.s32.totalorder %s41, 0
      %p188 = por %p186, %p187
      %s190 = sadd.s32 %s189, 1
      %p193 = scmp.eq.s32.totalorder %s35, 1
      %p194 = scmp.ne.s32.totalorder %s189, %s191
      %p195 = scmp.eq.s32.totalorder %s35, 0
      %p196 = por %p194, %p195
      %p197 = scmp.ne.s32.totalorder %s189, %s191
      %p198 = scmp.eq.s32.totalorder %s40, 1
      %p199 = por %p197, %p198
      %p200 = scmp.ne.s32.totalorder %s191, %s192
      %p201 = scmp.eq.s32.totalorder %s40, 0
      %p202 = por %p200, %p201
      %p203 = scmp.ne.s32.totalorder %s191, %s192
      %p204 = scmp.eq.s32.totalorder %s41, 1
      %p205 = por %p203, %p204
      %p207 = scmp.ne.s32.totalorder %s192, %s206
      %p208 = scmp.eq.s32.totalorder %s41, 0
      %p209 = por %p207, %p208
      %s211 = sadd.s32 %s210, 1
      %p214 = scmp.eq.s32.totalorder %s35, 1
      %p215 = scmp.ne.s32.totalorder %s210, %s212
      %p216 = scmp.eq.s32.totalorder %s35, 0
      %p217 = por %p215, %p216
      %p218 = scmp.ne.s32.totalorder %s210, %s212
      %p219 = scmp.eq.s32.totalorder %s40, 1
      %p220 = por %p218, %p219
      %p221 = scmp.ne.s32.totalorder %s212, %s213
      %p222 = scmp.eq.s32.totalorder %s40, 0
      %p223 = por %p221, %p222
      %p224 = scmp.ne.s32.totalorder %s212, %s213
      %p225 = scmp.eq.s32.totalorder %s41, 1
      %p226 = por %p224, %p225
      %p228 = scmp.ne.s32.totalorder %s213, %s227
      %p229 = scmp.eq.s32.totalorder %s41, 0
      %p230 = por %p228, %p229
      %s232 = sadd.s32 %s231, 1
      %p235 = scmp.eq.s32.totalorder %s35, 1
      %p236 = scmp.ne.s32.totalorder %s231, %s233
      %p237 = scmp.eq.s32.totalorder %s35, 0
      %p238 = por %p236, %p237
      %p239 = scmp.ne.s32.totalorder %s231, %s233
      %p240 = scmp.eq.s32.totalorder %s40, 1
      %p241 = por %p239, %p240
      %p242 = scmp.ne.s32.totalorder %s233, %s234
      %p243 = scmp.eq.s32.totalorder %s40, 0
      %p244 = por %p242, %p243
      %p245 = scmp.ne.s32.totalorder %s233, %s234
      %p246 = scmp.eq.s32.totalorder %s41, 1
      %p247 = por %p245, %p246
      %p249 = scmp.ne.s32.totalorder %s234, %s248
      %p250 = scmp.eq.s32.totalorder %s41, 0
      %p251 = por %p249, %p250
      %s253 = sadd.s32 %s252, 1
      %p256 = scmp.eq.s32.totalorder %s35, 1
      %p257 = scmp.ne.s32.totalorder %s252, %s254
      %p258 = scmp.eq.s32.totalorder %s35, 0
      %p259 = por %p257, %p258
      %p260 = scmp.ne.s32.totalorder %s252, %s254
      %p261 = scmp.eq.s32.totalorder %s40, 1
      %p262 = por %p260, %p261
      %p263 = scmp.ne.s32.totalorder %s254, %s255
      %p264 = scmp.eq.s32.totalorder %s40, 0
      %p265 = por %p263, %p264
      %p266 = scmp.ne.s32.totalorder %s254, %s255
      %p267 = scmp.eq.s32.totalorder %s41, 1
      %p268 = por %p266, %p267
      %p270 = scmp.ne.s32.totalorder %s255, %s269
      %p271 = scmp.eq.s32.totalorder %s41, 0
      %p272 = por %p270, %p271
      %s274 = sadd.s32 %s273, 1
      %p277 = scmp.eq.s32.totalorder %s35, 1
      %p278 = scmp.ne.s32.totalorder %s273, %s275
      %p279 = scmp.eq.s32.totalorder %s35, 0
      %p280 = por %p278, %p279
      %p281 = scmp.ne.s32.totalorder %s273, %s275
      %p282 = scmp.eq.s32.totalorder %s40, 1
      %p283 = por %p281, %p282
      %p284 = scmp.ne.s32.totalorder %s275, %s276
      %p285 = scmp.eq.s32.totalorder %s40, 0
      %p286 = por %p284, %p285
      %p287 = scmp.ne.s32.totalorder %s275, %s276
      %p288 = scmp.eq.s32.totalorder %s41, 1
      %p289 = por %p287, %p288
      %p291 = scmp.ne.s32.totalorder %s276, %s290
      %p292 = scmp.eq.s32.totalorder %s41, 0
      %p293 = por %p291, %p292
      %s295 = sadd.s32 %s294, 1
      %p298 = scmp.eq.s32.totalorder %s35, 1
      %p299 = scmp.ne.s32.totalorder %s294, %s296
      %p300 = scmp.eq.s32.totalorder %s35, 0
      %p301 = por %p299, %p300
      %p302 = scmp.ne.s32.totalorder %s294, %s296
      %p303 = scmp.eq.s32.totalorder %s40, 1
      %p304 = por %p302, %p303
      %p305 = scmp.ne.s32.totalorder %s296, %s297
      %p306 = scmp.eq.s32.totalorder %s40, 0
      %p307 = por %p305, %p306
      %p308 = scmp.ne.s32.totalorder %s296, %s297
      %p309 = scmp.eq.s32.totalorder %s41, 1
      %p310 = por %p308, %p309
      %p312 = scmp.ne.s32.totalorder %s297, %s311
      %p313 = scmp.eq.s32.totalorder %s41, 0
      %p314 = por %p312, %p313
      %s315 = ssub.s32 %s35, %s42
      %p316 = scmp.eq.s32.totalorder %s315, 0
      %s318 = sadd.s32 %s317, 1
      %s319 = scalar_select %p316, %s317, %s318
      %p322 = pneg %p316
      %p323 = scmp.eq.s32.totalorder %s35, 1
      %p324 = por %p322, %p323
      %p325 = scmp.ne.s32.totalorder %s317, %s320
      %p326 = scmp.eq.s32.totalorder %s35, 0
      %p327 = por %p325, %p326
      %p328 = scmp.ne.s32.totalorder %s317, %s320
      %p329 = scmp.eq.s32.totalorder %s40, 1
      %p330 = por %p328, %p329
      %p331 = scmp.ne.s32.totalorder %s320, %s321
      %p332 = scmp.eq.s32.totalorder %s40, 0
      %p333 = por %p331, %p332
      %p334 = scmp.ne.s32.totalorder %s320, %s321
      %p335 = scmp.eq.s32.totalorder %s41, 1
      %p336 = por %p334, %p335
      %p338 = scmp.ne.s32.totalorder %s321, %s337
      %p339 = scmp.eq.s32.totalorder %s41, 0
      %p340 = por %p338, %p339
      %s341 = ssub.s32 %s35, %s42
      %p342 = scmp.eq.s32.totalorder %s341, 0
      %s344 = sadd.s32 %s343, 1
      %s345 = scalar_select %p342, %s343, %s344
      %p348 = pneg %p342
      %p349 = scmp.eq.s32.totalorder %s35, 1
      %p350 = por %p348, %p349
      %p351 = scmp.ne.s32.totalorder %s343, %s346
      %p352 = scmp.eq.s32.totalorder %s35, 0
      %p353 = por %p351, %p352
      %p354 = scmp.ne.s32.totalorder %s343, %s346
      %p355 = scmp.eq.s32.totalorder %s40, 1
      %p356 = por %p354, %p355
      %p357 = scmp.ne.s32.totalorder %s346, %s347
      %p358 = scmp.eq.s32.totalorder %s40, 0
      %p359 = por %p357, %p358
      %p360 = scmp.ne.s32.totalorder %s346, %s347
      %p361 = scmp.eq.s32.totalorder %s41, 1
      %p362 = por %p360, %p361
      %p364 = scmp.ne.s32.totalorder %s347, %s363
      %p365 = scmp.eq.s32.totalorder %s41, 0
      %p366 = por %p364, %p365
      %s367 = ssub.s32 %s35, %s42
      %p368 = scmp.eq.s32.totalorder %s367, 0
      %s370 = sadd.s32 %s369, 1
      %s371 = scalar_select %p368, %s369, %s370
      %p374 = pneg %p368
      %p375 = scmp.eq.s32.totalorder %s35, 1
      %p376 = por %p374, %p375
      %p377 = scmp.ne.s32.totalorder %s369, %s372
      %p378 = scmp.eq.s32.totalorder %s35, 0
      %p379 = por %p377, %p378
      %p380 = scmp.ne.s32.totalorder %s369, %s372
      %p381 = scmp.eq.s32.totalorder %s40, 1
      %p382 = por %p380, %p381
      %p383 = scmp.ne.s32.totalorder %s372, %s373
      %p384 = scmp.eq.s32.totalorder %s40, 0
      %p385 = por %p383, %p384
      %p386 = scmp.ne.s32.totalorder %s372, %s373
      %p387 = scmp.eq.s32.totalorder %s41, 1
      %p388 = por %p386, %p387
      %p390 = scmp.ne.s32.totalorder %s373, %s389
      %p391 = scmp.eq.s32.totalorder %s41, 0
      %p392 = por %p390, %p391
      %p393 = scmp.le.s32.totalorder 1, %s35
      %p394 = scmp.lt.s32.totalorder %s35, 3
      %p395 = pnand %p393, %p394
      %p396 = pneg %p395
      // Predicated region
      $region9: #{tpu_custom_call.1} parent=5 // pred_check
        _
      $region10: #{tpu_custom_call.1} parent=5 // pred_check_branch
        %398 = sbr.rel (%p395) target = $region12
      $region11: #{tpu_custom_call.1} parent=5 // pred_region
        %s399 = ssub.s32 %s35, 1
        // Predicated region
        $region13: #{tpu_custom_call.1} parent=11 // pred_check
          %p400 = pneg %p160
        $region14: #{tpu_custom_call.1} parent=11 // pred_check_branch
          %402 = sbr.rel (%p400) target = $region16
        $region15: #{tpu_custom_call.1} parent=11 // pred_region
          %s404 = ssub.s32 512, 512
          %405 = vsyncadd [#allocation9], %s404
          %s406 = sshll.u32 [#allocation8], 4
          %s407 = int_to_ptr.vmem [resolvable:$true] %s406
          %412 = dma.hbm_to_vmem [thread:$0]  %s4, 512, %s407, [#allocation9], 128, 128, 8
        $region16: #{tpu_custom_call.1} parent=11 // pred_fallthru
          _
        // Predicated region
        $region17: #{tpu_custom_call.1} parent=11 // pred_check
          %p413 = pneg %p181
        $region18: #{tpu_custom_call.1} parent=11 // pred_check_branch
          %415 = sbr.rel (%p413) target = $region20
        $region19: #{tpu_custom_call.1} parent=11 // pred_region
          _
        $region20: #{tpu_custom_call.1} parent=11 // pred_fallthru
          _
        // Predicated region
        $region21: #{tpu_custom_call.1} parent=11 // pred_check
          %p416 = pneg %p202
        $region22: #{tpu_custom_call.1} parent=11 // pred_check_branch
          %418 = sbr.rel (%p416) target = $region24
        $region23: #{tpu_custom_call.1} parent=11 // pred_region
          %s420 = ssub.s32 512, 512
          %421 = vsyncadd [#allocation9], %s420
          %s422 = sshll.u32 [#allocation10], 4
          %s423 = int_to_ptr.vmem [resolvable:$true] %s422
          %428 = dma.hbm_to_vmem [thread:$0]  %s6, 512, %s423, [#allocation9], 128, 128, 8
        $region24: #{tpu_custom_call.1} parent=11 // pred_fallthru
          _
        // Predicated region
        $region25: #{tpu_custom_call.1} parent=11 // pred_check
          %p429 = pneg %p223
        $region26: #{tpu_custom_call.1} parent=11 // pred_check_branch
          %431 = sbr.rel (%p429) target = $region28
        $region27: #{tpu_custom_call.1} parent=11 // pred_region
          _
        $region28: #{tpu_custom_call.1} parent=11 // pred_fallthru
          _
        // Predicated region
        $region29: #{tpu_custom_call.1} parent=11 // pred_check
          %p432 = pneg %p244
        $region30: #{tpu_custom_call.1} parent=11 // pred_check_branch
          %434 = sbr.rel (%p432) target = $region32
        $region31: #{tpu_custom_call.1} parent=11 // pred_region
          %s436 = ssub.s32 512, 512
          %437 = vsyncadd [#allocation12], %s436
          %s438 = sshll.u32 [#allocation11], 4
          %s439 = int_to_ptr.vmem [resolvable:$true] %s438
          %444 = dma.hbm_to_vmem [thread:$0]  %s8, 512, %s439, [#allocation12], 128, 128, 8
        $region32: #{tpu_custom_call.1} parent=11 // pred_fallthru
          _
        // Predicated region
        $region33: #{tpu_custom_call.1} parent=11 // pred_check
          %p445 = pneg %p265
        $region34: #{tpu_custom_call.1} parent=11 // pred_check_branch
          %447 = sbr.rel (%p445) target = $region36
        $region35: #{tpu_custom_call.1} parent=11 // pred_region
          _
        $region36: #{tpu_custom_call.1} parent=11 // pred_fallthru
          _
        // Predicated region
        $region37: #{tpu_custom_call.1} parent=11 // pred_check
          %p448 = pneg %p286
        $region38: #{tpu_custom_call.1} parent=11 // pred_check_branch
          %450 = sbr.rel (%p448) target = $region40
        $region39: #{tpu_custom_call.1} parent=11 // pred_region
          _
        $region40: #{tpu_custom_call.1} parent=11 // pred_fallthru
          _
        // Predicated region
        $region41: #{tpu_custom_call.1} parent=11 // pred_check
          %p451 = pneg %p307
        $region42: #{tpu_custom_call.1} parent=11 // pred_check_branch
          %453 = sbr.rel (%p451) target = $region44
        $region43: #{tpu_custom_call.1} parent=11 // pred_region
          _
        $region44: #{tpu_custom_call.1} parent=11 // pred_fallthru
          _
      $region12: #{tpu_custom_call.1} parent=5 // pred_fallthru
        _
      %p454 = scmp.lt.s32.totalorder %s35, 2
      // Predicated region
      $region45: #{tpu_custom_call.1} parent=5 // pred_check
        %p455 = pneg %p454
      $region46: #{tpu_custom_call.1} parent=5 // pred_check_branch
        %457 = sbr.rel (%p455) target = $region48
      $region47: #{tpu_custom_call.1} parent=5 // pred_region
        // Predicated region
        $region49: #{tpu_custom_call.1} parent=47 // pred_check
          %p458 = pneg %p55
        $region50: #{tpu_custom_call.1} parent=47 // pred_check_branch
          %460 = sbr.rel (%p458) target = $region52
        $region51: #{tpu_custom_call.1} parent=47 // pred_region
          %s461 = sand.u32 %s45, 1
          %s462 = scalar_lea.sflag [#allocation3], %s461
          %s463 = sand.u32 %s45, 1
          %s464 = smul.addr %s463, 8
          %s465 = scalar_lea.vmem [#allocation2], %s464
          %s467 = ssub.s32 128, 128
          %468 = vsyncadd %s462, %s467
          %s469 = smul.addr %s35, 128
          %s470 = scalar_lea.hbm %s0, %s469
          %s472 = sshll.u32 %s465, 4
          %s473 = int_to_ptr.vmem [resolvable:$true] %s472
          %475 = dma.hbm_to_vmem [thread:$0]  %s470, 128, %s473, %s462
        $region52: #{tpu_custom_call.1} parent=47 // pred_fallthru
          _
        // Predicated region
        $region53: #{tpu_custom_call.1} parent=47 // pred_check
          %p476 = pneg %p81
        $region54: #{tpu_custom_call.1} parent=47 // pred_check_branch
          %478 = sbr.rel (%p476) target = $region56
        $region55: #{tpu_custom_call.1} parent=47 // pred_region
          %s479 = sand.u32 %s35, 1
          %s480 = scalar_lea.sflag [#allocation6], %s479
          %s481 = sand.u32 %s71, 1
          %s482 = smul.addr %s481, 8
          %s483 = scalar_lea.vmem [#allocation5], %s482
          %s485 = ssub.s32 128, 128
          %486 = vsyncadd %s480, %s485
          %s487 = smul.addr %s35, 128
          %s488 = scalar_lea.hbm %s1, %s487
          %s490 = sshll.u32 %s483, 4
          %s491 = int_to_ptr.vmem [resolvable:$true] %s490
          %493 = dma.hbm_to_vmem [thread:$0]  %s488, 128, %s491, %s480
        $region56: #{tpu_custom_call.1} parent=47 // pred_fallthru
          _
        // Predicated region
        $region57: #{tpu_custom_call.1} parent=47 // pred_check
          %p494 = pneg %p107
        $region58: #{tpu_custom_call.1} parent=47 // pred_check_branch
          %496 = sbr.rel (%p494) target = $region60
        $region59: #{tpu_custom_call.1} parent=47 // pred_region
          %s497 = sand.u32 %s35, 1
          %s498 = scalar_lea.sflag [#allocation6], %s497
          %s499 = sand.u32 %s97, 1
          %s500 = smul.addr %s499, 8
          %s501 = scalar_lea.vmem [#allocation7], %s500
          %s503 = ssub.s32 128, 128
          %504 = vsyncadd %s498, %s503
          %s505 = smul.addr %s35, 128
          %s506 = scalar_lea.hbm %s2, %s505
          %s508 = sshll.u32 %s501, 4
          %s509 = int_to_ptr.vmem [resolvable:$true] %s508
          %511 = dma.hbm_to_vmem [thread:$0]  %s506, 128, %s509, %s498
        $region60: #{tpu_custom_call.1} parent=47 // pred_fallthru
          _
        // Predicated region
        $region61: #{tpu_custom_call.1} parent=47 // pred_check
          %p512 = pneg %p133
        $region62: #{tpu_custom_call.1} parent=47 // pred_check_branch
          %514 = sbr.rel (%p512) target = $region64
        $region63: #{tpu_custom_call.1} parent=47 // pred_region
          %p515 = scmp.lt.s32.totalorder %s35, 1
          %s516 = scalar_select %p515, %s35, 1
          %s517 = scalar_lea.vmem %s3, %s516
        $region64: #{tpu_custom_call.1} parent=47 // pred_fallthru
          _
      $region48: #{tpu_custom_call.1} parent=5 // pred_fallthru
        _
      %p518 = scmp.le.s32.totalorder 1, %s35
      %p519 = scmp.lt.s32.totalorder %s35, 3
      %p520 = pnand %p518, %p519
      %p521 = pneg %p520
      // Predicated region
      $region65: #{tpu_custom_call.1} parent=5 // pred_check
        _
      $region66: #{tpu_custom_call.1} parent=5 // pred_check_branch
        %523 = sbr.rel (%p520) target = $region68
      $region67: #{tpu_custom_call.1} parent=5 // pred_region
        %s524 = ssub.s32 %s35, 1
        %s525 = sand.u32 %s48, 1
        %s526 = scalar_lea.sflag [#allocation3], %s525
        %s527 = sand.u32 %s48, 1
        %s528 = smul.addr %s527, 8
        %s529 = scalar_lea.vmem [#allocation2], %s528
        // Predicated region
        $region69: #{tpu_custom_call.1} parent=67 // pred_check
          %p530 = pneg %p61
        $region70: #{tpu_custom_call.1} parent=67 // pred_check_branch
          %532 = sbr.rel (%p530) target = $region72
        $region71: #{tpu_custom_call.1} parent=67 // pred_region
          %533 = dma.done %s526, 128
        $region72: #{tpu_custom_call.1} parent=67 // pred_fallthru
          _
        %s534 = sand.u32 %s40, 1
        %s535 = scalar_lea.sflag [#allocation6], %s534
        %s536 = sand.u32 %s74, 1
        %s537 = smul.addr %s536, 8
        %s538 = scalar_lea.vmem [#allocation5], %s537
        // Predicated region
        $region73: #{tpu_custom_call.1} parent=67 // pred_check
          %p539 = pneg %p87
        $region74: #{tpu_custom_call.1} parent=67 // pred_check_branch
          %541 = sbr.rel (%p539) target = $region76
        $region75: #{tpu_custom_call.1} parent=67 // pred_region
          %542 = dma.done %s535, 128
        $region76: #{tpu_custom_call.1} parent=67 // pred_fallthru
          _
        %s543 = sand.u32 %s40, 1
        %s544 = scalar_lea.sflag [#allocation6], %s543
        %s545 = sand.u32 %s100, 1
        %s546 = smul.addr %s545, 8
        %s547 = scalar_lea.vmem [#allocation7], %s546
        // Predicated region
        $region77: #{tpu_custom_call.1} parent=67 // pred_check
          %p548 = pneg %p113
        $region78: #{tpu_custom_call.1} parent=67 // pred_check_branch
          %550 = sbr.rel (%p548) target = $region80
        $region79: #{tpu_custom_call.1} parent=67 // pred_region
          %551 = dma.done %s544, 128
        $region80: #{tpu_custom_call.1} parent=67 // pred_fallthru
          _
        // Predicated region
        $region81: #{tpu_custom_call.1} parent=67 // pred_check
          %p552 = pneg %p160
        $region82: #{tpu_custom_call.1} parent=67 // pred_check_branch
          %554 = sbr.rel (%p552) target = $region84
        $region83: #{tpu_custom_call.1} parent=67 // pred_region
          %555 = dma.done [#allocation9], 512
        $region84: #{tpu_custom_call.1} parent=67 // pred_fallthru
          _
        // Predicated region
        $region85: #{tpu_custom_call.1} parent=67 // pred_check
          %p556 = pneg %p202
        $region86: #{tpu_custom_call.1} parent=67 // pred_check_branch
          %558 = sbr.rel (%p556) target = $region88
        $region87: #{tpu_custom_call.1} parent=67 // pred_region
          %559 = dma.done [#allocation9], 512
        $region88: #{tpu_custom_call.1} parent=67 // pred_fallthru
          _
        // Predicated region
        $region89: #{tpu_custom_call.1} parent=67 // pred_check
          %p560 = pneg %p244
        $region90: #{tpu_custom_call.1} parent=67 // pred_check_branch
          %562 = sbr.rel (%p560) target = $region92
        $region91: #{tpu_custom_call.1} parent=67 // pred_region
          %563 = dma.done [#allocation12], 512
        $region92: #{tpu_custom_call.1} parent=67 // pred_fallthru
          _
        %s564 = sand.u32 %s48, 1
        %s565 = scalar_lea.sflag [#allocation3], %s564
        %s566 = sand.u32 %s48, 1
        %s567 = smul.addr %s566, 8
        %s568 = scalar_lea.vmem [#allocation2], %s567
        %p569 = pneg %p61
        %p570 = pneg %p58
        %s571 = sand.u32 %s40, 1
        %s572 = scalar_lea.sflag [#allocation6], %s571
        %s573 = sand.u32 %s74, 1
        %s574 = smul.addr %s573, 8
        %s575 = scalar_lea.vmem [#allocation5], %s574
        %p576 = pneg %p87
        %p577 = pneg %p84
        %s578 = sand.u32 %s40, 1
        %s579 = scalar_lea.sflag [#allocation6], %s578
        %s580 = sand.u32 %s100, 1
        %s581 = smul.addr %s580, 8
        %s582 = scalar_lea.vmem [#allocation7], %s581
        %p583 = pneg %p113
        %p584 = pneg %p110
        %p585 = scmp.lt.s32.totalorder %s40, 1
        %s586 = scalar_select %p585, %s40, 1
        %s587 = scalar_lea.vmem %s3, %s586
        %p588 = pneg %p139
        %p589 = pneg %p136
        %p590 = pneg %p160
        %p591 = pneg %p157
        %p592 = pneg %p181
        %p593 = pneg %p178
        %p594 = pneg %p202
        %p595 = pneg %p199
        %p596 = pneg %p223
        %p597 = pneg %p220
        %p598 = pneg %p244
        %p599 = pneg %p241
        %p600 = pneg %p265
        %p601 = pneg %p262
        %p602 = pneg %p286
        %p603 = pneg %p283
        %p604 = pneg %p307
        %p605 = pneg %p304
        %p606 = pneg %p333
        %p607 = pneg %p330
        %s608 = sand.u32 %s320, 1
        %s609 = scalar_lea.sflag [#allocation4], %s608
        %s610 = sand.u32 %s320, 1
        %s611 = smul.addr %s610, 8
        %s612 = scalar_lea.vmem [#allocation13], %s611
        %p613 = pneg %p359
        %p614 = pneg %p356
        %s615 = sand.u32 %s40, 1
        %s616 = scalar_lea.sflag [#allocation15], %s615
        %s617 = sand.u32 %s346, 1
        %s618 = smul.addr %s617, 8
        %s619 = scalar_lea.vmem [#allocation14], %s618
        %p620 = pneg %p385
        %p621 = pneg %p382
        %s622 = sand.u32 %s40, 1
        %s623 = scalar_lea.sflag [#allocation15], %s622
        %s624 = sand.u32 %s372, 1
        %s625 = smul.addr %s624, 8
        %s626 = scalar_lea.vmem [#allocation16], %s625
        %p627 = scmp.lt.s32.totalorder %s40, 1
        %s628 = scalar_select %p627, %s40, 1
        %s629 = scalar_lea.vmem %s3, %s628
        %v630 = vld [vmem:[%s529] sm:$0xff]
        %v631 = vld [vmem:[#allocation8] sm:$0xff]
        %v632 = vld [vmem:[#allocation8 + $0x8] sm:$0xff]
        %v633 = vld [vmem:[#allocation8 + $0x10] sm:$0xff]
        %v634 = vld [vmem:[#allocation8 + $0x18] sm:$0xff]
        %v635 = vld [vmem:[%s5] sm:$0x1]
        %v637 = vlaneseq
        %v638 = vshrl.u32 %v637, 7
        %v639 = vsub.s32 0, %v638
        %v640 = vrot.slane %v635, %v639
        %vm642 = vcmask 261120
        %v644 = vsel %vm642, %v630, 0
        %646 = vmatprep.subr.mxu0 0.0
        %v647 = vand.u32 %v631, 4294901760
        %648 = vmatpush1.msra.mxu0 %v647
        %649 = vmatprep.subr.mxu0 0.0
        %v650 = vand.u32 %v632, 4294901760
        %651 = vmatpush1.msra.mxu0 %v650
        %652 = vmatprep.subr.mxu0 0.0
        %v653 = vand.u32 %v633, 4294901760
        %654 = vmatpush1.msra.mxu0 %v653
        %655 = vmatprep.subr.mxu0 0.0
        %v656 = vand.u32 %v634, 4294901760
        %657 = vmatpush1.msra.mxu0 %v656
        %658 = vmatprep.subr.mxu0 0.0
        %659 = vmatpush1.msra.mxu0 0.0
        %660 = vmatprep.subr.mxu0 0.0
        %661 = vmatpush1.msra.mxu0 0.0
        %662 = vmatprep.subr.mxu0 0.0
        %663 = vmatpush1.msra.mxu0 0.0
        %664 = vmatprep.subr.mxu0 0.0
        %665 = vmatpush1.msra.mxu0 0.0
        %666 = vmatprep.subr.mxu0 0.0
        %667 = vmatpush1.msra.mxu0 0.0
        %668 = vmatprep.subr.mxu0 0.0
        %669 = vmatpush1.msra.mxu0 0.0
        %670 = vmatprep.subr.mxu0 0.0
        %671 = vmatpush1.msra.mxu0 0.0
        %672 = vmatprep.subr.mxu0 0.0
        %673 = vmatpush1.msra.mxu0 0.0
        %674 = vmatprep.subr.mxu0 0.0
        %675 = vmatpush1.msra.mxu0 0.0
        %676 = vmatprep.subr.mxu0 0.0
        %677 = vmatpush1.msra.mxu0 0.0
        %678 = vmatprep.subr.mxu0 0.0
        %679 = vmatpush1.msra.mxu0 0.0
        %680 = vmatprep.subr.mxu0 0.0
        %681 = vmatpush1.msra.mxu0 0.0
        %682 = vmatprep.subr.mxu0 0.0
        %683 = vmatpush1.msra.mxu0 0.0
        %684 = vmatprep.subr.mxu0 0.0
        %685 = vmatpush1.msra.mxu0 0.0
        %686 = vmatprep.subr.mxu0 0.0
        %687 = vmatpush1.msra.mxu0 0.0
        %688 = vmatprep.subr.mxu0 0.0
        %689 = vmatpush1.msra.mxu0 0.0
        %690 = vmatprep.subr.mxu0 0.0
        %691 = vmatpush1.msra.mxu0 0.0
        %692 = vmatprep.subr.mxu0 0.0
        %693 = vmatpush1.msra.mxu0 0.0
        %694 = vmatprep.subr.mxu0 0.0
        %695 = vmatpush1.msra.mxu0 0.0
        %696 = vmatprep.subr.mxu0 0.0
        %697 = vmatpush1.msra.mxu0 0.0
        %698 = vmatprep.subr.mxu0 0.0
        %699 = vmatpush1.msra.mxu0 0.0
        %700 = vmatprep.subr.mxu0 0.0
        %701 = vmatpush1.msra.mxu0 0.0
        %702 = vmatprep.subr.mxu0 0.0
        %703 = vmatpush1.msra.mxu0 0.0
        %704 = vmatprep.subr.mxu0 0.0
        %705 = vmatpush1.msra.mxu0 0.0
        %706 = vmatprep.subr.mxu0 0.0
        %707 = vmatpush1.msra.mxu0 0.0
        %708 = vmatprep.subr.mxu0 0.0
        %709 = vmatpush1.msra.mxu0 0.0
        %710 = vmatprep.subr.mxu0 0.0
        %711 = vmatpush1.msra.mxu0 0.0
        %712 = vmatprep.subr.mxu0 0.0
        %713 = vmatpush1.msra.mxu0 0.0
        %714 = vmatprep.mubr.f32.mxu0 0.0
        %v715 = vand.u32 %v644, 4294901760
        %v716 = vsub.f32 %v644, %v715
        %v717 = vand.u32 %v716, 4294901760
        %v718 = vsub.f32 %v716, %v717
        %v719 = vand.u32 %v718, 4294901760
        %720 = vmatmul.mubr.f32.gmra.mrb[0].mxu0 %v719
        %v721 = vpop.f32.mrb[0].mxu0
        %v722 = vadd.f32 %v640, %v721
        %v723 = vpop.f32.mrb[0].mxu0
        %724 = vdwg.mxu0
        %725 = vmatprep.subr.mxu0 0.0
        %v726 = vand.u32 %v631, 4294901760
        %v727 = vsub.f32 %v631, %v726
        %v728 = vand.u32 %v727, 4294901760
        %v729 = vsub.f32 %v727, %v728
        %v730 = vand.u32 %v729, 4294901760
        %731 = vmatpush1.msra.mxu0 %v730
        %732 = vmatprep.subr.mxu0 0.0
        %v733 = vand.u32 %v632, 4294901760
        %v734 = vsub.f32 %v632, %v733
        %v735 = vand.u32 %v734, 4294901760
        %v736 = vsub.f32 %v734, %v735
        %v737 = vand.u32 %v736, 4294901760
        %738 = vmatpush1.msra.mxu0 %v737
        %739 = vmatprep.subr.mxu0 0.0
        %v740 = vand.u32 %v633, 4294901760
        %v741 = vsub.f32 %v633, %v740
        %v742 = vand.u32 %v741, 4294901760
        %v743 = vsub.f32 %v741, %v742
        %v744 = vand.u32 %v743, 4294901760
        %745 = vmatpush1.msra.mxu0 %v744
        %746 = vmatprep.subr.mxu0 0.0
        %v747 = vand.u32 %v634, 4294901760
        %v748 = vsub.f32 %v634, %v747
        %v749 = vand.u32 %v748, 4294901760
        %v750 = vsub.f32 %v748, %v749
        %v751 = vand.u32 %v750, 4294901760
        %752 = vmatpush1.msra.mxu0 %v751
        %753 = vmatprep.subr.mxu0 0.0
        %754 = vmatpush1.msra.mxu0 0.0
        %755 = vmatprep.subr.mxu0 0.0
        %756 = vmatpush1.msra.mxu0 0.0
        %757 = vmatprep.subr.mxu0 0.0
        %758 = vmatpush1.msra.mxu0 0.0
        %759 = vmatprep.subr.mxu0 0.0
        %760 = vmatpush1.msra.mxu0 0.0
        %761 = vmatprep.subr.mxu0 0.0
        %762 = vmatpush1.msra.mxu0 0.0
        %763 = vmatprep.subr.mxu0 0.0
        %764 = vmatpush1.msra.mxu0 0.0
        %765 = vmatprep.subr.mxu0 0.0
        %766 = vmatpush1.msra.mxu0 0.0
        %767 = vmatprep.subr.mxu0 0.0
        %768 = vmatpush1.msra.mxu0 0.0
        %769 = vmatprep.subr.mxu0 0.0
        %770 = vmatpush1.msra.mxu0 0.0
        %771 = vmatprep.subr.mxu0 0.0
        %772 = vmatpush1.msra.mxu0 0.0
        %773 = vmatprep.subr.mxu0 0.0
        %774 = vmatpush1.msra.mxu0 0.0
        %775 = vmatprep.subr.mxu0 0.0
        %776 = vmatpush1.msra.mxu0 0.0
        %777 = vmatprep.subr.mxu0 0.0
        %778 = vmatpush1.msra.mxu0 0.0
        %779 = vmatprep.subr.mxu0 0.0
        %780 = vmatpush1.msra.mxu0 0.0
        %781 = vmatprep.subr.mxu0 0.0
        %782 = vmatpush1.msra.mxu0 0.0
        %783 = vmatprep.subr.mxu0 0.0
        %784 = vmatpush1.msra.mxu0 0.0
        %785 = vmatprep.subr.mxu0 0.0
        %786 = vmatpush1.msra.mxu0 0.0
        %787 = vmatprep.subr.mxu0 0.0
        %788 = vmatpush1.msra.mxu0 0.0
        %789 = vmatprep.subr.mxu0 0.0
        %790 = vmatpush1.msra.mxu0 0.0
        %791 = vmatprep.subr.mxu0 0.0
        %792 = vmatpush1.msra.mxu0 0.0
        %793 = vmatprep.subr.mxu0 0.0
        %794 = vmatpush1.msra.mxu0 0.0
        %795 = vmatprep.subr.mxu0 0.0
        %796 = vmatpush1.msra.mxu0 0.0
        %797 = vmatprep.subr.mxu0 0.0
        %798 = vmatpush1.msra.mxu0 0.0
        %799 = vmatprep.subr.mxu0 0.0
        %800 = vmatpush1.msra.mxu0 0.0
        %801 = vmatprep.subr.mxu0 0.0
        %802 = vmatpush1.msra.mxu0 0.0
        %803 = vmatprep.subr.mxu0 0.0
        %804 = vmatpush1.msra.mxu0 0.0
        %805 = vmatprep.subr.mxu0 0.0
        %806 = vmatpush1.msra.mxu0 0.0
        %807 = vmatprep.subr.mxu0 0.0
        %808 = vmatpush1.msra.mxu0 0.0
        %809 = vmatprep.mubr.f32.mxu0 0.0
        %v810 = vand.u32 %v644, 4294901760
        %811 = vmatmul.mubr.f32.gmra.mrb[0].mxu0 %v810
        %v812 = vpop.f32.mrb[0].mxu0
        %v813 = vadd.f32 %v722, %v812
        %v814 = vpop.f32.mrb[0].mxu0
        %815 = vdwg.mxu0
        %816 = vmatprep.subr.mxu0 0.0
        %v817 = vand.u32 %v631, 4294901760
        %v818 = vsub.f32 %v631, %v817
        %819 = vmatpush1.msra.mxu0 %v818
        %820 = vmatprep.subr.mxu0 0.0
        %v821 = vand.u32 %v632, 4294901760
        %v822 = vsub.f32 %v632, %v821
        %823 = vmatpush1.msra.mxu0 %v822
        %824 = vmatprep.subr.mxu0 0.0
        %v825 = vand.u32 %v633, 4294901760
        %v826 = vsub.f32 %v633, %v825
        %827 = vmatpush1.msra.mxu0 %v826
        %828 = vmatprep.subr.mxu0 0.0
        %v829 = vand.u32 %v634, 4294901760
        %v830 = vsub.f32 %v634, %v829
        %831 = vmatpush1.msra.mxu0 %v830
        %832 = vmatprep.subr.mxu0 0.0
        %833 = vmatpush1.msra.mxu0 0.0
        %834 = vmatprep.subr.mxu0 0.0
        %835 = vmatpush1.msra.mxu0 0.0
        %836 = vmatprep.subr.mxu0 0.0
        %837 = vmatpush1.msra.mxu0 0.0
        %838 = vmatprep.subr.mxu0 0.0
        %839 = vmatpush1.msra.mxu0 0.0
        %840 = vmatprep.subr.mxu0 0.0
        %841 = vmatpush1.msra.mxu0 0.0
        %842 = vmatprep.subr.mxu0 0.0
        %843 = vmatpush1.msra.mxu0 0.0
        %844 = vmatprep.subr.mxu0 0.0
        %845 = vmatpush1.msra.mxu0 0.0
        %846 = vmatprep.subr.mxu0 0.0
        %847 = vmatpush1.msra.mxu0 0.0
        %848 = vmatprep.subr.mxu0 0.0
        %849 = vmatpush1.msra.mxu0 0.0
        %850 = vmatprep.subr.mxu0 0.0
        %851 = vmatpush1.msra.mxu0 0.0
        %852 = vmatprep.subr.mxu0 0.0
        %853 = vmatpush1.msra.mxu0 0.0
        %854 = vmatprep.subr.mxu0 0.0
        %855 = vmatpush1.msra.mxu0 0.0
        %856 = vmatprep.subr.mxu0 0.0
        %857 = vmatpush1.msra.mxu0 0.0
        %858 = vmatprep.subr.mxu0 0.0
        %859 = vmatpush1.msra.mxu0 0.0
        %860 = vmatprep.subr.mxu0 0.0
        %861 = vmatpush1.msra.mxu0 0.0
        %862 = vmatprep.subr.mxu0 0.0
        %863 = vmatpush1.msra.mxu0 0.0
        %864 = vmatprep.subr.mxu0 0.0
        %865 = vmatpush1.msra.mxu0 0.0
        %866 = vmatprep.subr.mxu0 0.0
        %867 = vmatpush1.msra.mxu0 0.0
        %868 = vmatprep.subr.mxu0 0.0
        %869 = vmatpush1.msra.mxu0 0.0
        %870 = vmatprep.subr.mxu0 0.0
        %871 = vmatpush1.msra.mxu0 0.0
        %872 = vmatprep.subr.mxu0 0.0
        %873 = vmatpush1.msra.mxu0 0.0
        %874 = vmatprep.subr.mxu0 0.0
        %875 = vmatpush1.msra.mxu0 0.0
        %876 = vmatprep.subr.mxu0 0.0
        %877 = vmatpush1.msra.mxu0 0.0
        %878 = vmatprep.subr.mxu0 0.0
        %879 = vmatpush1.msra.mxu0 0.0
        %880 = vmatprep.subr.mxu0 0.0
        %881 = vmatpush1.msra.mxu0 0.0
        %882 = vmatprep.subr.mxu0 0.0
        %883 = vmatpush1.msra.mxu0 0.0
        %884 = vmatprep.subr.mxu0 0.0
        %885 = vmatpush1.msra.mxu0 0.0
        %886 = vmatprep.subr.mxu0 0.0
        %887 = vmatpush1.msra.mxu0 0.0
        %888 = vmatprep.mubr.f32.mxu0 0.0
        %v889 = vand.u32 %v644, 4294901760
        %v890 = vsub.f32 %v644, %v889
        %891 = vmatmul.mubr.f32.gmra.mrb[0].mxu0 %v890
        %v892 = vpop.f32.mrb[0].mxu0
        %v893 = vadd.f32 %v813, %v892
        %v894 = vpop.f32.mrb[0].mxu0
        %895 = vdwg.mxu0
        %896 = vmatprep.subr.mxu0 0.0
        %v897 = vand.u32 %v631, 4294901760
        %898 = vmatpush1.msra.mxu0 %v897
        %899 = vmatprep.subr.mxu0 0.0
        %v900 = vand.u32 %v632, 4294901760
        %901 = vmatpush1.msra.mxu0 %v900
        %902 = vmatprep.subr.mxu0 0.0
        %v903 = vand.u32 %v633, 4294901760
        %904 = vmatpush1.msra.mxu0 %v903
        %905 = vmatprep.subr.mxu0 0.0
        %v906 = vand.u32 %v634, 4294901760
        %907 = vmatpush1.msra.mxu0 %v906
        %908 = vmatprep.subr.mxu0 0.0
        %909 = vmatpush1.msra.mxu0 0.0
        %910 = vmatprep.subr.mxu0 0.0
        %911 = vmatpush1.msra.mxu0 0.0
        %912 = vmatprep.subr.mxu0 0.0
        %913 = vmatpush1.msra.mxu0 0.0
        %914 = vmatprep.subr.mxu0 0.0
        %915 = vmatpush1.msra.mxu0 0.0
        %916 = vmatprep.subr.mxu0 0.0
        %917 = vmatpush1.msra.mxu0 0.0
        %918 = vmatprep.subr.mxu0 0.0
        %919 = vmatpush1.msra.mxu0 0.0
        %920 = vmatprep.subr.mxu0 0.0
        %921 = vmatpush1.msra.mxu0 0.0
        %922 = vmatprep.subr.mxu0 0.0
        %923 = vmatpush1.msra.mxu0 0.0
        %924 = vmatprep.subr.mxu0 0.0
        %925 = vmatpush1.msra.mxu0 0.0
        %926 = vmatprep.subr.mxu0 0.0
        %927 = vmatpush1.msra.mxu0 0.0
        %928 = vmatprep.subr.mxu0 0.0
        %929 = vmatpush1.msra.mxu0 0.0
        %930 = vmatprep.subr.mxu0 0.0
        %931 = vmatpush1.msra.mxu0 0.0
        %932 = vmatprep.subr.mxu0 0.0
        %933 = vmatpush1.msra.mxu0 0.0
        %934 = vmatprep.subr.mxu0 0.0
        %935 = vmatpush1.msra.mxu0 0.0
        %936 = vmatprep.subr.mxu0 0.0
        %937 = vmatpush1.msra.mxu0 0.0
        %938 = vmatprep.subr.mxu0 0.0
        %939 = vmatpush1.msra.mxu0 0.0
        %940 = vmatprep.subr.mxu0 0.0
        %941 = vmatpush1.msra.mxu0 0.0
        %942 = vmatprep.subr.mxu0 0.0
        %943 = vmatpush1.msra.mxu0 0.0
        %944 = vmatprep.subr.mxu0 0.0
        %945 = vmatpush1.msra.mxu0 0.0
        %946 = vmatprep.subr.mxu0 0.0
        %947 = vmatpush1.msra.mxu0 0.0
        %948 = vmatprep.subr.mxu0 0.0
        %949 = vmatpush1.msra.mxu0 0.0
        %950 = vmatprep.subr.mxu0 0.0
        %951 = vmatpush1.msra.mxu0 0.0
        %952 = vmatprep.subr.mxu0 0.0
        %953 = vmatpush1.msra.mxu0 0.0
        %954 = vmatprep.subr.mxu0 0.0
        %955 = vmatpush1.msra.mxu0 0.0
        %956 = vmatprep.subr.mxu0 0.0
        %957 = vmatpush1.msra.mxu0 0.0
        %958 = vmatprep.subr.mxu0 0.0
        %959 = vmatpush1.msra.mxu0 0.0
        %960 = vmatprep.subr.mxu0 0.0
        %961 = vmatpush1.msra.mxu0 0.0
        %962 = vmatprep.subr.mxu0 0.0
        %963 = vmatpush1.msra.mxu0 0.0
        %964 = vmatprep.mubr.f32.mxu0 0.0
        %v965 = vand.u32 %v644, 4294901760
        %v966 = vsub.f32 %v644, %v965
        %v967 = vand.u32 %v966, 4294901760
        %968 = vmatmul.mubr.f32.gmra.mrb[0].mxu0 %v967
        %v969 = vpop.f32.mrb[0].mxu0
        %v970 = vadd.f32 %v893, %v969
        %v971 = vpop.f32.mrb[0].mxu0
        %972 = vdwg.mxu0
        %973 = vmatprep.subr.mxu0 0.0
        %v974 = vand.u32 %v631, 4294901760
        %v975 = vsub.f32 %v631, %v974
        %v976 = vand.u32 %v975, 4294901760
        %977 = vmatpush1.msra.mxu0 %v976
        %978 = vmatprep.subr.mxu0 0.0
        %v979 = vand.u32 %v632, 4294901760
        %v980 = vsub.f32 %v632, %v979
        %v981 = vand.u32 %v980, 4294901760
        %982 = vmatpush1.msra.mxu0 %v981
        %983 = vmatprep.subr.mxu0 0.0
        %v984 = vand.u32 %v633, 4294901760
        %v985 = vsub.f32 %v633, %v984
        %v986 = vand.u32 %v985, 4294901760
        %987 = vmatpush1.msra.mxu0 %v986
        %988 = vmatprep.subr.mxu0 0.0
        %v989 = vand.u32 %v634, 4294901760
        %v990 = vsub.f32 %v634, %v989
        %v991 = vand.u32 %v990, 4294901760
        %992 = vmatpush1.msra.mxu0 %v991
        %993 = vmatprep.subr.mxu0 0.0
        %994 = vmatpush1.msra.mxu0 0.0
        %995 = vmatprep.subr.mxu0 0.0
        %996 = vmatpush1.msra.mxu0 0.0
        %997 = vmatprep.subr.mxu0 0.0
        %998 = vmatpush1.msra.mxu0 0.0
        %999 = vmatprep.subr.mxu0 0.0
        %1000 = vmatpush1.msra.mxu0 0.0
        %1001 = vmatprep.subr.mxu0 0.0
        %1002 = vmatpush1.msra.mxu0 0.0
        %1003 = vmatprep.subr.mxu0 0.0
        %1004 = vmatpush1.msra.mxu0 0.0
        %1005 = vmatprep.subr.mxu0 0.0
        %1006 = vmatpush1.msra.mxu0 0.0
        %1007 = vmatprep.subr.mxu0 0.0
        %1008 = vmatpush1.msra.mxu0 0.0
        %1009 = vmatprep.subr.mxu0 0.0
        %1010 = vmatpush1.msra.mxu0 0.0
        %1011 = vmatprep.subr.mxu0 0.0
        %1012 = vmatpush1.msra.mxu0 0.0
        %1013 = vmatprep.subr.mxu0 0.0
        %1014 = vmatpush1.msra.mxu0 0.0
        %1015 = vmatprep.subr.mxu0 0.0
        %1016 = vmatpush1.msra.mxu0 0.0
        %1017 = vmatprep.subr.mxu0 0.0
        %1018 = vmatpush1.msra.mxu0 0.0
        %1019 = vmatprep.subr.mxu0 0.0
        %1020 = vmatpush1.msra.mxu0 0.0
        %1021 = vmatprep.subr.mxu0 0.0
        %1022 = vmatpush1.msra.mxu0 0.0
        %1023 = vmatprep.subr.mxu0 0.0
        %1024 = vmatpush1.msra.mxu0 0.0
        %1025 = vmatprep.subr.mxu0 0.0
        %1026 = vmatpush1.msra.mxu0 0.0
        %1027 = vmatprep.subr.mxu0 0.0
        %1028 = vmatpush1.msra.mxu0 0.0
        %1029 = vmatprep.subr.mxu0 0.0
        %1030 = vmatpush1.msra.mxu0 0.0
        %1031 = vmatprep.subr.mxu0 0.0
        %1032 = vmatpush1.msra.mxu0 0.0
        %1033 = vmatprep.subr.mxu0 0.0
        %1034 = vmatpush1.msra.mxu0 0.0
        %1035 = vmatprep.subr.mxu0 0.0
        %1036 = vmatpush1.msra.mxu0 0.0
        %1037 = vmatprep.subr.mxu0 0.0
        %1038 = vmatpush1.msra.mxu0 0.0
        %1039 = vmatprep.subr.mxu0 0.0
        %1040 = vmatpush1.msra.mxu0 0.0
        %1041 = vmatprep.subr.mxu0 0.0
        %1042 = vmatpush1.msra.mxu0 0.0
        %1043 = vmatprep.subr.mxu0 0.0
        %1044 = vmatpush1.msra.mxu0 0.0
        %1045 = vmatprep.subr.mxu0 0.0
        %1046 = vmatpush1.msra.mxu0 0.0
        %1047 = vmatprep.subr.mxu0 0.0
        %1048 = vmatpush1.msra.mxu0 0.0
        %1049 = vmatprep.mubr.f32.mxu0 0.0
        %v1050 = vand.u32 %v644, 4294901760
        %1051 = vmatmul.mubr.f32.gmra.mrb[0].mxu0 %v1050
        %v1052 = vpop.f32.mrb[0].mxu0
        %v1053 = vadd.f32 %v970, %v1052
        %v1054 = vpop.f32.mrb[0].mxu0
        %1055 = vdwg.mxu0
        %1056 = vmatprep.subr.mxu0 0.0
        %v1057 = vand.u32 %v631, 4294901760
        %1058 = vmatpush1.msra.mxu0 %v1057
        %1059 = vmatprep.subr.mxu0 0.0
        %v1060 = vand.u32 %v632, 4294901760
        %1061 = vmatpush1.msra.mxu0 %v1060
        %1062 = vmatprep.subr.mxu0 0.0
        %v1063 = vand.u32 %v633, 4294901760
        %1064 = vmatpush1.msra.mxu0 %v1063
        %1065 = vmatprep.subr.mxu0 0.0
        %v1066 = vand.u32 %v634, 4294901760
        %1067 = vmatpush1.msra.mxu0 %v1066
        %1068 = vmatprep.subr.mxu0 0.0
        %1069 = vmatpush1.msra.mxu0 0.0
        %1070 = vmatprep.subr.mxu0 0.0
        %1071 = vmatpush1.msra.mxu0 0.0
        %1072 = vmatprep.subr.mxu0 0.0
        %1073 = vmatpush1.msra.mxu0 0.0
        %1074 = vmatprep.subr.mxu0 0.0
        %1075 = vmatpush1.msra.mxu0 0.0
        %1076 = vmatprep.subr.mxu0 0.0
        %1077 = vmatpush1.msra.mxu0 0.0
        %1078 = vmatprep.subr.mxu0 0.0
        %1079 = vmatpush1.msra.mxu0 0.0
        %1080 = vmatprep.subr.mxu0 0.0
        %1081 = vmatpush1.msra.mxu0 0.0
        %1082 = vmatprep.subr.mxu0 0.0
        %1083 = vmatpush1.msra.mxu0 0.0
        %1084 = vmatprep.subr.mxu0 0.0
        %1085 = vmatpush1.msra.mxu0 0.0
        %1086 = vmatprep.subr.mxu0 0.0
        %1087 = vmatpush1.msra.mxu0 0.0
        %1088 = vmatprep.subr.mxu0 0.0
        %1089 = vmatpush1.msra.mxu0 0.0
        %1090 = vmatprep.subr.mxu0 0.0
        %1091 = vmatpush1.msra.mxu0 0.0
        %1092 = vmatprep.subr.mxu0 0.0
        %1093 = vmatpush1.msra.mxu0 0.0
        %1094 = vmatprep.subr.mxu0 0.0
        %1095 = vmatpush1.msra.mxu0 0.0
        %1096 = vmatprep.subr.mxu0 0.0
        %1097 = vmatpush1.msra.mxu0 0.0
        %1098 = vmatprep.subr.mxu0 0.0
        %1099 = vmatpush1.msra.mxu0 0.0
        %1100 = vmatprep.subr.mxu0 0.0
        %1101 = vmatpush1.msra.mxu0 0.0
        %1102 = vmatprep.subr.mxu0 0.0
        %1103 = vmatpush1.msra.mxu0 0.0
        %1104 = vmatprep.subr.mxu0 0.0
        %1105 = vmatpush1.msra.mxu0 0.0
        %1106 = vmatprep.subr.mxu0 0.0
        %1107 = vmatpush1.msra.mxu0 0.0
        %1108 = vmatprep.subr.mxu0 0.0
        %1109 = vmatpush1.msra.mxu0 0.0
        %1110 = vmatprep.subr.mxu0 0.0
        %1111 = vmatpush1.msra.mxu0 0.0
        %1112 = vmatprep.subr.mxu0 0.0
        %1113 = vmatpush1.msra.mxu0 0.0
        %1114 = vmatprep.subr.mxu0 0.0
        %1115 = vmatpush1.msra.mxu0 0.0
        %1116 = vmatprep.subr.mxu0 0.0
        %1117 = vmatpush1.msra.mxu0 0.0
        %1118 = vmatprep.subr.mxu0 0.0
        %1119 = vmatpush1.msra.mxu0 0.0
        %1120 = vmatprep.subr.mxu0 0.0
        %1121 = vmatpush1.msra.mxu0 0.0
        %1122 = vmatprep.subr.mxu0 0.0
        %1123 = vmatpush1.msra.mxu0 0.0
        %1124 = vmatprep.mubr.f32.mxu0 0.0
        %v1125 = vand.u32 %v644, 4294901760
        %1126 = vmatmul.mubr.f32.gmra.mrb[0].mxu0 %v1125
        %v1127 = vpop.f32.mrb[0].mxu0
        %v1128 = vadd.f32 %v1053, %v1127
        %v1129 = vpop.f32.mrb[0].mxu0
        %1130 = vdwg.mxu0
        %v1131 = vld [vmem:[%s538] sm:$0xff]
        %v1132 = vld [vmem:[#allocation10] sm:$0xff]
        %v1133 = vld [vmem:[#allocation10 + $0x8] sm:$0xff]
        %v1134 = vld [vmem:[#allocation10 + $0x10] sm:$0xff]
        %v1135 = vld [vmem:[#allocation10 + $0x18] sm:$0xff]
        %v1136 = vld [vmem:[%s7] sm:$0x1]
        %v1138 = vlaneseq
        %v1139 = vshrl.u32 %v1138, 7
        %v1140 = vsub.s32 0, %v1139
        %v1141 = vrot.slane %v1136, %v1140
        %v1144 = vsel %vm642, %v1131, 0
        %1146 = vmatprep.subr.mxu0 0.0
        %v1147 = vand.u32 %v1132, 4294901760
        %1148 = vmatpush1.msra.mxu0 %v1147
        %1149 = vmatprep.subr.mxu0 0.0
        %v1150 = vand.u32 %v1133, 4294901760
        %1151 = vmatpush1.msra.mxu0 %v1150
        %1152 = vmatprep.subr.mxu0 0.0
        %v1153 = vand.u32 %v1134, 4294901760
        %1154 = vmatpush1.msra.mxu0 %v1153
        %1155 = vmatprep.subr.mxu0 0.0
        %v1156 = vand.u32 %v1135, 4294901760
        %1157 = vmatpush1.msra.mxu0 %v1156
        %1158 = vmatprep.subr.mxu0 0.0
        %1159 = vmatpush1.msra.mxu0 0.0
        %1160 = vmatprep.subr.mxu0 0.0
        %1161 = vmatpush1.msra.mxu0 0.0
        %1162 = vmatprep.subr.mxu0 0.0
        %1163 = vmatpush1.msra.mxu0 0.0
        %1164 = vmatprep.subr.mxu0 0.0
        %1165 = vmatpush1.msra.mxu0 0.0
        %1166 = vmatprep.subr.mxu0 0.0
        %1167 = vmatpush1.msra.mxu0 0.0
        %1168 = vmatprep.subr.mxu0 0.0
        %1169 = vmatpush1.msra.mxu0 0.0
        %1170 = vmatprep.subr.mxu0 0.0
        %1171 = vmatpush1.msra.mxu0 0.0
        %1172 = vmatprep.subr.mxu0 0.0
        %1173 = vmatpush1.msra.mxu0 0.0
        %1174 = vmatprep.subr.mxu0 0.0
        %1175 = vmatpush1.msra.mxu0 0.0
        %1176 = vmatprep.subr.mxu0 0.0
        %1177 = vmatpush1.msra.mxu0 0.0
        %1178 = vmatprep.subr.mxu0 0.0
        %1179 = vmatpush1.msra.mxu0 0.0
        %1180 = vmatprep.subr.mxu0 0.0
        %1181 = vmatpush1.msra.mxu0 0.0
        %1182 = vmatprep.subr.mxu0 0.0
        %1183 = vmatpush1.msra.mxu0 0.0
        %1184 = vmatprep.subr.mxu0 0.0
        %1185 = vmatpush1.msra.mxu0 0.0
        %1186 = vmatprep.subr.mxu0 0.0
        %1187 = vmatpush1.msra.mxu0 0.0
        %1188 = vmatprep.subr.mxu0 0.0
        %1189 = vmatpush1.msra.mxu0 0.0
        %1190 = vmatprep.subr.mxu0 0.0
        %1191 = vmatpush1.msra.mxu0 0.0
        %1192 = vmatprep.subr.mxu0 0.0
        %1193 = vmatpush1.msra.mxu0 0.0
        %1194 = vmatprep.subr.mxu0 0.0
        %1195 = vmatpush1.msra.mxu0 0.0
        %1196 = vmatprep.subr.mxu0 0.0
        %1197 = vmatpush1.msra.mxu0 0.0
        %1198 = vmatprep.subr.mxu0 0.0
        %1199 = vmatpush1.msra.mxu0 0.0
        %1200 = vmatprep.subr.mxu0 0.0
        %1201 = vmatpush1.msra.mxu0 0.0
        %1202 = vmatprep.subr.mxu0 0.0
        %1203 = vmatpush1.msra.mxu0 0.0
        %1204 = vmatprep.subr.mxu0 0.0
        %1205 = vmatpush1.msra.mxu0 0.0
        %1206 = vmatprep.subr.mxu0 0.0
        %1207 = vmatpush1.msra.mxu0 0.0
        %1208 = vmatprep.subr.mxu0 0.0
        %1209 = vmatpush1.msra.mxu0 0.0
        %1210 = vmatprep.subr.mxu0 0.0
        %1211 = vmatpush1.msra.mxu0 0.0
        %1212 = vmatprep.subr.mxu0 0.0
        %1213 = vmatpush1.msra.mxu0 0.0
        %1214 = vmatprep.mubr.f32.mxu0 0.0
        %v1215 = vand.u32 %v1144, 4294901760
        %v1216 = vsub.f32 %v1144, %v1215
        %v1217 = vand.u32 %v1216, 4294901760
        %v1218 = vsub.f32 %v1216, %v1217
        %v1219 = vand.u32 %v1218, 4294901760
        %1220 = vmatmul.mubr.f32.gmra.mrb[0].mxu0 %v1219
        %v1221 = vpop.f32.mrb[0].mxu0
        %v1222 = vadd.f32 %v1141, %v1221
        %v1223 = vpop.f32.mrb[0].mxu0
        %1224 = vdwg.mxu0
        %1225 = vmatprep.subr.mxu0 0.0
        %v1226 = vand.u32 %v1132, 4294901760
        %v1227 = vsub.f32 %v1132, %v1226
        %v1228 = vand.u32 %v1227, 4294901760
        %v1229 = vsub.f32 %v1227, %v1228
        %v1230 = vand.u32 %v1229, 4294901760
        %1231 = vmatpush1.msra.mxu0 %v1230
        %1232 = vmatprep.subr.mxu0 0.0
        %v1233 = vand.u32 %v1133, 4294901760
        %v1234 = vsub.f32 %v1133, %v1233
        %v1235 = vand.u32 %v1234, 4294901760
        %v1236 = vsub.f32 %v1234, %v1235
        %v1237 = vand.u32 %v1236, 4294901760
        %1238 = vmatpush1.msra.mxu0 %v1237
        %1239 = vmatprep.subr.mxu0 0.0
        %v1240 = vand.u32 %v1134, 4294901760
        %v1241 = vsub.f32 %v1134, %v1240
        %v1242 = vand.u32 %v1241, 4294901760
        %v1243 = vsub.f32 %v1241, %v1242
        %v1244 = vand.u32 %v1243, 4294901760
        %1245 = vmatpush1.msra.mxu0 %v1244
        %1246 = vmatprep.subr.mxu0 0.0
        %v1247 = vand.u32 %v1135, 4294901760
        %v1248 = vsub.f32 %v1135, %v1247
        %v1249 = vand.u32 %v1248, 4294901760
        %v1250 = vsub.f32 %v1248, %v1249
        %v1251 = vand.u32 %v1250, 4294901760
        %1252 = vmatpush1.msra.mxu0 %v1251
        %1253 = vmatprep.subr.mxu0 0.0
        %1254 = vmatpush1.msra.mxu0 0.0
        %1255 = vmatprep.subr.mxu0 0.0
        %1256 = vmatpush1.msra.mxu0 0.0
        %1257 = vmatprep.subr.mxu0 0.0
        %1258 = vmatpush1.msra.mxu0 0.0
        %1259 = vmatprep.subr.mxu0 0.0
        %1260 = vmatpush1.msra.mxu0 0.0
        %1261 = vmatprep.subr.mxu0 0.0
        %1262 = vmatpush1.msra.mxu0 0.0
        %1263 = vmatprep.subr.mxu0 0.0
        %1264 = vmatpush1.msra.mxu0 0.0
        %1265 = vmatprep.subr.mxu0 0.0
        %1266 = vmatpush1.msra.mxu0 0.0
        %1267 = vmatprep.subr.mxu0 0.0
        %1268 = vmatpush1.msra.mxu0 0.0
        %1269 = vmatprep.subr.mxu0 0.0
        %1270 = vmatpush1.msra.mxu0 0.0
        %1271 = vmatprep.subr.mxu0 0.0
        %1272 = vmatpush1.msra.mxu0 0.0
        %1273 = vmatprep.subr.mxu0 0.0
        %1274 = vmatpush1.msra.mxu0 0.0
        %1275 = vmatprep.subr.mxu0 0.0
        %1276 = vmatpush1.msra.mxu0 0.0
        %1277 = vmatprep.subr.mxu0 0.0
        %1278 = vmatpush1.msra.mxu0 0.0
        %1279 = vmatprep.subr.mxu0 0.0
        %1280 = vmatpush1.msra.mxu0 0.0
        %1281 = vmatprep.subr.mxu0 0.0
        %1282 = vmatpush1.msra.mxu0 0.0
        %1283 = vmatprep.subr.mxu0 0.0
        %1284 = vmatpush1.msra.mxu0 0.0
        %1285 = vmatprep.subr.mxu0 0.0
        %1286 = vmatpush1.msra.mxu0 0.0
        %1287 = vmatprep.subr.mxu0 0.0
        %1288 = vmatpush1.msra.mxu0 0.0
        %1289 = vmatprep.subr.mxu0 0.0
        %1290 = vmatpush1.msra.mxu0 0.0
        %1291 = vmatprep.subr.mxu0 0.0
        %1292 = vmatpush1.msra.mxu0 0.0
        %1293 = vmatprep.subr.mxu0 0.0
        %1294 = vmatpush1.msra.mxu0 0.0
        %1295 = vmatprep.subr.mxu0 0.0
        %1296 = vmatpush1.msra.mxu0 0.0
        %1297 = vmatprep.subr.mxu0 0.0
        %1298 = vmatpush1.msra.mxu0 0.0
        %1299 = vmatprep.subr.mxu0 0.0
        %1300 = vmatpush1.msra.mxu0 0.0
        %1301 = vmatprep.subr.mxu0 0.0
        %1302 = vmatpush1.msra.mxu0 0.0
        %1303 = vmatprep.subr.mxu0 0.0
        %1304 = vmatpush1.msra.mxu0 0.0
        %1305 = vmatprep.subr.mxu0 0.0
        %1306 = vmatpush1.msra.mxu0 0.0
        %1307 = vmatprep.subr.mxu0 0.0
        %1308 = vmatpush1.msra.mxu0 0.0
        %1309 = vmatprep.mubr.f32.mxu0 0.0
        %v1310 = vand.u32 %v1144, 4294901760
        %1311 = vmatmul.mubr.f32.gmra.mrb[0].mxu0 %v1310
        %v1312 = vpop.f32.mrb[0].mxu0
        %v1313 = vadd.f32 %v1222, %v1312
        %v1314 = vpop.f32.mrb[0].mxu0
        %1315 = vdwg.mxu0
        %1316 = vmatprep.subr.mxu0 0.0
        %v1317 = vand.u32 %v1132, 4294901760
        %v1318 = vsub.f32 %v1132, %v1317
        %1319 = vmatpush1.msra.mxu0 %v1318
        %1320 = vmatprep.subr.mxu0 0.0
        %v1321 = vand.u32 %v1133, 4294901760
        %v1322 = vsub.f32 %v1133, %v1321
        %1323 = vmatpush1.msra.mxu0 %v1322
        %1324 = vmatprep.subr.mxu0 0.0
        %v1325 = vand.u32 %v1134, 4294901760
        %v1326 = vsub.f32 %v1134, %v1325
        %1327 = vmatpush1.msra.mxu0 %v1326
        %1328 = vmatprep.subr.mxu0 0.0
        %v1329 = vand.u32 %v1135, 4294901760
        %v1330 = vsub.f32 %v1135, %v1329
        %1331 = vmatpush1.msra.mxu0 %v1330
        %1332 = vmatprep.subr.mxu0 0.0
        %1333 = vmatpush1.msra.mxu0 0.0
        %1334 = vmatprep.subr.mxu0 0.0
        %1335 = vmatpush1.msra.mxu0 0.0
        %1336 = vmatprep.subr.mxu0 0.0
        %1337 = vmatpush1.msra.mxu0 0.0
        %1338 = vmatprep.subr.mxu0 0.0
        %1339 = vmatpush1.msra.mxu0 0.0
        %1340 = vmatprep.subr.mxu0 0.0
        %1341 = vmatpush1.msra.mxu0 0.0
        %1342 = vmatprep.subr.mxu0 0.0
        %1343 = vmatpush1.msra.mxu0 0.0
        %1344 = vmatprep.subr.mxu0 0.0
        %1345 = vmatpush1.msra.mxu0 0.0
        %1346 = vmatprep.subr.mxu0 0.0
        %1347 = vmatpush1.msra.mxu0 0.0
        %1348 = vmatprep.subr.mxu0 0.0
        %1349 = vmatpush1.msra.mxu0 0.0
        %1350 = vmatprep.subr.mxu0 0.0
        %1351 = vmatpush1.msra.mxu0 0.0
        %1352 = vmatprep.subr.mxu0 0.0
        %1353 = vmatpush1.msra.mxu0 0.0
        %1354 = vmatprep.subr.mxu0 0.0
        %1355 = vmatpush1.msra.mxu0 0.0
        %1356 = vmatprep.subr.mxu0 0.0
        %1357 = vmatpush1.msra.mxu0 0.0
        %1358 = vmatprep.subr.mxu0 0.0
        %1359 = vmatpush1.msra.mxu0 0.0
        %1360 = vmatprep.subr.mxu0 0.0
        %1361 = vmatpush1.msra.mxu0 0.0
        %1362 = vmatprep.subr.mxu0 0.0
        %1363 = vmatpush1.msra.mxu0 0.0
        %1364 = vmatprep.subr.mxu0 0.0
        %1365 = vmatpush1.msra.mxu0 0.0
        %1366 = vmatprep.subr.mxu0 0.0
        %1367 = vmatpush1.msra.mxu0 0.0
        %1368 = vmatprep.subr.mxu0 0.0
        %1369 = vmatpush1.msra.mxu0 0.0
        %1370 = vmatprep.subr.mxu0 0.0
        %1371 = vmatpush1.msra.mxu0 0.0
        %1372 = vmatprep.subr.mxu0 0.0
        %1373 = vmatpush1.msra.mxu0 0.0
        %1374 = vmatprep.subr.mxu0 0.0
        %1375 = vmatpush1.msra.mxu0 0.0
        %1376 = vmatprep.subr.mxu0 0.0
        %1377 = vmatpush1.msra.mxu0 0.0
        %1378 = vmatprep.subr.mxu0 0.0
        %1379 = vmatpush1.msra.mxu0 0.0
        %1380 = vmatprep.subr.mxu0 0.0
        %1381 = vmatpush1.msra.mxu0 0.0
        %1382 = vmatprep.subr.mxu0 0.0
        %1383 = vmatpush1.msra.mxu0 0.0
        %1384 = vmatprep.subr.mxu0 0.0
        %1385 = vmatpush1.msra.mxu0 0.0
        %1386 = vmatprep.subr.mxu0 0.0
        %1387 = vmatpush1.msra.mxu0 0.0
        %1388 = vmatprep.mubr.f32.mxu0 0.0
        %v1389 = vand.u32 %v1144, 4294901760
        %v1390 = vsub.f32 %v1144, %v1389
        %1391 = vmatmul.mubr.f32.gmra.mrb[0].mxu0 %v1390
        %v1392 = vpop.f32.mrb[0].mxu0
        %v1393 = vadd.f32 %v1313, %v1392
        %v1394 = vpop.f32.mrb[0].mxu0
        %1395 = vdwg.mxu0
        %1396 = vmatprep.subr.mxu0 0.0
        %v1397 = vand.u32 %v1132, 4294901760
        %1398 = vmatpush1.msra.mxu0 %v1397
        %1399 = vmatprep.subr.mxu0 0.0
        %v1400 = vand.u32 %v1133, 4294901760
        %1401 = vmatpush1.msra.mxu0 %v1400
        %1402 = vmatprep.subr.mxu0 0.0
        %v1403 = vand.u32 %v1134, 4294901760
        %1404 = vmatpush1.msra.mxu0 %v1403
        %1405 = vmatprep.subr.mxu0 0.0
        %v1406 = vand.u32 %v1135, 4294901760
        %1407 = vmatpush1.msra.mxu0 %v1406
        %1408 = vmatprep.subr.mxu0 0.0
        %1409 = vmatpush1.msra.mxu0 0.0
        %1410 = vmatprep.subr.mxu0 0.0
        %1411 = vmatpush1.msra.mxu0 0.0
        %1412 = vmatprep.subr.mxu0 0.0
        %1413 = vmatpush1.msra.mxu0 0.0
        %1414 = vmatprep.subr.mxu0 0.0
        %1415 = vmatpush1.msra.mxu0 0.0
        %1416 = vmatprep.subr.mxu0 0.0
        %1417 = vmatpush1.msra.mxu0 0.0
        %1418 = vmatprep.subr.mxu0 0.0
        %1419 = vmatpush1.msra.mxu0 0.0
        %1420 = vmatprep.subr.mxu0 0.0
        %1421 = vmatpush1.msra.mxu0 0.0
        %1422 = vmatprep.subr.mxu0 0.0
        %1423 = vmatpush1.msra.mxu0 0.0
        %1424 = vmatprep.subr.mxu0 0.0
        %1425 = vmatpush1.msra.mxu0 0.0
        %1426 = vmatprep.subr.mxu0 0.0
        %1427 = vmatpush1.msra.mxu0 0.0
        %1428 = vmatprep.subr.mxu0 0.0
        %1429 = vmatpush1.msra.mxu0 0.0
        %1430 = vmatprep.subr.mxu0 0.0
        %1431 = vmatpush1.msra.mxu0 0.0
        %1432 = vmatprep.subr.mxu0 0.0
        %1433 = vmatpush1.msra.mxu0 0.0
        %1434 = vmatprep.subr.mxu0 0.0
        %1435 = vmatpush1.msra.mxu0 0.0
        %1436 = vmatprep.subr.mxu0 0.0
        %1437 = vmatpush1.msra.mxu0 0.0
        %1438 = vmatprep.subr.mxu0 0.0
        %1439 = vmatpush1.msra.mxu0 0.0
        %1440 = vmatprep.subr.mxu0 0.0
        %1441 = vmatpush1.msra.mxu0 0.0
        %1442 = vmatprep.subr.mxu0 0.0
        %1443 = vmatpush1.msra.mxu0 0.0
        %1444 = vmatprep.subr.mxu0 0.0
        %1445 = vmatpush1.msra.mxu0 0.0
        %1446 = vmatprep.subr.mxu0 0.0
        %1447 = vmatpush1.msra.mxu0 0.0
        %1448 = vmatprep.subr.mxu0 0.0
        %1449 = vmatpush1.msra.mxu0 0.0
        %1450 = vmatprep.subr.mxu0 0.0
        %1451 = vmatpush1.msra.mxu0 0.0
        %1452 = vmatprep.subr.mxu0 0.0
        %1453 = vmatpush1.msra.mxu0 0.0
        %1454 = vmatprep.subr.mxu0 0.0
        %1455 = vmatpush1.msra.mxu0 0.0
        %1456 = vmatprep.subr.mxu0 0.0
        %1457 = vmatpush1.msra.mxu0 0.0
        %1458 = vmatprep.subr.mxu0 0.0
        %1459 = vmatpush1.msra.mxu0 0.0
        %1460 = vmatprep.subr.mxu0 0.0
        %1461 = vmatpush1.msra.mxu0 0.0
        %1462 = vmatprep.subr.mxu0 0.0
        %1463 = vmatpush1.msra.mxu0 0.0
        %1464 = vmatprep.mubr.f32.mxu0 0.0
        %v1465 = vand.u32 %v1144, 4294901760
        %v1466 = vsub.f32 %v1144, %v1465
        %v1467 = vand.u32 %v1466, 4294901760
        %1468 = vmatmul.mubr.f32.gmra.mrb[0].mxu0 %v1467
        %v1469 = vpop.f32.mrb[0].mxu0
        %v1470 = vadd.f32 %v1393, %v1469
        %v1471 = vpop.f32.mrb[0].mxu0
        %1472 = vdwg.mxu0
        %1473 = vmatprep.subr.mxu0 0.0
        %v1474 = vand.u32 %v1132, 4294901760
        %v1475 = vsub.f32 %v1132, %v1474
        %v1476 = vand.u32 %v1475, 4294901760
        %1477 = vmatpush1.msra.mxu0 %v1476
        %1478 = vmatprep.subr.mxu0 0.0
        %v1479 = vand.u32 %v1133, 4294901760
        %v1480 = vsub.f32 %v1133, %v1479
        %v1481 = vand.u32 %v1480, 4294901760
        %1482 = vmatpush1.msra.mxu0 %v1481
        %1483 = vmatprep.subr.mxu0 0.0
        %v1484 = vand.u32 %v1134, 4294901760
        %v1485 = vsub.f32 %v1134, %v1484
        %v1486 = vand.u32 %v1485, 4294901760
        %1487 = vmatpush1.msra.mxu0 %v1486
        %1488 = vmatprep.subr.mxu0 0.0
        %v1489 = vand.u32 %v1135, 4294901760
        %v1490 = vsub.f32 %v1135, %v1489
        %v1491 = vand.u32 %v1490, 4294901760
        %1492 = vmatpush1.msra.mxu0 %v1491
        %1493 = vmatprep.subr.mxu0 0.0
        %1494 = vmatpush1.msra.mxu0 0.0
        %1495 = vmatprep.subr.mxu0 0.0
        %1496 = vmatpush1.msra.mxu0 0.0
        %1497 = vmatprep.subr.mxu0 0.0
        %1498 = vmatpush1.msra.mxu0 0.0
        %1499 = vmatprep.subr.mxu0 0.0
        %1500 = vmatpush1.msra.mxu0 0.0
        %1501 = vmatprep.subr.mxu0 0.0
        %1502 = vmatpush1.msra.mxu0 0.0
        %1503 = vmatprep.subr.mxu0 0.0
        %1504 = vmatpush1.msra.mxu0 0.0
        %1505 = vmatprep.subr.mxu0 0.0
        %1506 = vmatpush1.msra.mxu0 0.0
        %1507 = vmatprep.subr.mxu0 0.0
        %1508 = vmatpush1.msra.mxu0 0.0
        %1509 = vmatprep.subr.mxu0 0.0
        %1510 = vmatpush1.msra.mxu0 0.0
        %1511 = vmatprep.subr.mxu0 0.0
        %1512 = vmatpush1.msra.mxu0 0.0
        %1513 = vmatprep.subr.mxu0 0.0
        %1514 = vmatpush1.msra.mxu0 0.0
        %1515 = vmatprep.subr.mxu0 0.0
        %1516 = vmatpush1.msra.mxu0 0.0
        %1517 = vmatprep.subr.mxu0 0.0
        %1518 = vmatpush1.msra.mxu0 0.0
        %1519 = vmatprep.subr.mxu0 0.0
        %1520 = vmatpush1.msra.mxu0 0.0
        %1521 = vmatprep.subr.mxu0 0.0
        %1522 = vmatpush1.msra.mxu0 0.0
        %1523 = vmatprep.subr.mxu0 0.0
        %1524 = vmatpush1.msra.mxu0 0.0
        %1525 = vmatprep.subr.mxu0 0.0
        %1526 = vmatpush1.msra.mxu0 0.0
        %1527 = vmatprep.subr.mxu0 0.0
        %1528 = vmatpush1.msra.mxu0 0.0
        %1529 = vmatprep.subr.mxu0 0.0
        %1530 = vmatpush1.msra.mxu0 0.0
        %1531 = vmatprep.subr.mxu0 0.0
        %1532 = vmatpush1.msra.mxu0 0.0
        %1533 = vmatprep.subr.mxu0 0.0
        %1534 = vmatpush1.msra.mxu0 0.0
        %1535 = vmatprep.subr.mxu0 0.0
        %1536 = vmatpush1.msra.mxu0 0.0
        %1537 = vmatprep.subr.mxu0 0.0
        %1538 = vmatpush1.msra.mxu0 0.0
        %1539 = vmatprep.subr.mxu0 0.0
        %1540 = vmatpush1.msra.mxu0 0.0
        %1541 = vmatprep.subr.mxu0 0.0
        %1542 = vmatpush1.msra.mxu0 0.0
        %1543 = vmatprep.subr.mxu0 0.0
        %1544 = vmatpush1.msra.mxu0 0.0
        %1545 = vmatprep.subr.mxu0 0.0
        %1546 = vmatpush1.msra.mxu0 0.0
        %1547 = vmatprep.subr.mxu0 0.0
        %1548 = vmatpush1.msra.mxu0 0.0
        %1549 = vmatprep.mubr.f32.mxu0 0.0
        %v1550 = vand.u32 %v1144, 4294901760
        %1551 = vmatmul.mubr.f32.gmra.mrb[0].mxu0 %v1550
        %v1552 = vpop.f32.mrb[0].mxu0
        %v1553 = vadd.f32 %v1470, %v1552
        %v1554 = vpop.f32.mrb[0].mxu0
        %1555 = vdwg.mxu0
        %1556 = vmatprep.subr.mxu0 0.0
        %v1557 = vand.u32 %v1132, 4294901760
        %1558 = vmatpush1.msra.mxu0 %v1557
        %1559 = vmatprep.subr.mxu0 0.0
        %v1560 = vand.u32 %v1133, 4294901760
        %1561 = vmatpush1.msra.mxu0 %v1560
        %1562 = vmatprep.subr.mxu0 0.0
        %v1563 = vand.u32 %v1134, 4294901760
        %1564 = vmatpush1.msra.mxu0 %v1563
        %1565 = vmatprep.subr.mxu0 0.0
        %v1566 = vand.u32 %v1135, 4294901760
        %1567 = vmatpush1.msra.mxu0 %v1566
        %1568 = vmatprep.subr.mxu0 0.0
        %1569 = vmatpush1.msra.mxu0 0.0
        %1570 = vmatprep.subr.mxu0 0.0
        %1571 = vmatpush1.msra.mxu0 0.0
        %1572 = vmatprep.subr.mxu0 0.0
        %1573 = vmatpush1.msra.mxu0 0.0
        %1574 = vmatprep.subr.mxu0 0.0
        %1575 = vmatpush1.msra.mxu0 0.0
        %1576 = vmatprep.subr.mxu0 0.0
        %1577 = vmatpush1.msra.mxu0 0.0
        %1578 = vmatprep.subr.mxu0 0.0
        %1579 = vmatpush1.msra.mxu0 0.0
        %1580 = vmatprep.subr.mxu0 0.0
        %1581 = vmatpush1.msra.mxu0 0.0
        %1582 = vmatprep.subr.mxu0 0.0
        %1583 = vmatpush1.msra.mxu0 0.0
        %1584 = vmatprep.subr.mxu0 0.0
        %1585 = vmatpush1.msra.mxu0 0.0
        %1586 = vmatprep.subr.mxu0 0.0
        %1587 = vmatpush1.msra.mxu0 0.0
        %1588 = vmatprep.subr.mxu0 0.0
        %1589 = vmatpush1.msra.mxu0 0.0
        %1590 = vmatprep.subr.mxu0 0.0
        %1591 = vmatpush1.msra.mxu0 0.0
        %1592 = vmatprep.subr.mxu0 0.0
        %1593 = vmatpush1.msra.mxu0 0.0
        %1594 = vmatprep.subr.mxu0 0.0
        %1595 = vmatpush1.msra.mxu0 0.0
        %1596 = vmatprep.subr.mxu0 0.0
        %1597 = vmatpush1.msra.mxu0 0.0
        %1598 = vmatprep.subr.mxu0 0.0
        %1599 = vmatpush1.msra.mxu0 0.0
        %1600 = vmatprep.subr.mxu0 0.0
        %1601 = vmatpush1.msra.mxu0 0.0
        %1602 = vmatprep.subr.mxu0 0.0
        %1603 = vmatpush1.msra.mxu0 0.0
        %1604 = vmatprep.subr.mxu0 0.0
        %1605 = vmatpush1.msra.mxu0 0.0
        %1606 = vmatprep.subr.mxu0 0.0
        %1607 = vmatpush1.msra.mxu0 0.0
        %1608 = vmatprep.subr.mxu0 0.0
        %1609 = vmatpush1.msra.mxu0 0.0
        %1610 = vmatprep.subr.mxu0 0.0
        %1611 = vmatpush1.msra.mxu0 0.0
        %1612 = vmatprep.subr.mxu0 0.0
        %1613 = vmatpush1.msra.mxu0 0.0
        %1614 = vmatprep.subr.mxu0 0.0
        %1615 = vmatpush1.msra.mxu0 0.0
        %1616 = vmatprep.subr.mxu0 0.0
        %1617 = vmatpush1.msra.mxu0 0.0
        %1618 = vmatprep.subr.mxu0 0.0
        %1619 = vmatpush1.msra.mxu0 0.0
        %1620 = vmatprep.subr.mxu0 0.0
        %1621 = vmatpush1.msra.mxu0 0.0
        %1622 = vmatprep.subr.mxu0 0.0
        %1623 = vmatpush1.msra.mxu0 0.0
        %1624 = vmatprep.mubr.f32.mxu0 0.0
        %v1625 = vand.u32 %v1144, 4294901760
        %1626 = vmatmul.mubr.f32.gmra.mrb[0].mxu0 %v1625
        %v1627 = vpop.f32.mrb[0].mxu0
        %v1628 = vadd.f32 %v1553, %v1627
        %v1629 = vpop.f32.mrb[0].mxu0
        %1630 = vdwg.mxu0
        %v1631 = vld [vmem:[%s547] sm:$0xff]
        %v1632 = vld [vmem:[#allocation11] sm:$0xff]
        %v1633 = vld [vmem:[#allocation11 + $0x8] sm:$0xff]
        %v1634 = vld [vmem:[#allocation11 + $0x10] sm:$0xff]
        %v1635 = vld [vmem:[#allocation11 + $0x18] sm:$0xff]
        %v1636 = vld [vmem:[%s9] sm:$0x1]
        %v1638 = vlaneseq
        %v1639 = vshrl.u32 %v1638, 7
        %v1640 = vsub.s32 0, %v1639
        %v1641 = vrot.slane %v1636, %v1640
        %v1644 = vsel %vm642, %v1631, 0
        %1646 = vmatprep.subr.mxu0 0.0
        %v1647 = vand.u32 %v1632, 4294901760
        %1648 = vmatpush1.msra.mxu0 %v1647
        %1649 = vmatprep.subr.mxu0 0.0
        %v1650 = vand.u32 %v1633, 4294901760
        %1651 = vmatpush1.msra.mxu0 %v1650
        %1652 = vmatprep.subr.mxu0 0.0
        %v1653 = vand.u32 %v1634, 4294901760
        %1654 = vmatpush1.msra.mxu0 %v1653
        %1655 = vmatprep.subr.mxu0 0.0
        %v1656 = vand.u32 %v1635, 4294901760
        %1657 = vmatpush1.msra.mxu0 %v1656
        %1658 = vmatprep.subr.mxu0 0.0
        %1659 = vmatpush1.msra.mxu0 0.0
        %1660 = vmatprep.subr.mxu0 0.0
        %1661 = vmatpush1.msra.mxu0 0.0
        %1662 = vmatprep.subr.mxu0 0.0
        %1663 = vmatpush1.msra.mxu0 0.0
        %1664 = vmatprep.subr.mxu0 0.0
        %1665 = vmatpush1.msra.mxu0 0.0
        %1666 = vmatprep.subr.mxu0 0.0
        %1667 = vmatpush1.msra.mxu0 0.0
        %1668 = vmatprep.subr.mxu0 0.0
        %1669 = vmatpush1.msra.mxu0 0.0
        %1670 = vmatprep.subr.mxu0 0.0
        %1671 = vmatpush1.msra.mxu0 0.0
        %1672 = vmatprep.subr.mxu0 0.0
        %1673 = vmatpush1.msra.mxu0 0.0
        %1674 = vmatprep.subr.mxu0 0.0
        %1675 = vmatpush1.msra.mxu0 0.0
        %1676 = vmatprep.subr.mxu0 0.0
        %1677 = vmatpush1.msra.mxu0 0.0
        %1678 = vmatprep.subr.mxu0 0.0
        %1679 = vmatpush1.msra.mxu0 0.0
        %1680 = vmatprep.subr.mxu0 0.0
        %1681 = vmatpush1.msra.mxu0 0.0
        %1682 = vmatprep.subr.mxu0 0.0
        %1683 = vmatpush1.msra.mxu0 0.0
        %1684 = vmatprep.subr.mxu0 0.0
        %1685 = vmatpush1.msra.mxu0 0.0
        %1686 = vmatprep.subr.mxu0 0.0
        %1687 = vmatpush1.msra.mxu0 0.0
        %1688 = vmatprep.subr.mxu0 0.0
        %1689 = vmatpush1.msra.mxu0 0.0
        %1690 = vmatprep.subr.mxu0 0.0
        %1691 = vmatpush1.msra.mxu0 0.0
        %1692 = vmatprep.subr.mxu0 0.0
        %1693 = vmatpush1.msra.mxu0 0.0
        %1694 = vmatprep.subr.mxu0 0.0
        %1695 = vmatpush1.msra.mxu0 0.0
        %1696 = vmatprep.subr.mxu0 0.0
        %1697 = vmatpush1.msra.mxu0 0.0
        %1698 = vmatprep.subr.mxu0 0.0
        %1699 = vmatpush1.msra.mxu0 0.0
        %1700 = vmatprep.subr.mxu0 0.0
        %1701 = vmatpush1.msra.mxu0 0.0
        %1702 = vmatprep.subr.mxu0 0.0
        %1703 = vmatpush1.msra.mxu0 0.0
        %1704 = vmatprep.subr.mxu0 0.0
        %1705 = vmatpush1.msra.mxu0 0.0
        %1706 = vmatprep.subr.mxu0 0.0
        %1707 = vmatpush1.msra.mxu0 0.0
        %1708 = vmatprep.subr.mxu0 0.0
        %1709 = vmatpush1.msra.mxu0 0.0
        %1710 = vmatprep.subr.mxu0 0.0
        %1711 = vmatpush1.msra.mxu0 0.0
        %1712 = vmatprep.subr.mxu0 0.0
        %1713 = vmatpush1.msra.mxu0 0.0
        %1714 = vmatprep.mubr.f32.mxu0 0.0
        %v1715 = vand.u32 %v1644, 4294901760
        %v1716 = vsub.f32 %v1644, %v1715
        %v1717 = vand.u32 %v1716, 4294901760
        %v1718 = vsub.f32 %v1716, %v1717
        %v1719 = vand.u32 %v1718, 4294901760
        %1720 = vmatmul.mubr.f32.gmra.mrb[0].mxu0 %v1719
        %v1721 = vpop.f32.mrb[0].mxu0
        %v1722 = vadd.f32 %v1641, %v1721
        %v1723 = vpop.f32.mrb[0].mxu0
        %1724 = vdwg.mxu0
        %1725 = vmatprep.subr.mxu0 0.0
        %v1726 = vand.u32 %v1632, 4294901760
        %v1727 = vsub.f32 %v1632, %v1726
        %v1728 = vand.u32 %v1727, 4294901760
        %v1729 = vsub.f32 %v1727, %v1728
        %v1730 = vand.u32 %v1729, 4294901760
        %1731 = vmatpush1.msra.mxu0 %v1730
        %1732 = vmatprep.subr.mxu0 0.0
        %v1733 = vand.u32 %v1633, 4294901760
        %v1734 = vsub.f32 %v1633, %v1733
        %v1735 = vand.u32 %v1734, 4294901760
        %v1736 = vsub.f32 %v1734, %v1735
        %v1737 = vand.u32 %v1736, 4294901760
        %1738 = vmatpush1.msra.mxu0 %v1737
        %1739 = vmatprep.subr.mxu0 0.0
        %v1740 = vand.u32 %v1634, 4294901760
        %v1741 = vsub.f32 %v1634, %v1740
        %v1742 = vand.u32 %v1741, 4294901760
        %v1743 = vsub.f32 %v1741, %v1742
        %v1744 = vand.u32 %v1743, 4294901760
        %1745 = vmatpush1.msra.mxu0 %v1744
        %1746 = vmatprep.subr.mxu0 0.0
        %v1747 = vand.u32 %v1635, 4294901760
        %v1748 = vsub.f32 %v1635, %v1747
        %v1749 = vand.u32 %v1748, 4294901760
        %v1750 = vsub.f32 %v1748, %v1749
        %v1751 = vand.u32 %v1750, 4294901760
        %1752 = vmatpush1.msra.mxu0 %v1751
        %1753 = vmatprep.subr.mxu0 0.0
        %1754 = vmatpush1.msra.mxu0 0.0
        %1755 = vmatprep.subr.mxu0 0.0
        %1756 = vmatpush1.msra.mxu0 0.0
        %1757 = vmatprep.subr.mxu0 0.0
        %1758 = vmatpush1.msra.mxu0 0.0
        %1759 = vmatprep.subr.mxu0 0.0
        %1760 = vmatpush1.msra.mxu0 0.0
        %1761 = vmatprep.subr.mxu0 0.0
        %1762 = vmatpush1.msra.mxu0 0.0
        %1763 = vmatprep.subr.mxu0 0.0
        %1764 = vmatpush1.msra.mxu0 0.0
        %1765 = vmatprep.subr.mxu0 0.0
        %1766 = vmatpush1.msra.mxu0 0.0
        %1767 = vmatprep.subr.mxu0 0.0
        %1768 = vmatpush1.msra.mxu0 0.0
        %1769 = vmatprep.subr.mxu0 0.0
        %1770 = vmatpush1.msra.mxu0 0.0
        %1771 = vmatprep.subr.mxu0 0.0
        %1772 = vmatpush1.msra.mxu0 0.0
        %1773 = vmatprep.subr.mxu0 0.0
        %1774 = vmatpush1.msra.mxu0 0.0
        %1775 = vmatprep.subr.mxu0 0.0
        %1776 = vmatpush1.msra.mxu0 0.0
        %1777 = vmatprep.subr.mxu0 0.0
        %1778 = vmatpush1.msra.mxu0 0.0
        %1779 = vmatprep.subr.mxu0 0.0
        %1780 = vmatpush1.msra.mxu0 0.0
        %1781 = vmatprep.subr.mxu0 0.0
        %1782 = vmatpush1.msra.mxu0 0.0
        %1783 = vmatprep.subr.mxu0 0.0
        %1784 = vmatpush1.msra.mxu0 0.0
        %1785 = vmatprep.subr.mxu0 0.0
        %1786 = vmatpush1.msra.mxu0 0.0
        %1787 = vmatprep.subr.mxu0 0.0
        %1788 = vmatpush1.msra.mxu0 0.0
        %1789 = vmatprep.subr.mxu0 0.0
        %1790 = vmatpush1.msra.mxu0 0.0
        %1791 = vmatprep.subr.mxu0 0.0
        %1792 = vmatpush1.msra.mxu0 0.0
        %1793 = vmatprep.subr.mxu0 0.0
        %1794 = vmatpush1.msra.mxu0 0.0
        %1795 = vmatprep.subr.mxu0 0.0
        %1796 = vmatpush1.msra.mxu0 0.0
        %1797 = vmatprep.subr.mxu0 0.0
        %1798 = vmatpush1.msra.mxu0 0.0
        %1799 = vmatprep.subr.mxu0 0.0
        %1800 = vmatpush1.msra.mxu0 0.0
        %1801 = vmatprep.subr.mxu0 0.0
        %1802 = vmatpush1.msra.mxu0 0.0
        %1803 = vmatprep.subr.mxu0 0.0
        %1804 = vmatpush1.msra.mxu0 0.0
        %1805 = vmatprep.subr.mxu0 0.0
        %1806 = vmatpush1.msra.mxu0 0.0
        %1807 = vmatprep.subr.mxu0 0.0
        %1808 = vmatpush1.msra.mxu0 0.0
        %1809 = vmatprep.mubr.f32.mxu0 0.0
        %v1810 = vand.u32 %v1644, 4294901760
        %1811 = vmatmul.mubr.f32.gmra.mrb[0].mxu0 %v1810
        %v1812 = vpop.f32.mrb[0].mxu0
        %v1813 = vadd.f32 %v1722, %v1812
        %v1814 = vpop.f32.mrb[0].mxu0
        %1815 = vdwg.mxu0
        %1816 = vmatprep.subr.mxu0 0.0
        %v1817 = vand.u32 %v1632, 4294901760
        %v1818 = vsub.f32 %v1632, %v1817
        %1819 = vmatpush1.msra.mxu0 %v1818
        %1820 = vmatprep.subr.mxu0 0.0
        %v1821 = vand.u32 %v1633, 4294901760
        %v1822 = vsub.f32 %v1633, %v1821
        %1823 = vmatpush1.msra.mxu0 %v1822
        %1824 = vmatprep.subr.mxu0 0.0
        %v1825 = vand.u32 %v1634, 4294901760
        %v1826 = vsub.f32 %v1634, %v1825
        %1827 = vmatpush1.msra.mxu0 %v1826
        %1828 = vmatprep.subr.mxu0 0.0
        %v1829 = vand.u32 %v1635, 4294901760
        %v1830 = vsub.f32 %v1635, %v1829
        %1831 = vmatpush1.msra.mxu0 %v1830
        %1832 = vmatprep.subr.mxu0 0.0
        %1833 = vmatpush1.msra.mxu0 0.0
        %1834 = vmatprep.subr.mxu0 0.0
        %1835 = vmatpush1.msra.mxu0 0.0
        %1836 = vmatprep.subr.mxu0 0.0
        %1837 = vmatpush1.msra.mxu0 0.0
        %1838 = vmatprep.subr.mxu0 0.0
        %1839 = vmatpush1.msra.mxu0 0.0
        %1840 = vmatprep.subr.mxu0 0.0
        %1841 = vmatpush1.msra.mxu0 0.0
        %1842 = vmatprep.subr.mxu0 0.0
        %1843 = vmatpush1.msra.mxu0 0.0
        %1844 = vmatprep.subr.mxu0 0.0
        %1845 = vmatpush1.msra.mxu0 0.0
        %1846 = vmatprep.subr.mxu0 0.0
        %1847 = vmatpush1.msra.mxu0 0.0
        %1848 = vmatprep.subr.mxu0 0.0
        %1849 = vmatpush1.msra.mxu0 0.0
        %1850 = vmatprep.subr.mxu0 0.0
        %1851 = vmatpush1.msra.mxu0 0.0
        %1852 = vmatprep.subr.mxu0 0.0
        %1853 = vmatpush1.msra.mxu0 0.0
        %1854 = vmatprep.subr.mxu0 0.0
        %1855 = vmatpush1.msra.mxu0 0.0
        %1856 = vmatprep.subr.mxu0 0.0
        %1857 = vmatpush1.msra.mxu0 0.0
        %1858 = vmatprep.subr.mxu0 0.0
        %1859 = vmatpush1.msra.mxu0 0.0
        %1860 = vmatprep.subr.mxu0 0.0
        %1861 = vmatpush1.msra.mxu0 0.0
        %1862 = vmatprep.subr.mxu0 0.0
        %1863 = vmatpush1.msra.mxu0 0.0
        %1864 = vmatprep.subr.mxu0 0.0
        %1865 = vmatpush1.msra.mxu0 0.0
        %1866 = vmatprep.subr.mxu0 0.0
        %1867 = vmatpush1.msra.mxu0 0.0
        %1868 = vmatprep.subr.mxu0 0.0
        %1869 = vmatpush1.msra.mxu0 0.0
        %1870 = vmatprep.subr.mxu0 0.0
        %1871 = vmatpush1.msra.mxu0 0.0
        %1872 = vmatprep.subr.mxu0 0.0
        %1873 = vmatpush1.msra.mxu0 0.0
        %1874 = vmatprep.subr.mxu0 0.0
        %1875 = vmatpush1.msra.mxu0 0.0
        %1876 = vmatprep.subr.mxu0 0.0
        %1877 = vmatpush1.msra.mxu0 0.0
        %1878 = vmatprep.subr.mxu0 0.0
        %1879 = vmatpush1.msra.mxu0 0.0
        %1880 = vmatprep.subr.mxu0 0.0
        %1881 = vmatpush1.msra.mxu0 0.0
        %1882 = vmatprep.subr.mxu0 0.0
        %1883 = vmatpush1.msra.mxu0 0.0
        %1884 = vmatprep.subr.mxu0 0.0
        %1885 = vmatpush1.msra.mxu0 0.0
        %1886 = vmatprep.subr.mxu0 0.0
        %1887 = vmatpush1.msra.mxu0 0.0
        %1888 = vmatprep.mubr.f32.mxu0 0.0
        %v1889 = vand.u32 %v1644, 4294901760
        %v1890 = vsub.f32 %v1644, %v1889
        %1891 = vmatmul.mubr.f32.gmra.mrb[0].mxu0 %v1890
        %v1892 = vpop.f32.mrb[0].mxu0
        %v1893 = vadd.f32 %v1813, %v1892
        %v1894 = vpop.f32.mrb[0].mxu0
        %1895 = vdwg.mxu0
        %1896 = vmatprep.subr.mxu0 0.0
        %v1897 = vand.u32 %v1632, 4294901760
        %1898 = vmatpush1.msra.mxu0 %v1897
        %1899 = vmatprep.subr.mxu0 0.0
        %v1900 = vand.u32 %v1633, 4294901760
        %1901 = vmatpush1.msra.mxu0 %v1900
        %1902 = vmatprep.subr.mxu0 0.0
        %v1903 = vand.u32 %v1634, 4294901760
        %1904 = vmatpush1.msra.mxu0 %v1903
        %1905 = vmatprep.subr.mxu0 0.0
        %v1906 = vand.u32 %v1635, 4294901760
        %1907 = vmatpush1.msra.mxu0 %v1906
        %1908 = vmatprep.subr.mxu0 0.0
        %1909 = vmatpush1.msra.mxu0 0.0
        %1910 = vmatprep.subr.mxu0 0.0
        %1911 = vmatpush1.msra.mxu0 0.0
        %1912 = vmatprep.subr.mxu0 0.0
        %1913 = vmatpush1.msra.mxu0 0.0
        %1914 = vmatprep.subr.mxu0 0.0
        %1915 = vmatpush1.msra.mxu0 0.0
        %1916 = vmatprep.subr.mxu0 0.0
        %1917 = vmatpush1.msra.mxu0 0.0
        %1918 = vmatprep.subr.mxu0 0.0
        %1919 = vmatpush1.msra.mxu0 0.0
        %1920 = vmatprep.subr.mxu0 0.0
        %1921 = vmatpush1.msra.mxu0 0.0
        %1922 = vmatprep.subr.mxu0 0.0
        %1923 = vmatpush1.msra.mxu0 0.0
        %1924 = vmatprep.subr.mxu0 0.0
        %1925 = vmatpush1.msra.mxu0 0.0
        %1926 = vmatprep.subr.mxu0 0.0
        %1927 = vmatpush1.msra.mxu0 0.0
        %1928 = vmatprep.subr.mxu0 0.0
        %1929 = vmatpush1.msra.mxu0 0.0
        %1930 = vmatprep.subr.mxu0 0.0
        %1931 = vmatpush1.msra.mxu0 0.0
        %1932 = vmatprep.subr.mxu0 0.0
        %1933 = vmatpush1.msra.mxu0 0.0
        %1934 = vmatprep.subr.mxu0 0.0
        %1935 = vmatpush1.msra.mxu0 0.0
        %1936 = vmatprep.subr.mxu0 0.0
        %1937 = vmatpush1.msra.mxu0 0.0
        %1938 = vmatprep.subr.mxu0 0.0
        %1939 = vmatpush1.msra.mxu0 0.0
        %1940 = vmatprep.subr.mxu0 0.0
        %1941 = vmatpush1.msra.mxu0 0.0
        %1942 = vmatprep.subr.mxu0 0.0
        %1943 = vmatpush1.msra.mxu0 0.0
        %1944 = vmatprep.subr.mxu0 0.0
        %1945 = vmatpush1.msra.mxu0 0.0
        %1946 = vmatprep.subr.mxu0 0.0
        %1947 = vmatpush1.msra.mxu0 0.0
        %1948 = vmatprep.subr.mxu0 0.0
        %1949 = vmatpush1.msra.mxu0 0.0
        %1950 = vmatprep.subr.mxu0 0.0
        %1951 = vmatpush1.msra.mxu0 0.0
        %1952 = vmatprep.subr.mxu0 0.0
        %1953 = vmatpush1.msra.mxu0 0.0
        %1954 = vmatprep.subr.mxu0 0.0
        %1955 = vmatpush1.msra.mxu0 0.0
        %1956 = vmatprep.subr.mxu0 0.0
        %1957 = vmatpush1.msra.mxu0 0.0
        %1958 = vmatprep.subr.mxu0 0.0
        %1959 = vmatpush1.msra.mxu0 0.0
        %1960 = vmatprep.subr.mxu0 0.0
        %1961 = vmatpush1.msra.mxu0 0.0
        %1962 = vmatprep.subr.mxu0 0.0
        %1963 = vmatpush1.msra.mxu0 0.0
        %1964 = vmatprep.mubr.f32.mxu0 0.0
        %v1965 = vand.u32 %v1644, 4294901760
        %v1966 = vsub.f32 %v1644, %v1965
        %v1967 = vand.u32 %v1966, 4294901760
        %1968 = vmatmul.mubr.f32.gmra.mrb[0].mxu0 %v1967
        %v1969 = vpop.f32.mrb[0].mxu0
        %v1970 = vadd.f32 %v1893, %v1969
        %v1971 = vpop.f32.mrb[0].mxu0
        %1972 = vdwg.mxu0
        %1973 = vmatprep.subr.mxu0 0.0
        %v1974 = vand.u32 %v1632, 4294901760
        %v1975 = vsub.f32 %v1632, %v1974
        %v1976 = vand.u32 %v1975, 4294901760
        %1977 = vmatpush1.msra.mxu0 %v1976
        %1978 = vmatprep.subr.mxu0 0.0
        %v1979 = vand.u32 %v1633, 4294901760
        %v1980 = vsub.f32 %v1633, %v1979
        %v1981 = vand.u32 %v1980, 4294901760
        %1982 = vmatpush1.msra.mxu0 %v1981
        %1983 = vmatprep.subr.mxu0 0.0
        %v1984 = vand.u32 %v1634, 4294901760
        %v1985 = vsub.f32 %v1634, %v1984
        %v1986 = vand.u32 %v1985, 4294901760
        %1987 = vmatpush1.msra.mxu0 %v1986
        %1988 = vmatprep.subr.mxu0 0.0
        %v1989 = vand.u32 %v1635, 4294901760
        %v1990 = vsub.f32 %v1635, %v1989
        %v1991 = vand.u32 %v1990, 4294901760
        %1992 = vmatpush1.msra.mxu0 %v1991
        %1993 = vmatprep.subr.mxu0 0.0
        %1994 = vmatpush1.msra.mxu0 0.0
        %1995 = vmatprep.subr.mxu0 0.0
        %1996 = vmatpush1.msra.mxu0 0.0
        %1997 = vmatprep.subr.mxu0 0.0
        %1998 = vmatpush1.msra.mxu0 0.0
        %1999 = vmatprep.subr.mxu0 0.0
        %2000 = vmatpush1.msra.mxu0 0.0
        %2001 = vmatprep.subr.mxu0 0.0
        %2002 = vmatpush1.msra.mxu0 0.0
        %2003 = vmatprep.subr.mxu0 0.0
        %2004 = vmatpush1.msra.mxu0 0.0
        %2005 = vmatprep.subr.mxu0 0.0
        %2006 = vmatpush1.msra.mxu0 0.0
        %2007 = vmatprep.subr.mxu0 0.0
        %2008 = vmatpush1.msra.mxu0 0.0
        %2009 = vmatprep.subr.mxu0 0.0
        %2010 = vmatpush1.msra.mxu0 0.0
        %2011 = vmatprep.subr.mxu0 0.0
        %2012 = vmatpush1.msra.mxu0 0.0
        %2013 = vmatprep.subr.mxu0 0.0
        %2014 = vmatpush1.msra.mxu0 0.0
        %2015 = vmatprep.subr.mxu0 0.0
        %2016 = vmatpush1.msra.mxu0 0.0
        %2017 = vmatprep.subr.mxu0 0.0
        %2018 = vmatpush1.msra.mxu0 0.0
        %2019 = vmatprep.subr.mxu0 0.0
        %2020 = vmatpush1.msra.mxu0 0.0
        %2021 = vmatprep.subr.mxu0 0.0
        %2022 = vmatpush1.msra.mxu0 0.0
        %2023 = vmatprep.subr.mxu0 0.0
        %2024 = vmatpush1.msra.mxu0 0.0
        %2025 = vmatprep.subr.mxu0 0.0
        %2026 = vmatpush1.msra.mxu0 0.0
        %2027 = vmatprep.subr.mxu0 0.0
        %2028 = vmatpush1.msra.mxu0 0.0
        %2029 = vmatprep.subr.mxu0 0.0
        %2030 = vmatpush1.msra.mxu0 0.0
        %2031 = vmatprep.subr.mxu0 0.0
        %2032 = vmatpush1.msra.mxu0 0.0
        %2033 = vmatprep.subr.mxu0 0.0
        %2034 = vmatpush1.msra.mxu0 0.0
        %2035 = vmatprep.subr.mxu0 0.0
        %2036 = vmatpush1.msra.mxu0 0.0
        %2037 = vmatprep.subr.mxu0 0.0
        %2038 = vmatpush1.msra.mxu0 0.0
        %2039 = vmatprep.subr.mxu0 0.0
        %2040 = vmatpush1.msra.mxu0 0.0
        %2041 = vmatprep.subr.mxu0 0.0
        %2042 = vmatpush1.msra.mxu0 0.0
        %2043 = vmatprep.subr.mxu0 0.0
        %2044 = vmatpush1.msra.mxu0 0.0
        %2045 = vmatprep.subr.mxu0 0.0
        %2046 = vmatpush1.msra.mxu0 0.0
        %2047 = vmatprep.subr.mxu0 0.0
        %2048 = vmatpush1.msra.mxu0 0.0
        %2049 = vmatprep.mubr.f32.mxu0 0.0
        %v2050 = vand.u32 %v1644, 4294901760
        %2051 = vmatmul.mubr.f32.gmra.mrb[0].mxu0 %v2050
        %v2052 = vpop.f32.mrb[0].mxu0
        %v2053 = vadd.f32 %v1970, %v2052
        %v2054 = vpop.f32.mrb[0].mxu0
        %2055 = vdwg.mxu0
        %2056 = vmatprep.subr.mxu0 0.0
        %v2057 = vand.u32 %v1632, 4294901760
        %2058 = vmatpush1.msra.mxu0 %v2057
        %2059 = vmatprep.subr.mxu0 0.0
        %v2060 = vand.u32 %v1633, 4294901760
        %2061 = vmatpush1.msra.mxu0 %v2060
        %2062 = vmatprep.subr.mxu0 0.0
        %v2063 = vand.u32 %v1634, 4294901760
        %2064 = vmatpush1.msra.mxu0 %v2063
        %2065 = vmatprep.subr.mxu0 0.0
        %v2066 = vand.u32 %v1635, 4294901760
        %2067 = vmatpush1.msra.mxu0 %v2066
        %2068 = vmatprep.subr.mxu0 0.0
        %2069 = vmatpush1.msra.mxu0 0.0
        %2070 = vmatprep.subr.mxu0 0.0
        %2071 = vmatpush1.msra.mxu0 0.0
        %2072 = vmatprep.subr.mxu0 0.0
        %2073 = vmatpush1.msra.mxu0 0.0
        %2074 = vmatprep.subr.mxu0 0.0
        %2075 = vmatpush1.msra.mxu0 0.0
        %2076 = vmatprep.subr.mxu0 0.0
        %2077 = vmatpush1.msra.mxu0 0.0
        %2078 = vmatprep.subr.mxu0 0.0
        %2079 = vmatpush1.msra.mxu0 0.0
        %2080 = vmatprep.subr.mxu0 0.0
        %2081 = vmatpush1.msra.mxu0 0.0
        %2082 = vmatprep.subr.mxu0 0.0
        %2083 = vmatpush1.msra.mxu0 0.0
        %2084 = vmatprep.subr.mxu0 0.0
        %2085 = vmatpush1.msra.mxu0 0.0
        %2086 = vmatprep.subr.mxu0 0.0
        %2087 = vmatpush1.msra.mxu0 0.0
        %2088 = vmatprep.subr.mxu0 0.0
        %2089 = vmatpush1.msra.mxu0 0.0
        %2090 = vmatprep.subr.mxu0 0.0
        %2091 = vmatpush1.msra.mxu0 0.0
        %2092 = vmatprep.subr.mxu0 0.0
        %2093 = vmatpush1.msra.mxu0 0.0
        %2094 = vmatprep.subr.mxu0 0.0
        %2095 = vmatpush1.msra.mxu0 0.0
        %2096 = vmatprep.subr.mxu0 0.0
        %2097 = vmatpush1.msra.mxu0 0.0
        %2098 = vmatprep.subr.mxu0 0.0
        %2099 = vmatpush1.msra.mxu0 0.0
        %2100 = vmatprep.subr.mxu0 0.0
        %2101 = vmatpush1.msra.mxu0 0.0
        %2102 = vmatprep.subr.mxu0 0.0
        %2103 = vmatpush1.msra.mxu0 0.0
        %2104 = vmatprep.subr.mxu0 0.0
        %2105 = vmatpush1.msra.mxu0 0.0
        %2106 = vmatprep.subr.mxu0 0.0
        %2107 = vmatpush1.msra.mxu0 0.0
        %2108 = vmatprep.subr.mxu0 0.0
        %2109 = vmatpush1.msra.mxu0 0.0
        %2110 = vmatprep.subr.mxu0 0.0
        %2111 = vmatpush1.msra.mxu0 0.0
        %2112 = vmatprep.subr.mxu0 0.0
        %2113 = vmatpush1.msra.mxu0 0.0
        %2114 = vmatprep.subr.mxu0 0.0
        %2115 = vmatpush1.msra.mxu0 0.0
        %2116 = vmatprep.subr.mxu0 0.0
        %2117 = vmatpush1.msra.mxu0 0.0
        %2118 = vmatprep.subr.mxu0 0.0
        %2119 = vmatpush1.msra.mxu0 0.0
        %2120 = vmatprep.subr.mxu0 0.0
        %2121 = vmatpush1.msra.mxu0 0.0
        %2122 = vmatprep.subr.mxu0 0.0
        %2123 = vmatpush1.msra.mxu0 0.0
        %2124 = vmatprep.mubr.f32.mxu0 0.0
        %v2125 = vand.u32 %v1644, 4294901760
        %2126 = vmatmul.mubr.f32.gmra.mrb[0].mxu0 %v2125
        %v2127 = vpop.f32.mrb[0].mxu0
        %v2128 = vadd.f32 %v2053, %v2127
        %v2129 = vpop.f32.mrb[0].mxu0
        %2130 = vdwg.mxu0
        %2131 = vst.msk [vmem:[%s619] sm:$0xff] %vm642, %v1628
        %2132 = vst.msk [vmem:[%s626] sm:$0xff] %vm642, %v2128
        %v2133 = vld [vmem:[%s629] sm:$0x1]
        %vm2134 = vcmp.eq.s32.totalorder %v2133, 0
        %v2135 = vsel %vm2134, -1e+30, 0.0
        %v2136 = vld [vmem:[%s10] sm:$0xff]
        %v2137 = vld [vmem:[%s10 + $0x8] sm:$0xff]
        %v2138 = vld [vmem:[%s10 + $0x10] sm:$0xff]
        %v2139 = vld [vmem:[%s10 + $0x18] sm:$0xff]
        %v2141 = vlaneseq
        %v2142 = vshrl.u32 %v2141, 7
        %v2143 = vsub.s32 0, %v2142
        %v2144 = vrot.slane %v2135, %v2143
        %vm2146 = vcmask 64512
        %v2148 = vsel %vm2146, %v1128, 0
        %v2151 = vsel %vm2146, %v1628, 0
        %2153 = vmatprep.subr.mxu0 0.0
        %v2154 = vand.u32 %v2151, 4294901760
        %2155 = vmatpush1.xpose.msra.mxu0 %v2154
        %2156 = vmatprep.subr.mxu0 0.0
        %2157 = vmatpush1.xpose.msra.mxu0 0.0
        %2158 = vmatprep.subr.mxu0 0.0
        %2159 = vmatpush1.xpose.msra.mxu0 0.0
        %2160 = vmatprep.subr.mxu0 0.0
        %2161 = vmatpush1.xpose.msra.mxu0 0.0
        %2162 = vmatprep.subr.mxu0 0.0
        %2163 = vmatpush1.xpose.msra.mxu0 0.0
        %2164 = vmatprep.subr.mxu0 0.0
        %2165 = vmatpush1.xpose.msra.mxu0 0.0
        %2166 = vmatprep.subr.mxu0 0.0
        %2167 = vmatpush1.xpose.msra.mxu0 0.0
        %2168 = vmatprep.subr.mxu0 0.0
        %2169 = vmatpush1.xpose.msra.mxu0 0.0
        %2170 = vmatprep.subr.mxu0 0.0
        %2171 = vmatpush1.xpose.msra.mxu0 0.0
        %2172 = vmatprep.subr.mxu0 0.0
        %2173 = vmatpush1.xpose.msra.mxu0 0.0
        %2174 = vmatprep.subr.mxu0 0.0
        %2175 = vmatpush1.xpose.msra.mxu0 0.0
        %2176 = vmatprep.subr.mxu0 0.0
        %2177 = vmatpush1.xpose.msra.mxu0 0.0
        %2178 = vmatprep.subr.mxu0 0.0
        %2179 = vmatpush1.xpose.msra.mxu0 0.0
        %2180 = vmatprep.subr.mxu0 0.0
        %2181 = vmatpush1.xpose.msra.mxu0 0.0
        %2182 = vmatprep.subr.mxu0 0.0
        %2183 = vmatpush1.xpose.msra.mxu0 0.0
        %2184 = vmatprep.subr.mxu0 0.0
        %2185 = vmatpush1.xpose.msra.mxu0 0.0
        %2186 = vmatprep.subr.mxu0 0.0
        %2187 = vmatpush1.xpose.msra.mxu0 0.0
        %2188 = vmatprep.subr.mxu0 0.0
        %2189 = vmatpush1.xpose.msra.mxu0 0.0
        %2190 = vmatprep.subr.mxu0 0.0
        %2191 = vmatpush1.xpose.msra.mxu0 0.0
        %2192 = vmatprep.subr.mxu0 0.0
        %2193 = vmatpush1.xpose.msra.mxu0 0.0
        %2194 = vmatprep.subr.mxu0 0.0
        %2195 = vmatpush1.xpose.msra.mxu0 0.0
        %2196 = vmatprep.subr.mxu0 0.0
        %2197 = vmatpush1.xpose.msra.mxu0 0.0
        %2198 = vmatprep.subr.mxu0 0.0
        %2199 = vmatpush1.xpose.msra.mxu0 0.0
        %2200 = vmatprep.subr.mxu0 0.0
        %2201 = vmatpush1.xpose.msra.mxu0 0.0
        %2202 = vmatprep.subr.mxu0 0.0
        %2203 = vmatpush1.xpose.msra.mxu0 0.0
        %2204 = vmatprep.subr.mxu0 0.0
        %2205 = vmatpush1.xpose.msra.mxu0 0.0
        %2206 = vmatprep.subr.mxu0 0.0
        %2207 = vmatpush1.xpose.msra.mxu0 0.0
        %2208 = vmatprep.subr.mxu0 0.0
        %2209 = vmatpush1.xpose.msra.mxu0 0.0
        %2210 = vmatprep.subr.mxu0 0.0
        %2211 = vmatpush1.xpose.msra.mxu0 0.0
        %2212 = vmatprep.subr.mxu0 0.0
        %2213 = vmatpush1.xpose.msra.mxu0 0.0
        %2214 = vmatprep.subr.mxu0 0.0
        %2215 = vmatpush1.xpose.msra.mxu0 0.0
        %2216 = vmatprep.subr.mxu0 0.0
        %2217 = vmatpush1.xpose.msra.mxu0 0.0
        %2218 = vmatprep.mubr.f32.mxu0 0.0
        %v2219 = vand.u32 %v2148, 4294901760
        %v2220 = vsub.f32 %v2148, %v2219
        %v2221 = vand.u32 %v2220, 4294901760
        %v2222 = vsub.f32 %v2220, %v2221
        %v2223 = vand.u32 %v2222, 4294901760
        %2224 = vmatmul.mubr.f32.gmra.mrb[0].mxu0 %v2223
        %v2225 = vpop.f32.mrb[0].mxu0
        %v2226 = vadd.f32 %v2144, %v2225
        %v2227 = vpop.f32.mrb[0].mxu0
        %2228 = vdwg.mxu0
        %2229 = vmatprep.subr.mxu0 0.0
        %v2230 = vand.u32 %v2151, 4294901760
        %v2231 = vsub.f32 %v2151, %v2230
        %v2232 = vand.u32 %v2231, 4294901760
        %v2233 = vsub.f32 %v2231, %v2232
        %v2234 = vand.u32 %v2233, 4294901760
        %2235 = vmatpush1.xpose.msra.mxu0 %v2234
        %2236 = vmatprep.subr.mxu0 0.0
        %2237 = vmatpush1.xpose.msra.mxu0 0.0
        %2238 = vmatprep.subr.mxu0 0.0
        %2239 = vmatpush1.xpose.msra.mxu0 0.0
        %2240 = vmatprep.subr.mxu0 0.0
        %2241 = vmatpush1.xpose.msra.mxu0 0.0
        %2242 = vmatprep.subr.mxu0 0.0
        %2243 = vmatpush1.xpose.msra.mxu0 0.0
        %2244 = vmatprep.subr.mxu0 0.0
        %2245 = vmatpush1.xpose.msra.mxu0 0.0
        %2246 = vmatprep.subr.mxu0 0.0
        %2247 = vmatpush1.xpose.msra.mxu0 0.0
        %2248 = vmatprep.subr.mxu0 0.0
        %2249 = vmatpush1.xpose.msra.mxu0 0.0
        %2250 = vmatprep.subr.mxu0 0.0
        %2251 = vmatpush1.xpose.msra.mxu0 0.0
        %2252 = vmatprep.subr.mxu0 0.0
        %2253 = vmatpush1.xpose.msra.mxu0 0.0
        %2254 = vmatprep.subr.mxu0 0.0
        %2255 = vmatpush1.xpose.msra.mxu0 0.0
        %2256 = vmatprep.subr.mxu0 0.0
        %2257 = vmatpush1.xpose.msra.mxu0 0.0
        %2258 = vmatprep.subr.mxu0 0.0
        %2259 = vmatpush1.xpose.msra.mxu0 0.0
        %2260 = vmatprep.subr.mxu0 0.0
        %2261 = vmatpush1.xpose.msra.mxu0 0.0
        %2262 = vmatprep.subr.mxu0 0.0
        %2263 = vmatpush1.xpose.msra.mxu0 0.0
        %2264 = vmatprep.subr.mxu0 0.0
        %2265 = vmatpush1.xpose.msra.mxu0 0.0
        %2266 = vmatprep.subr.mxu0 0.0
        %2267 = vmatpush1.xpose.msra.mxu0 0.0
        %2268 = vmatprep.subr.mxu0 0.0
        %2269 = vmatpush1.xpose.msra.mxu0 0.0
        %2270 = vmatprep.subr.mxu0 0.0
        %2271 = vmatpush1.xpose.msra.mxu0 0.0
        %2272 = vmatprep.subr.mxu0 0.0
        %2273 = vmatpush1.xpose.msra.mxu0 0.0
        %2274 = vmatprep.subr.mxu0 0.0
        %2275 = vmatpush1.xpose.msra.mxu0 0.0
        %2276 = vmatprep.subr.mxu0 0.0
        %2277 = vmatpush1.xpose.msra.mxu0 0.0
        %2278 = vmatprep.subr.mxu0 0.0
        %2279 = vmatpush1.xpose.msra.mxu0 0.0
        %2280 = vmatprep.subr.mxu0 0.0
        %2281 = vmatpush1.xpose.msra.mxu0 0.0
        %2282 = vmatprep.subr.mxu0 0.0
        %2283 = vmatpush1.xpose.msra.mxu0 0.0
        %2284 = vmatprep.subr.mxu0 0.0
        %2285 = vmatpush1.xpose.msra.mxu0 0.0
        %2286 = vmatprep.subr.mxu0 0.0
        %2287 = vmatpush1.xpose.msra.mxu0 0.0
        %2288 = vmatprep.subr.mxu0 0.0
        %2289 = vmatpush1.xpose.msra.mxu0 0.0
        %2290 = vmatprep.subr.mxu0 0.0
        %2291 = vmatpush1.xpose.msra.mxu0 0.0
        %2292 = vmatprep.subr.mxu0 0.0
        %2293 = vmatpush1.xpose.msra.mxu0 0.0
        %2294 = vmatprep.subr.mxu0 0.0
        %2295 = vmatpush1.xpose.msra.mxu0 0.0
        %2296 = vmatprep.subr.mxu0 0.0
        %2297 = vmatpush1.xpose.msra.mxu0 0.0
        %2298 = vmatprep.mubr.f32.mxu0 0.0
        %v2299 = vand.u32 %v2148, 4294901760
        %2300 = vmatmul.mubr.f32.gmra.mrb[0].mxu0 %v2299
        %v2301 = vpop.f32.mrb[0].mxu0
        %v2302 = vadd.f32 %v2226, %v2301
        %v2303 = vpop.f32.mrb[0].mxu0
        %2304 = vdwg.mxu0
        %2305 = vmatprep.subr.mxu0 0.0
        %v2306 = vand.u32 %v2151, 4294901760
        %v2307 = vsub.f32 %v2151, %v2306
        %2308 = vmatpush1.xpose.msra.mxu0 %v2307
        %2309 = vmatprep.subr.mxu0 0.0
        %2310 = vmatpush1.xpose.msra.mxu0 0.0
        %2311 = vmatprep.subr.mxu0 0.0
        %2312 = vmatpush1.xpose.msra.mxu0 0.0
        %2313 = vmatprep.subr.mxu0 0.0
        %2314 = vmatpush1.xpose.msra.mxu0 0.0
        %2315 = vmatprep.subr.mxu0 0.0
        %2316 = vmatpush1.xpose.msra.mxu0 0.0
        %2317 = vmatprep.subr.mxu0 0.0
        %2318 = vmatpush1.xpose.msra.mxu0 0.0
        %2319 = vmatprep.subr.mxu0 0.0
        %2320 = vmatpush1.xpose.msra.mxu0 0.0
        %2321 = vmatprep.subr.mxu0 0.0
        %2322 = vmatpush1.xpose.msra.mxu0 0.0
        %2323 = vmatprep.subr.mxu0 0.0
        %2324 = vmatpush1.xpose.msra.mxu0 0.0
        %2325 = vmatprep.subr.mxu0 0.0
        %2326 = vmatpush1.xpose.msra.mxu0 0.0
        %2327 = vmatprep.subr.mxu0 0.0
        %2328 = vmatpush1.xpose.msra.mxu0 0.0
        %2329 = vmatprep.subr.mxu0 0.0
        %2330 = vmatpush1.xpose.msra.mxu0 0.0
        %2331 = vmatprep.subr.mxu0 0.0
        %2332 = vmatpush1.xpose.msra.mxu0 0.0
        %2333 = vmatprep.subr.mxu0 0.0
        %2334 = vmatpush1.xpose.msra.mxu0 0.0
        %2335 = vmatprep.subr.mxu0 0.0
        %2336 = vmatpush1.xpose.msra.mxu0 0.0
        %2337 = vmatprep.subr.mxu0 0.0
        %2338 = vmatpush1.xpose.msra.mxu0 0.0
        %2339 = vmatprep.subr.mxu0 0.0
        %2340 = vmatpush1.xpose.msra.mxu0 0.0
        %2341 = vmatprep.subr.mxu0 0.0
        %2342 = vmatpush1.xpose.msra.mxu0 0.0
        %2343 = vmatprep.subr.mxu0 0.0
        %2344 = vmatpush1.xpose.msra.mxu0 0.0
        %2345 = vmatprep.subr.mxu0 0.0
        %2346 = vmatpush1.xpose.msra.mxu0 0.0
        %2347 = vmatprep.subr.mxu0 0.0
        %2348 = vmatpush1.xpose.msra.mxu0 0.0
        %2349 = vmatprep.subr.mxu0 0.0
        %2350 = vmatpush1.xpose.msra.mxu0 0.0
        %2351 = vmatprep.subr.mxu0 0.0
        %2352 = vmatpush1.xpose.msra.mxu0 0.0
        %2353 = vmatprep.subr.mxu0 0.0
        %2354 = vmatpush1.xpose.msra.mxu0 0.0
        %2355 = vmatprep.subr.mxu0 0.0
        %2356 = vmatpush1.xpose.msra.mxu0 0.0
        %2357 = vmatprep.subr.mxu0 0.0
        %2358 = vmatpush1.xpose.msra.mxu0 0.0
        %2359 = vmatprep.subr.mxu0 0.0
        %2360 = vmatpush1.xpose.msra.mxu0 0.0
        %2361 = vmatprep.subr.mxu0 0.0
        %2362 = vmatpush1.xpose.msra.mxu0 0.0
        %2363 = vmatprep.subr.mxu0 0.0
        %2364 = vmatpush1.xpose.msra.mxu0 0.0
        %2365 = vmatprep.subr.mxu0 0.0
        %2366 = vmatpush1.xpose.msra.mxu0 0.0
        %2367 = vmatprep.subr.mxu0 0.0
        %2368 = vmatpush1.xpose.msra.mxu0 0.0
        %2369 = vmatprep.subr.mxu0 0.0
        %2370 = vmatpush1.xpose.msra.mxu0 0.0
        %2371 = vmatprep.mubr.f32.mxu0 0.0
        %v2372 = vand.u32 %v2148, 4294901760
        %v2373 = vsub.f32 %v2148, %v2372
        %2374 = vmatmul.mubr.f32.gmra.mrb[0].mxu0 %v2373
        %v2375 = vpop.f32.mrb[0].mxu0
        %v2376 = vadd.f32 %v2302, %v2375
        %v2377 = vpop.f32.mrb[0].mxu0
        %2378 = vdwg.mxu0
        %2379 = vmatprep.subr.mxu0 0.0
        %v2380 = vand.u32 %v2151, 4294901760
        %2381 = vmatpush1.xpose.msra.mxu0 %v2380
        %2382 = vmatprep.subr.mxu0 0.0
        %2383 = vmatpush1.xpose.msra.mxu0 0.0
        %2384 = vmatprep.subr.mxu0 0.0
        %2385 = vmatpush1.xpose.msra.mxu0 0.0
        %2386 = vmatprep.subr.mxu0 0.0
        %2387 = vmatpush1.xpose.msra.mxu0 0.0
        %2388 = vmatprep.subr.mxu0 0.0
        %2389 = vmatpush1.xpose.msra.mxu0 0.0
        %2390 = vmatprep.subr.mxu0 0.0
        %2391 = vmatpush1.xpose.msra.mxu0 0.0
        %2392 = vmatprep.subr.mxu0 0.0
        %2393 = vmatpush1.xpose.msra.mxu0 0.0
        %2394 = vmatprep.subr.mxu0 0.0
        %2395 = vmatpush1.xpose.msra.mxu0 0.0
        %2396 = vmatprep.subr.mxu0 0.0
        %2397 = vmatpush1.xpose.msra.mxu0 0.0
        %2398 = vmatprep.subr.mxu0 0.0
        %2399 = vmatpush1.xpose.msra.mxu0 0.0
        %2400 = vmatprep.subr.mxu0 0.0
        %2401 = vmatpush1.xpose.msra.mxu0 0.0
        %2402 = vmatprep.subr.mxu0 0.0
        %2403 = vmatpush1.xpose.msra.mxu0 0.0
        %2404 = vmatprep.subr.mxu0 0.0
        %2405 = vmatpush1.xpose.msra.mxu0 0.0
        %2406 = vmatprep.subr.mxu0 0.0
        %2407 = vmatpush1.xpose.msra.mxu0 0.0
        %2408 = vmatprep.subr.mxu0 0.0
        %2409 = vmatpush1.xpose.msra.mxu0 0.0
        %2410 = vmatprep.subr.mxu0 0.0
        %2411 = vmatpush1.xpose.msra.mxu0 0.0
        %2412 = vmatprep.subr.mxu0 0.0
        %2413 = vmatpush1.xpose.msra.mxu0 0.0
        %2414 = vmatprep.subr.mxu0 0.0
        %2415 = vmatpush1.xpose.msra.mxu0 0.0
        %2416 = vmatprep.subr.mxu0 0.0
        %2417 = vmatpush1.xpose.msra.mxu0 0.0
        %2418 = vmatprep.subr.mxu0 0.0
        %2419 = vmatpush1.xpose.msra.mxu0 0.0
        %2420 = vmatprep.subr.mxu0 0.0
        %2421 = vmatpush1.xpose.msra.mxu0 0.0
        %2422 = vmatprep.subr.mxu0 0.0
        %2423 = vmatpush1.xpose.msra.mxu0 0.0
        %2424 = vmatprep.subr.mxu0 0.0
        %2425 = vmatpush1.xpose.msra.mxu0 0.0
        %2426 = vmatprep.subr.mxu0 0.0
        %2427 = vmatpush1.xpose.msra.mxu0 0.0
        %2428 = vmatprep.subr.mxu0 0.0
        %2429 = vmatpush1.xpose.msra.mxu0 0.0
        %2430 = vmatprep.subr.mxu0 0.0
        %2431 = vmatpush1.xpose.msra.mxu0 0.0
        %2432 = vmatprep.subr.mxu0 0.0
        %2433 = vmatpush1.xpose.msra.mxu0 0.0
        %2434 = vmatprep.subr.mxu0 0.0
        %2435 = vmatpush1.xpose.msra.mxu0 0.0
        %2436 = vmatprep.subr.mxu0 0.0
        %2437 = vmatpush1.xpose.msra.mxu0 0.0
        %2438 = vmatprep.subr.mxu0 0.0
        %2439 = vmatpush1.xpose.msra.mxu0 0.0
        %2440 = vmatprep.subr.mxu0 0.0
        %2441 = vmatpush1.xpose.msra.mxu0 0.0
        %2442 = vmatprep.subr.mxu0 0.0
        %2443 = vmatpush1.xpose.msra.mxu0 0.0
        %2444 = vmatprep.mubr.f32.mxu0 0.0
        %v2445 = vand.u32 %v2148, 4294901760
        %v2446 = vsub.f32 %v2148, %v2445
        %v2447 = vand.u32 %v2446, 4294901760
        %2448 = vmatmul.mubr.f32.gmra.mrb[0].mxu0 %v2447
        %v2449 = vpop.f32.mrb[0].mxu0
        %v2450 = vadd.f32 %v2376, %v2449
        %v2451 = vpop.f32.mrb[0].mxu0
        %2452 = vdwg.mxu0
        %2453 = vmatprep.subr.mxu0 0.0
        %v2454 = vand.u32 %v2151, 4294901760
        %v2455 = vsub.f32 %v2151, %v2454
        %v2456 = vand.u32 %v2455, 4294901760
        %2457 = vmatpush1.xpose.msra.mxu0 %v2456
        %2458 = vmatprep.subr.mxu0 0.0
        %2459 = vmatpush1.xpose.msra.mxu0 0.0
        %2460 = vmatprep.subr.mxu0 0.0
        %2461 = vmatpush1.xpose.msra.mxu0 0.0
        %2462 = vmatprep.subr.mxu0 0.0
        %2463 = vmatpush1.xpose.msra.mxu0 0.0
        %2464 = vmatprep.subr.mxu0 0.0
        %2465 = vmatpush1.xpose.msra.mxu0 0.0
        %2466 = vmatprep.subr.mxu0 0.0
        %2467 = vmatpush1.xpose.msra.mxu0 0.0
        %2468 = vmatprep.subr.mxu0 0.0
        %2469 = vmatpush1.xpose.msra.mxu0 0.0
        %2470 = vmatprep.subr.mxu0 0.0
        %2471 = vmatpush1.xpose.msra.mxu0 0.0
        %2472 = vmatprep.subr.mxu0 0.0
        %2473 = vmatpush1.xpose.msra.mxu0 0.0
        %2474 = vmatprep.subr.mxu0 0.0
        %2475 = vmatpush1.xpose.msra.mxu0 0.0
        %2476 = vmatprep.subr.mxu0 0.0
        %2477 = vmatpush1.xpose.msra.mxu0 0.0
        %2478 = vmatprep.subr.mxu0 0.0
        %2479 = vmatpush1.xpose.msra.mxu0 0.0
        %2480 = vmatprep.subr.mxu0 0.0
        %2481 = vmatpush1.xpose.msra.mxu0 0.0
        %2482 = vmatprep.subr.mxu0 0.0
        %2483 = vmatpush1.xpose.msra.mxu0 0.0
        %2484 = vmatprep.subr.mxu0 0.0
        %2485 = vmatpush1.xpose.msra.mxu0 0.0
        %2486 = vmatprep.subr.mxu0 0.0
        %2487 = vmatpush1.xpose.msra.mxu0 0.0
        %2488 = vmatprep.subr.mxu0 0.0
        %2489 = vmatpush1.xpose.msra.mxu0 0.0
        %2490 = vmatprep.subr.mxu0 0.0
        %2491 = vmatpush1.xpose.msra.mxu0 0.0
        %2492 = vmatprep.subr.mxu0 0.0
        %2493 = vmatpush1.xpose.msra.mxu0 0.0
        %2494 = vmatprep.subr.mxu0 0.0
        %2495 = vmatpush1.xpose.msra.mxu0 0.0
        %2496 = vmatprep.subr.mxu0 0.0
        %2497 = vmatpush1.xpose.msra.mxu0 0.0
        %2498 = vmatprep.subr.mxu0 0.0
        %2499 = vmatpush1.xpose.msra.mxu0 0.0
        %2500 = vmatprep.subr.mxu0 0.0
        %2501 = vmatpush1.xpose.msra.mxu0 0.0
        %2502 = vmatprep.subr.mxu0 0.0
        %2503 = vmatpush1.xpose.msra.mxu0 0.0
        %2504 = vmatprep.subr.mxu0 0.0
        %2505 = vmatpush1.xpose.msra.mxu0 0.0
        %2506 = vmatprep.subr.mxu0 0.0
        %2507 = vmatpush1.xpose.msra.mxu0 0.0
        %2508 = vmatprep.subr.mxu0 0.0
        %2509 = vmatpush1.xpose.msra.mxu0 0.0
        %2510 = vmatprep.subr.mxu0 0.0
        %2511 = vmatpush1.xpose.msra.mxu0 0.0
        %2512 = vmatprep.subr.mxu0 0.0
        %2513 = vmatpush1.xpose.msra.mxu0 0.0
        %2514 = vmatprep.subr.mxu0 0.0
        %2515 = vmatpush1.xpose.msra.mxu0 0.0
        %2516 = vmatprep.subr.mxu0 0.0
        %2517 = vmatpush1.xpose.msra.mxu0 0.0
        %2518 = vmatprep.subr.mxu0 0.0
        %2519 = vmatpush1.xpose.msra.mxu0 0.0
        %2520 = vmatprep.mubr.f32.mxu0 0.0
        %v2521 = vand.u32 %v2148, 4294901760
        %2522 = vmatmul.mubr.f32.gmra.mrb[0].mxu0 %v2521
        %v2523 = vpop.f32.mrb[0].mxu0
        %v2524 = vadd.f32 %v2450, %v2523
        %v2525 = vpop.f32.mrb[0].mxu0
        %2526 = vdwg.mxu0
        %2527 = vmatprep.subr.mxu0 0.0
        %v2528 = vand.u32 %v2151, 4294901760
        %2529 = vmatpush1.xpose.msra.mxu0 %v2528
        %2530 = vmatprep.subr.mxu0 0.0
        %2531 = vmatpush1.xpose.msra.mxu0 0.0
        %2532 = vmatprep.subr.mxu0 0.0
        %2533 = vmatpush1.xpose.msra.mxu0 0.0
        %2534 = vmatprep.subr.mxu0 0.0
        %2535 = vmatpush1.xpose.msra.mxu0 0.0
        %2536 = vmatprep.subr.mxu0 0.0
        %2537 = vmatpush1.xpose.msra.mxu0 0.0
        %2538 = vmatprep.subr.mxu0 0.0
        %2539 = vmatpush1.xpose.msra.mxu0 0.0
        %2540 = vmatprep.subr.mxu0 0.0
        %2541 = vmatpush1.xpose.msra.mxu0 0.0
        %2542 = vmatprep.subr.mxu0 0.0
        %2543 = vmatpush1.xpose.msra.mxu0 0.0
        %2544 = vmatprep.subr.mxu0 0.0
        %2545 = vmatpush1.xpose.msra.mxu0 0.0
        %2546 = vmatprep.subr.mxu0 0.0
        %2547 = vmatpush1.xpose.msra.mxu0 0.0
        %2548 = vmatprep.subr.mxu0 0.0
        %2549 = vmatpush1.xpose.msra.mxu0 0.0
        %2550 = vmatprep.subr.mxu0 0.0
        %2551 = vmatpush1.xpose.msra.mxu0 0.0
        %2552 = vmatprep.subr.mxu0 0.0
        %2553 = vmatpush1.xpose.msra.mxu0 0.0
        %2554 = vmatprep.subr.mxu0 0.0
        %2555 = vmatpush1.xpose.msra.mxu0 0.0
        %2556 = vmatprep.subr.mxu0 0.0
        %2557 = vmatpush1.xpose.msra.mxu0 0.0
        %2558 = vmatprep.subr.mxu0 0.0
        %2559 = vmatpush1.xpose.msra.mxu0 0.0
        %2560 = vmatprep.subr.mxu0 0.0
        %2561 = vmatpush1.xpose.msra.mxu0 0.0
        %2562 = vmatprep.subr.mxu0 0.0
        %2563 = vmatpush1.xpose.msra.mxu0 0.0
        %2564 = vmatprep.subr.mxu0 0.0
        %2565 = vmatpush1.xpose.msra.mxu0 0.0
        %2566 = vmatprep.subr.mxu0 0.0
        %2567 = vmatpush1.xpose.msra.mxu0 0.0
        %2568 = vmatprep.subr.mxu0 0.0
        %2569 = vmatpush1.xpose.msra.mxu0 0.0
        %2570 = vmatprep.subr.mxu0 0.0
        %2571 = vmatpush1.xpose.msra.mxu0 0.0
        %2572 = vmatprep.subr.mxu0 0.0
        %2573 = vmatpush1.xpose.msra.mxu0 0.0
        %2574 = vmatprep.subr.mxu0 0.0
        %2575 = vmatpush1.xpose.msra.mxu0 0.0
        %2576 = vmatprep.subr.mxu0 0.0
        %2577 = vmatpush1.xpose.msra.mxu0 0.0
        %2578 = vmatprep.subr.mxu0 0.0
        %2579 = vmatpush1.xpose.msra.mxu0 0.0
        %2580 = vmatprep.subr.mxu0 0.0
        %2581 = vmatpush1.xpose.msra.mxu0 0.0
        %2582 = vmatprep.subr.mxu0 0.0
        %2583 = vmatpush1.xpose.msra.mxu0 0.0
        %2584 = vmatprep.subr.mxu0 0.0
        %2585 = vmatpush1.xpose.msra.mxu0 0.0
        %2586 = vmatprep.subr.mxu0 0.0
        %2587 = vmatpush1.xpose.msra.mxu0 0.0
        %2588 = vmatprep.subr.mxu0 0.0
        %2589 = vmatpush1.xpose.msra.mxu0 0.0
        %2590 = vmatprep.subr.mxu0 0.0
        %2591 = vmatpush1.xpose.msra.mxu0 0.0
        %2592 = vmatprep.mubr.f32.mxu0 0.0
        %v2593 = vand.u32 %v2148, 4294901760
        %2594 = vmatmul.mubr.f32.gmra.mrb[0].mxu0 %v2593
        %v2595 = vpop.f32.mrb[0].mxu0
        %v2596 = vadd.f32 %v2524, %v2595
        %v2597 = vpop.f32.mrb[0].mxu0
        %2598 = vdwg.mxu0
        %v2599 = vsel %vm2146, %v2596, -inf
        %2600 = vmax.xlane.f32.xlu0 %v2599
        %v2601 = vpop.xlane.xlu0 %2600
        %v2602 = vsub.f32 %v2596, %v2601
        %v2603 = vmul.f32 %v2602, 1.442695
        %v2604 = vpow.pop %v2603
        %v2605 = vsel %vm2146, %v2604, 0.0
        %2606 = vadd.xlane.f32.xlu0 %v2605
        %v2607 = vpop.xlane.xlu0 %2606
        %v2608 = vrcp.pop %v2607
        %v2609 = vmul.f32 %v2604, %v2608
        %v2610 = vsel %vm2134, 1, 0
        %v2611 = vlaneseq
        %v2612 = vshrl.u32 %v2611, 7
        %v2613 = vsub.s32 0, %v2612
        %v2614 = vrot.slane %v2610, %v2613
        %vm2615 = vcmp.eq.s32.totalorder %v2614, 1
        %v2616 = vsel %vm2615, 0.0, %v2609
        %v2618 = vsel %vm2146, %v2616, 0
        %2620 = vmatprep.subr.mxu0 0.0
        %v2621 = vand.u32 %v2128, 4294901760
        %2622 = vmatpush1.msra.mxu0 %v2621
        %2623 = vmatprep.subr.mxu0 0.0
        %2624 = vmatpush1.msra.mxu0 0.0
        %2625 = vmatprep.subr.mxu0 0.0
        %2626 = vmatpush1.msra.mxu0 0.0
        %2627 = vmatprep.subr.mxu0 0.0
        %2628 = vmatpush1.msra.mxu0 0.0
        %2629 = vmatprep.subr.mxu0 0.0
        %2630 = vmatpush1.msra.mxu0 0.0
        %2631 = vmatprep.subr.mxu0 0.0
        %2632 = vmatpush1.msra.mxu0 0.0
        %2633 = vmatprep.subr.mxu0 0.0
        %2634 = vmatpush1.msra.mxu0 0.0
        %2635 = vmatprep.subr.mxu0 0.0
        %2636 = vmatpush1.msra.mxu0 0.0
        %2637 = vmatprep.subr.mxu0 0.0
        %2638 = vmatpush1.msra.mxu0 0.0
        %2639 = vmatprep.subr.mxu0 0.0
        %2640 = vmatpush1.msra.mxu0 0.0
        %2641 = vmatprep.subr.mxu0 0.0
        %2642 = vmatpush1.msra.mxu0 0.0
        %2643 = vmatprep.subr.mxu0 0.0
        %2644 = vmatpush1.msra.mxu0 0.0
        %2645 = vmatprep.subr.mxu0 0.0
        %2646 = vmatpush1.msra.mxu0 0.0
        %2647 = vmatprep.subr.mxu0 0.0
        %2648 = vmatpush1.msra.mxu0 0.0
        %2649 = vmatprep.subr.mxu0 0.0
        %2650 = vmatpush1.msra.mxu0 0.0
        %2651 = vmatprep.subr.mxu0 0.0
        %2652 = vmatpush1.msra.mxu0 0.0
        %2653 = vmatprep.subr.mxu0 0.0
        %2654 = vmatpush1.msra.mxu0 0.0
        %2655 = vmatprep.subr.mxu0 0.0
        %2656 = vmatpush1.msra.mxu0 0.0
        %2657 = vmatprep.subr.mxu0 0.0
        %2658 = vmatpush1.msra.mxu0 0.0
        %2659 = vmatprep.subr.mxu0 0.0
        %2660 = vmatpush1.msra.mxu0 0.0
        %2661 = vmatprep.subr.mxu0 0.0
        %2662 = vmatpush1.msra.mxu0 0.0
        %2663 = vmatprep.subr.mxu0 0.0
        %2664 = vmatpush1.msra.mxu0 0.0
        %2665 = vmatprep.subr.mxu0 0.0
        %2666 = vmatpush1.msra.mxu0 0.0
        %2667 = vmatprep.subr.mxu0 0.0
        %2668 = vmatpush1.msra.mxu0 0.0
        %2669 = vmatprep.subr.mxu0 0.0
        %2670 = vmatpush1.msra.mxu0 0.0
        %2671 = vmatprep.subr.mxu0 0.0
        %2672 = vmatpush1.msra.mxu0 0.0
        %2673 = vmatprep.subr.mxu0 0.0
        %2674 = vmatpush1.msra.mxu0 0.0
        %2675 = vmatprep.subr.mxu0 0.0
        %2676 = vmatpush1.msra.mxu0 0.0
        %2677 = vmatprep.subr.mxu0 0.0
        %2678 = vmatpush1.msra.mxu0 0.0
        %2679 = vmatprep.subr.mxu0 0.0
        %2680 = vmatpush1.msra.mxu0 0.0
        %2681 = vmatprep.subr.mxu0 0.0
        %2682 = vmatpush1.msra.mxu0 0.0
        %2683 = vmatprep.subr.mxu0 0.0
        %2684 = vmatpush1.msra.mxu0 0.0
        %2685 = vmatprep.mubr.f32.mxu0 0.0
        %v2686 = vand.u32 %v2618, 4294901760
        %v2687 = vsub.f32 %v2618, %v2686
        %v2688 = vand.u32 %v2687, 4294901760
        %v2689 = vsub.f32 %v2687, %v2688
        %v2690 = vand.u32 %v2689, 4294901760
        %2691 = vmatmul.mubr.f32.gmra.mrb[0].mxu0 %v2690
        %v2692 = vpop.f32.mrb[0].mxu0
        %v2693 = vadd.f32 0.0, %v2692
        %v2694 = vpop.f32.mrb[0].mxu0
        %2695 = vdwg.mxu0
        %2696 = vmatprep.subr.mxu0 0.0
        %v2697 = vand.u32 %v2128, 4294901760
        %v2698 = vsub.f32 %v2128, %v2697
        %v2699 = vand.u32 %v2698, 4294901760
        %v2700 = vsub.f32 %v2698, %v2699
        %v2701 = vand.u32 %v2700, 4294901760
        %2702 = vmatpush1.msra.mxu0 %v2701
        %2703 = vmatprep.subr.mxu0 0.0
        %2704 = vmatpush1.msra.mxu0 0.0
        %2705 = vmatprep.subr.mxu0 0.0
        %2706 = vmatpush1.msra.mxu0 0.0
        %2707 = vmatprep.subr.mxu0 0.0
        %2708 = vmatpush1.msra.mxu0 0.0
        %2709 = vmatprep.subr.mxu0 0.0
        %2710 = vmatpush1.msra.mxu0 0.0
        %2711 = vmatprep.subr.mxu0 0.0
        %2712 = vmatpush1.msra.mxu0 0.0
        %2713 = vmatprep.subr.mxu0 0.0
        %2714 = vmatpush1.msra.mxu0 0.0
        %2715 = vmatprep.subr.mxu0 0.0
        %2716 = vmatpush1.msra.mxu0 0.0
        %2717 = vmatprep.subr.mxu0 0.0
        %2718 = vmatpush1.msra.mxu0 0.0
        %2719 = vmatprep.subr.mxu0 0.0
        %2720 = vmatpush1.msra.mxu0 0.0
        %2721 = vmatprep.subr.mxu0 0.0
        %2722 = vmatpush1.msra.mxu0 0.0
        %2723 = vmatprep.subr.mxu0 0.0
        %2724 = vmatpush1.msra.mxu0 0.0
        %2725 = vmatprep.subr.mxu0 0.0
        %2726 = vmatpush1.msra.mxu0 0.0
        %2727 = vmatprep.subr.mxu0 0.0
        %2728 = vmatpush1.msra.mxu0 0.0
        %2729 = vmatprep.subr.mxu0 0.0
        %2730 = vmatpush1.msra.mxu0 0.0
        %2731 = vmatprep.subr.mxu0 0.0
        %2732 = vmatpush1.msra.mxu0 0.0
        %2733 = vmatprep.subr.mxu0 0.0
        %2734 = vmatpush1.msra.mxu0 0.0
        %2735 = vmatprep.subr.mxu0 0.0
        %2736 = vmatpush1.msra.mxu0 0.0
        %2737 = vmatprep.subr.mxu0 0.0
        %2738 = vmatpush1.msra.mxu0 0.0
        %2739 = vmatprep.subr.mxu0 0.0
        %2740 = vmatpush1.msra.mxu0 0.0
        %2741 = vmatprep.subr.mxu0 0.0
        %2742 = vmatpush1.msra.mxu0 0.0
        %2743 = vmatprep.subr.mxu0 0.0
        %2744 = vmatpush1.msra.mxu0 0.0
        %2745 = vmatprep.subr.mxu0 0.0
        %2746 = vmatpush1.msra.mxu0 0.0
        %2747 = vmatprep.subr.mxu0 0.0
        %2748 = vmatpush1.msra.mxu0 0.0
        %2749 = vmatprep.subr.mxu0 0.0
        %2750 = vmatpush1.msra.mxu0 0.0
        %2751 = vmatprep.subr.mxu0 0.0
        %2752 = vmatpush1.msra.mxu0 0.0
        %2753 = vmatprep.subr.mxu0 0.0
        %2754 = vmatpush1.msra.mxu0 0.0
        %2755 = vmatprep.subr.mxu0 0.0
        %2756 = vmatpush1.msra.mxu0 0.0
        %2757 = vmatprep.subr.mxu0 0.0
        %2758 = vmatpush1.msra.mxu0 0.0
        %2759 = vmatprep.subr.mxu0 0.0
        %2760 = vmatpush1.msra.mxu0 0.0
        %2761 = vmatprep.subr.mxu0 0.0
        %2762 = vmatpush1.msra.mxu0 0.0
        %2763 = vmatprep.subr.mxu0 0.0
        %2764 = vmatpush1.msra.mxu0 0.0
        %2765 = vmatprep.mubr.f32.mxu0 0.0
        %v2766 = vand.u32 %v2618, 4294901760
        %2767 = vmatmul.mubr.f32.gmra.mrb[0].mxu0 %v2766
        %v2768 = vpop.f32.mrb[0].mxu0
        %v2769 = vadd.f32 %v2693, %v2768
        %v2770 = vpop.f32.mrb[0].mxu0
        %2771 = vdwg.mxu0
        %2772 = vmatprep.subr.mxu0 0.0
        %v2773 = vand.u32 %v2128, 4294901760
        %v2774 = vsub.f32 %v2128, %v2773
        %2775 = vmatpush1.msra.mxu0 %v2774
        %2776 = vmatprep.subr.mxu0 0.0
        %2777 = vmatpush1.msra.mxu0 0.0
        %2778 = vmatprep.subr.mxu0 0.0
        %2779 = vmatpush1.msra.mxu0 0.0
        %2780 = vmatprep.subr.mxu0 0.0
        %2781 = vmatpush1.msra.mxu0 0.0
        %2782 = vmatprep.subr.mxu0 0.0
        %2783 = vmatpush1.msra.mxu0 0.0
        %2784 = vmatprep.subr.mxu0 0.0
        %2785 = vmatpush1.msra.mxu0 0.0
        %2786 = vmatprep.subr.mxu0 0.0
        %2787 = vmatpush1.msra.mxu0 0.0
        %2788 = vmatprep.subr.mxu0 0.0
        %2789 = vmatpush1.msra.mxu0 0.0
        %2790 = vmatprep.subr.mxu0 0.0
        %2791 = vmatpush1.msra.mxu0 0.0
        %2792 = vmatprep.subr.mxu0 0.0
        %2793 = vmatpush1.msra.mxu0 0.0
        %2794 = vmatprep.subr.mxu0 0.0
        %2795 = vmatpush1.msra.mxu0 0.0
        %2796 = vmatprep.subr.mxu0 0.0
        %2797 = vmatpush1.msra.mxu0 0.0
        %2798 = vmatprep.subr.mxu0 0.0
        %2799 = vmatpush1.msra.mxu0 0.0
        %2800 = vmatprep.subr.mxu0 0.0
        %2801 = vmatpush1.msra.mxu0 0.0
        %2802 = vmatprep.subr.mxu0 0.0
        %2803 = vmatpush1.msra.mxu0 0.0
        %2804 = vmatprep.subr.mxu0 0.0
        %2805 = vmatpush1.msra.mxu0 0.0
        %2806 = vmatprep.subr.mxu0 0.0
        %2807 = vmatpush1.msra.mxu0 0.0
        %2808 = vmatprep.subr.mxu0 0.0
        %2809 = vmatpush1.msra.mxu0 0.0
        %2810 = vmatprep.subr.mxu0 0.0
        %2811 = vmatpush1.msra.mxu0 0.0
        %2812 = vmatprep.subr.mxu0 0.0
        %2813 = vmatpush1.msra.mxu0 0.0
        %2814 = vmatprep.subr.mxu0 0.0
        %2815 = vmatpush1.msra.mxu0 0.0
        %2816 = vmatprep.subr.mxu0 0.0
        %2817 = vmatpush1.msra.mxu0 0.0
        %2818 = vmatprep.subr.mxu0 0.0
        %2819 = vmatpush1.msra.mxu0 0.0
        %2820 = vmatprep.subr.mxu0 0.0
        %2821 = vmatpush1.msra.mxu0 0.0
        %2822 = vmatprep.subr.mxu0 0.0
        %2823 = vmatpush1.msra.mxu0 0.0
        %2824 = vmatprep.subr.mxu0 0.0
        %2825 = vmatpush1.msra.mxu0 0.0
        %2826 = vmatprep.subr.mxu0 0.0
        %2827 = vmatpush1.msra.mxu0 0.0
        %2828 = vmatprep.subr.mxu0 0.0
        %2829 = vmatpush1.msra.mxu0 0.0
        %2830 = vmatprep.subr.mxu0 0.0
        %2831 = vmatpush1.msra.mxu0 0.0
        %2832 = vmatprep.subr.mxu0 0.0
        %2833 = vmatpush1.msra.mxu0 0.0
        %2834 = vmatprep.subr.mxu0 0.0
        %2835 = vmatpush1.msra.mxu0 0.0
        %2836 = vmatprep.subr.mxu0 0.0
        %2837 = vmatpush1.msra.mxu0 0.0
        %2838 = vmatprep.mubr.f32.mxu0 0.0
        %v2839 = vand.u32 %v2618, 4294901760
        %v2840 = vsub.f32 %v2618, %v2839
        %2841 = vmatmul.mubr.f32.gmra.mrb[0].mxu0 %v2840
        %v2842 = vpop.f32.mrb[0].mxu0
        %v2843 = vadd.f32 %v2769, %v2842
        %v2844 = vpop.f32.mrb[0].mxu0
        %2845 = vdwg.mxu0
        %2846 = vmatprep.subr.mxu0 0.0
        %v2847 = vand.u32 %v2128, 4294901760
        %2848 = vmatpush1.msra.mxu0 %v2847
        %2849 = vmatprep.subr.mxu0 0.0
        %2850 = vmatpush1.msra.mxu0 0.0
        %2851 = vmatprep.subr.mxu0 0.0
        %2852 = vmatpush1.msra.mxu0 0.0
        %2853 = vmatprep.subr.mxu0 0.0
        %2854 = vmatpush1.msra.mxu0 0.0
        %2855 = vmatprep.subr.mxu0 0.0
        %2856 = vmatpush1.msra.mxu0 0.0
        %2857 = vmatprep.subr.mxu0 0.0
        %2858 = vmatpush1.msra.mxu0 0.0
        %2859 = vmatprep.subr.mxu0 0.0
        %2860 = vmatpush1.msra.mxu0 0.0
        %2861 = vmatprep.subr.mxu0 0.0
        %2862 = vmatpush1.msra.mxu0 0.0
        %2863 = vmatprep.subr.mxu0 0.0
        %2864 = vmatpush1.msra.mxu0 0.0
        %2865 = vmatprep.subr.mxu0 0.0
        %2866 = vmatpush1.msra.mxu0 0.0
        %2867 = vmatprep.subr.mxu0 0.0
        %2868 = vmatpush1.msra.mxu0 0.0
        %2869 = vmatprep.subr.mxu0 0.0
        %2870 = vmatpush1.msra.mxu0 0.0
        %2871 = vmatprep.subr.mxu0 0.0
        %2872 = vmatpush1.msra.mxu0 0.0
        %2873 = vmatprep.subr.mxu0 0.0
        %2874 = vmatpush1.msra.mxu0 0.0
        %2875 = vmatprep.subr.mxu0 0.0
        %2876 = vmatpush1.msra.mxu0 0.0
        %2877 = vmatprep.subr.mxu0 0.0
        %2878 = vmatpush1.msra.mxu0 0.0
        %2879 = vmatprep.subr.mxu0 0.0
        %2880 = vmatpush1.msra.mxu0 0.0
        %2881 = vmatprep.subr.mxu0 0.0
        %2882 = vmatpush1.msra.mxu0 0.0
        %2883 = vmatprep.subr.mxu0 0.0
        %2884 = vmatpush1.msra.mxu0 0.0
        %2885 = vmatprep.subr.mxu0 0.0
        %2886 = vmatpush1.msra.mxu0 0.0
        %2887 = vmatprep.subr.mxu0 0.0
        %2888 = vmatpush1.msra.mxu0 0.0
        %2889 = vmatprep.subr.mxu0 0.0
        %2890 = vmatpush1.msra.mxu0 0.0
        %2891 = vmatprep.subr.mxu0 0.0
        %2892 = vmatpush1.msra.mxu0 0.0
        %2893 = vmatprep.subr.mxu0 0.0
        %2894 = vmatpush1.msra.mxu0 0.0
        %2895 = vmatprep.subr.mxu0 0.0
        %2896 = vmatpush1.msra.mxu0 0.0
        %2897 = vmatprep.subr.mxu0 0.0
        %2898 = vmatpush1.msra.mxu0 0.0
        %2899 = vmatprep.subr.mxu0 0.0
        %2900 = vmatpush1.msra.mxu0 0.0
        %2901 = vmatprep.subr.mxu0 0.0
        %2902 = vmatpush1.msra.mxu0 0.0
        %2903 = vmatprep.subr.mxu0 0.0
        %2904 = vmatpush1.msra.mxu0 0.0
        %2905 = vmatprep.subr.mxu0 0.0
        %2906 = vmatpush1.msra.mxu0 0.0
        %2907 = vmatprep.subr.mxu0 0.0
        %2908 = vmatpush1.msra.mxu0 0.0
        %2909 = vmatprep.subr.mxu0 0.0
        %2910 = vmatpush1.msra.mxu0 0.0
        %2911 = vmatprep.mubr.f32.mxu0 0.0
        %v2912 = vand.u32 %v2618, 4294901760
        %v2913 = vsub.f32 %v2618, %v2912
        %v2914 = vand.u32 %v2913, 4294901760
        %2915 = vmatmul.mubr.f32.gmra.mrb[0].mxu0 %v2914
        %v2916 = vpop.f32.mrb[0].mxu0
        %v2917 = vadd.f32 %v2843, %v2916
        %v2918 = vpop.f32.mrb[0].mxu0
        %2919 = vdwg.mxu0
        %2920 = vmatprep.subr.mxu0 0.0
        %v2921 = vand.u32 %v2128, 4294901760
        %v2922 = vsub.f32 %v2128, %v2921
        %v2923 = vand.u32 %v2922, 4294901760
        %2924 = vmatpush1.msra.mxu0 %v2923
        %2925 = vmatprep.subr.mxu0 0.0
        %2926 = vmatpush1.msra.mxu0 0.0
        %2927 = vmatprep.subr.mxu0 0.0
        %2928 = vmatpush1.msra.mxu0 0.0
        %2929 = vmatprep.subr.mxu0 0.0
        %2930 = vmatpush1.msra.mxu0 0.0
        %2931 = vmatprep.subr.mxu0 0.0
        %2932 = vmatpush1.msra.mxu0 0.0
        %2933 = vmatprep.subr.mxu0 0.0
        %2934 = vmatpush1.msra.mxu0 0.0
        %2935 = vmatprep.subr.mxu0 0.0
        %2936 = vmatpush1.msra.mxu0 0.0
        %2937 = vmatprep.subr.mxu0 0.0
        %2938 = vmatpush1.msra.mxu0 0.0
        %2939 = vmatprep.subr.mxu0 0.0
        %2940 = vmatpush1.msra.mxu0 0.0
        %2941 = vmatprep.subr.mxu0 0.0
        %2942 = vmatpush1.msra.mxu0 0.0
        %2943 = vmatprep.subr.mxu0 0.0
        %2944 = vmatpush1.msra.mxu0 0.0
        %2945 = vmatprep.subr.mxu0 0.0
        %2946 = vmatpush1.msra.mxu0 0.0
        %2947 = vmatprep.subr.mxu0 0.0
        %2948 = vmatpush1.msra.mxu0 0.0
        %2949 = vmatprep.subr.mxu0 0.0
        %2950 = vmatpush1.msra.mxu0 0.0
        %2951 = vmatprep.subr.mxu0 0.0
        %2952 = vmatpush1.msra.mxu0 0.0
        %2953 = vmatprep.subr.mxu0 0.0
        %2954 = vmatpush1.msra.mxu0 0.0
        %2955 = vmatprep.subr.mxu0 0.0
        %2956 = vmatpush1.msra.mxu0 0.0
        %2957 = vmatprep.subr.mxu0 0.0
        %2958 = vmatpush1.msra.mxu0 0.0
        %2959 = vmatprep.subr.mxu0 0.0
        %2960 = vmatpush1.msra.mxu0 0.0
        %2961 = vmatprep.subr.mxu0 0.0
        %2962 = vmatpush1.msra.mxu0 0.0
        %2963 = vmatprep.subr.mxu0 0.0
        %2964 = vmatpush1.msra.mxu0 0.0
        %2965 = vmatprep.subr.mxu0 0.0
        %2966 = vmatpush1.msra.mxu0 0.0
        %2967 = vmatprep.subr.mxu0 0.0
        %2968 = vmatpush1.msra.mxu0 0.0
        %2969 = vmatprep.subr.mxu0 0.0
        %2970 = vmatpush1.msra.mxu0 0.0
        %2971 = vmatprep.subr.mxu0 0.0
        %2972 = vmatpush1.msra.mxu0 0.0
        %2973 = vmatprep.subr.mxu0 0.0
        %2974 = vmatpush1.msra.mxu0 0.0
        %2975 = vmatprep.subr.mxu0 0.0
        %2976 = vmatpush1.msra.mxu0 0.0
        %2977 = vmatprep.subr.mxu0 0.0
        %2978 = vmatpush1.msra.mxu0 0.0
        %2979 = vmatprep.subr.mxu0 0.0
        %2980 = vmatpush1.msra.mxu0 0.0
        %2981 = vmatprep.subr.mxu0 0.0
        %2982 = vmatpush1.msra.mxu0 0.0
        %2983 = vmatprep.subr.mxu0 0.0
        %2984 = vmatpush1.msra.mxu0 0.0
        %2985 = vmatprep.subr.mxu0 0.0
        %2986 = vmatpush1.msra.mxu0 0.0
        %2987 = vmatprep.mubr.f32.mxu0 0.0
        %v2988 = vand.u32 %v2618, 4294901760
        %2989 = vmatmul.mubr.f32.gmra.mrb[0].mxu0 %v2988
        %v2990 = vpop.f32.mrb[0].mxu0
        %v2991 = vadd.f32 %v2917, %v2990
        %v2992 = vpop.f32.mrb[0].mxu0
        %2993 = vdwg.mxu0
        %2994 = vmatprep.subr.mxu0 0.0
        %v2995 = vand.u32 %v2128, 4294901760
        %2996 = vmatpush1.msra.mxu0 %v2995
        %2997 = vmatprep.subr.mxu0 0.0
        %2998 = vmatpush1.msra.mxu0 0.0
        %2999 = vmatprep.subr.mxu0 0.0
        %3000 = vmatpush1.msra.mxu0 0.0
        %3001 = vmatprep.subr.mxu0 0.0
        %3002 = vmatpush1.msra.mxu0 0.0
        %3003 = vmatprep.subr.mxu0 0.0
        %3004 = vmatpush1.msra.mxu0 0.0
        %3005 = vmatprep.subr.mxu0 0.0
        %3006 = vmatpush1.msra.mxu0 0.0
        %3007 = vmatprep.subr.mxu0 0.0
        %3008 = vmatpush1.msra.mxu0 0.0
        %3009 = vmatprep.subr.mxu0 0.0
        %3010 = vmatpush1.msra.mxu0 0.0
        %3011 = vmatprep.subr.mxu0 0.0
        %3012 = vmatpush1.msra.mxu0 0.0
        %3013 = vmatprep.subr.mxu0 0.0
        %3014 = vmatpush1.msra.mxu0 0.0
        %3015 = vmatprep.subr.mxu0 0.0
        %3016 = vmatpush1.msra.mxu0 0.0
        %3017 = vmatprep.subr.mxu0 0.0
        %3018 = vmatpush1.msra.mxu0 0.0
        %3019 = vmatprep.subr.mxu0 0.0
        %3020 = vmatpush1.msra.mxu0 0.0
        %3021 = vmatprep.subr.mxu0 0.0
        %3022 = vmatpush1.msra.mxu0 0.0
        %3023 = vmatprep.subr.mxu0 0.0
        %3024 = vmatpush1.msra.mxu0 0.0
        %3025 = vmatprep.subr.mxu0 0.0
        %3026 = vmatpush1.msra.mxu0 0.0
        %3027 = vmatprep.subr.mxu0 0.0
        %3028 = vmatpush1.msra.mxu0 0.0
        %3029 = vmatprep.subr.mxu0 0.0
        %3030 = vmatpush1.msra.mxu0 0.0
        %3031 = vmatprep.subr.mxu0 0.0
        %3032 = vmatpush1.msra.mxu0 0.0
        %3033 = vmatprep.subr.mxu0 0.0
        %3034 = vmatpush1.msra.mxu0 0.0
        %3035 = vmatprep.subr.mxu0 0.0
        %3036 = vmatpush1.msra.mxu0 0.0
        %3037 = vmatprep.subr.mxu0 0.0
        %3038 = vmatpush1.msra.mxu0 0.0
        %3039 = vmatprep.subr.mxu0 0.0
        %3040 = vmatpush1.msra.mxu0 0.0
        %3041 = vmatprep.subr.mxu0 0.0
        %3042 = vmatpush1.msra.mxu0 0.0
        %3043 = vmatprep.subr.mxu0 0.0
        %3044 = vmatpush1.msra.mxu0 0.0
        %3045 = vmatprep.subr.mxu0 0.0
        %3046 = vmatpush1.msra.mxu0 0.0
        %3047 = vmatprep.subr.mxu0 0.0
        %3048 = vmatpush1.msra.mxu0 0.0
        %3049 = vmatprep.subr.mxu0 0.0
        %3050 = vmatpush1.msra.mxu0 0.0
        %3051 = vmatprep.subr.mxu0 0.0
        %3052 = vmatpush1.msra.mxu0 0.0
        %3053 = vmatprep.subr.mxu0 0.0
        %3054 = vmatpush1.msra.mxu0 0.0
        %3055 = vmatprep.subr.mxu0 0.0
        %3056 = vmatpush1.msra.mxu0 0.0
        %3057 = vmatprep.subr.mxu0 0.0
        %3058 = vmatpush1.msra.mxu0 0.0
        %3059 = vmatprep.mubr.f32.mxu0 0.0
        %v3060 = vand.u32 %v2618, 4294901760
        %3061 = vmatmul.mubr.f32.gmra.mrb[0].mxu0 %v3060
        %v3062 = vpop.f32.mrb[0].mxu0
        %v3063 = vadd.f32 %v2991, %v3062
        %v3064 = vpop.f32.mrb[0].mxu0
        %3065 = vdwg.mxu0
        %3066 = vrot.lane.b32.xlu0 %v1128, 120
        %v3067 = vpop.permute.xlu0 %3066
        %3068 = vrot.lane.b32.xlu0 %v1628, 120
        %v3069 = vpop.permute.xlu0 %3068
        %v3070 = vsel %vm2146, %v3067, 0
        %v3072 = vsel %vm2146, %v3069, 0
        %3074 = vmatprep.subr.mxu0 0.0
        %v3075 = vand.u32 %v3072, 4294901760
        %3076 = vmatpush1.xpose.msra.mxu0 %v3075
        %3077 = vmatprep.subr.mxu0 0.0
        %3078 = vmatpush1.xpose.msra.mxu0 0.0
        %3079 = vmatprep.subr.mxu0 0.0
        %3080 = vmatpush1.xpose.msra.mxu0 0.0
        %3081 = vmatprep.subr.mxu0 0.0
        %3082 = vmatpush1.xpose.msra.mxu0 0.0
        %3083 = vmatprep.subr.mxu0 0.0
        %3084 = vmatpush1.xpose.msra.mxu0 0.0
        %3085 = vmatprep.subr.mxu0 0.0
        %3086 = vmatpush1.xpose.msra.mxu0 0.0
        %3087 = vmatprep.subr.mxu0 0.0
        %3088 = vmatpush1.xpose.msra.mxu0 0.0
        %3089 = vmatprep.subr.mxu0 0.0
        %3090 = vmatpush1.xpose.msra.mxu0 0.0
        %3091 = vmatprep.subr.mxu0 0.0
        %3092 = vmatpush1.xpose.msra.mxu0 0.0
        %3093 = vmatprep.subr.mxu0 0.0
        %3094 = vmatpush1.xpose.msra.mxu0 0.0
        %3095 = vmatprep.subr.mxu0 0.0
        %3096 = vmatpush1.xpose.msra.mxu0 0.0
        %3097 = vmatprep.subr.mxu0 0.0
        %3098 = vmatpush1.xpose.msra.mxu0 0.0
        %3099 = vmatprep.subr.mxu0 0.0
        %3100 = vmatpush1.xpose.msra.mxu0 0.0
        %3101 = vmatprep.subr.mxu0 0.0
        %3102 = vmatpush1.xpose.msra.mxu0 0.0
        %3103 = vmatprep.subr.mxu0 0.0
        %3104 = vmatpush1.xpose.msra.mxu0 0.0
        %3105 = vmatprep.subr.mxu0 0.0
        %3106 = vmatpush1.xpose.msra.mxu0 0.0
        %3107 = vmatprep.subr.mxu0 0.0
        %3108 = vmatpush1.xpose.msra.mxu0 0.0
        %3109 = vmatprep.subr.mxu0 0.0
        %3110 = vmatpush1.xpose.msra.mxu0 0.0
        %3111 = vmatprep.subr.mxu0 0.0
        %3112 = vmatpush1.xpose.msra.mxu0 0.0
        %3113 = vmatprep.subr.mxu0 0.0
        %3114 = vmatpush1.xpose.msra.mxu0 0.0
        %3115 = vmatprep.subr.mxu0 0.0
        %3116 = vmatpush1.xpose.msra.mxu0 0.0
        %3117 = vmatprep.subr.mxu0 0.0
        %3118 = vmatpush1.xpose.msra.mxu0 0.0
        %3119 = vmatprep.subr.mxu0 0.0
        %3120 = vmatpush1.xpose.msra.mxu0 0.0
        %3121 = vmatprep.subr.mxu0 0.0
        %3122 = vmatpush1.xpose.msra.mxu0 0.0
        %3123 = vmatprep.subr.mxu0 0.0
        %3124 = vmatpush1.xpose.msra.mxu0 0.0
        %3125 = vmatprep.subr.mxu0 0.0
        %3126 = vmatpush1.xpose.msra.mxu0 0.0
        %3127 = vmatprep.subr.mxu0 0.0
        %3128 = vmatpush1.xpose.msra.mxu0 0.0
        %3129 = vmatprep.subr.mxu0 0.0
        %3130 = vmatpush1.xpose.msra.mxu0 0.0
        %3131 = vmatprep.subr.mxu0 0.0
        %3132 = vmatpush1.xpose.msra.mxu0 0.0
        %3133 = vmatprep.subr.mxu0 0.0
        %3134 = vmatpush1.xpose.msra.mxu0 0.0
        %3135 = vmatprep.subr.mxu0 0.0
        %3136 = vmatpush1.xpose.msra.mxu0 0.0
        %3137 = vmatprep.subr.mxu0 0.0
        %3138 = vmatpush1.xpose.msra.mxu0 0.0
        %3139 = vmatprep.mubr.f32.mxu0 0.0
        %v3140 = vand.u32 %v3070, 4294901760
        %v3141 = vsub.f32 %v3070, %v3140
        %v3142 = vand.u32 %v3141, 4294901760
        %v3143 = vsub.f32 %v3141, %v3142
        %v3144 = vand.u32 %v3143, 4294901760
        %3145 = vmatmul.mubr.f32.gmra.mrb[0].mxu0 %v3144
        %v3146 = vpop.f32.mrb[0].mxu0
        %v3147 = vadd.f32 %v2144, %v3146
        %v3148 = vpop.f32.mrb[0].mxu0
        %3149 = vdwg.mxu0
        %3150 = vmatprep.subr.mxu0 0.0
        %v3151 = vand.u32 %v3072, 4294901760
        %v3152 = vsub.f32 %v3072, %v3151
        %v3153 = vand.u32 %v3152, 4294901760
        %v3154 = vsub.f32 %v3152, %v3153
        %v3155 = vand.u32 %v3154, 4294901760
        %3156 = vmatpush1.xpose.msra.mxu0 %v3155
        %3157 = vmatprep.subr.mxu0 0.0
        %3158 = vmatpush1.xpose.msra.mxu0 0.0
        %3159 = vmatprep.subr.mxu0 0.0
        %3160 = vmatpush1.xpose.msra.mxu0 0.0
        %3161 = vmatprep.subr.mxu0 0.0
        %3162 = vmatpush1.xpose.msra.mxu0 0.0
        %3163 = vmatprep.subr.mxu0 0.0
        %3164 = vmatpush1.xpose.msra.mxu0 0.0
        %3165 = vmatprep.subr.mxu0 0.0
        %3166 = vmatpush1.xpose.msra.mxu0 0.0
        %3167 = vmatprep.subr.mxu0 0.0
        %3168 = vmatpush1.xpose.msra.mxu0 0.0
        %3169 = vmatprep.subr.mxu0 0.0
        %3170 = vmatpush1.xpose.msra.mxu0 0.0
        %3171 = vmatprep.subr.mxu0 0.0
        %3172 = vmatpush1.xpose.msra.mxu0 0.0
        %3173 = vmatprep.subr.mxu0 0.0
        %3174 = vmatpush1.xpose.msra.mxu0 0.0
        %3175 = vmatprep.subr.mxu0 0.0
        %3176 = vmatpush1.xpose.msra.mxu0 0.0
        %3177 = vmatprep.subr.mxu0 0.0
        %3178 = vmatpush1.xpose.msra.mxu0 0.0
        %3179 = vmatprep.subr.mxu0 0.0
        %3180 = vmatpush1.xpose.msra.mxu0 0.0
        %3181 = vmatprep.subr.mxu0 0.0
        %3182 = vmatpush1.xpose.msra.mxu0 0.0
        %3183 = vmatprep.subr.mxu0 0.0
        %3184 = vmatpush1.xpose.msra.mxu0 0.0
        %3185 = vmatprep.subr.mxu0 0.0
        %3186 = vmatpush1.xpose.msra.mxu0 0.0
        %3187 = vmatprep.subr.mxu0 0.0
        %3188 = vmatpush1.xpose.msra.mxu0 0.0
        %3189 = vmatprep.subr.mxu0 0.0
        %3190 = vmatpush1.xpose.msra.mxu0 0.0
        %3191 = vmatprep.subr.mxu0 0.0
        %3192 = vmatpush1.xpose.msra.mxu0 0.0
        %3193 = vmatprep.subr.mxu0 0.0
        %3194 = vmatpush1.xpose.msra.mxu0 0.0
        %3195 = vmatprep.subr.mxu0 0.0
        %3196 = vmatpush1.xpose.msra.mxu0 0.0
        %3197 = vmatprep.subr.mxu0 0.0
        %3198 = vmatpush1.xpose.msra.mxu0 0.0
        %3199 = vmatprep.subr.mxu0 0.0
        %3200 = vmatpush1.xpose.msra.mxu0 0.0
        %3201 = vmatprep.subr.mxu0 0.0
        %3202 = vmatpush1.xpose.msra.mxu0 0.0
        %3203 = vmatprep.subr.mxu0 0.0
        %3204 = vmatpush1.xpose.msra.mxu0 0.0
        %3205 = vmatprep.subr.mxu0 0.0
        %3206 = vmatpush1.xpose.msra.mxu0 0.0
        %3207 = vmatprep.subr.mxu0 0.0
        %3208 = vmatpush1.xpose.msra.mxu0 0.0
        %3209 = vmatprep.subr.mxu0 0.0
        %3210 = vmatpush1.xpose.msra.mxu0 0.0
        %3211 = vmatprep.subr.mxu0 0.0
        %3212 = vmatpush1.xpose.msra.mxu0 0.0
        %3213 = vmatprep.subr.mxu0 0.0
        %3214 = vmatpush1.xpose.msra.mxu0 0.0
        %3215 = vmatprep.subr.mxu0 0.0
        %3216 = vmatpush1.xpose.msra.mxu0 0.0
        %3217 = vmatprep.subr.mxu0 0.0
        %3218 = vmatpush1.xpose.msra.mxu0 0.0
        %3219 = vmatprep.mubr.f32.mxu0 0.0
        %v3220 = vand.u32 %v3070, 4294901760
        %3221 = vmatmul.mubr.f32.gmra.mrb[0].mxu0 %v3220
        %v3222 = vpop.f32.mrb[0].mxu0
        %v3223 = vadd.f32 %v3147, %v3222
        %v3224 = vpop.f32.mrb[0].mxu0
        %3225 = vdwg.mxu0
        %3226 = vmatprep.subr.mxu0 0.0
        %v3227 = vand.u32 %v3072, 4294901760
        %v3228 = vsub.f32 %v3072, %v3227
        %3229 = vmatpush1.xpose.msra.mxu0 %v3228
        %3230 = vmatprep.subr.mxu0 0.0
        %3231 = vmatpush1.xpose.msra.mxu0 0.0
        %3232 = vmatprep.subr.mxu0 0.0
        %3233 = vmatpush1.xpose.msra.mxu0 0.0
        %3234 = vmatprep.subr.mxu0 0.0
        %3235 = vmatpush1.xpose.msra.mxu0 0.0
        %3236 = vmatprep.subr.mxu0 0.0
        %3237 = vmatpush1.xpose.msra.mxu0 0.0
        %3238 = vmatprep.subr.mxu0 0.0
        %3239 = vmatpush1.xpose.msra.mxu0 0.0
        %3240 = vmatprep.subr.mxu0 0.0
        %3241 = vmatpush1.xpose.msra.mxu0 0.0
        %3242 = vmatprep.subr.mxu0 0.0
        %3243 = vmatpush1.xpose.msra.mxu0 0.0
        %3244 = vmatprep.subr.mxu0 0.0
        %3245 = vmatpush1.xpose.msra.mxu0 0.0
        %3246 = vmatprep.subr.mxu0 0.0
        %3247 = vmatpush1.xpose.msra.mxu0 0.0
        %3248 = vmatprep.subr.mxu0 0.0
        %3249 = vmatpush1.xpose.msra.mxu0 0.0
        %3250 = vmatprep.subr.mxu0 0.0
        %3251 = vmatpush1.xpose.msra.mxu0 0.0
        %3252 = vmatprep.subr.mxu0 0.0
        %3253 = vmatpush1.xpose.msra.mxu0 0.0
        %3254 = vmatprep.subr.mxu0 0.0
        %3255 = vmatpush1.xpose.msra.mxu0 0.0
        %3256 = vmatprep.subr.mxu0 0.0
        %3257 = vmatpush1.xpose.msra.mxu0 0.0
        %3258 = vmatprep.subr.mxu0 0.0
        %3259 = vmatpush1.xpose.msra.mxu0 0.0
        %3260 = vmatprep.subr.mxu0 0.0
        %3261 = vmatpush1.xpose.msra.mxu0 0.0
        %3262 = vmatprep.subr.mxu0 0.0
        %3263 = vmatpush1.xpose.msra.mxu0 0.0
        %3264 = vmatprep.subr.mxu0 0.0
        %3265 = vmatpush1.xpose.msra.mxu0 0.0
        %3266 = vmatprep.subr.mxu0 0.0
        %3267 = vmatpush1.xpose.msra.mxu0 0.0
        %3268 = vmatprep.subr.mxu0 0.0
        %3269 = vmatpush1.xpose.msra.mxu0 0.0
        %3270 = vmatprep.subr.mxu0 0.0
        %3271 = vmatpush1.xpose.msra.mxu0 0.0
        %3272 = vmatprep.subr.mxu0 0.0
        %3273 = vmatpush1.xpose.msra.mxu0 0.0
        %3274 = vmatprep.subr.mxu0 0.0
        %3275 = vmatpush1.xpose.msra.mxu0 0.0
        %3276 = vmatprep.subr.mxu0 0.0
        %3277 = vmatpush1.xpose.msra.mxu0 0.0
        %3278 = vmatprep.subr.mxu0 0.0
        %3279 = vmatpush1.xpose.msra.mxu0 0.0
        %3280 = vmatprep.subr.mxu0 0.0
        %3281 = vmatpush1.xpose.msra.mxu0 0.0
        %3282 = vmatprep.subr.mxu0 0.0
        %3283 = vmatpush1.xpose.msra.mxu0 0.0
        %3284 = vmatprep.subr.mxu0 0.0
        %3285 = vmatpush1.xpose.msra.mxu0 0.0
        %3286 = vmatprep.subr.mxu0 0.0
        %3287 = vmatpush1.xpose.msra.mxu0 0.0
        %3288 = vmatprep.subr.mxu0 0.0
        %3289 = vmatpush1.xpose.msra.mxu0 0.0
        %3290 = vmatprep.subr.mxu0 0.0
        %3291 = vmatpush1.xpose.msra.mxu0 0.0
        %3292 = vmatprep.mubr.f32.mxu0 0.0
        %v3293 = vand.u32 %v3070, 4294901760
        %v3294 = vsub.f32 %v3070, %v3293
        %3295 = vmatmul.mubr.f32.gmra.mrb[0].mxu0 %v3294
        %v3296 = vpop.f32.mrb[0].mxu0
        %v3297 = vadd.f32 %v3223, %v3296
        %v3298 = vpop.f32.mrb[0].mxu0
        %3299 = vdwg.mxu0
        %3300 = vmatprep.subr.mxu0 0.0
        %v3301 = vand.u32 %v3072, 4294901760
        %3302 = vmatpush1.xpose.msra.mxu0 %v3301
        %3303 = vmatprep.subr.mxu0 0.0
        %3304 = vmatpush1.xpose.msra.mxu0 0.0
        %3305 = vmatprep.subr.mxu0 0.0
        %3306 = vmatpush1.xpose.msra.mxu0 0.0
        %3307 = vmatprep.subr.mxu0 0.0
        %3308 = vmatpush1.xpose.msra.mxu0 0.0
        %3309 = vmatprep.subr.mxu0 0.0
        %3310 = vmatpush1.xpose.msra.mxu0 0.0
        %3311 = vmatprep.subr.mxu0 0.0
        %3312 = vmatpush1.xpose.msra.mxu0 0.0
        %3313 = vmatprep.subr.mxu0 0.0
        %3314 = vmatpush1.xpose.msra.mxu0 0.0
        %3315 = vmatprep.subr.mxu0 0.0
        %3316 = vmatpush1.xpose.msra.mxu0 0.0
        %3317 = vmatprep.subr.mxu0 0.0
        %3318 = vmatpush1.xpose.msra.mxu0 0.0
        %3319 = vmatprep.subr.mxu0 0.0
        %3320 = vmatpush1.xpose.msra.mxu0 0.0
        %3321 = vmatprep.subr.mxu0 0.0
        %3322 = vmatpush1.xpose.msra.mxu0 0.0
        %3323 = vmatprep.subr.mxu0 0.0
        %3324 = vmatpush1.xpose.msra.mxu0 0.0
        %3325 = vmatprep.subr.mxu0 0.0
        %3326 = vmatpush1.xpose.msra.mxu0 0.0
        %3327 = vmatprep.subr.mxu0 0.0
        %3328 = vmatpush1.xpose.msra.mxu0 0.0
        %3329 = vmatprep.subr.mxu0 0.0
        %3330 = vmatpush1.xpose.msra.mxu0 0.0
        %3331 = vmatprep.subr.mxu0 0.0
        %3332 = vmatpush1.xpose.msra.mxu0 0.0
        %3333 = vmatprep.subr.mxu0 0.0
        %3334 = vmatpush1.xpose.msra.mxu0 0.0
        %3335 = vmatprep.subr.mxu0 0.0
        %3336 = vmatpush1.xpose.msra.mxu0 0.0
        %3337 = vmatprep.subr.mxu0 0.0
        %3338 = vmatpush1.xpose.msra.mxu0 0.0
        %3339 = vmatprep.subr.mxu0 0.0
        %3340 = vmatpush1.xpose.msra.mxu0 0.0
        %3341 = vmatprep.subr.mxu0 0.0
        %3342 = vmatpush1.xpose.msra.mxu0 0.0
        %3343 = vmatprep.subr.mxu0 0.0
        %3344 = vmatpush1.xpose.msra.mxu0 0.0
        %3345 = vmatprep.subr.mxu0 0.0
        %3346 = vmatpush1.xpose.msra.mxu0 0.0
        %3347 = vmatprep.subr.mxu0 0.0
        %3348 = vmatpush1.xpose.msra.mxu0 0.0
        %3349 = vmatprep.subr.mxu0 0.0
        %3350 = vmatpush1.xpose.msra.mxu0 0.0
        %3351 = vmatprep.subr.mxu0 0.0
        %3352 = vmatpush1.xpose.msra.mxu0 0.0
        %3353 = vmatprep.subr.mxu0 0.0
        %3354 = vmatpush1.xpose.msra.mxu0 0.0
        %3355 = vmatprep.subr.mxu0 0.0
        %3356 = vmatpush1.xpose.msra.mxu0 0.0
        %3357 = vmatprep.subr.mxu0 0.0
        %3358 = vmatpush1.xpose.msra.mxu0 0.0
        %3359 = vmatprep.subr.mxu0 0.0
        %3360 = vmatpush1.xpose.msra.mxu0 0.0
        %3361 = vmatprep.subr.mxu0 0.0
        %3362 = vmatpush1.xpose.msra.mxu0 0.0
        %3363 = vmatprep.subr.mxu0 0.0
        %3364 = vmatpush1.xpose.msra.mxu0 0.0
        %3365 = vmatprep.mubr.f32.mxu0 0.0
        %v3366 = vand.u32 %v3070, 4294901760
        %v3367 = vsub.f32 %v3070, %v3366
        %v3368 = vand.u32 %v3367, 4294901760
        %3369 = vmatmul.mubr.f32.gmra.mrb[0].mxu0 %v3368
        %v3370 = vpop.f32.mrb[0].mxu0
        %v3371 = vadd.f32 %v3297, %v3370
        %v3372 = vpop.f32.mrb[0].mxu0
        %3373 = vdwg.mxu0
        %3374 = vmatprep.subr.mxu0 0.0
        %v3375 = vand.u32 %v3072, 4294901760
        %v3376 = vsub.f32 %v3072, %v3375
        %v3377 = vand.u32 %v3376, 4294901760
        %3378 = vmatpush1.xpose.msra.mxu0 %v3377
        %3379 = vmatprep.subr.mxu0 0.0
        %3380 = vmatpush1.xpose.msra.mxu0 0.0
        %3381 = vmatprep.subr.mxu0 0.0
        %3382 = vmatpush1.xpose.msra.mxu0 0.0
        %3383 = vmatprep.subr.mxu0 0.0
        %3384 = vmatpush1.xpose.msra.mxu0 0.0
        %3385 = vmatprep.subr.mxu0 0.0
        %3386 = vmatpush1.xpose.msra.mxu0 0.0
        %3387 = vmatprep.subr.mxu0 0.0
        %3388 = vmatpush1.xpose.msra.mxu0 0.0
        %3389 = vmatprep.subr.mxu0 0.0
        %3390 = vmatpush1.xpose.msra.mxu0 0.0
        %3391 = vmatprep.subr.mxu0 0.0
        %3392 = vmatpush1.xpose.msra.mxu0 0.0
        %3393 = vmatprep.subr.mxu0 0.0
        %3394 = vmatpush1.xpose.msra.mxu0 0.0
        %3395 = vmatprep.subr.mxu0 0.0
        %3396 = vmatpush1.xpose.msra.mxu0 0.0
        %3397 = vmatprep.subr.mxu0 0.0
        %3398 = vmatpush1.xpose.msra.mxu0 0.0
        %3399 = vmatprep.subr.mxu0 0.0
        %3400 = vmatpush1.xpose.msra.mxu0 0.0
        %3401 = vmatprep.subr.mxu0 0.0
        %3402 = vmatpush1.xpose.msra.mxu0 0.0
        %3403 = vmatprep.subr.mxu0 0.0
        %3404 = vmatpush1.xpose.msra.mxu0 0.0
        %3405 = vmatprep.subr.mxu0 0.0
        %3406 = vmatpush1.xpose.msra.mxu0 0.0
        %3407 = vmatprep.subr.mxu0 0.0
        %3408 = vmatpush1.xpose.msra.mxu0 0.0
        %3409 = vmatprep.subr.mxu0 0.0
        %3410 = vmatpush1.xpose.msra.mxu0 0.0
        %3411 = vmatprep.subr.mxu0 0.0
        %3412 = vmatpush1.xpose.msra.mxu0 0.0
        %3413 = vmatprep.subr.mxu0 0.0
        %3414 = vmatpush1.xpose.msra.mxu0 0.0
        %3415 = vmatprep.subr.mxu0 0.0
        %3416 = vmatpush1.xpose.msra.mxu0 0.0
        %3417 = vmatprep.subr.mxu0 0.0
        %3418 = vmatpush1.xpose.msra.mxu0 0.0
        %3419 = vmatprep.subr.mxu0 0.0
        %3420 = vmatpush1.xpose.msra.mxu0 0.0
        %3421 = vmatprep.subr.mxu0 0.0
        %3422 = vmatpush1.xpose.msra.mxu0 0.0
        %3423 = vmatprep.subr.mxu0 0.0
        %3424 = vmatpush1.xpose.msra.mxu0 0.0
        %3425 = vmatprep.subr.mxu0 0.0
        %3426 = vmatpush1.xpose.msra.mxu0 0.0
        %3427 = vmatprep.subr.mxu0 0.0
        %3428 = vmatpush1.xpose.msra.mxu0 0.0
        %3429 = vmatprep.subr.mxu0 0.0
        %3430 = vmatpush1.xpose.msra.mxu0 0.0
        %3431 = vmatprep.subr.mxu0 0.0
        %3432 = vmatpush1.xpose.msra.mxu0 0.0
        %3433 = vmatprep.subr.mxu0 0.0
        %3434 = vmatpush1.xpose.msra.mxu0 0.0
        %3435 = vmatprep.subr.mxu0 0.0
        %3436 = vmatpush1.xpose.msra.mxu0 0.0
        %3437 = vmatprep.subr.mxu0 0.0
        %3438 = vmatpush1.xpose.msra.mxu0 0.0
        %3439 = vmatprep.subr.mxu0 0.0
        %3440 = vmatpush1.xpose.msra.mxu0 0.0
        %3441 = vmatprep.mubr.f32.mxu0 0.0
        %v3442 = vand.u32 %v3070, 4294901760
        %3443 = vmatmul.mubr.f32.gmra.mrb[0].mxu0 %v3442
        %v3444 = vpop.f32.mrb[0].mxu0
        %v3445 = vadd.f32 %v3371, %v3444
        %v3446 = vpop.f32.mrb[0].mxu0
        %3447 = vdwg.mxu0
        %3448 = vmatprep.subr.mxu0 0.0
        %v3449 = vand.u32 %v3072, 4294901760
        %3450 = vmatpush1.xpose.msra.mxu0 %v3449
        %3451 = vmatprep.subr.mxu0 0.0
        %3452 = vmatpush1.xpose.msra.mxu0 0.0
        %3453 = vmatprep.subr.mxu0 0.0
        %3454 = vmatpush1.xpose.msra.mxu0 0.0
        %3455 = vmatprep.subr.mxu0 0.0
        %3456 = vmatpush1.xpose.msra.mxu0 0.0
        %3457 = vmatprep.subr.mxu0 0.0
        %3458 = vmatpush1.xpose.msra.mxu0 0.0
        %3459 = vmatprep.subr.mxu0 0.0
        %3460 = vmatpush1.xpose.msra.mxu0 0.0
        %3461 = vmatprep.subr.mxu0 0.0
        %3462 = vmatpush1.xpose.msra.mxu0 0.0
        %3463 = vmatprep.subr.mxu0 0.0
        %3464 = vmatpush1.xpose.msra.mxu0 0.0
        %3465 = vmatprep.subr.mxu0 0.0
        %3466 = vmatpush1.xpose.msra.mxu0 0.0
        %3467 = vmatprep.subr.mxu0 0.0
        %3468 = vmatpush1.xpose.msra.mxu0 0.0
        %3469 = vmatprep.subr.mxu0 0.0
        %3470 = vmatpush1.xpose.msra.mxu0 0.0
        %3471 = vmatprep.subr.mxu0 0.0
        %3472 = vmatpush1.xpose.msra.mxu0 0.0
        %3473 = vmatprep.subr.mxu0 0.0
        %3474 = vmatpush1.xpose.msra.mxu0 0.0
        %3475 = vmatprep.subr.mxu0 0.0
        %3476 = vmatpush1.xpose.msra.mxu0 0.0
        %3477 = vmatprep.subr.mxu0 0.0
        %3478 = vmatpush1.xpose.msra.mxu0 0.0
        %3479 = vmatprep.subr.mxu0 0.0
        %3480 = vmatpush1.xpose.msra.mxu0 0.0
        %3481 = vmatprep.subr.mxu0 0.0
        %3482 = vmatpush1.xpose.msra.mxu0 0.0
        %3483 = vmatprep.subr.mxu0 0.0
        %3484 = vmatpush1.xpose.msra.mxu0 0.0
        %3485 = vmatprep.subr.mxu0 0.0
        %3486 = vmatpush1.xpose.msra.mxu0 0.0
        %3487 = vmatprep.subr.mxu0 0.0
        %3488 = vmatpush1.xpose.msra.mxu0 0.0
        %3489 = vmatprep.subr.mxu0 0.0
        %3490 = vmatpush1.xpose.msra.mxu0 0.0
        %3491 = vmatprep.subr.mxu0 0.0
        %3492 = vmatpush1.xpose.msra.mxu0 0.0
        %3493 = vmatprep.subr.mxu0 0.0
        %3494 = vmatpush1.xpose.msra.mxu0 0.0
        %3495 = vmatprep.subr.mxu0 0.0
        %3496 = vmatpush1.xpose.msra.mxu0 0.0
        %3497 = vmatprep.subr.mxu0 0.0
        %3498 = vmatpush1.xpose.msra.mxu0 0.0
        %3499 = vmatprep.subr.mxu0 0.0
        %3500 = vmatpush1.xpose.msra.mxu0 0.0
        %3501 = vmatprep.subr.mxu0 0.0
        %3502 = vmatpush1.xpose.msra.mxu0 0.0
        %3503 = vmatprep.subr.mxu0 0.0
        %3504 = vmatpush1.xpose.msra.mxu0 0.0
        %3505 = vmatprep.subr.mxu0 0.0
        %3506 = vmatpush1.xpose.msra.mxu0 0.0
        %3507 = vmatprep.subr.mxu0 0.0
        %3508 = vmatpush1.xpose.msra.mxu0 0.0
        %3509 = vmatprep.subr.mxu0 0.0
        %3510 = vmatpush1.xpose.msra.mxu0 0.0
        %3511 = vmatprep.subr.mxu0 0.0
        %3512 = vmatpush1.xpose.msra.mxu0 0.0
        %3513 = vmatprep.mubr.f32.mxu0 0.0
        %v3514 = vand.u32 %v3070, 4294901760
        %3515 = vmatmul.mubr.f32.gmra.mrb[0].mxu0 %v3514
        %v3516 = vpop.f32.mrb[0].mxu0
        %v3517 = vadd.f32 %v3445, %v3516
        %v3518 = vpop.f32.mrb[0].mxu0
        %3519 = vdwg.mxu0
        %v3520 = vsel %vm2146, %v3517, -inf
        %3521 = vmax.xlane.f32.xlu0 %v3520
        %v3522 = vpop.xlane.xlu0 %3521
        %v3523 = vsub.f32 %v3517, %v3522
        %v3524 = vmul.f32 %v3523, 1.442695
        %v3525 = vpow.pop %v3524
        %v3526 = vsel %vm2146, %v3525, 0.0
        %3527 = vadd.xlane.f32.xlu0 %v3526
        %v3528 = vpop.xlane.xlu0 %3527
        %v3529 = vrcp.pop %v3528
        %v3530 = vmul.f32 %v3525, %v3529
        %v3531 = vsel %vm2615, 0.0, %v3530
        %3533 = vrot.lane.b32.xlu0 %v2128, 120
        %v3534 = vpop.permute.xlu0 %3533
        %v3537 = vsel %vm2146, %v3531, 0
        %3539 = vmatprep.subr.mxu0 0.0
        %v3540 = vand.u32 %v3534, 4294901760
        %3541 = vmatpush1.msra.mxu0 %v3540
        %3542 = vmatprep.subr.mxu0 0.0
        %3543 = vmatpush1.msra.mxu0 0.0
        %3544 = vmatprep.subr.mxu0 0.0
        %3545 = vmatpush1.msra.mxu0 0.0
        %3546 = vmatprep.subr.mxu0 0.0
        %3547 = vmatpush1.msra.mxu0 0.0
        %3548 = vmatprep.subr.mxu0 0.0
        %3549 = vmatpush1.msra.mxu0 0.0
        %3550 = vmatprep.subr.mxu0 0.0
        %3551 = vmatpush1.msra.mxu0 0.0
        %3552 = vmatprep.subr.mxu0 0.0
        %3553 = vmatpush1.msra.mxu0 0.0
        %3554 = vmatprep.subr.mxu0 0.0
        %3555 = vmatpush1.msra.mxu0 0.0
        %3556 = vmatprep.subr.mxu0 0.0
        %3557 = vmatpush1.msra.mxu0 0.0
        %3558 = vmatprep.subr.mxu0 0.0
        %3559 = vmatpush1.msra.mxu0 0.0
        %3560 = vmatprep.subr.mxu0 0.0
        %3561 = vmatpush1.msra.mxu0 0.0
        %3562 = vmatprep.subr.mxu0 0.0
        %3563 = vmatpush1.msra.mxu0 0.0
        %3564 = vmatprep.subr.mxu0 0.0
        %3565 = vmatpush1.msra.mxu0 0.0
        %3566 = vmatprep.subr.mxu0 0.0
        %3567 = vmatpush1.msra.mxu0 0.0
        %3568 = vmatprep.subr.mxu0 0.0
        %3569 = vmatpush1.msra.mxu0 0.0
        %3570 = vmatprep.subr.mxu0 0.0
        %3571 = vmatpush1.msra.mxu0 0.0
        %3572 = vmatprep.subr.mxu0 0.0
        %3573 = vmatpush1.msra.mxu0 0.0
        %3574 = vmatprep.subr.mxu0 0.0
        %3575 = vmatpush1.msra.mxu0 0.0
        %3576 = vmatprep.subr.mxu0 0.0
        %3577 = vmatpush1.msra.mxu0 0.0
        %3578 = vmatprep.subr.mxu0 0.0
        %3579 = vmatpush1.msra.mxu0 0.0
        %3580 = vmatprep.subr.mxu0 0.0
        %3581 = vmatpush1.msra.mxu0 0.0
        %3582 = vmatprep.subr.mxu0 0.0
        %3583 = vmatpush1.msra.mxu0 0.0
        %3584 = vmatprep.subr.mxu0 0.0
        %3585 = vmatpush1.msra.mxu0 0.0
        %3586 = vmatprep.subr.mxu0 0.0
        %3587 = vmatpush1.msra.mxu0 0.0
        %3588 = vmatprep.subr.mxu0 0.0
        %3589 = vmatpush1.msra.mxu0 0.0
        %3590 = vmatprep.subr.mxu0 0.0
        %3591 = vmatpush1.msra.mxu0 0.0
        %3592 = vmatprep.subr.mxu0 0.0
        %3593 = vmatpush1.msra.mxu0 0.0
        %3594 = vmatprep.subr.mxu0 0.0
        %3595 = vmatpush1.msra.mxu0 0.0
        %3596 = vmatprep.subr.mxu0 0.0
        %3597 = vmatpush1.msra.mxu0 0.0
        %3598 = vmatprep.subr.mxu0 0.0
        %3599 = vmatpush1.msra.mxu0 0.0
        %3600 = vmatprep.subr.mxu0 0.0
        %3601 = vmatpush1.msra.mxu0 0.0
        %3602 = vmatprep.subr.mxu0 0.0
        %3603 = vmatpush1.msra.mxu0 0.0
        %3604 = vmatprep.mubr.f32.mxu0 0.0
        %v3605 = vand.u32 %v3537, 4294901760
        %v3606 = vsub.f32 %v3537, %v3605
        %v3607 = vand.u32 %v3606, 4294901760
        %v3608 = vsub.f32 %v3606, %v3607
        %v3609 = vand.u32 %v3608, 4294901760
        %3610 = vmatmul.mubr.f32.gmra.mrb[0].mxu0 %v3609
        %v3611 = vpop.f32.mrb[0].mxu0
        %v3612 = vadd.f32 0.0, %v3611
        %v3613 = vpop.f32.mrb[0].mxu0
        %3614 = vdwg.mxu0
        %3615 = vmatprep.subr.mxu0 0.0
        %v3616 = vand.u32 %v3534, 4294901760
        %v3617 = vsub.f32 %v3534, %v3616
        %v3618 = vand.u32 %v3617, 4294901760
        %v3619 = vsub.f32 %v3617, %v3618
        %v3620 = vand.u32 %v3619, 4294901760
        %3621 = vmatpush1.msra.mxu0 %v3620
        %3622 = vmatprep.subr.mxu0 0.0
        %3623 = vmatpush1.msra.mxu0 0.0
        %3624 = vmatprep.subr.mxu0 0.0
        %3625 = vmatpush1.msra.mxu0 0.0
        %3626 = vmatprep.subr.mxu0 0.0
        %3627 = vmatpush1.msra.mxu0 0.0
        %3628 = vmatprep.subr.mxu0 0.0
        %3629 = vmatpush1.msra.mxu0 0.0
        %3630 = vmatprep.subr.mxu0 0.0
        %3631 = vmatpush1.msra.mxu0 0.0
        %3632 = vmatprep.subr.mxu0 0.0
        %3633 = vmatpush1.msra.mxu0 0.0
        %3634 = vmatprep.subr.mxu0 0.0
        %3635 = vmatpush1.msra.mxu0 0.0
        %3636 = vmatprep.subr.mxu0 0.0
        %3637 = vmatpush1.msra.mxu0 0.0
        %3638 = vmatprep.subr.mxu0 0.0
        %3639 = vmatpush1.msra.mxu0 0.0
        %3640 = vmatprep.subr.mxu0 0.0
        %3641 = vmatpush1.msra.mxu0 0.0
        %3642 = vmatprep.subr.mxu0 0.0
        %3643 = vmatpush1.msra.mxu0 0.0
        %3644 = vmatprep.subr.mxu0 0.0
        %3645 = vmatpush1.msra.mxu0 0.0
        %3646 = vmatprep.subr.mxu0 0.0
        %3647 = vmatpush1.msra.mxu0 0.0
        %3648 = vmatprep.subr.mxu0 0.0
        %3649 = vmatpush1.msra.mxu0 0.0
        %3650 = vmatprep.subr.mxu0 0.0
        %3651 = vmatpush1.msra.mxu0 0.0
        %3652 = vmatprep.subr.mxu0 0.0
        %3653 = vmatpush1.msra.mxu0 0.0
        %3654 = vmatprep.subr.mxu0 0.0
        %3655 = vmatpush1.msra.mxu0 0.0
        %3656 = vmatprep.subr.mxu0 0.0
        %3657 = vmatpush1.msra.mxu0 0.0
        %3658 = vmatprep.subr.mxu0 0.0
        %3659 = vmatpush1.msra.mxu0 0.0
        %3660 = vmatprep.subr.mxu0 0.0
        %3661 = vmatpush1.msra.mxu0 0.0
        %3662 = vmatprep.subr.mxu0 0.0
        %3663 = vmatpush1.msra.mxu0 0.0
        %3664 = vmatprep.subr.mxu0 0.0
        %3665 = vmatpush1.msra.mxu0 0.0
        %3666 = vmatprep.subr.mxu0 0.0
        %3667 = vmatpush1.msra.mxu0 0.0
        %3668 = vmatprep.subr.mxu0 0.0
        %3669 = vmatpush1.msra.mxu0 0.0
        %3670 = vmatprep.subr.mxu0 0.0
        %3671 = vmatpush1.msra.mxu0 0.0
        %3672 = vmatprep.subr.mxu0 0.0
        %3673 = vmatpush1.msra.mxu0 0.0
        %3674 = vmatprep.subr.mxu0 0.0
        %3675 = vmatpush1.msra.mxu0 0.0
        %3676 = vmatprep.subr.mxu0 0.0
        %3677 = vmatpush1.msra.mxu0 0.0
        %3678 = vmatprep.subr.mxu0 0.0
        %3679 = vmatpush1.msra.mxu0 0.0
        %3680 = vmatprep.subr.mxu0 0.0
        %3681 = vmatpush1.msra.mxu0 0.0
        %3682 = vmatprep.subr.mxu0 0.0
        %3683 = vmatpush1.msra.mxu0 0.0
        %3684 = vmatprep.mubr.f32.mxu0 0.0
        %v3685 = vand.u32 %v3537, 4294901760
        %3686 = vmatmul.mubr.f32.gmra.mrb[0].mxu0 %v3685
        %v3687 = vpop.f32.mrb[0].mxu0
        %v3688 = vadd.f32 %v3612, %v3687
        %v3689 = vpop.f32.mrb[0].mxu0
        %3690 = vdwg.mxu0
        %3691 = vmatprep.subr.mxu0 0.0
        %v3692 = vand.u32 %v3534, 4294901760
        %v3693 = vsub.f32 %v3534, %v3692
        %3694 = vmatpush1.msra.mxu0 %v3693
        %3695 = vmatprep.subr.mxu0 0.0
        %3696 = vmatpush1.msra.mxu0 0.0
        %3697 = vmatprep.subr.mxu0 0.0
        %3698 = vmatpush1.msra.mxu0 0.0
        %3699 = vmatprep.subr.mxu0 0.0
        %3700 = vmatpush1.msra.mxu0 0.0
        %3701 = vmatprep.subr.mxu0 0.0
        %3702 = vmatpush1.msra.mxu0 0.0
        %3703 = vmatprep.subr.mxu0 0.0
        %3704 = vmatpush1.msra.mxu0 0.0
        %3705 = vmatprep.subr.mxu0 0.0
        %3706 = vmatpush1.msra.mxu0 0.0
        %3707 = vmatprep.subr.mxu0 0.0
        %3708 = vmatpush1.msra.mxu0 0.0
        %3709 = vmatprep.subr.mxu0 0.0
        %3710 = vmatpush1.msra.mxu0 0.0
        %3711 = vmatprep.subr.mxu0 0.0
        %3712 = vmatpush1.msra.mxu0 0.0
        %3713 = vmatprep.subr.mxu0 0.0
        %3714 = vmatpush1.msra.mxu0 0.0
        %3715 = vmatprep.subr.mxu0 0.0
        %3716 = vmatpush1.msra.mxu0 0.0
        %3717 = vmatprep.subr.mxu0 0.0
        %3718 = vmatpush1.msra.mxu0 0.0
        %3719 = vmatprep.subr.mxu0 0.0
        %3720 = vmatpush1.msra.mxu0 0.0
        %3721 = vmatprep.subr.mxu0 0.0
        %3722 = vmatpush1.msra.mxu0 0.0
        %3723 = vmatprep.subr.mxu0 0.0
        %3724 = vmatpush1.msra.mxu0 0.0
        %3725 = vmatprep.subr.mxu0 0.0
        %3726 = vmatpush1.msra.mxu0 0.0
        %3727 = vmatprep.subr.mxu0 0.0
        %3728 = vmatpush1.msra.mxu0 0.0
        %3729 = vmatprep.subr.mxu0 0.0
        %3730 = vmatpush1.msra.mxu0 0.0
        %3731 = vmatprep.subr.mxu0 0.0
        %3732 = vmatpush1.msra.mxu0 0.0
        %3733 = vmatprep.subr.mxu0 0.0
        %3734 = vmatpush1.msra.mxu0 0.0
        %3735 = vmatprep.subr.mxu0 0.0
        %3736 = vmatpush1.msra.mxu0 0.0
        %3737 = vmatprep.subr.mxu0 0.0
        %3738 = vmatpush1.msra.mxu0 0.0
        %3739 = vmatprep.subr.mxu0 0.0
        %3740 = vmatpush1.msra.mxu0 0.0
        %3741 = vmatprep.subr.mxu0 0.0
        %3742 = vmatpush1.msra.mxu0 0.0
        %3743 = vmatprep.subr.mxu0 0.0
        %3744 = vmatpush1.msra.mxu0 0.0
        %3745 = vmatprep.subr.mxu0 0.0
        %3746 = vmatpush1.msra.mxu0 0.0
        %3747 = vmatprep.subr.mxu0 0.0
        %3748 = vmatpush1.msra.mxu0 0.0
        %3749 = vmatprep.subr.mxu0 0.0
        %3750 = vmatpush1.msra.mxu0 0.0
        %3751 = vmatprep.subr.mxu0 0.0
        %3752 = vmatpush1.msra.mxu0 0.0
        %3753 = vmatprep.subr.mxu0 0.0
        %3754 = vmatpush1.msra.mxu0 0.0
        %3755 = vmatprep.subr.mxu0 0.0
        %3756 = vmatpush1.msra.mxu0 0.0
        %3757 = vmatprep.mubr.f32.mxu0 0.0
        %v3758 = vand.u32 %v3537, 4294901760
        %v3759 = vsub.f32 %v3537, %v3758
        %3760 = vmatmul.mubr.f32.gmra.mrb[0].mxu0 %v3759
        %v3761 = vpop.f32.mrb[0].mxu0
        %v3762 = vadd.f32 %v3688, %v3761
        %v3763 = vpop.f32.mrb[0].mxu0
        %3764 = vdwg.mxu0
        %3765 = vmatprep.subr.mxu0 0.0
        %v3766 = vand.u32 %v3534, 4294901760
        %3767 = vmatpush1.msra.mxu0 %v3766
        %3768 = vmatprep.subr.mxu0 0.0
        %3769 = vmatpush1.msra.mxu0 0.0
        %3770 = vmatprep.subr.mxu0 0.0
        %3771 = vmatpush1.msra.mxu0 0.0
        %3772 = vmatprep.subr.mxu0 0.0
        %3773 = vmatpush1.msra.mxu0 0.0
        %3774 = vmatprep.subr.mxu0 0.0
        %3775 = vmatpush1.msra.mxu0 0.0
        %3776 = vmatprep.subr.mxu0 0.0
        %3777 = vmatpush1.msra.mxu0 0.0
        %3778 = vmatprep.subr.mxu0 0.0
        %3779 = vmatpush1.msra.mxu0 0.0
        %3780 = vmatprep.subr.mxu0 0.0
        %3781 = vmatpush1.msra.mxu0 0.0
        %3782 = vmatprep.subr.mxu0 0.0
        %3783 = vmatpush1.msra.mxu0 0.0
        %3784 = vmatprep.subr.mxu0 0.0
        %3785 = vmatpush1.msra.mxu0 0.0
        %3786 = vmatprep.subr.mxu0 0.0
        %3787 = vmatpush1.msra.mxu0 0.0
        %3788 = vmatprep.subr.mxu0 0.0
        %3789 = vmatpush1.msra.mxu0 0.0
        %3790 = vmatprep.subr.mxu0 0.0
        %3791 = vmatpush1.msra.mxu0 0.0
        %3792 = vmatprep.subr.mxu0 0.0
        %3793 = vmatpush1.msra.mxu0 0.0
        %3794 = vmatprep.subr.mxu0 0.0
        %3795 = vmatpush1.msra.mxu0 0.0
        %3796 = vmatprep.subr.mxu0 0.0
        %3797 = vmatpush1.msra.mxu0 0.0
        %3798 = vmatprep.subr.mxu0 0.0
        %3799 = vmatpush1.msra.mxu0 0.0
        %3800 = vmatprep.subr.mxu0 0.0
        %3801 = vmatpush1.msra.mxu0 0.0
        %3802 = vmatprep.subr.mxu0 0.0
        %3803 = vmatpush1.msra.mxu0 0.0
        %3804 = vmatprep.subr.mxu0 0.0
        %3805 = vmatpush1.msra.mxu0 0.0
        %3806 = vmatprep.subr.mxu0 0.0
        %3807 = vmatpush1.msra.mxu0 0.0
        %3808 = vmatprep.subr.mxu0 0.0
        %3809 = vmatpush1.msra.mxu0 0.0
        %3810 = vmatprep.subr.mxu0 0.0
        %3811 = vmatpush1.msra.mxu0 0.0
        %3812 = vmatprep.subr.mxu0 0.0
        %3813 = vmatpush1.msra.mxu0 0.0
        %3814 = vmatprep.subr.mxu0 0.0
        %3815 = vmatpush1.msra.mxu0 0.0
        %3816 = vmatprep.subr.mxu0 0.0
        %3817 = vmatpush1.msra.mxu0 0.0
        %3818 = vmatprep.subr.mxu0 0.0
        %3819 = vmatpush1.msra.mxu0 0.0
        %3820 = vmatprep.subr.mxu0 0.0
        %3821 = vmatpush1.msra.mxu0 0.0
        %3822 = vmatprep.subr.mxu0 0.0
        %3823 = vmatpush1.msra.mxu0 0.0
        %3824 = vmatprep.subr.mxu0 0.0
        %3825 = vmatpush1.msra.mxu0 0.0
        %3826 = vmatprep.subr.mxu0 0.0
        %3827 = vmatpush1.msra.mxu0 0.0
        %3828 = vmatprep.subr.mxu0 0.0
        %3829 = vmatpush1.msra.mxu0 0.0
        %3830 = vmatprep.mubr.f32.mxu0 0.0
        %v3831 = vand.u32 %v3537, 4294901760
        %v3832 = vsub.f32 %v3537, %v3831
        %v3833 = vand.u32 %v3832, 4294901760
        %3834 = vmatmul.mubr.f32.gmra.mrb[0].mxu0 %v3833
        %v3835 = vpop.f32.mrb[0].mxu0
        %v3836 = vadd.f32 %v3762, %v3835
        %v3837 = vpop.f32.mrb[0].mxu0
        %3838 = vdwg.mxu0
        %3839 = vmatprep.subr.mxu0 0.0
        %v3840 = vand.u32 %v3534, 4294901760
        %v3841 = vsub.f32 %v3534, %v3840
        %v3842 = vand.u32 %v3841, 4294901760
        %3843 = vmatpush1.msra.mxu0 %v3842
        %3844 = vmatprep.subr.mxu0 0.0
        %3845 = vmatpush1.msra.mxu0 0.0
        %3846 = vmatprep.subr.mxu0 0.0
        %3847 = vmatpush1.msra.mxu0 0.0
        %3848 = vmatprep.subr.mxu0 0.0
        %3849 = vmatpush1.msra.mxu0 0.0
        %3850 = vmatprep.subr.mxu0 0.0
        %3851 = vmatpush1.msra.mxu0 0.0
        %3852 = vmatprep.subr.mxu0 0.0
        %3853 = vmatpush1.msra.mxu0 0.0
        %3854 = vmatprep.subr.mxu0 0.0
        %3855 = vmatpush1.msra.mxu0 0.0
        %3856 = vmatprep.subr.mxu0 0.0
        %3857 = vmatpush1.msra.mxu0 0.0
        %3858 = vmatprep.subr.mxu0 0.0
        %3859 = vmatpush1.msra.mxu0 0.0
        %3860 = vmatprep.subr.mxu0 0.0
        %3861 = vmatpush1.msra.mxu0 0.0
        %3862 = vmatprep.subr.mxu0 0.0
        %3863 = vmatpush1.msra.mxu0 0.0
        %3864 = vmatprep.subr.mxu0 0.0
        %3865 = vmatpush1.msra.mxu0 0.0
        %3866 = vmatprep.subr.mxu0 0.0
        %3867 = vmatpush1.msra.mxu0 0.0
        %3868 = vmatprep.subr.mxu0 0.0
        %3869 = vmatpush1.msra.mxu0 0.0
        %3870 = vmatprep.subr.mxu0 0.0
        %3871 = vmatpush1.msra.mxu0 0.0
        %3872 = vmatprep.subr.mxu0 0.0
        %3873 = vmatpush1.msra.mxu0 0.0
        %3874 = vmatprep.subr.mxu0 0.0
        %3875 = vmatpush1.msra.mxu0 0.0
        %3876 = vmatprep.subr.mxu0 0.0
        %3877 = vmatpush1.msra.mxu0 0.0
        %3878 = vmatprep.subr.mxu0 0.0
        %3879 = vmatpush1.msra.mxu0 0.0
        %3880 = vmatprep.subr.mxu0 0.0
        %3881 = vmatpush1.msra.mxu0 0.0
        %3882 = vmatprep.subr.mxu0 0.0
        %3883 = vmatpush1.msra.mxu0 0.0
        %3884 = vmatprep.subr.mxu0 0.0
        %3885 = vmatpush1.msra.mxu0 0.0
        %3886 = vmatprep.subr.mxu0 0.0
        %3887 = vmatpush1.msra.mxu0 0.0
        %3888 = vmatprep.subr.mxu0 0.0
        %3889 = vmatpush1.msra.mxu0 0.0
        %3890 = vmatprep.subr.mxu0 0.0
        %3891 = vmatpush1.msra.mxu0 0.0
        %3892 = vmatprep.subr.mxu0 0.0
        %3893 = vmatpush1.msra.mxu0 0.0
        %3894 = vmatprep.subr.mxu0 0.0
        %3895 = vmatpush1.msra.mxu0 0.0
        %3896 = vmatprep.subr.mxu0 0.0
        %3897 = vmatpush1.msra.mxu0 0.0
        %3898 = vmatprep.subr.mxu0 0.0
        %3899 = vmatpush1.msra.mxu0 0.0
        %3900 = vmatprep.subr.mxu0 0.0
        %3901 = vmatpush1.msra.mxu0 0.0
        %3902 = vmatprep.subr.mxu0 0.0
        %3903 = vmatpush1.msra.mxu0 0.0
        %3904 = vmatprep.subr.mxu0 0.0
        %3905 = vmatpush1.msra.mxu0 0.0
        %3906 = vmatprep.mubr.f32.mxu0 0.0
        %v3907 = vand.u32 %v3537, 4294901760
        %3908 = vmatmul.mubr.f32.gmra.mrb[0].mxu0 %v3907
        %v3909 = vpop.f32.mrb[0].mxu0
        %v3910 = vadd.f32 %v3836, %v3909
        %v3911 = vpop.f32.mrb[0].mxu0
        %3912 = vdwg.mxu0
        %3913 = vmatprep.subr.mxu0 0.0
        %v3914 = vand.u32 %v3534, 4294901760
        %3915 = vmatpush1.msra.mxu0 %v3914
        %3916 = vmatprep.subr.mxu0 0.0
        %3917 = vmatpush1.msra.mxu0 0.0
        %3918 = vmatprep.subr.mxu0 0.0
        %3919 = vmatpush1.msra.mxu0 0.0
        %3920 = vmatprep.subr.mxu0 0.0
        %3921 = vmatpush1.msra.mxu0 0.0
        %3922 = vmatprep.subr.mxu0 0.0
        %3923 = vmatpush1.msra.mxu0 0.0
        %3924 = vmatprep.subr.mxu0 0.0
        %3925 = vmatpush1.msra.mxu0 0.0
        %3926 = vmatprep.subr.mxu0 0.0
        %3927 = vmatpush1.msra.mxu0 0.0
        %3928 = vmatprep.subr.mxu0 0.0
        %3929 = vmatpush1.msra.mxu0 0.0
        %3930 = vmatprep.subr.mxu0 0.0
        %3931 = vmatpush1.msra.mxu0 0.0
        %3932 = vmatprep.subr.mxu0 0.0
        %3933 = vmatpush1.msra.mxu0 0.0
        %3934 = vmatprep.subr.mxu0 0.0
        %3935 = vmatpush1.msra.mxu0 0.0
        %3936 = vmatprep.subr.mxu0 0.0
        %3937 = vmatpush1.msra.mxu0 0.0
        %3938 = vmatprep.subr.mxu0 0.0
        %3939 = vmatpush1.msra.mxu0 0.0
        %3940 = vmatprep.subr.mxu0 0.0
        %3941 = vmatpush1.msra.mxu0 0.0
        %3942 = vmatprep.subr.mxu0 0.0
        %3943 = vmatpush1.msra.mxu0 0.0
        %3944 = vmatprep.subr.mxu0 0.0
        %3945 = vmatpush1.msra.mxu0 0.0
        %3946 = vmatprep.subr.mxu0 0.0
        %3947 = vmatpush1.msra.mxu0 0.0
        %3948 = vmatprep.subr.mxu0 0.0
        %3949 = vmatpush1.msra.mxu0 0.0
        %3950 = vmatprep.subr.mxu0 0.0
        %3951 = vmatpush1.msra.mxu0 0.0
        %3952 = vmatprep.subr.mxu0 0.0
        %3953 = vmatpush1.msra.mxu0 0.0
        %3954 = vmatprep.subr.mxu0 0.0
        %3955 = vmatpush1.msra.mxu0 0.0
        %3956 = vmatprep.subr.mxu0 0.0
        %3957 = vmatpush1.msra.mxu0 0.0
        %3958 = vmatprep.subr.mxu0 0.0
        %3959 = vmatpush1.msra.mxu0 0.0
        %3960 = vmatprep.subr.mxu0 0.0
        %3961 = vmatpush1.msra.mxu0 0.0
        %3962 = vmatprep.subr.mxu0 0.0
        %3963 = vmatpush1.msra.mxu0 0.0
        %3964 = vmatprep.subr.mxu0 0.0
        %3965 = vmatpush1.msra.mxu0 0.0
        %3966 = vmatprep.subr.mxu0 0.0
        %3967 = vmatpush1.msra.mxu0 0.0
        %3968 = vmatprep.subr.mxu0 0.0
        %3969 = vmatpush1.msra.mxu0 0.0
        %3970 = vmatprep.subr.mxu0 0.0
        %3971 = vmatpush1.msra.mxu0 0.0
        %3972 = vmatprep.subr.mxu0 0.0
        %3973 = vmatpush1.msra.mxu0 0.0
        %3974 = vmatprep.subr.mxu0 0.0
        %3975 = vmatpush1.msra.mxu0 0.0
        %3976 = vmatprep.subr.mxu0 0.0
        %3977 = vmatpush1.msra.mxu0 0.0
        %3978 = vmatprep.mubr.f32.mxu0 0.0
        %v3979 = vand.u32 %v3537, 4294901760
        %3980 = vmatmul.mubr.f32.gmra.mrb[0].mxu0 %v3979
        %v3981 = vpop.f32.mrb[0].mxu0
        %v3982 = vadd.f32 %v3910, %v3981
        %v3983 = vpop.f32.mrb[0].mxu0
        %3984 = vdwg.mxu0
        %v3986 = vsel %vm2146, %v3982, 0
        %3988 = vmatprep.subr.mxu0 0.0
        %v3989 = vand.u32 %v2137, 4294901760
        %3990 = vmatpush1.msra.mxu0 %v3989
        %3991 = vmatprep.subr.mxu0 0.0
        %3992 = vmatpush1.msra.mxu0 0.0
        %3993 = vmatprep.subr.mxu0 0.0
        %3994 = vmatpush1.msra.mxu0 0.0
        %3995 = vmatprep.subr.mxu0 0.0
        %3996 = vmatpush1.msra.mxu0 0.0
        %3997 = vmatprep.subr.mxu0 0.0
        %3998 = vmatpush1.msra.mxu0 0.0
        %3999 = vmatprep.subr.mxu0 0.0
        %4000 = vmatpush1.msra.mxu0 0.0
        %4001 = vmatprep.subr.mxu0 0.0
        %4002 = vmatpush1.msra.mxu0 0.0
        %4003 = vmatprep.subr.mxu0 0.0
        %4004 = vmatpush1.msra.mxu0 0.0
        %4005 = vmatprep.subr.mxu0 0.0
        %4006 = vmatpush1.msra.mxu0 0.0
        %4007 = vmatprep.subr.mxu0 0.0
        %4008 = vmatpush1.msra.mxu0 0.0
        %4009 = vmatprep.subr.mxu0 0.0
        %4010 = vmatpush1.msra.mxu0 0.0
        %4011 = vmatprep.subr.mxu0 0.0
        %4012 = vmatpush1.msra.mxu0 0.0
        %4013 = vmatprep.subr.mxu0 0.0
        %4014 = vmatpush1.msra.mxu0 0.0
        %4015 = vmatprep.subr.mxu0 0.0
        %4016 = vmatpush1.msra.mxu0 0.0
        %4017 = vmatprep.subr.mxu0 0.0
        %4018 = vmatpush1.msra.mxu0 0.0
        %4019 = vmatprep.subr.mxu0 0.0
        %4020 = vmatpush1.msra.mxu0 0.0
        %4021 = vmatprep.subr.mxu0 0.0
        %4022 = vmatpush1.msra.mxu0 0.0
        %4023 = vmatprep.subr.mxu0 0.0
        %4024 = vmatpush1.msra.mxu0 0.0
        %4025 = vmatprep.subr.mxu0 0.0
        %4026 = vmatpush1.msra.mxu0 0.0
        %4027 = vmatprep.subr.mxu0 0.0
        %4028 = vmatpush1.msra.mxu0 0.0
        %4029 = vmatprep.subr.mxu0 0.0
        %4030 = vmatpush1.msra.mxu0 0.0
        %4031 = vmatprep.subr.mxu0 0.0
        %4032 = vmatpush1.msra.mxu0 0.0
        %4033 = vmatprep.subr.mxu0 0.0
        %4034 = vmatpush1.msra.mxu0 0.0
        %4035 = vmatprep.subr.mxu0 0.0
        %4036 = vmatpush1.msra.mxu0 0.0
        %4037 = vmatprep.subr.mxu0 0.0
        %4038 = vmatpush1.msra.mxu0 0.0
        %4039 = vmatprep.subr.mxu0 0.0
        %4040 = vmatpush1.msra.mxu0 0.0
        %4041 = vmatprep.subr.mxu0 0.0
        %4042 = vmatpush1.msra.mxu0 0.0
        %4043 = vmatprep.subr.mxu0 0.0
        %4044 = vmatpush1.msra.mxu0 0.0
        %4045 = vmatprep.subr.mxu0 0.0
        %4046 = vmatpush1.msra.mxu0 0.0
        %4047 = vmatprep.subr.mxu0 0.0
        %4048 = vmatpush1.msra.mxu0 0.0
        %4049 = vmatprep.subr.mxu0 0.0
        %4050 = vmatpush1.msra.mxu0 0.0
        %4051 = vmatprep.subr.mxu0 0.0
        %4052 = vmatpush1.msra.mxu0 0.0
        %4053 = vmatprep.mubr.f32.mxu0 0.0
        %v4054 = vand.u32 %v3986, 4294901760
        %v4055 = vsub.f32 %v3986, %v4054
        %v4056 = vand.u32 %v4055, 4294901760
        %v4057 = vsub.f32 %v4055, %v4056
        %v4058 = vand.u32 %v4057, 4294901760
        %4059 = vmatmul.mubr.f32.gmra.mrb[0].mxu0 %v4058
        %v4060 = vpop.f32.mrb[0].mxu0
        %v4061 = vadd.f32 0.0, %v4060
        %v4062 = vpop.f32.mrb[0].mxu0
        %4063 = vdwg.mxu0
        %4064 = vmatprep.subr.mxu0 0.0
        %v4065 = vand.u32 %v2137, 4294901760
        %v4066 = vsub.f32 %v2137, %v4065
        %v4067 = vand.u32 %v4066, 4294901760
        %v4068 = vsub.f32 %v4066, %v4067
        %v4069 = vand.u32 %v4068, 4294901760
        %4070 = vmatpush1.msra.mxu0 %v4069
        %4071 = vmatprep.subr.mxu0 0.0
        %4072 = vmatpush1.msra.mxu0 0.0
        %4073 = vmatprep.subr.mxu0 0.0
        %4074 = vmatpush1.msra.mxu0 0.0
        %4075 = vmatprep.subr.mxu0 0.0
        %4076 = vmatpush1.msra.mxu0 0.0
        %4077 = vmatprep.subr.mxu0 0.0
        %4078 = vmatpush1.msra.mxu0 0.0
        %4079 = vmatprep.subr.mxu0 0.0
        %4080 = vmatpush1.msra.mxu0 0.0
        %4081 = vmatprep.subr.mxu0 0.0
        %4082 = vmatpush1.msra.mxu0 0.0
        %4083 = vmatprep.subr.mxu0 0.0
        %4084 = vmatpush1.msra.mxu0 0.0
        %4085 = vmatprep.subr.mxu0 0.0
        %4086 = vmatpush1.msra.mxu0 0.0
        %4087 = vmatprep.subr.mxu0 0.0
        %4088 = vmatpush1.msra.mxu0 0.0
        %4089 = vmatprep.subr.mxu0 0.0
        %4090 = vmatpush1.msra.mxu0 0.0
        %4091 = vmatprep.subr.mxu0 0.0
        %4092 = vmatpush1.msra.mxu0 0.0
        %4093 = vmatprep.subr.mxu0 0.0
        %4094 = vmatpush1.msra.mxu0 0.0
        %4095 = vmatprep.subr.mxu0 0.0
        %4096 = vmatpush1.msra.mxu0 0.0
        %4097 = vmatprep.subr.mxu0 0.0
        %4098 = vmatpush1.msra.mxu0 0.0
        %4099 = vmatprep.subr.mxu0 0.0
        %4100 = vmatpush1.msra.mxu0 0.0
        %4101 = vmatprep.subr.mxu0 0.0
        %4102 = vmatpush1.msra.mxu0 0.0
        %4103 = vmatprep.subr.mxu0 0.0
        %4104 = vmatpush1.msra.mxu0 0.0
        %4105 = vmatprep.subr.mxu0 0.0
        %4106 = vmatpush1.msra.mxu0 0.0
        %4107 = vmatprep.subr.mxu0 0.0
        %4108 = vmatpush1.msra.mxu0 0.0
        %4109 = vmatprep.subr.mxu0 0.0
        %4110 = vmatpush1.msra.mxu0 0.0
        %4111 = vmatprep.subr.mxu0 0.0
        %4112 = vmatpush1.msra.mxu0 0.0
        %4113 = vmatprep.subr.mxu0 0.0
        %4114 = vmatpush1.msra.mxu0 0.0
        %4115 = vmatprep.subr.mxu0 0.0
        %4116 = vmatpush1.msra.mxu0 0.0
        %4117 = vmatprep.subr.mxu0 0.0
        %4118 = vmatpush1.msra.mxu0 0.0
        %4119 = vmatprep.subr.mxu0 0.0
        %4120 = vmatpush1.msra.mxu0 0.0
        %4121 = vmatprep.subr.mxu0 0.0
        %4122 = vmatpush1.msra.mxu0 0.0
        %4123 = vmatprep.subr.mxu0 0.0
        %4124 = vmatpush1.msra.mxu0 0.0
        %4125 = vmatprep.subr.mxu0 0.0
        %4126 = vmatpush1.msra.mxu0 0.0
        %4127 = vmatprep.subr.mxu0 0.0
        %4128 = vmatpush1.msra.mxu0 0.0
        %4129 = vmatprep.subr.mxu0 0.0
        %4130 = vmatpush1.msra.mxu0 0.0
        %4131 = vmatprep.subr.mxu0 0.0
        %4132 = vmatpush1.msra.mxu0 0.0
        %4133 = vmatprep.mubr.f32.mxu0 0.0
        %v4134 = vand.u32 %v3986, 4294901760
        %4135 = vmatmul.mubr.f32.gmra.mrb[0].mxu0 %v4134
        %v4136 = vpop.f32.mrb[0].mxu0
        %v4137 = vadd.f32 %v4061, %v4136
        %v4138 = vpop.f32.mrb[0].mxu0
        %4139 = vdwg.mxu0
        %4140 = vmatprep.subr.mxu0 0.0
        %v4141 = vand.u32 %v2137, 4294901760
        %v4142 = vsub.f32 %v2137, %v4141
        %4143 = vmatpush1.msra.mxu0 %v4142
        %4144 = vmatprep.subr.mxu0 0.0
        %4145 = vmatpush1.msra.mxu0 0.0
        %4146 = vmatprep.subr.mxu0 0.0
        %4147 = vmatpush1.msra.mxu0 0.0
        %4148 = vmatprep.subr.mxu0 0.0
        %4149 = vmatpush1.msra.mxu0 0.0
        %4150 = vmatprep.subr.mxu0 0.0
        %4151 = vmatpush1.msra.mxu0 0.0
        %4152 = vmatprep.subr.mxu0 0.0
        %4153 = vmatpush1.msra.mxu0 0.0
        %4154 = vmatprep.subr.mxu0 0.0
        %4155 = vmatpush1.msra.mxu0 0.0
        %4156 = vmatprep.subr.mxu0 0.0
        %4157 = vmatpush1.msra.mxu0 0.0
        %4158 = vmatprep.subr.mxu0 0.0
        %4159 = vmatpush1.msra.mxu0 0.0
        %4160 = vmatprep.subr.mxu0 0.0
        %4161 = vmatpush1.msra.mxu0 0.0
        %4162 = vmatprep.subr.mxu0 0.0
        %4163 = vmatpush1.msra.mxu0 0.0
        %4164 = vmatprep.subr.mxu0 0.0
        %4165 = vmatpush1.msra.mxu0 0.0
        %4166 = vmatprep.subr.mxu0 0.0
        %4167 = vmatpush1.msra.mxu0 0.0
        %4168 = vmatprep.subr.mxu0 0.0
        %4169 = vmatpush1.msra.mxu0 0.0
        %4170 = vmatprep.subr.mxu0 0.0
        %4171 = vmatpush1.msra.mxu0 0.0
        %4172 = vmatprep.subr.mxu0 0.0
        %4173 = vmatpush1.msra.mxu0 0.0
        %4174 = vmatprep.subr.mxu0 0.0
        %4175 = vmatpush1.msra.mxu0 0.0
        %4176 = vmatprep.subr.mxu0 0.0
        %4177 = vmatpush1.msra.mxu0 0.0
        %4178 = vmatprep.subr.mxu0 0.0
        %4179 = vmatpush1.msra.mxu0 0.0
        %4180 = vmatprep.subr.mxu0 0.0
        %4181 = vmatpush1.msra.mxu0 0.0
        %4182 = vmatprep.subr.mxu0 0.0
        %4183 = vmatpush1.msra.mxu0 0.0
        %4184 = vmatprep.subr.mxu0 0.0
        %4185 = vmatpush1.msra.mxu0 0.0
        %4186 = vmatprep.subr.mxu0 0.0
        %4187 = vmatpush1.msra.mxu0 0.0
        %4188 = vmatprep.subr.mxu0 0.0
        %4189 = vmatpush1.msra.mxu0 0.0
        %4190 = vmatprep.subr.mxu0 0.0
        %4191 = vmatpush1.msra.mxu0 0.0
        %4192 = vmatprep.subr.mxu0 0.0
        %4193 = vmatpush1.msra.mxu0 0.0
        %4194 = vmatprep.subr.mxu0 0.0
        %4195 = vmatpush1.msra.mxu0 0.0
        %4196 = vmatprep.subr.mxu0 0.0
        %4197 = vmatpush1.msra.mxu0 0.0
        %4198 = vmatprep.subr.mxu0 0.0
        %4199 = vmatpush1.msra.mxu0 0.0
        %4200 = vmatprep.subr.mxu0 0.0
        %4201 = vmatpush1.msra.mxu0 0.0
        %4202 = vmatprep.subr.mxu0 0.0
        %4203 = vmatpush1.msra.mxu0 0.0
        %4204 = vmatprep.subr.mxu0 0.0
        %4205 = vmatpush1.msra.mxu0 0.0
        %4206 = vmatprep.mubr.f32.mxu0 0.0
        %v4207 = vand.u32 %v3986, 4294901760
        %v4208 = vsub.f32 %v3986, %v4207
        %4209 = vmatmul.mubr.f32.gmra.mrb[0].mxu0 %v4208
        %v4210 = vpop.f32.mrb[0].mxu0
        %v4211 = vadd.f32 %v4137, %v4210
        %v4212 = vpop.f32.mrb[0].mxu0
        %4213 = vdwg.mxu0
        %4214 = vmatprep.subr.mxu0 0.0
        %v4215 = vand.u32 %v2137, 4294901760
        %4216 = vmatpush1.msra.mxu0 %v4215
        %4217 = vmatprep.subr.mxu0 0.0
        %4218 = vmatpush1.msra.mxu0 0.0
        %4219 = vmatprep.subr.mxu0 0.0
        %4220 = vmatpush1.msra.mxu0 0.0
        %4221 = vmatprep.subr.mxu0 0.0
        %4222 = vmatpush1.msra.mxu0 0.0
        %4223 = vmatprep.subr.mxu0 0.0
        %4224 = vmatpush1.msra.mxu0 0.0
        %4225 = vmatprep.subr.mxu0 0.0
        %4226 = vmatpush1.msra.mxu0 0.0
        %4227 = vmatprep.subr.mxu0 0.0
        %4228 = vmatpush1.msra.mxu0 0.0
        %4229 = vmatprep.subr.mxu0 0.0
        %4230 = vmatpush1.msra.mxu0 0.0
        %4231 = vmatprep.subr.mxu0 0.0
        %4232 = vmatpush1.msra.mxu0 0.0
        %4233 = vmatprep.subr.mxu0 0.0
        %4234 = vmatpush1.msra.mxu0 0.0
        %4235 = vmatprep.subr.mxu0 0.0
        %4236 = vmatpush1.msra.mxu0 0.0
        %4237 = vmatprep.subr.mxu0 0.0
        %4238 = vmatpush1.msra.mxu0 0.0
        %4239 = vmatprep.subr.mxu0 0.0
        %4240 = vmatpush1.msra.mxu0 0.0
        %4241 = vmatprep.subr.mxu0 0.0
        %4242 = vmatpush1.msra.mxu0 0.0
        %4243 = vmatprep.subr.mxu0 0.0
        %4244 = vmatpush1.msra.mxu0 0.0
        %4245 = vmatprep.subr.mxu0 0.0
        %4246 = vmatpush1.msra.mxu0 0.0
        %4247 = vmatprep.subr.mxu0 0.0
        %4248 = vmatpush1.msra.mxu0 0.0
        %4249 = vmatprep.subr.mxu0 0.0
        %4250 = vmatpush1.msra.mxu0 0.0
        %4251 = vmatprep.subr.mxu0 0.0
        %4252 = vmatpush1.msra.mxu0 0.0
        %4253 = vmatprep.subr.mxu0 0.0
        %4254 = vmatpush1.msra.mxu0 0.0
        %4255 = vmatprep.subr.mxu0 0.0
        %4256 = vmatpush1.msra.mxu0 0.0
        %4257 = vmatprep.subr.mxu0 0.0
        %4258 = vmatpush1.msra.mxu0 0.0
        %4259 = vmatprep.subr.mxu0 0.0
        %4260 = vmatpush1.msra.mxu0 0.0
        %4261 = vmatprep.subr.mxu0 0.0
        %4262 = vmatpush1.msra.mxu0 0.0
        %4263 = vmatprep.subr.mxu0 0.0
        %4264 = vmatpush1.msra.mxu0 0.0
        %4265 = vmatprep.subr.mxu0 0.0
        %4266 = vmatpush1.msra.mxu0 0.0
        %4267 = vmatprep.subr.mxu0 0.0
        %4268 = vmatpush1.msra.mxu0 0.0
        %4269 = vmatprep.subr.mxu0 0.0
        %4270 = vmatpush1.msra.mxu0 0.0
        %4271 = vmatprep.subr.mxu0 0.0
        %4272 = vmatpush1.msra.mxu0 0.0
        %4273 = vmatprep.subr.mxu0 0.0
        %4274 = vmatpush1.msra.mxu0 0.0
        %4275 = vmatprep.subr.mxu0 0.0
        %4276 = vmatpush1.msra.mxu0 0.0
        %4277 = vmatprep.subr.mxu0 0.0
        %4278 = vmatpush1.msra.mxu0 0.0
        %4279 = vmatprep.mubr.f32.mxu0 0.0
        %v4280 = vand.u32 %v3986, 4294901760
        %v4281 = vsub.f32 %v3986, %v4280
        %v4282 = vand.u32 %v4281, 4294901760
        %4283 = vmatmul.mubr.f32.gmra.mrb[0].mxu0 %v4282
        %v4284 = vpop.f32.mrb[0].mxu0
        %v4285 = vadd.f32 %v4211, %v4284
        %v4286 = vpop.f32.mrb[0].mxu0
        %4287 = vdwg.mxu0
        %4288 = vmatprep.subr.mxu0 0.0
        %v4289 = vand.u32 %v2137, 4294901760
        %v4290 = vsub.f32 %v2137, %v4289
        %v4291 = vand.u32 %v4290, 4294901760
        %4292 = vmatpush1.msra.mxu0 %v4291
        %4293 = vmatprep.subr.mxu0 0.0
        %4294 = vmatpush1.msra.mxu0 0.0
        %4295 = vmatprep.subr.mxu0 0.0
        %4296 = vmatpush1.msra.mxu0 0.0
        %4297 = vmatprep.subr.mxu0 0.0
        %4298 = vmatpush1.msra.mxu0 0.0
        %4299 = vmatprep.subr.mxu0 0.0
        %4300 = vmatpush1.msra.mxu0 0.0
        %4301 = vmatprep.subr.mxu0 0.0
        %4302 = vmatpush1.msra.mxu0 0.0
        %4303 = vmatprep.subr.mxu0 0.0
        %4304 = vmatpush1.msra.mxu0 0.0
        %4305 = vmatprep.subr.mxu0 0.0
        %4306 = vmatpush1.msra.mxu0 0.0
        %4307 = vmatprep.subr.mxu0 0.0
        %4308 = vmatpush1.msra.mxu0 0.0
        %4309 = vmatprep.subr.mxu0 0.0
        %4310 = vmatpush1.msra.mxu0 0.0
        %4311 = vmatprep.subr.mxu0 0.0
        %4312 = vmatpush1.msra.mxu0 0.0
        %4313 = vmatprep.subr.mxu0 0.0
        %4314 = vmatpush1.msra.mxu0 0.0
        %4315 = vmatprep.subr.mxu0 0.0
        %4316 = vmatpush1.msra.mxu0 0.0
        %4317 = vmatprep.subr.mxu0 0.0
        %4318 = vmatpush1.msra.mxu0 0.0
        %4319 = vmatprep.subr.mxu0 0.0
        %4320 = vmatpush1.msra.mxu0 0.0
        %4321 = vmatprep.subr.mxu0 0.0
        %4322 = vmatpush1.msra.mxu0 0.0
        %4323 = vmatprep.subr.mxu0 0.0
        %4324 = vmatpush1.msra.mxu0 0.0
        %4325 = vmatprep.subr.mxu0 0.0
        %4326 = vmatpush1.msra.mxu0 0.0
        %4327 = vmatprep.subr.mxu0 0.0
        %4328 = vmatpush1.msra.mxu0 0.0
        %4329 = vmatprep.subr.mxu0 0.0
        %4330 = vmatpush1.msra.mxu0 0.0
        %4331 = vmatprep.subr.mxu0 0.0
        %4332 = vmatpush1.msra.mxu0 0.0
        %4333 = vmatprep.subr.mxu0 0.0
        %4334 = vmatpush1.msra.mxu0 0.0
        %4335 = vmatprep.subr.mxu0 0.0
        %4336 = vmatpush1.msra.mxu0 0.0
        %4337 = vmatprep.subr.mxu0 0.0
        %4338 = vmatpush1.msra.mxu0 0.0
        %4339 = vmatprep.subr.mxu0 0.0
        %4340 = vmatpush1.msra.mxu0 0.0
        %4341 = vmatprep.subr.mxu0 0.0
        %4342 = vmatpush1.msra.mxu0 0.0
        %4343 = vmatprep.subr.mxu0 0.0
        %4344 = vmatpush1.msra.mxu0 0.0
        %4345 = vmatprep.subr.mxu0 0.0
        %4346 = vmatpush1.msra.mxu0 0.0
        %4347 = vmatprep.subr.mxu0 0.0
        %4348 = vmatpush1.msra.mxu0 0.0
        %4349 = vmatprep.subr.mxu0 0.0
        %4350 = vmatpush1.msra.mxu0 0.0
        %4351 = vmatprep.subr.mxu0 0.0
        %4352 = vmatpush1.msra.mxu0 0.0
        %4353 = vmatprep.subr.mxu0 0.0
        %4354 = vmatpush1.msra.mxu0 0.0
        %4355 = vmatprep.mubr.f32.mxu0 0.0
        %v4356 = vand.u32 %v3986, 4294901760
        %4357 = vmatmul.mubr.f32.gmra.mrb[0].mxu0 %v4356
        %v4358 = vpop.f32.mrb[0].mxu0
        %v4359 = vadd.f32 %v4285, %v4358
        %v4360 = vpop.f32.mrb[0].mxu0
        %4361 = vdwg.mxu0
        %4362 = vmatprep.subr.mxu0 0.0
        %v4363 = vand.u32 %v2137, 4294901760
        %4364 = vmatpush1.msra.mxu0 %v4363
        %4365 = vmatprep.subr.mxu0 0.0
        %4366 = vmatpush1.msra.mxu0 0.0
        %4367 = vmatprep.subr.mxu0 0.0
        %4368 = vmatpush1.msra.mxu0 0.0
        %4369 = vmatprep.subr.mxu0 0.0
        %4370 = vmatpush1.msra.mxu0 0.0
        %4371 = vmatprep.subr.mxu0 0.0
        %4372 = vmatpush1.msra.mxu0 0.0
        %4373 = vmatprep.subr.mxu0 0.0
        %4374 = vmatpush1.msra.mxu0 0.0
        %4375 = vmatprep.subr.mxu0 0.0
        %4376 = vmatpush1.msra.mxu0 0.0
        %4377 = vmatprep.subr.mxu0 0.0
        %4378 = vmatpush1.msra.mxu0 0.0
        %4379 = vmatprep.subr.mxu0 0.0
        %4380 = vmatpush1.msra.mxu0 0.0
        %4381 = vmatprep.subr.mxu0 0.0
        %4382 = vmatpush1.msra.mxu0 0.0
        %4383 = vmatprep.subr.mxu0 0.0
        %4384 = vmatpush1.msra.mxu0 0.0
        %4385 = vmatprep.subr.mxu0 0.0
        %4386 = vmatpush1.msra.mxu0 0.0
        %4387 = vmatprep.subr.mxu0 0.0
        %4388 = vmatpush1.msra.mxu0 0.0
        %4389 = vmatprep.subr.mxu0 0.0
        %4390 = vmatpush1.msra.mxu0 0.0
        %4391 = vmatprep.subr.mxu0 0.0
        %4392 = vmatpush1.msra.mxu0 0.0
        %4393 = vmatprep.subr.mxu0 0.0
        %4394 = vmatpush1.msra.mxu0 0.0
        %4395 = vmatprep.subr.mxu0 0.0
        %4396 = vmatpush1.msra.mxu0 0.0
        %4397 = vmatprep.subr.mxu0 0.0
        %4398 = vmatpush1.msra.mxu0 0.0
        %4399 = vmatprep.subr.mxu0 0.0
        %4400 = vmatpush1.msra.mxu0 0.0
        %4401 = vmatprep.subr.mxu0 0.0
        %4402 = vmatpush1.msra.mxu0 0.0
        %4403 = vmatprep.subr.mxu0 0.0
        %4404 = vmatpush1.msra.mxu0 0.0
        %4405 = vmatprep.subr.mxu0 0.0
        %4406 = vmatpush1.msra.mxu0 0.0
        %4407 = vmatprep.subr.mxu0 0.0
        %4408 = vmatpush1.msra.mxu0 0.0
        %4409 = vmatprep.subr.mxu0 0.0
        %4410 = vmatpush1.msra.mxu0 0.0
        %4411 = vmatprep.subr.mxu0 0.0
        %4412 = vmatpush1.msra.mxu0 0.0
        %4413 = vmatprep.subr.mxu0 0.0
        %4414 = vmatpush1.msra.mxu0 0.0
        %4415 = vmatprep.subr.mxu0 0.0
        %4416 = vmatpush1.msra.mxu0 0.0
        %4417 = vmatprep.subr.mxu0 0.0
        %4418 = vmatpush1.msra.mxu0 0.0
        %4419 = vmatprep.subr.mxu0 0.0
        %4420 = vmatpush1.msra.mxu0 0.0
        %4421 = vmatprep.subr.mxu0 0.0
        %4422 = vmatpush1.msra.mxu0 0.0
        %4423 = vmatprep.subr.mxu0 0.0
        %4424 = vmatpush1.msra.mxu0 0.0
        %4425 = vmatprep.subr.mxu0 0.0
        %4426 = vmatpush1.msra.mxu0 0.0
        %4427 = vmatprep.mubr.f32.mxu0 0.0
        %v4428 = vand.u32 %v3986, 4294901760
        %4429 = vmatmul.mubr.f32.gmra.mrb[0].mxu0 %v4428
        %v4430 = vpop.f32.mrb[0].mxu0
        %v4431 = vadd.f32 %v4359, %v4430
        %v4432 = vpop.f32.mrb[0].mxu0
        %4433 = vdwg.mxu0
        %v4435 = vsel %vm2146, %v3063, 0
        %4437 = vmatprep.subr.mxu0 0.0
        %v4438 = vand.u32 %v2136, 4294901760
        %4439 = vmatpush1.msra.mxu0 %v4438
        %4440 = vmatprep.subr.mxu0 0.0
        %4441 = vmatpush1.msra.mxu0 0.0
        %4442 = vmatprep.subr.mxu0 0.0
        %4443 = vmatpush1.msra.mxu0 0.0
        %4444 = vmatprep.subr.mxu0 0.0
        %4445 = vmatpush1.msra.mxu0 0.0
        %4446 = vmatprep.subr.mxu0 0.0
        %4447 = vmatpush1.msra.mxu0 0.0
        %4448 = vmatprep.subr.mxu0 0.0
        %4449 = vmatpush1.msra.mxu0 0.0
        %4450 = vmatprep.subr.mxu0 0.0
        %4451 = vmatpush1.msra.mxu0 0.0
        %4452 = vmatprep.subr.mxu0 0.0
        %4453 = vmatpush1.msra.mxu0 0.0
        %4454 = vmatprep.subr.mxu0 0.0
        %4455 = vmatpush1.msra.mxu0 0.0
        %4456 = vmatprep.subr.mxu0 0.0
        %4457 = vmatpush1.msra.mxu0 0.0
        %4458 = vmatprep.subr.mxu0 0.0
        %4459 = vmatpush1.msra.mxu0 0.0
        %4460 = vmatprep.subr.mxu0 0.0
        %4461 = vmatpush1.msra.mxu0 0.0
        %4462 = vmatprep.subr.mxu0 0.0
        %4463 = vmatpush1.msra.mxu0 0.0
        %4464 = vmatprep.subr.mxu0 0.0
        %4465 = vmatpush1.msra.mxu0 0.0
        %4466 = vmatprep.subr.mxu0 0.0
        %4467 = vmatpush1.msra.mxu0 0.0
        %4468 = vmatprep.subr.mxu0 0.0
        %4469 = vmatpush1.msra.mxu0 0.0
        %4470 = vmatprep.subr.mxu0 0.0
        %4471 = vmatpush1.msra.mxu0 0.0
        %4472 = vmatprep.subr.mxu0 0.0
        %4473 = vmatpush1.msra.mxu0 0.0
        %4474 = vmatprep.subr.mxu0 0.0
        %4475 = vmatpush1.msra.mxu0 0.0
        %4476 = vmatprep.subr.mxu0 0.0
        %4477 = vmatpush1.msra.mxu0 0.0
        %4478 = vmatprep.subr.mxu0 0.0
        %4479 = vmatpush1.msra.mxu0 0.0
        %4480 = vmatprep.subr.mxu0 0.0
        %4481 = vmatpush1.msra.mxu0 0.0
        %4482 = vmatprep.subr.mxu0 0.0
        %4483 = vmatpush1.msra.mxu0 0.0
        %4484 = vmatprep.subr.mxu0 0.0
        %4485 = vmatpush1.msra.mxu0 0.0
        %4486 = vmatprep.subr.mxu0 0.0
        %4487 = vmatpush1.msra.mxu0 0.0
        %4488 = vmatprep.subr.mxu0 0.0
        %4489 = vmatpush1.msra.mxu0 0.0
        %4490 = vmatprep.subr.mxu0 0.0
        %4491 = vmatpush1.msra.mxu0 0.0
        %4492 = vmatprep.subr.mxu0 0.0
        %4493 = vmatpush1.msra.mxu0 0.0
        %4494 = vmatprep.subr.mxu0 0.0
        %4495 = vmatpush1.msra.mxu0 0.0
        %4496 = vmatprep.subr.mxu0 0.0
        %4497 = vmatpush1.msra.mxu0 0.0
        %4498 = vmatprep.subr.mxu0 0.0
        %4499 = vmatpush1.msra.mxu0 0.0
        %4500 = vmatprep.subr.mxu0 0.0
        %4501 = vmatpush1.msra.mxu0 0.0
        %4502 = vmatprep.mubr.f32.mxu0 0.0
        %v4503 = vand.u32 %v4435, 4294901760
        %v4504 = vsub.f32 %v4435, %v4503
        %v4505 = vand.u32 %v4504, 4294901760
        %v4506 = vsub.f32 %v4504, %v4505
        %v4507 = vand.u32 %v4506, 4294901760
        %4508 = vmatmul.mubr.f32.gmra.mrb[0].mxu0 %v4507
        %v4509 = vpop.f32.mrb[0].mxu0
        %v4510 = vadd.f32 %v4431, %v4509
        %v4511 = vpop.f32.mrb[0].mxu0
        %4512 = vdwg.mxu0
        %4513 = vmatprep.subr.mxu0 0.0
        %v4514 = vand.u32 %v2136, 4294901760
        %v4515 = vsub.f32 %v2136, %v4514
        %v4516 = vand.u32 %v4515, 4294901760
        %v4517 = vsub.f32 %v4515, %v4516
        %v4518 = vand.u32 %v4517, 4294901760
        %4519 = vmatpush1.msra.mxu0 %v4518
        %4520 = vmatprep.subr.mxu0 0.0
        %4521 = vmatpush1.msra.mxu0 0.0
        %4522 = vmatprep.subr.mxu0 0.0
        %4523 = vmatpush1.msra.mxu0 0.0
        %4524 = vmatprep.subr.mxu0 0.0
        %4525 = vmatpush1.msra.mxu0 0.0
        %4526 = vmatprep.subr.mxu0 0.0
        %4527 = vmatpush1.msra.mxu0 0.0
        %4528 = vmatprep.subr.mxu0 0.0
        %4529 = vmatpush1.msra.mxu0 0.0
        %4530 = vmatprep.subr.mxu0 0.0
        %4531 = vmatpush1.msra.mxu0 0.0
        %4532 = vmatprep.subr.mxu0 0.0
        %4533 = vmatpush1.msra.mxu0 0.0
        %4534 = vmatprep.subr.mxu0 0.0
        %4535 = vmatpush1.msra.mxu0 0.0
        %4536 = vmatprep.subr.mxu0 0.0
        %4537 = vmatpush1.msra.mxu0 0.0
        %4538 = vmatprep.subr.mxu0 0.0
        %4539 = vmatpush1.msra.mxu0 0.0
        %4540 = vmatprep.subr.mxu0 0.0
        %4541 = vmatpush1.msra.mxu0 0.0
        %4542 = vmatprep.subr.mxu0 0.0
        %4543 = vmatpush1.msra.mxu0 0.0
        %4544 = vmatprep.subr.mxu0 0.0
        %4545 = vmatpush1.msra.mxu0 0.0
        %4546 = vmatprep.subr.mxu0 0.0
        %4547 = vmatpush1.msra.mxu0 0.0
        %4548 = vmatprep.subr.mxu0 0.0
        %4549 = vmatpush1.msra.mxu0 0.0
        %4550 = vmatprep.subr.mxu0 0.0
        %4551 = vmatpush1.msra.mxu0 0.0
        %4552 = vmatprep.subr.mxu0 0.0
        %4553 = vmatpush1.msra.mxu0 0.0
        %4554 = vmatprep.subr.mxu0 0.0
        %4555 = vmatpush1.msra.mxu0 0.0
        %4556 = vmatprep.subr.mxu0 0.0
        %4557 = vmatpush1.msra.mxu0 0.0
        %4558 = vmatprep.subr.mxu0 0.0
        %4559 = vmatpush1.msra.mxu0 0.0
        %4560 = vmatprep.subr.mxu0 0.0
        %4561 = vmatpush1.msra.mxu0 0.0
        %4562 = vmatprep.subr.mxu0 0.0
        %4563 = vmatpush1.msra.mxu0 0.0
        %4564 = vmatprep.subr.mxu0 0.0
        %4565 = vmatpush1.msra.mxu0 0.0
        %4566 = vmatprep.subr.mxu0 0.0
        %4567 = vmatpush1.msra.mxu0 0.0
        %4568 = vmatprep.subr.mxu0 0.0
        %4569 = vmatpush1.msra.mxu0 0.0
        %4570 = vmatprep.subr.mxu0 0.0
        %4571 = vmatpush1.msra.mxu0 0.0
        %4572 = vmatprep.subr.mxu0 0.0
        %4573 = vmatpush1.msra.mxu0 0.0
        %4574 = vmatprep.subr.mxu0 0.0
        %4575 = vmatpush1.msra.mxu0 0.0
        %4576 = vmatprep.subr.mxu0 0.0
        %4577 = vmatpush1.msra.mxu0 0.0
        %4578 = vmatprep.subr.mxu0 0.0
        %4579 = vmatpush1.msra.mxu0 0.0
        %4580 = vmatprep.subr.mxu0 0.0
        %4581 = vmatpush1.msra.mxu0 0.0
        %4582 = vmatprep.mubr.f32.mxu0 0.0
        %v4583 = vand.u32 %v4435, 4294901760
        %4584 = vmatmul.mubr.f32.gmra.mrb[0].mxu0 %v4583
        %v4585 = vpop.f32.mrb[0].mxu0
        %v4586 = vadd.f32 %v4510, %v4585
        %v4587 = vpop.f32.mrb[0].mxu0
        %4588 = vdwg.mxu0
        %4589 = vmatprep.subr.mxu0 0.0
        %v4590 = vand.u32 %v2136, 4294901760
        %v4591 = vsub.f32 %v2136, %v4590
        %4592 = vmatpush1.msra.mxu0 %v4591
        %4593 = vmatprep.subr.mxu0 0.0
        %4594 = vmatpush1.msra.mxu0 0.0
        %4595 = vmatprep.subr.mxu0 0.0
        %4596 = vmatpush1.msra.mxu0 0.0
        %4597 = vmatprep.subr.mxu0 0.0
        %4598 = vmatpush1.msra.mxu0 0.0
        %4599 = vmatprep.subr.mxu0 0.0
        %4600 = vmatpush1.msra.mxu0 0.0
        %4601 = vmatprep.subr.mxu0 0.0
        %4602 = vmatpush1.msra.mxu0 0.0
        %4603 = vmatprep.subr.mxu0 0.0
        %4604 = vmatpush1.msra.mxu0 0.0
        %4605 = vmatprep.subr.mxu0 0.0
        %4606 = vmatpush1.msra.mxu0 0.0
        %4607 = vmatprep.subr.mxu0 0.0
        %4608 = vmatpush1.msra.mxu0 0.0
        %4609 = vmatprep.subr.mxu0 0.0
        %4610 = vmatpush1.msra.mxu0 0.0
        %4611 = vmatprep.subr.mxu0 0.0
        %4612 = vmatpush1.msra.mxu0 0.0
        %4613 = vmatprep.subr.mxu0 0.0
        %4614 = vmatpush1.msra.mxu0 0.0
        %4615 = vmatprep.subr.mxu0 0.0
        %4616 = vmatpush1.msra.mxu0 0.0
        %4617 = vmatprep.subr.mxu0 0.0
        %4618 = vmatpush1.msra.mxu0 0.0
        %4619 = vmatprep.subr.mxu0 0.0
        %4620 = vmatpush1.msra.mxu0 0.0
        %4621 = vmatprep.subr.mxu0 0.0
        %4622 = vmatpush1.msra.mxu0 0.0
        %4623 = vmatprep.subr.mxu0 0.0
        %4624 = vmatpush1.msra.mxu0 0.0
        %4625 = vmatprep.subr.mxu0 0.0
        %4626 = vmatpush1.msra.mxu0 0.0
        %4627 = vmatprep.subr.mxu0 0.0
        %4628 = vmatpush1.msra.mxu0 0.0
        %4629 = vmatprep.subr.mxu0 0.0
        %4630 = vmatpush1.msra.mxu0 0.0
        %4631 = vmatprep.subr.mxu0 0.0
        %4632 = vmatpush1.msra.mxu0 0.0
        %4633 = vmatprep.subr.mxu0 0.0
        %4634 = vmatpush1.msra.mxu0 0.0
        %4635 = vmatprep.subr.mxu0 0.0
        %4636 = vmatpush1.msra.mxu0 0.0
        %4637 = vmatprep.subr.mxu0 0.0
        %4638 = vmatpush1.msra.mxu0 0.0
        %4639 = vmatprep.subr.mxu0 0.0
        %4640 = vmatpush1.msra.mxu0 0.0
        %4641 = vmatprep.subr.mxu0 0.0
        %4642 = vmatpush1.msra.mxu0 0.0
        %4643 = vmatprep.subr.mxu0 0.0
        %4644 = vmatpush1.msra.mxu0 0.0
        %4645 = vmatprep.subr.mxu0 0.0
        %4646 = vmatpush1.msra.mxu0 0.0
        %4647 = vmatprep.subr.mxu0 0.0
        %4648 = vmatpush1.msra.mxu0 0.0
        %4649 = vmatprep.subr.mxu0 0.0
        %4650 = vmatpush1.msra.mxu0 0.0
        %4651 = vmatprep.subr.mxu0 0.0
        %4652 = vmatpush1.msra.mxu0 0.0
        %4653 = vmatprep.subr.mxu0 0.0
        %4654 = vmatpush1.msra.mxu0 0.0
        %4655 = vmatprep.mubr.f32.mxu0 0.0
        %v4656 = vand.u32 %v4435, 4294901760
        %v4657 = vsub.f32 %v4435, %v4656
        %4658 = vmatmul.mubr.f32.gmra.mrb[0].mxu0 %v4657
        %v4659 = vpop.f32.mrb[0].mxu0
        %v4660 = vadd.f32 %v4586, %v4659
        %v4661 = vpop.f32.mrb[0].mxu0
        %4662 = vdwg.mxu0
        %4663 = vmatprep.subr.mxu0 0.0
        %v4664 = vand.u32 %v2136, 4294901760
        %4665 = vmatpush1.msra.mxu0 %v4664
        %4666 = vmatprep.subr.mxu0 0.0
        %4667 = vmatpush1.msra.mxu0 0.0
        %4668 = vmatprep.subr.mxu0 0.0
        %4669 = vmatpush1.msra.mxu0 0.0
        %4670 = vmatprep.subr.mxu0 0.0
        %4671 = vmatpush1.msra.mxu0 0.0
        %4672 = vmatprep.subr.mxu0 0.0
        %4673 = vmatpush1.msra.mxu0 0.0
        %4674 = vmatprep.subr.mxu0 0.0
        %4675 = vmatpush1.msra.mxu0 0.0
        %4676 = vmatprep.subr.mxu0 0.0
        %4677 = vmatpush1.msra.mxu0 0.0
        %4678 = vmatprep.subr.mxu0 0.0
        %4679 = vmatpush1.msra.mxu0 0.0
        %4680 = vmatprep.subr.mxu0 0.0
        %4681 = vmatpush1.msra.mxu0 0.0
        %4682 = vmatprep.subr.mxu0 0.0
        %4683 = vmatpush1.msra.mxu0 0.0
        %4684 = vmatprep.subr.mxu0 0.0
        %4685 = vmatpush1.msra.mxu0 0.0
        %4686 = vmatprep.subr.mxu0 0.0
        %4687 = vmatpush1.msra.mxu0 0.0
        %4688 = vmatprep.subr.mxu0 0.0
        %4689 = vmatpush1.msra.mxu0 0.0
        %4690 = vmatprep.subr.mxu0 0.0
        %4691 = vmatpush1.msra.mxu0 0.0
        %4692 = vmatprep.subr.mxu0 0.0
        %4693 = vmatpush1.msra.mxu0 0.0
        %4694 = vmatprep.subr.mxu0 0.0
        %4695 = vmatpush1.msra.mxu0 0.0
        %4696 = vmatprep.subr.mxu0 0.0
        %4697 = vmatpush1.msra.mxu0 0.0
        %4698 = vmatprep.subr.mxu0 0.0
        %4699 = vmatpush1.msra.mxu0 0.0
        %4700 = vmatprep.subr.mxu0 0.0
        %4701 = vmatpush1.msra.mxu0 0.0
        %4702 = vmatprep.subr.mxu0 0.0
        %4703 = vmatpush1.msra.mxu0 0.0
        %4704 = vmatprep.subr.mxu0 0.0
        %4705 = vmatpush1.msra.mxu0 0.0
        %4706 = vmatprep.subr.mxu0 0.0
        %4707 = vmatpush1.msra.mxu0 0.0
        %4708 = vmatprep.subr.mxu0 0.0
        %4709 = vmatpush1.msra.mxu0 0.0
        %4710 = vmatprep.subr.mxu0 0.0
        %4711 = vmatpush1.msra.mxu0 0.0
        %4712 = vmatprep.subr.mxu0 0.0
        %4713 = vmatpush1.msra.mxu0 0.0
        %4714 = vmatprep.subr.mxu0 0.0
        %4715 = vmatpush1.msra.mxu0 0.0
        %4716 = vmatprep.subr.mxu0 0.0
        %4717 = vmatpush1.msra.mxu0 0.0
        %4718 = vmatprep.subr.mxu0 0.0
        %4719 = vmatpush1.msra.mxu0 0.0
        %4720 = vmatprep.subr.mxu0 0.0
        %4721 = vmatpush1.msra.mxu0 0.0
        %4722 = vmatprep.subr.mxu0 0.0
        %4723 = vmatpush1.msra.mxu0 0.0
        %4724 = vmatprep.subr.mxu0 0.0
        %4725 = vmatpush1.msra.mxu0 0.0
        %4726 = vmatprep.subr.mxu0 0.0
        %4727 = vmatpush1.msra.mxu0 0.0
        %4728 = vmatprep.mubr.f32.mxu0 0.0
        %v4729 = vand.u32 %v4435, 4294901760
        %v4730 = vsub.f32 %v4435, %v4729
        %v4731 = vand.u32 %v4730, 4294901760
        %4732 = vmatmul.mubr.f32.gmra.mrb[0].mxu0 %v4731
        %v4733 = vpop.f32.mrb[0].mxu0
        %v4734 = vadd.f32 %v4660, %v4733
        %v4735 = vpop.f32.mrb[0].mxu0
        %4736 = vdwg.mxu0
        %4737 = vmatprep.subr.mxu0 0.0
        %v4738 = vand.u32 %v2136, 4294901760
        %v4739 = vsub.f32 %v2136, %v4738
        %v4740 = vand.u32 %v4739, 4294901760
        %4741 = vmatpush1.msra.mxu0 %v4740
        %4742 = vmatprep.subr.mxu0 0.0
        %4743 = vmatpush1.msra.mxu0 0.0
        %4744 = vmatprep.subr.mxu0 0.0
        %4745 = vmatpush1.msra.mxu0 0.0
        %4746 = vmatprep.subr.mxu0 0.0
        %4747 = vmatpush1.msra.mxu0 0.0
        %4748 = vmatprep.subr.mxu0 0.0
        %4749 = vmatpush1.msra.mxu0 0.0
        %4750 = vmatprep.subr.mxu0 0.0
        %4751 = vmatpush1.msra.mxu0 0.0
        %4752 = vmatprep.subr.mxu0 0.0
        %4753 = vmatpush1.msra.mxu0 0.0
        %4754 = vmatprep.subr.mxu0 0.0
        %4755 = vmatpush1.msra.mxu0 0.0
        %4756 = vmatprep.subr.mxu0 0.0
        %4757 = vmatpush1.msra.mxu0 0.0
        %4758 = vmatprep.subr.mxu0 0.0
        %4759 = vmatpush1.msra.mxu0 0.0
        %4760 = vmatprep.subr.mxu0 0.0
        %4761 = vmatpush1.msra.mxu0 0.0
        %4762 = vmatprep.subr.mxu0 0.0
        %4763 = vmatpush1.msra.mxu0 0.0
        %4764 = vmatprep.subr.mxu0 0.0
        %4765 = vmatpush1.msra.mxu0 0.0
        %4766 = vmatprep.subr.mxu0 0.0
        %4767 = vmatpush1.msra.mxu0 0.0
        %4768 = vmatprep.subr.mxu0 0.0
        %4769 = vmatpush1.msra.mxu0 0.0
        %4770 = vmatprep.subr.mxu0 0.0
        %4771 = vmatpush1.msra.mxu0 0.0
        %4772 = vmatprep.subr.mxu0 0.0
        %4773 = vmatpush1.msra.mxu0 0.0
        %4774 = vmatprep.subr.mxu0 0.0
        %4775 = vmatpush1.msra.mxu0 0.0
        %4776 = vmatprep.subr.mxu0 0.0
        %4777 = vmatpush1.msra.mxu0 0.0
        %4778 = vmatprep.subr.mxu0 0.0
        %4779 = vmatpush1.msra.mxu0 0.0
        %4780 = vmatprep.subr.mxu0 0.0
        %4781 = vmatpush1.msra.mxu0 0.0
        %4782 = vmatprep.subr.mxu0 0.0
        %4783 = vmatpush1.msra.mxu0 0.0
        %4784 = vmatprep.subr.mxu0 0.0
        %4785 = vmatpush1.msra.mxu0 0.0
        %4786 = vmatprep.subr.mxu0 0.0
        %4787 = vmatpush1.msra.mxu0 0.0
        %4788 = vmatprep.subr.mxu0 0.0
        %4789 = vmatpush1.msra.mxu0 0.0
        %4790 = vmatprep.subr.mxu0 0.0
        %4791 = vmatpush1.msra.mxu0 0.0
        %4792 = vmatprep.subr.mxu0 0.0
        %4793 = vmatpush1.msra.mxu0 0.0
        %4794 = vmatprep.subr.mxu0 0.0
        %4795 = vmatpush1.msra.mxu0 0.0
        %4796 = vmatprep.subr.mxu0 0.0
        %4797 = vmatpush1.msra.mxu0 0.0
        %4798 = vmatprep.subr.mxu0 0.0
        %4799 = vmatpush1.msra.mxu0 0.0
        %4800 = vmatprep.subr.mxu0 0.0
        %4801 = vmatpush1.msra.mxu0 0.0
        %4802 = vmatprep.subr.mxu0 0.0
        %4803 = vmatpush1.msra.mxu0 0.0
        %4804 = vmatprep.mubr.f32.mxu0 0.0
        %v4805 = vand.u32 %v4435, 4294901760
        %4806 = vmatmul.mubr.f32.gmra.mrb[0].mxu0 %v4805
        %v4807 = vpop.f32.mrb[0].mxu0
        %v4808 = vadd.f32 %v4734, %v4807
        %v4809 = vpop.f32.mrb[0].mxu0
        %4810 = vdwg.mxu0
        %4811 = vmatprep.subr.mxu0 0.0
        %v4812 = vand.u32 %v2136, 4294901760
        %4813 = vmatpush1.msra.mxu0 %v4812
        %4814 = vmatprep.subr.mxu0 0.0
        %4815 = vmatpush1.msra.mxu0 0.0
        %4816 = vmatprep.subr.mxu0 0.0
        %4817 = vmatpush1.msra.mxu0 0.0
        %4818 = vmatprep.subr.mxu0 0.0
        %4819 = vmatpush1.msra.mxu0 0.0
        %4820 = vmatprep.subr.mxu0 0.0
        %4821 = vmatpush1.msra.mxu0 0.0
        %4822 = vmatprep.subr.mxu0 0.0
        %4823 = vmatpush1.msra.mxu0 0.0
        %4824 = vmatprep.subr.mxu0 0.0
        %4825 = vmatpush1.msra.mxu0 0.0
        %4826 = vmatprep.subr.mxu0 0.0
        %4827 = vmatpush1.msra.mxu0 0.0
        %4828 = vmatprep.subr.mxu0 0.0
        %4829 = vmatpush1.msra.mxu0 0.0
        %4830 = vmatprep.subr.mxu0 0.0
        %4831 = vmatpush1.msra.mxu0 0.0
        %4832 = vmatprep.subr.mxu0 0.0
        %4833 = vmatpush1.msra.mxu0 0.0
        %4834 = vmatprep.subr.mxu0 0.0
        %4835 = vmatpush1.msra.mxu0 0.0
        %4836 = vmatprep.subr.mxu0 0.0
        %4837 = vmatpush1.msra.mxu0 0.0
        %4838 = vmatprep.subr.mxu0 0.0
        %4839 = vmatpush1.msra.mxu0 0.0
        %4840 = vmatprep.subr.mxu0 0.0
        %4841 = vmatpush1.msra.mxu0 0.0
        %4842 = vmatprep.subr.mxu0 0.0
        %4843 = vmatpush1.msra.mxu0 0.0
        %4844 = vmatprep.subr.mxu0 0.0
        %4845 = vmatpush1.msra.mxu0 0.0
        %4846 = vmatprep.subr.mxu0 0.0
        %4847 = vmatpush1.msra.mxu0 0.0
        %4848 = vmatprep.subr.mxu0 0.0
        %4849 = vmatpush1.msra.mxu0 0.0
        %4850 = vmatprep.subr.mxu0 0.0
        %4851 = vmatpush1.msra.mxu0 0.0
        %4852 = vmatprep.subr.mxu0 0.0
        %4853 = vmatpush1.msra.mxu0 0.0
        %4854 = vmatprep.subr.mxu0 0.0
        %4855 = vmatpush1.msra.mxu0 0.0
        %4856 = vmatprep.subr.mxu0 0.0
        %4857 = vmatpush1.msra.mxu0 0.0
        %4858 = vmatprep.subr.mxu0 0.0
        %4859 = vmatpush1.msra.mxu0 0.0
        %4860 = vmatprep.subr.mxu0 0.0
        %4861 = vmatpush1.msra.mxu0 0.0
        %4862 = vmatprep.subr.mxu0 0.0
        %4863 = vmatpush1.msra.mxu0 0.0
        %4864 = vmatprep.subr.mxu0 0.0
        %4865 = vmatpush1.msra.mxu0 0.0
        %4866 = vmatprep.subr.mxu0 0.0
        %4867 = vmatpush1.msra.mxu0 0.0
        %4868 = vmatprep.subr.mxu0 0.0
        %4869 = vmatpush1.msra.mxu0 0.0
        %4870 = vmatprep.subr.mxu0 0.0
        %4871 = vmatpush1.msra.mxu0 0.0
        %4872 = vmatprep.subr.mxu0 0.0
        %4873 = vmatpush1.msra.mxu0 0.0
        %4874 = vmatprep.subr.mxu0 0.0
        %4875 = vmatpush1.msra.mxu0 0.0
        %4876 = vmatprep.mubr.f32.mxu0 0.0
        %v4877 = vand.u32 %v4435, 4294901760
        %4878 = vmatmul.mubr.f32.gmra.mrb[0].mxu0 %v4877
        %v4879 = vpop.f32.mrb[0].mxu0
        %v4880 = vadd.f32 %v4808, %v4879
        %v4881 = vpop.f32.mrb[0].mxu0
        %4882 = vdwg.mxu0
        %4883 = vrot.lane.b32.xlu0 %v1128, 112
        %v4884 = vpop.permute.xlu0 %4883
        %4885 = vrot.lane.b32.xlu0 %v1628, 112
        %v4886 = vpop.permute.xlu0 %4885
        %v4887 = vsel %vm2146, %v4884, 0
        %v4889 = vsel %vm2146, %v4886, 0
        %4891 = vmatprep.subr.mxu0 0.0
        %v4892 = vand.u32 %v4889, 4294901760
        %4893 = vmatpush1.xpose.msra.mxu0 %v4892
        %4894 = vmatprep.subr.mxu0 0.0
        %4895 = vmatpush1.xpose.msra.mxu0 0.0
        %4896 = vmatprep.subr.mxu0 0.0
        %4897 = vmatpush1.xpose.msra.mxu0 0.0
        %4898 = vmatprep.subr.mxu0 0.0
        %4899 = vmatpush1.xpose.msra.mxu0 0.0
        %4900 = vmatprep.subr.mxu0 0.0
        %4901 = vmatpush1.xpose.msra.mxu0 0.0
        %4902 = vmatprep.subr.mxu0 0.0
        %4903 = vmatpush1.xpose.msra.mxu0 0.0
        %4904 = vmatprep.subr.mxu0 0.0
        %4905 = vmatpush1.xpose.msra.mxu0 0.0
        %4906 = vmatprep.subr.mxu0 0.0
        %4907 = vmatpush1.xpose.msra.mxu0 0.0
        %4908 = vmatprep.subr.mxu0 0.0
        %4909 = vmatpush1.xpose.msra.mxu0 0.0
        %4910 = vmatprep.subr.mxu0 0.0
        %4911 = vmatpush1.xpose.msra.mxu0 0.0
        %4912 = vmatprep.subr.mxu0 0.0
        %4913 = vmatpush1.xpose.msra.mxu0 0.0
        %4914 = vmatprep.subr.mxu0 0.0
        %4915 = vmatpush1.xpose.msra.mxu0 0.0
        %4916 = vmatprep.subr.mxu0 0.0
        %4917 = vmatpush1.xpose.msra.mxu0 0.0
        %4918 = vmatprep.subr.mxu0 0.0
        %4919 = vmatpush1.xpose.msra.mxu0 0.0
        %4920 = vmatprep.subr.mxu0 0.0
        %4921 = vmatpush1.xpose.msra.mxu0 0.0
        %4922 = vmatprep.subr.mxu0 0.0
        %4923 = vmatpush1.xpose.msra.mxu0 0.0
        %4924 = vmatprep.subr.mxu0 0.0
        %4925 = vmatpush1.xpose.msra.mxu0 0.0
        %4926 = vmatprep.subr.mxu0 0.0
        %4927 = vmatpush1.xpose.msra.mxu0 0.0
        %4928 = vmatprep.subr.mxu0 0.0
        %4929 = vmatpush1.xpose.msra.mxu0 0.0
        %4930 = vmatprep.subr.mxu0 0.0
        %4931 = vmatpush1.xpose.msra.mxu0 0.0
        %4932 = vmatprep.subr.mxu0 0.0
        %4933 = vmatpush1.xpose.msra.mxu0 0.0
        %4934 = vmatprep.subr.mxu0 0.0
        %4935 = vmatpush1.xpose.msra.mxu0 0.0
        %4936 = vmatprep.subr.mxu0 0.0
        %4937 = vmatpush1.xpose.msra.mxu0 0.0
        %4938 = vmatprep.subr.mxu0 0.0
        %4939 = vmatpush1.xpose.msra.mxu0 0.0
        %4940 = vmatprep.subr.mxu0 0.0
        %4941 = vmatpush1.xpose.msra.mxu0 0.0
        %4942 = vmatprep.subr.mxu0 0.0
        %4943 = vmatpush1.xpose.msra.mxu0 0.0
        %4944 = vmatprep.subr.mxu0 0.0
        %4945 = vmatpush1.xpose.msra.mxu0 0.0
        %4946 = vmatprep.subr.mxu0 0.0
        %4947 = vmatpush1.xpose.msra.mxu0 0.0
        %4948 = vmatprep.subr.mxu0 0.0
        %4949 = vmatpush1.xpose.msra.mxu0 0.0
        %4950 = vmatprep.subr.mxu0 0.0
        %4951 = vmatpush1.xpose.msra.mxu0 0.0
        %4952 = vmatprep.subr.mxu0 0.0
        %4953 = vmatpush1.xpose.msra.mxu0 0.0
        %4954 = vmatprep.subr.mxu0 0.0
        %4955 = vmatpush1.xpose.msra.mxu0 0.0
        %4956 = vmatprep.mubr.f32.mxu0 0.0
        %v4957 = vand.u32 %v4887, 4294901760
        %v4958 = vsub.f32 %v4887, %v4957
        %v4959 = vand.u32 %v4958, 4294901760
        %v4960 = vsub.f32 %v4958, %v4959
        %v4961 = vand.u32 %v4960, 4294901760
        %4962 = vmatmul.mubr.f32.gmra.mrb[0].mxu0 %v4961
        %v4963 = vpop.f32.mrb[0].mxu0
        %v4964 = vadd.f32 %v2144, %v4963
        %v4965 = vpop.f32.mrb[0].mxu0
        %4966 = vdwg.mxu0
        %4967 = vmatprep.subr.mxu0 0.0
        %v4968 = vand.u32 %v4889, 4294901760
        %v4969 = vsub.f32 %v4889, %v4968
        %v4970 = vand.u32 %v4969, 4294901760
        %v4971 = vsub.f32 %v4969, %v4970
        %v4972 = vand.u32 %v4971, 4294901760
        %4973 = vmatpush1.xpose.msra.mxu0 %v4972
        %4974 = vmatprep.subr.mxu0 0.0
        %4975 = vmatpush1.xpose.msra.mxu0 0.0
        %4976 = vmatprep.subr.mxu0 0.0
        %4977 = vmatpush1.xpose.msra.mxu0 0.0
        %4978 = vmatprep.subr.mxu0 0.0
        %4979 = vmatpush1.xpose.msra.mxu0 0.0
        %4980 = vmatprep.subr.mxu0 0.0
        %4981 = vmatpush1.xpose.msra.mxu0 0.0
        %4982 = vmatprep.subr.mxu0 0.0
        %4983 = vmatpush1.xpose.msra.mxu0 0.0
        %4984 = vmatprep.subr.mxu0 0.0
        %4985 = vmatpush1.xpose.msra.mxu0 0.0
        %4986 = vmatprep.subr.mxu0 0.0
        %4987 = vmatpush1.xpose.msra.mxu0 0.0
        %4988 = vmatprep.subr.mxu0 0.0
        %4989 = vmatpush1.xpose.msra.mxu0 0.0
        %4990 = vmatprep.subr.mxu0 0.0
        %4991 = vmatpush1.xpose.msra.mxu0 0.0
        %4992 = vmatprep.subr.mxu0 0.0
        %4993 = vmatpush1.xpose.msra.mxu0 0.0
        %4994 = vmatprep.subr.mxu0 0.0
        %4995 = vmatpush1.xpose.msra.mxu0 0.0
        %4996 = vmatprep.subr.mxu0 0.0
        %4997 = vmatpush1.xpose.msra.mxu0 0.0
        %4998 = vmatprep.subr.mxu0 0.0
        %4999 = vmatpush1.xpose.msra.mxu0 0.0
        %5000 = vmatprep.subr.mxu0 0.0
        %5001 = vmatpush1.xpose.msra.mxu0 0.0
        %5002 = vmatprep.subr.mxu0 0.0
        %5003 = vmatpush1.xpose.msra.mxu0 0.0
        %5004 = vmatprep.subr.mxu0 0.0
        %5005 = vmatpush1.xpose.msra.mxu0 0.0
        %5006 = vmatprep.subr.mxu0 0.0
        %5007 = vmatpush1.xpose.msra.mxu0 0.0
        %5008 = vmatprep.subr.mxu0 0.0
        %5009 = vmatpush1.xpose.msra.mxu0 0.0
        %5010 = vmatprep.subr.mxu0 0.0
        %5011 = vmatpush1.xpose.msra.mxu0 0.0
        %5012 = vmatprep.subr.mxu0 0.0
        %5013 = vmatpush1.xpose.msra.mxu0 0.0
        %5014 = vmatprep.subr.mxu0 0.0
        %5015 = vmatpush1.xpose.msra.mxu0 0.0
        %5016 = vmatprep.subr.mxu0 0.0
        %5017 = vmatpush1.xpose.msra.mxu0 0.0
        %5018 = vmatprep.subr.mxu0 0.0
        %5019 = vmatpush1.xpose.msra.mxu0 0.0
        %5020 = vmatprep.subr.mxu0 0.0
        %5021 = vmatpush1.xpose.msra.mxu0 0.0
        %5022 = vmatprep.subr.mxu0 0.0
        %5023 = vmatpush1.xpose.msra.mxu0 0.0
        %5024 = vmatprep.subr.mxu0 0.0
        %5025 = vmatpush1.xpose.msra.mxu0 0.0
        %5026 = vmatprep.subr.mxu0 0.0
        %5027 = vmatpush1.xpose.msra.mxu0 0.0
        %5028 = vmatprep.subr.mxu0 0.0
        %5029 = vmatpush1.xpose.msra.mxu0 0.0
        %5030 = vmatprep.subr.mxu0 0.0
        %5031 = vmatpush1.xpose.msra.mxu0 0.0
        %5032 = vmatprep.subr.mxu0 0.0
        %5033 = vmatpush1.xpose.msra.mxu0 0.0
        %5034 = vmatprep.subr.mxu0 0.0
        %5035 = vmatpush1.xpose.msra.mxu0 0.0
        %5036 = vmatprep.mubr.f32.mxu0 0.0
        %v5037 = vand.u32 %v4887, 4294901760
        %5038 = vmatmul.mubr.f32.gmra.mrb[0].mxu0 %v5037
        %v5039 = vpop.f32.mrb[0].mxu0
        %v5040 = vadd.f32 %v4964, %v5039
        %v5041 = vpop.f32.mrb[0].mxu0
        %5042 = vdwg.mxu0
        %5043 = vmatprep.subr.mxu0 0.0
        %v5044 = vand.u32 %v4889, 4294901760
        %v5045 = vsub.f32 %v4889, %v5044
        %5046 = vmatpush1.xpose.msra.mxu0 %v5045
        %5047 = vmatprep.subr.mxu0 0.0
        %5048 = vmatpush1.xpose.msra.mxu0 0.0
        %5049 = vmatprep.subr.mxu0 0.0
        %5050 = vmatpush1.xpose.msra.mxu0 0.0
        %5051 = vmatprep.subr.mxu0 0.0
        %5052 = vmatpush1.xpose.msra.mxu0 0.0
        %5053 = vmatprep.subr.mxu0 0.0
        %5054 = vmatpush1.xpose.msra.mxu0 0.0
        %5055 = vmatprep.subr.mxu0 0.0
        %5056 = vmatpush1.xpose.msra.mxu0 0.0
        %5057 = vmatprep.subr.mxu0 0.0
        %5058 = vmatpush1.xpose.msra.mxu0 0.0
        %5059 = vmatprep.subr.mxu0 0.0
        %5060 = vmatpush1.xpose.msra.mxu0 0.0
        %5061 = vmatprep.subr.mxu0 0.0
        %5062 = vmatpush1.xpose.msra.mxu0 0.0
        %5063 = vmatprep.subr.mxu0 0.0
        %5064 = vmatpush1.xpose.msra.mxu0 0.0
        %5065 = vmatprep.subr.mxu0 0.0
        %5066 = vmatpush1.xpose.msra.mxu0 0.0
        %5067 = vmatprep.subr.mxu0 0.0
        %5068 = vmatpush1.xpose.msra.mxu0 0.0
        %5069 = vmatprep.subr.mxu0 0.0
        %5070 = vmatpush1.xpose.msra.mxu0 0.0
        %5071 = vmatprep.subr.mxu0 0.0
        %5072 = vmatpush1.xpose.msra.mxu0 0.0
        %5073 = vmatprep.subr.mxu0 0.0
        %5074 = vmatpush1.xpose.msra.mxu0 0.0
        %5075 = vmatprep.subr.mxu0 0.0
        %5076 = vmatpush1.xpose.msra.mxu0 0.0
        %5077 = vmatprep.subr.mxu0 0.0
        %5078 = vmatpush1.xpose.msra.mxu0 0.0
        %5079 = vmatprep.subr.mxu0 0.0
        %5080 = vmatpush1.xpose.msra.mxu0 0.0
        %5081 = vmatprep.subr.mxu0 0.0
        %5082 = vmatpush1.xpose.msra.mxu0 0.0
        %5083 = vmatprep.subr.mxu0 0.0
        %5084 = vmatpush1.xpose.msra.mxu0 0.0
        %5085 = vmatprep.subr.mxu0 0.0
        %5086 = vmatpush1.xpose.msra.mxu0 0.0
        %5087 = vmatprep.subr.mxu0 0.0
        %5088 = vmatpush1.xpose.msra.mxu0 0.0
        %5089 = vmatprep.subr.mxu0 0.0
        %5090 = vmatpush1.xpose.msra.mxu0 0.0
        %5091 = vmatprep.subr.mxu0 0.0
        %5092 = vmatpush1.xpose.msra.mxu0 0.0
        %5093 = vmatprep.subr.mxu0 0.0
        %5094 = vmatpush1.xpose.msra.mxu0 0.0
        %5095 = vmatprep.subr.mxu0 0.0
        %5096 = vmatpush1.xpose.msra.mxu0 0.0
        %5097 = vmatprep.subr.mxu0 0.0
        %5098 = vmatpush1.xpose.msra.mxu0 0.0
        %5099 = vmatprep.subr.mxu0 0.0
        %5100 = vmatpush1.xpose.msra.mxu0 0.0
        %5101 = vmatprep.subr.mxu0 0.0
        %5102 = vmatpush1.xpose.msra.mxu0 0.0
        %5103 = vmatprep.subr.mxu0 0.0
        %5104 = vmatpush1.xpose.msra.mxu0 0.0
        %5105 = vmatprep.subr.mxu0 0.0
        %5106 = vmatpush1.xpose.msra.mxu0 0.0
        %5107 = vmatprep.subr.mxu0 0.0
        %5108 = vmatpush1.xpose.msra.mxu0 0.0
        %5109 = vmatprep.mubr.f32.mxu0 0.0
        %v5110 = vand.u32 %v4887, 4294901760
        %v5111 = vsub.f32 %v4887, %v5110
        %5112 = vmatmul.mubr.f32.gmra.mrb[0].mxu0 %v5111
        %v5113 = vpop.f32.mrb[0].mxu0
        %v5114 = vadd.f32 %v5040, %v5113
        %v5115 = vpop.f32.mrb[0].mxu0
        %5116 = vdwg.mxu0
        %5117 = vmatprep.subr.mxu0 0.0
        %v5118 = vand.u32 %v4889, 4294901760
        %5119 = vmatpush1.xpose.msra.mxu0 %v5118
        %5120 = vmatprep.subr.mxu0 0.0
        %5121 = vmatpush1.xpose.msra.mxu0 0.0
        %5122 = vmatprep.subr.mxu0 0.0
        %5123 = vmatpush1.xpose.msra.mxu0 0.0
        %5124 = vmatprep.subr.mxu0 0.0
        %5125 = vmatpush1.xpose.msra.mxu0 0.0
        %5126 = vmatprep.subr.mxu0 0.0
        %5127 = vmatpush1.xpose.msra.mxu0 0.0
        %5128 = vmatprep.subr.mxu0 0.0
        %5129 = vmatpush1.xpose.msra.mxu0 0.0
        %5130 = vmatprep.subr.mxu0 0.0
        %5131 = vmatpush1.xpose.msra.mxu0 0.0
        %5132 = vmatprep.subr.mxu0 0.0
        %5133 = vmatpush1.xpose.msra.mxu0 0.0
        %5134 = vmatprep.subr.mxu0 0.0
        %5135 = vmatpush1.xpose.msra.mxu0 0.0
        %5136 = vmatprep.subr.mxu0 0.0
        %5137 = vmatpush1.xpose.msra.mxu0 0.0
        %5138 = vmatprep.subr.mxu0 0.0
        %5139 = vmatpush1.xpose.msra.mxu0 0.0
        %5140 = vmatprep.subr.mxu0 0.0
        %5141 = vmatpush1.xpose.msra.mxu0 0.0
        %5142 = vmatprep.subr.mxu0 0.0
        %5143 = vmatpush1.xpose.msra.mxu0 0.0
        %5144 = vmatprep.subr.mxu0 0.0
        %5145 = vmatpush1.xpose.msra.mxu0 0.0
        %5146 = vmatprep.subr.mxu0 0.0
        %5147 = vmatpush1.xpose.msra.mxu0 0.0
        %5148 = vmatprep.subr.mxu0 0.0
        %5149 = vmatpush1.xpose.msra.mxu0 0.0
        %5150 = vmatprep.subr.mxu0 0.0
        %5151 = vmatpush1.xpose.msra.mxu0 0.0
        %5152 = vmatprep.subr.mxu0 0.0
        %5153 = vmatpush1.xpose.msra.mxu0 0.0
        %5154 = vmatprep.subr.mxu0 0.0
        %5155 = vmatpush1.xpose.msra.mxu0 0.0
        %5156 = vmatprep.subr.mxu0 0.0
        %5157 = vmatpush1.xpose.msra.mxu0 0.0
        %5158 = vmatprep.subr.mxu0 0.0
        %5159 = vmatpush1.xpose.msra.mxu0 0.0
        %5160 = vmatprep.subr.mxu0 0.0
        %5161 = vmatpush1.xpose.msra.mxu0 0.0
        %5162 = vmatprep.subr.mxu0 0.0
        %5163 = vmatpush1.xpose.msra.mxu0 0.0
        %5164 = vmatprep.subr.mxu0 0.0
        %5165 = vmatpush1.xpose.msra.mxu0 0.0
        %5166 = vmatprep.subr.mxu0 0.0
        %5167 = vmatpush1.xpose.msra.mxu0 0.0
        %5168 = vmatprep.subr.mxu0 0.0
        %5169 = vmatpush1.xpose.msra.mxu0 0.0
        %5170 = vmatprep.subr.mxu0 0.0
        %5171 = vmatpush1.xpose.msra.mxu0 0.0
        %5172 = vmatprep.subr.mxu0 0.0
        %5173 = vmatpush1.xpose.msra.mxu0 0.0
        %5174 = vmatprep.subr.mxu0 0.0
        %5175 = vmatpush1.xpose.msra.mxu0 0.0
        %5176 = vmatprep.subr.mxu0 0.0
        %5177 = vmatpush1.xpose.msra.mxu0 0.0
        %5178 = vmatprep.subr.mxu0 0.0
        %5179 = vmatpush1.xpose.msra.mxu0 0.0
        %5180 = vmatprep.subr.mxu0 0.0
        %5181 = vmatpush1.xpose.msra.mxu0 0.0
        %5182 = vmatprep.mubr.f32.mxu0 0.0
        %v5183 = vand.u32 %v4887, 4294901760
        %v5184 = vsub.f32 %v4887, %v5183
        %v5185 = vand.u32 %v5184, 4294901760
        %5186 = vmatmul.mubr.f32.gmra.mrb[0].mxu0 %v5185
        %v5187 = vpop.f32.mrb[0].mxu0
        %v5188 = vadd.f32 %v5114, %v5187
        %v5189 = vpop.f32.mrb[0].mxu0
        %5190 = vdwg.mxu0
        %5191 = vmatprep.subr.mxu0 0.0
        %v5192 = vand.u32 %v4889, 4294901760
        %v5193 = vsub.f32 %v4889, %v5192
        %v5194 = vand.u32 %v5193, 4294901760
        %5195 = vmatpush1.xpose.msra.mxu0 %v5194
        %5196 = vmatprep.subr.mxu0 0.0
        %5197 = vmatpush1.xpose.msra.mxu0 0.0
        %5198 = vmatprep.subr.mxu0 0.0
        %5199 = vmatpush1.xpose.msra.mxu0 0.0
        %5200 = vmatprep.subr.mxu0 0.0
        %5201 = vmatpush1.xpose.msra.mxu0 0.0
        %5202 = vmatprep.subr.mxu0 0.0
        %5203 = vmatpush1.xpose.msra.mxu0 0.0
        %5204 = vmatprep.subr.mxu0 0.0
        %5205 = vmatpush1.xpose.msra.mxu0 0.0
        %5206 = vmatprep.subr.mxu0 0.0
        %5207 = vmatpush1.xpose.msra.mxu0 0.0
        %5208 = vmatprep.subr.mxu0 0.0
        %5209 = vmatpush1.xpose.msra.mxu0 0.0
        %5210 = vmatprep.subr.mxu0 0.0
        %5211 = vmatpush1.xpose.msra.mxu0 0.0
        %5212 = vmatprep.subr.mxu0 0.0
        %5213 = vmatpush1.xpose.msra.mxu0 0.0
        %5214 = vmatprep.subr.mxu0 0.0
        %5215 = vmatpush1.xpose.msra.mxu0 0.0
        %5216 = vmatprep.subr.mxu0 0.0
        %5217 = vmatpush1.xpose.msra.mxu0 0.0
        %5218 = vmatprep.subr.mxu0 0.0
        %5219 = vmatpush1.xpose.msra.mxu0 0.0
        %5220 = vmatprep.subr.mxu0 0.0
        %5221 = vmatpush1.xpose.msra.mxu0 0.0
        %5222 = vmatprep.subr.mxu0 0.0
        %5223 = vmatpush1.xpose.msra.mxu0 0.0
        %5224 = vmatprep.subr.mxu0 0.0
        %5225 = vmatpush1.xpose.msra.mxu0 0.0
        %5226 = vmatprep.subr.mxu0 0.0
        %5227 = vmatpush1.xpose.msra.mxu0 0.0
        %5228 = vmatprep.subr.mxu0 0.0
        %5229 = vmatpush1.xpose.msra.mxu0 0.0
        %5230 = vmatprep.subr.mxu0 0.0
        %5231 = vmatpush1.xpose.msra.mxu0 0.0
        %5232 = vmatprep.subr.mxu0 0.0
        %5233 = vmatpush1.xpose.msra.mxu0 0.0
        %5234 = vmatprep.subr.mxu0 0.0
        %5235 = vmatpush1.xpose.msra.mxu0 0.0
        %5236 = vmatprep.subr.mxu0 0.0
        %5237 = vmatpush1.xpose.msra.mxu0 0.0
        %5238 = vmatprep.subr.mxu0 0.0
        %5239 = vmatpush1.xpose.msra.mxu0 0.0
        %5240 = vmatprep.subr.mxu0 0.0
        %5241 = vmatpush1.xpose.msra.mxu0 0.0
        %5242 = vmatprep.subr.mxu0 0.0
        %5243 = vmatpush1.xpose.msra.mxu0 0.0
        %5244 = vmatprep.subr.mxu0 0.0
        %5245 = vmatpush1.xpose.msra.mxu0 0.0
        %5246 = vmatprep.subr.mxu0 0.0
        %5247 = vmatpush1.xpose.msra.mxu0 0.0
        %5248 = vmatprep.subr.mxu0 0.0
        %5249 = vmatpush1.xpose.msra.mxu0 0.0
        %5250 = vmatprep.subr.mxu0 0.0
        %5251 = vmatpush1.xpose.msra.mxu0 0.0
        %5252 = vmatprep.subr.mxu0 0.0
        %5253 = vmatpush1.xpose.msra.mxu0 0.0
        %5254 = vmatprep.subr.mxu0 0.0
        %5255 = vmatpush1.xpose.msra.mxu0 0.0
        %5256 = vmatprep.subr.mxu0 0.0
        %5257 = vmatpush1.xpose.msra.mxu0 0.0
        %5258 = vmatprep.mubr.f32.mxu0 0.0
        %v5259 = vand.u32 %v4887, 4294901760
        %5260 = vmatmul.mubr.f32.gmra.mrb[0].mxu0 %v5259
        %v5261 = vpop.f32.mrb[0].mxu0
        %v5262 = vadd.f32 %v5188, %v5261
        %v5263 = vpop.f32.mrb[0].mxu0
        %5264 = vdwg.mxu0
        %5265 = vmatprep.subr.mxu0 0.0
        %v5266 = vand.u32 %v4889, 4294901760
        %5267 = vmatpush1.xpose.msra.mxu0 %v5266
        %5268 = vmatprep.subr.mxu0 0.0
        %5269 = vmatpush1.xpose.msra.mxu0 0.0
        %5270 = vmatprep.subr.mxu0 0.0
        %5271 = vmatpush1.xpose.msra.mxu0 0.0
        %5272 = vmatprep.subr.mxu0 0.0
        %5273 = vmatpush1.xpose.msra.mxu0 0.0
        %5274 = vmatprep.subr.mxu0 0.0
        %5275 = vmatpush1.xpose.msra.mxu0 0.0
        %5276 = vmatprep.subr.mxu0 0.0
        %5277 = vmatpush1.xpose.msra.mxu0 0.0
        %5278 = vmatprep.subr.mxu0 0.0
        %5279 = vmatpush1.xpose.msra.mxu0 0.0
        %5280 = vmatprep.subr.mxu0 0.0
        %5281 = vmatpush1.xpose.msra.mxu0 0.0
        %5282 = vmatprep.subr.mxu0 0.0
        %5283 = vmatpush1.xpose.msra.mxu0 0.0
        %5284 = vmatprep.subr.mxu0 0.0
        %5285 = vmatpush1.xpose.msra.mxu0 0.0
        %5286 = vmatprep.subr.mxu0 0.0
        %5287 = vmatpush1.xpose.msra.mxu0 0.0
        %5288 = vmatprep.subr.mxu0 0.0
        %5289 = vmatpush1.xpose.msra.mxu0 0.0
        %5290 = vmatprep.subr.mxu0 0.0
        %5291 = vmatpush1.xpose.msra.mxu0 0.0
        %5292 = vmatprep.subr.mxu0 0.0
        %5293 = vmatpush1.xpose.msra.mxu0 0.0
        %5294 = vmatprep.subr.mxu0 0.0
        %5295 = vmatpush1.xpose.msra.mxu0 0.0
        %5296 = vmatprep.subr.mxu0 0.0
        %5297 = vmatpush1.xpose.msra.mxu0 0.0
        %5298 = vmatprep.subr.mxu0 0.0
        %5299 = vmatpush1.xpose.msra.mxu0 0.0
        %5300 = vmatprep.subr.mxu0 0.0
        %5301 = vmatpush1.xpose.msra.mxu0 0.0
        %5302 = vmatprep.subr.mxu0 0.0
        %5303 = vmatpush1.xpose.msra.mxu0 0.0
        %5304 = vmatprep.subr.mxu0 0.0
        %5305 = vmatpush1.xpose.msra.mxu0 0.0
        %5306 = vmatprep.subr.mxu0 0.0
        %5307 = vmatpush1.xpose.msra.mxu0 0.0
        %5308 = vmatprep.subr.mxu0 0.0
        %5309 = vmatpush1.xpose.msra.mxu0 0.0
        %5310 = vmatprep.subr.mxu0 0.0
        %5311 = vmatpush1.xpose.msra.mxu0 0.0
        %5312 = vmatprep.subr.mxu0 0.0
        %5313 = vmatpush1.xpose.msra.mxu0 0.0
        %5314 = vmatprep.subr.mxu0 0.0
        %5315 = vmatpush1.xpose.msra.mxu0 0.0
        %5316 = vmatprep.subr.mxu0 0.0
        %5317 = vmatpush1.xpose.msra.mxu0 0.0
        %5318 = vmatprep.subr.mxu0 0.0
        %5319 = vmatpush1.xpose.msra.mxu0 0.0
        %5320 = vmatprep.subr.mxu0 0.0
        %5321 = vmatpush1.xpose.msra.mxu0 0.0
        %5322 = vmatprep.subr.mxu0 0.0
        %5323 = vmatpush1.xpose.msra.mxu0 0.0
        %5324 = vmatprep.subr.mxu0 0.0
        %5325 = vmatpush1.xpose.msra.mxu0 0.0
        %5326 = vmatprep.subr.mxu0 0.0
        %5327 = vmatpush1.xpose.msra.mxu0 0.0
        %5328 = vmatprep.subr.mxu0 0.0
        %5329 = vmatpush1.xpose.msra.mxu0 0.0
        %5330 = vmatprep.mubr.f32.mxu0 0.0
        %v5331 = vand.u32 %v4887, 4294901760
        %5332 = vmatmul.mubr.f32.gmra.mrb[0].mxu0 %v5331
        %v5333 = vpop.f32.mrb[0].mxu0
        %v5334 = vadd.f32 %v5262, %v5333
        %v5335 = vpop.f32.mrb[0].mxu0
        %5336 = vdwg.mxu0
        %v5337 = vsel %vm2146, %v5334, -inf
        %5338 = vmax.xlane.f32.xlu0 %v5337
        %v5339 = vpop.xlane.xlu0 %5338
        %v5340 = vsub.f32 %v5334, %v5339
        %v5341 = vmul.f32 %v5340, 1.442695
        %v5342 = vpow.pop %v5341
        %v5343 = vsel %vm2146, %v5342, 0.0
        %5344 = vadd.xlane.f32.xlu0 %v5343
        %v5345 = vpop.xlane.xlu0 %5344
        %v5346 = vrcp.pop %v5345
        %v5347 = vmul.f32 %v5342, %v5346
        %v5348 = vsel %vm2615, 0.0, %v5347
        %5349 = vrot.lane.b32.xlu0 %v2128, 112
        %v5350 = vpop.permute.xlu0 %5349
        %v5353 = vsel %vm2146, %v5348, 0
        %5355 = vmatprep.subr.mxu0 0.0
        %v5356 = vand.u32 %v5350, 4294901760
        %5357 = vmatpush1.msra.mxu0 %v5356
        %5358 = vmatprep.subr.mxu0 0.0
        %5359 = vmatpush1.msra.mxu0 0.0
        %5360 = vmatprep.subr.mxu0 0.0
        %5361 = vmatpush1.msra.mxu0 0.0
        %5362 = vmatprep.subr.mxu0 0.0
        %5363 = vmatpush1.msra.mxu0 0.0
        %5364 = vmatprep.subr.mxu0 0.0
        %5365 = vmatpush1.msra.mxu0 0.0
        %5366 = vmatprep.subr.mxu0 0.0
        %5367 = vmatpush1.msra.mxu0 0.0
        %5368 = vmatprep.subr.mxu0 0.0
        %5369 = vmatpush1.msra.mxu0 0.0
        %5370 = vmatprep.subr.mxu0 0.0
        %5371 = vmatpush1.msra.mxu0 0.0
        %5372 = vmatprep.subr.mxu0 0.0
        %5373 = vmatpush1.msra.mxu0 0.0
        %5374 = vmatprep.subr.mxu0 0.0
        %5375 = vmatpush1.msra.mxu0 0.0
        %5376 = vmatprep.subr.mxu0 0.0
        %5377 = vmatpush1.msra.mxu0 0.0
        %5378 = vmatprep.subr.mxu0 0.0
        %5379 = vmatpush1.msra.mxu0 0.0
        %5380 = vmatprep.subr.mxu0 0.0
        %5381 = vmatpush1.msra.mxu0 0.0
        %5382 = vmatprep.subr.mxu0 0.0
        %5383 = vmatpush1.msra.mxu0 0.0
        %5384 = vmatprep.subr.mxu0 0.0
        %5385 = vmatpush1.msra.mxu0 0.0
        %5386 = vmatprep.subr.mxu0 0.0
        %5387 = vmatpush1.msra.mxu0 0.0
        %5388 = vmatprep.subr.mxu0 0.0
        %5389 = vmatpush1.msra.mxu0 0.0
        %5390 = vmatprep.subr.mxu0 0.0
        %5391 = vmatpush1.msra.mxu0 0.0
        %5392 = vmatprep.subr.mxu0 0.0
        %5393 = vmatpush1.msra.mxu0 0.0
        %5394 = vmatprep.subr.mxu0 0.0
        %5395 = vmatpush1.msra.mxu0 0.0
        %5396 = vmatprep.subr.mxu0 0.0
        %5397 = vmatpush1.msra.mxu0 0.0
        %5398 = vmatprep.subr.mxu0 0.0
        %5399 = vmatpush1.msra.mxu0 0.0
        %5400 = vmatprep.subr.mxu0 0.0
        %5401 = vmatpush1.msra.mxu0 0.0
        %5402 = vmatprep.subr.mxu0 0.0
        %5403 = vmatpush1.msra.mxu0 0.0
        %5404 = vmatprep.subr.mxu0 0.0
        %5405 = vmatpush1.msra.mxu0 0.0
        %5406 = vmatprep.subr.mxu0 0.0
        %5407 = vmatpush1.msra.mxu0 0.0
        %5408 = vmatprep.subr.mxu0 0.0
        %5409 = vmatpush1.msra.mxu0 0.0
        %5410 = vmatprep.subr.mxu0 0.0
        %5411 = vmatpush1.msra.mxu0 0.0
        %5412 = vmatprep.subr.mxu0 0.0
        %5413 = vmatpush1.msra.mxu0 0.0
        %5414 = vmatprep.subr.mxu0 0.0
        %5415 = vmatpush1.msra.mxu0 0.0
        %5416 = vmatprep.subr.mxu0 0.0
        %5417 = vmatpush1.msra.mxu0 0.0
        %5418 = vmatprep.subr.mxu0 0.0
        %5419 = vmatpush1.msra.mxu0 0.0
        %5420 = vmatprep.mubr.f32.mxu0 0.0
        %v5421 = vand.u32 %v5353, 4294901760
        %v5422 = vsub.f32 %v5353, %v5421
        %v5423 = vand.u32 %v5422, 4294901760
        %v5424 = vsub.f32 %v5422, %v5423
        %v5425 = vand.u32 %v5424, 4294901760
        %5426 = vmatmul.mubr.f32.gmra.mrb[0].mxu0 %v5425
        %v5427 = vpop.f32.mrb[0].mxu0
        %v5428 = vadd.f32 0.0, %v5427
        %v5429 = vpop.f32.mrb[0].mxu0
        %5430 = vdwg.mxu0
        %5431 = vmatprep.subr.mxu0 0.0
        %v5432 = vand.u32 %v5350, 4294901760
        %v5433 = vsub.f32 %v5350, %v5432
        %v5434 = vand.u32 %v5433, 4294901760
        %v5435 = vsub.f32 %v5433, %v5434
        %v5436 = vand.u32 %v5435, 4294901760
        %5437 = vmatpush1.msra.mxu0 %v5436
        %5438 = vmatprep.subr.mxu0 0.0
        %5439 = vmatpush1.msra.mxu0 0.0
        %5440 = vmatprep.subr.mxu0 0.0
        %5441 = vmatpush1.msra.mxu0 0.0
        %5442 = vmatprep.subr.mxu0 0.0
        %5443 = vmatpush1.msra.mxu0 0.0
        %5444 = vmatprep.subr.mxu0 0.0
        %5445 = vmatpush1.msra.mxu0 0.0
        %5446 = vmatprep.subr.mxu0 0.0
        %5447 = vmatpush1.msra.mxu0 0.0
        %5448 = vmatprep.subr.mxu0 0.0
        %5449 = vmatpush1.msra.mxu0 0.0
        %5450 = vmatprep.subr.mxu0 0.0
        %5451 = vmatpush1.msra.mxu0 0.0
        %5452 = vmatprep.subr.mxu0 0.0
        %5453 = vmatpush1.msra.mxu0 0.0
        %5454 = vmatprep.subr.mxu0 0.0
        %5455 = vmatpush1.msra.mxu0 0.0
        %5456 = vmatprep.subr.mxu0 0.0
        %5457 = vmatpush1.msra.mxu0 0.0
        %5458 = vmatprep.subr.mxu0 0.0
        %5459 = vmatpush1.msra.mxu0 0.0
        %5460 = vmatprep.subr.mxu0 0.0
        %5461 = vmatpush1.msra.mxu0 0.0
        %5462 = vmatprep.subr.mxu0 0.0
        %5463 = vmatpush1.msra.mxu0 0.0
        %5464 = vmatprep.subr.mxu0 0.0
        %5465 = vmatpush1.msra.mxu0 0.0
        %5466 = vmatprep.subr.mxu0 0.0
        %5467 = vmatpush1.msra.mxu0 0.0
        %5468 = vmatprep.subr.mxu0 0.0
        %5469 = vmatpush1.msra.mxu0 0.0
        %5470 = vmatprep.subr.mxu0 0.0
        %5471 = vmatpush1.msra.mxu0 0.0
        %5472 = vmatprep.subr.mxu0 0.0
        %5473 = vmatpush1.msra.mxu0 0.0
        %5474 = vmatprep.subr.mxu0 0.0
        %5475 = vmatpush1.msra.mxu0 0.0
        %5476 = vmatprep.subr.mxu0 0.0
        %5477 = vmatpush1.msra.mxu0 0.0
        %5478 = vmatprep.subr.mxu0 0.0
        %5479 = vmatpush1.msra.mxu0 0.0
        %5480 = vmatprep.subr.mxu0 0.0
        %5481 = vmatpush1.msra.mxu0 0.0
        %5482 = vmatprep.subr.mxu0 0.0
        %5483 = vmatpush1.msra.mxu0 0.0
        %5484 = vmatprep.subr.mxu0 0.0
        %5485 = vmatpush1.msra.mxu0 0.0
        %5486 = vmatprep.subr.mxu0 0.0
        %5487 = vmatpush1.msra.mxu0 0.0
        %5488 = vmatprep.subr.mxu0 0.0
        %5489 = vmatpush1.msra.mxu0 0.0
        %5490 = vmatprep.subr.mxu0 0.0
        %5491 = vmatpush1.msra.mxu0 0.0
        %5492 = vmatprep.subr.mxu0 0.0
        %5493 = vmatpush1.msra.mxu0 0.0
        %5494 = vmatprep.subr.mxu0 0.0
        %5495 = vmatpush1.msra.mxu0 0.0
        %5496 = vmatprep.subr.mxu0 0.0
        %5497 = vmatpush1.msra.mxu0 0.0
        %5498 = vmatprep.subr.mxu0 0.0
        %5499 = vmatpush1.msra.mxu0 0.0
        %5500 = vmatprep.mubr.f32.mxu0 0.0
        %v5501 = vand.u32 %v5353, 4294901760
        %5502 = vmatmul.mubr.f32.gmra.mrb[0].mxu0 %v5501
        %v5503 = vpop.f32.mrb[0].mxu0
        %v5504 = vadd.f32 %v5428, %v5503
        %v5505 = vpop.f32.mrb[0].mxu0
        %5506 = vdwg.mxu0
        %5507 = vmatprep.subr.mxu0 0.0
        %v5508 = vand.u32 %v5350, 4294901760
        %v5509 = vsub.f32 %v5350, %v5508
        %5510 = vmatpush1.msra.mxu0 %v5509
        %5511 = vmatprep.subr.mxu0 0.0
        %5512 = vmatpush1.msra.mxu0 0.0
        %5513 = vmatprep.subr.mxu0 0.0
        %5514 = vmatpush1.msra.mxu0 0.0
        %5515 = vmatprep.subr.mxu0 0.0
        %5516 = vmatpush1.msra.mxu0 0.0
        %5517 = vmatprep.subr.mxu0 0.0
        %5518 = vmatpush1.msra.mxu0 0.0
        %5519 = vmatprep.subr.mxu0 0.0
        %5520 = vmatpush1.msra.mxu0 0.0
        %5521 = vmatprep.subr.mxu0 0.0
        %5522 = vmatpush1.msra.mxu0 0.0
        %5523 = vmatprep.subr.mxu0 0.0
        %5524 = vmatpush1.msra.mxu0 0.0
        %5525 = vmatprep.subr.mxu0 0.0
        %5526 = vmatpush1.msra.mxu0 0.0
        %5527 = vmatprep.subr.mxu0 0.0
        %5528 = vmatpush1.msra.mxu0 0.0
        %5529 = vmatprep.subr.mxu0 0.0
        %5530 = vmatpush1.msra.mxu0 0.0
        %5531 = vmatprep.subr.mxu0 0.0
        %5532 = vmatpush1.msra.mxu0 0.0
        %5533 = vmatprep.subr.mxu0 0.0
        %5534 = vmatpush1.msra.mxu0 0.0
        %5535 = vmatprep.subr.mxu0 0.0
        %5536 = vmatpush1.msra.mxu0 0.0
        %5537 = vmatprep.subr.mxu0 0.0
        %5538 = vmatpush1.msra.mxu0 0.0
        %5539 = vmatprep.subr.mxu0 0.0
        %5540 = vmatpush1.msra.mxu0 0.0
        %5541 = vmatprep.subr.mxu0 0.0
        %5542 = vmatpush1.msra.mxu0 0.0
        %5543 = vmatprep.subr.mxu0 0.0
        %5544 = vmatpush1.msra.mxu0 0.0
        %5545 = vmatprep.subr.mxu0 0.0
        %5546 = vmatpush1.msra.mxu0 0.0
        %5547 = vmatprep.subr.mxu0 0.0
        %5548 = vmatpush1.msra.mxu0 0.0
        %5549 = vmatprep.subr.mxu0 0.0
        %5550 = vmatpush1.msra.mxu0 0.0
        %5551 = vmatprep.subr.mxu0 0.0
        %5552 = vmatpush1.msra.mxu0 0.0
        %5553 = vmatprep.subr.mxu0 0.0
        %5554 = vmatpush1.msra.mxu0 0.0
        %5555 = vmatprep.subr.mxu0 0.0
        %5556 = vmatpush1.msra.mxu0 0.0
        %5557 = vmatprep.subr.mxu0 0.0
        %5558 = vmatpush1.msra.mxu0 0.0
        %5559 = vmatprep.subr.mxu0 0.0
        %5560 = vmatpush1.msra.mxu0 0.0
        %5561 = vmatprep.subr.mxu0 0.0
        %5562 = vmatpush1.msra.mxu0 0.0
        %5563 = vmatprep.subr.mxu0 0.0
        %5564 = vmatpush1.msra.mxu0 0.0
        %5565 = vmatprep.subr.mxu0 0.0
        %5566 = vmatpush1.msra.mxu0 0.0
        %5567 = vmatprep.subr.mxu0 0.0
        %5568 = vmatpush1.msra.mxu0 0.0
        %5569 = vmatprep.subr.mxu0 0.0
        %5570 = vmatpush1.msra.mxu0 0.0
        %5571 = vmatprep.subr.mxu0 0.0
        %5572 = vmatpush1.msra.mxu0 0.0
        %5573 = vmatprep.mubr.f32.mxu0 0.0
        %v5574 = vand.u32 %v5353, 4294901760
        %v5575 = vsub.f32 %v5353, %v5574
        %5576 = vmatmul.mubr.f32.gmra.mrb[0].mxu0 %v5575
        %v5577 = vpop.f32.mrb[0].mxu0
        %v5578 = vadd.f32 %v5504, %v5577
        %v5579 = vpop.f32.mrb[0].mxu0
        %5580 = vdwg.mxu0
        %5581 = vmatprep.subr.mxu0 0.0
        %v5582 = vand.u32 %v5350, 4294901760
        %5583 = vmatpush1.msra.mxu0 %v5582
        %5584 = vmatprep.subr.mxu0 0.0
        %5585 = vmatpush1.msra.mxu0 0.0
        %5586 = vmatprep.subr.mxu0 0.0
        %5587 = vmatpush1.msra.mxu0 0.0
        %5588 = vmatprep.subr.mxu0 0.0
        %5589 = vmatpush1.msra.mxu0 0.0
        %5590 = vmatprep.subr.mxu0 0.0
        %5591 = vmatpush1.msra.mxu0 0.0
        %5592 = vmatprep.subr.mxu0 0.0
        %5593 = vmatpush1.msra.mxu0 0.0
        %5594 = vmatprep.subr.mxu0 0.0
        %5595 = vmatpush1.msra.mxu0 0.0
        %5596 = vmatprep.subr.mxu0 0.0
        %5597 = vmatpush1.msra.mxu0 0.0
        %5598 = vmatprep.subr.mxu0 0.0
        %5599 = vmatpush1.msra.mxu0 0.0
        %5600 = vmatprep.subr.mxu0 0.0
        %5601 = vmatpush1.msra.mxu0 0.0
        %5602 = vmatprep.subr.mxu0 0.0
        %5603 = vmatpush1.msra.mxu0 0.0
        %5604 = vmatprep.subr.mxu0 0.0
        %5605 = vmatpush1.msra.mxu0 0.0
        %5606 = vmatprep.subr.mxu0 0.0
        %5607 = vmatpush1.msra.mxu0 0.0
        %5608 = vmatprep.subr.mxu0 0.0
        %5609 = vmatpush1.msra.mxu0 0.0
        %5610 = vmatprep.subr.mxu0 0.0
        %5611 = vmatpush1.msra.mxu0 0.0
        %5612 = vmatprep.subr.mxu0 0.0
        %5613 = vmatpush1.msra.mxu0 0.0
        %5614 = vmatprep.subr.mxu0 0.0
        %5615 = vmatpush1.msra.mxu0 0.0
        %5616 = vmatprep.subr.mxu0 0.0
        %5617 = vmatpush1.msra.mxu0 0.0
        %5618 = vmatprep.subr.mxu0 0.0
        %5619 = vmatpush1.msra.mxu0 0.0
        %5620 = vmatprep.subr.mxu0 0.0
        %5621 = vmatpush1.msra.mxu0 0.0
        %5622 = vmatprep.subr.mxu0 0.0
        %5623 = vmatpush1.msra.mxu0 0.0
        %5624 = vmatprep.subr.mxu0 0.0
        %5625 = vmatpush1.msra.mxu0 0.0
        %5626 = vmatprep.subr.mxu0 0.0
        %5627 = vmatpush1.msra.mxu0 0.0
        %5628 = vmatprep.subr.mxu0 0.0
        %5629 = vmatpush1.msra.mxu0 0.0
        %5630 = vmatprep.subr.mxu0 0.0
        %5631 = vmatpush1.msra.mxu0 0.0
        %5632 = vmatprep.subr.mxu0 0.0
        %5633 = vmatpush1.msra.mxu0 0.0
        %5634 = vmatprep.subr.mxu0 0.0
        %5635 = vmatpush1.msra.mxu0 0.0
        %5636 = vmatprep.subr.mxu0 0.0
        %5637 = vmatpush1.msra.mxu0 0.0
        %5638 = vmatprep.subr.mxu0 0.0
        %5639 = vmatpush1.msra.mxu0 0.0
        %5640 = vmatprep.subr.mxu0 0.0
        %5641 = vmatpush1.msra.mxu0 0.0
        %5642 = vmatprep.subr.mxu0 0.0
        %5643 = vmatpush1.msra.mxu0 0.0
        %5644 = vmatprep.subr.mxu0 0.0
        %5645 = vmatpush1.msra.mxu0 0.0
        %5646 = vmatprep.mubr.f32.mxu0 0.0
        %v5647 = vand.u32 %v5353, 4294901760
        %v5648 = vsub.f32 %v5353, %v5647
        %v5649 = vand.u32 %v5648, 4294901760
        %5650 = vmatmul.mubr.f32.gmra.mrb[0].mxu0 %v5649
        %v5651 = vpop.f32.mrb[0].mxu0
        %v5652 = vadd.f32 %v5578, %v5651
        %v5653 = vpop.f32.mrb[0].mxu0
        %5654 = vdwg.mxu0
        %5655 = vmatprep.subr.mxu0 0.0
        %v5656 = vand.u32 %v5350, 4294901760
        %v5657 = vsub.f32 %v5350, %v5656
        %v5658 = vand.u32 %v5657, 4294901760
        %5659 = vmatpush1.msra.mxu0 %v5658
        %5660 = vmatprep.subr.mxu0 0.0
        %5661 = vmatpush1.msra.mxu0 0.0
        %5662 = vmatprep.subr.mxu0 0.0
        %5663 = vmatpush1.msra.mxu0 0.0
        %5664 = vmatprep.subr.mxu0 0.0
        %5665 = vmatpush1.msra.mxu0 0.0
        %5666 = vmatprep.subr.mxu0 0.0
        %5667 = vmatpush1.msra.mxu0 0.0
        %5668 = vmatprep.subr.mxu0 0.0
        %5669 = vmatpush1.msra.mxu0 0.0
        %5670 = vmatprep.subr.mxu0 0.0
        %5671 = vmatpush1.msra.mxu0 0.0
        %5672 = vmatprep.subr.mxu0 0.0
        %5673 = vmatpush1.msra.mxu0 0.0
        %5674 = vmatprep.subr.mxu0 0.0
        %5675 = vmatpush1.msra.mxu0 0.0
        %5676 = vmatprep.subr.mxu0 0.0
        %5677 = vmatpush1.msra.mxu0 0.0
        %5678 = vmatprep.subr.mxu0 0.0
        %5679 = vmatpush1.msra.mxu0 0.0
        %5680 = vmatprep.subr.mxu0 0.0
        %5681 = vmatpush1.msra.mxu0 0.0
        %5682 = vmatprep.subr.mxu0 0.0
        %5683 = vmatpush1.msra.mxu0 0.0
        %5684 = vmatprep.subr.mxu0 0.0
        %5685 = vmatpush1.msra.mxu0 0.0
        %5686 = vmatprep.subr.mxu0 0.0
        %5687 = vmatpush1.msra.mxu0 0.0
        %5688 = vmatprep.subr.mxu0 0.0
        %5689 = vmatpush1.msra.mxu0 0.0
        %5690 = vmatprep.subr.mxu0 0.0
        %5691 = vmatpush1.msra.mxu0 0.0
        %5692 = vmatprep.subr.mxu0 0.0
        %5693 = vmatpush1.msra.mxu0 0.0
        %5694 = vmatprep.subr.mxu0 0.0
        %5695 = vmatpush1.msra.mxu0 0.0
        %5696 = vmatprep.subr.mxu0 0.0
        %5697 = vmatpush1.msra.mxu0 0.0
        %5698 = vmatprep.subr.mxu0 0.0
        %5699 = vmatpush1.msra.mxu0 0.0
        %5700 = vmatprep.subr.mxu0 0.0
        %5701 = vmatpush1.msra.mxu0 0.0
        %5702 = vmatprep.subr.mxu0 0.0
        %5703 = vmatpush1.msra.mxu0 0.0
        %5704 = vmatprep.subr.mxu0 0.0
        %5705 = vmatpush1.msra.mxu0 0.0
        %5706 = vmatprep.subr.mxu0 0.0
        %5707 = vmatpush1.msra.mxu0 0.0
        %5708 = vmatprep.subr.mxu0 0.0
        %5709 = vmatpush1.msra.mxu0 0.0
        %5710 = vmatprep.subr.mxu0 0.0
        %5711 = vmatpush1.msra.mxu0 0.0
        %5712 = vmatprep.subr.mxu0 0.0
        %5713 = vmatpush1.msra.mxu0 0.0
        %5714 = vmatprep.subr.mxu0 0.0
        %5715 = vmatpush1.msra.mxu0 0.0
        %5716 = vmatprep.subr.mxu0 0.0
        %5717 = vmatpush1.msra.mxu0 0.0
        %5718 = vmatprep.subr.mxu0 0.0
        %5719 = vmatpush1.msra.mxu0 0.0
        %5720 = vmatprep.subr.mxu0 0.0
        %5721 = vmatpush1.msra.mxu0 0.0
        %5722 = vmatprep.mubr.f32.mxu0 0.0
        %v5723 = vand.u32 %v5353, 4294901760
        %5724 = vmatmul.mubr.f32.gmra.mrb[0].mxu0 %v5723
        %v5725 = vpop.f32.mrb[0].mxu0
        %v5726 = vadd.f32 %v5652, %v5725
        %v5727 = vpop.f32.mrb[0].mxu0
        %5728 = vdwg.mxu0
        %5729 = vmatprep.subr.mxu0 0.0
        %v5730 = vand.u32 %v5350, 4294901760
        %5731 = vmatpush1.msra.mxu0 %v5730
        %5732 = vmatprep.subr.mxu0 0.0
        %5733 = vmatpush1.msra.mxu0 0.0
        %5734 = vmatprep.subr.mxu0 0.0
        %5735 = vmatpush1.msra.mxu0 0.0
        %5736 = vmatprep.subr.mxu0 0.0
        %5737 = vmatpush1.msra.mxu0 0.0
        %5738 = vmatprep.subr.mxu0 0.0
        %5739 = vmatpush1.msra.mxu0 0.0
        %5740 = vmatprep.subr.mxu0 0.0
        %5741 = vmatpush1.msra.mxu0 0.0
        %5742 = vmatprep.subr.mxu0 0.0
        %5743 = vmatpush1.msra.mxu0 0.0
        %5744 = vmatprep.subr.mxu0 0.0
        %5745 = vmatpush1.msra.mxu0 0.0
        %5746 = vmatprep.subr.mxu0 0.0
        %5747 = vmatpush1.msra.mxu0 0.0
        %5748 = vmatprep.subr.mxu0 0.0
        %5749 = vmatpush1.msra.mxu0 0.0
        %5750 = vmatprep.subr.mxu0 0.0
        %5751 = vmatpush1.msra.mxu0 0.0
        %5752 = vmatprep.subr.mxu0 0.0
        %5753 = vmatpush1.msra.mxu0 0.0
        %5754 = vmatprep.subr.mxu0 0.0
        %5755 = vmatpush1.msra.mxu0 0.0
        %5756 = vmatprep.subr.mxu0 0.0
        %5757 = vmatpush1.msra.mxu0 0.0
        %5758 = vmatprep.subr.mxu0 0.0
        %5759 = vmatpush1.msra.mxu0 0.0
        %5760 = vmatprep.subr.mxu0 0.0
        %5761 = vmatpush1.msra.mxu0 0.0
        %5762 = vmatprep.subr.mxu0 0.0
        %5763 = vmatpush1.msra.mxu0 0.0
        %5764 = vmatprep.subr.mxu0 0.0
        %5765 = vmatpush1.msra.mxu0 0.0
        %5766 = vmatprep.subr.mxu0 0.0
        %5767 = vmatpush1.msra.mxu0 0.0
        %5768 = vmatprep.subr.mxu0 0.0
        %5769 = vmatpush1.msra.mxu0 0.0
        %5770 = vmatprep.subr.mxu0 0.0
        %5771 = vmatpush1.msra.mxu0 0.0
        %5772 = vmatprep.subr.mxu0 0.0
        %5773 = vmatpush1.msra.mxu0 0.0
        %5774 = vmatprep.subr.mxu0 0.0
        %5775 = vmatpush1.msra.mxu0 0.0
        %5776 = vmatprep.subr.mxu0 0.0
        %5777 = vmatpush1.msra.mxu0 0.0
        %5778 = vmatprep.subr.mxu0 0.0
        %5779 = vmatpush1.msra.mxu0 0.0
        %5780 = vmatprep.subr.mxu0 0.0
        %5781 = vmatpush1.msra.mxu0 0.0
        %5782 = vmatprep.subr.mxu0 0.0
        %5783 = vmatpush1.msra.mxu0 0.0
        %5784 = vmatprep.subr.mxu0 0.0
        %5785 = vmatpush1.msra.mxu0 0.0
        %5786 = vmatprep.subr.mxu0 0.0
        %5787 = vmatpush1.msra.mxu0 0.0
        %5788 = vmatprep.subr.mxu0 0.0
        %5789 = vmatpush1.msra.mxu0 0.0
        %5790 = vmatprep.subr.mxu0 0.0
        %5791 = vmatpush1.msra.mxu0 0.0
        %5792 = vmatprep.subr.mxu0 0.0
        %5793 = vmatpush1.msra.mxu0 0.0
        %5794 = vmatprep.mubr.f32.mxu0 0.0
        %v5795 = vand.u32 %v5353, 4294901760
        %5796 = vmatmul.mubr.f32.gmra.mrb[0].mxu0 %v5795
        %v5797 = vpop.f32.mrb[0].mxu0
        %v5798 = vadd.f32 %v5726, %v5797
        %v5799 = vpop.f32.mrb[0].mxu0
        %5800 = vdwg.mxu0
        %v5802 = vsel %vm2146, %v5798, 0
        %5804 = vmatprep.subr.mxu0 0.0
        %v5805 = vand.u32 %v2138, 4294901760
        %5806 = vmatpush1.msra.mxu0 %v5805
        %5807 = vmatprep.subr.mxu0 0.0
        %5808 = vmatpush1.msra.mxu0 0.0
        %5809 = vmatprep.subr.mxu0 0.0
        %5810 = vmatpush1.msra.mxu0 0.0
        %5811 = vmatprep.subr.mxu0 0.0
        %5812 = vmatpush1.msra.mxu0 0.0
        %5813 = vmatprep.subr.mxu0 0.0
        %5814 = vmatpush1.msra.mxu0 0.0
        %5815 = vmatprep.subr.mxu0 0.0
        %5816 = vmatpush1.msra.mxu0 0.0
        %5817 = vmatprep.subr.mxu0 0.0
        %5818 = vmatpush1.msra.mxu0 0.0
        %5819 = vmatprep.subr.mxu0 0.0
        %5820 = vmatpush1.msra.mxu0 0.0
        %5821 = vmatprep.subr.mxu0 0.0
        %5822 = vmatpush1.msra.mxu0 0.0
        %5823 = vmatprep.subr.mxu0 0.0
        %5824 = vmatpush1.msra.mxu0 0.0
        %5825 = vmatprep.subr.mxu0 0.0
        %5826 = vmatpush1.msra.mxu0 0.0
        %5827 = vmatprep.subr.mxu0 0.0
        %5828 = vmatpush1.msra.mxu0 0.0
        %5829 = vmatprep.subr.mxu0 0.0
        %5830 = vmatpush1.msra.mxu0 0.0
        %5831 = vmatprep.subr.mxu0 0.0
        %5832 = vmatpush1.msra.mxu0 0.0
        %5833 = vmatprep.subr.mxu0 0.0
        %5834 = vmatpush1.msra.mxu0 0.0
        %5835 = vmatprep.subr.mxu0 0.0
        %5836 = vmatpush1.msra.mxu0 0.0
        %5837 = vmatprep.subr.mxu0 0.0
        %5838 = vmatpush1.msra.mxu0 0.0
        %5839 = vmatprep.subr.mxu0 0.0
        %5840 = vmatpush1.msra.mxu0 0.0
        %5841 = vmatprep.subr.mxu0 0.0
        %5842 = vmatpush1.msra.mxu0 0.0
        %5843 = vmatprep.subr.mxu0 0.0
        %5844 = vmatpush1.msra.mxu0 0.0
        %5845 = vmatprep.subr.mxu0 0.0
        %5846 = vmatpush1.msra.mxu0 0.0
        %5847 = vmatprep.subr.mxu0 0.0
        %5848 = vmatpush1.msra.mxu0 0.0
        %5849 = vmatprep.subr.mxu0 0.0
        %5850 = vmatpush1.msra.mxu0 0.0
        %5851 = vmatprep.subr.mxu0 0.0
        %5852 = vmatpush1.msra.mxu0 0.0
        %5853 = vmatprep.subr.mxu0 0.0
        %5854 = vmatpush1.msra.mxu0 0.0
        %5855 = vmatprep.subr.mxu0 0.0
        %5856 = vmatpush1.msra.mxu0 0.0
        %5857 = vmatprep.subr.mxu0 0.0
        %5858 = vmatpush1.msra.mxu0 0.0
        %5859 = vmatprep.subr.mxu0 0.0
        %5860 = vmatpush1.msra.mxu0 0.0
        %5861 = vmatprep.subr.mxu0 0.0
        %5862 = vmatpush1.msra.mxu0 0.0
        %5863 = vmatprep.subr.mxu0 0.0
        %5864 = vmatpush1.msra.mxu0 0.0
        %5865 = vmatprep.subr.mxu0 0.0
        %5866 = vmatpush1.msra.mxu0 0.0
        %5867 = vmatprep.subr.mxu0 0.0
        %5868 = vmatpush1.msra.mxu0 0.0
        %5869 = vmatprep.mubr.f32.mxu0 0.0
        %v5870 = vand.u32 %v5802, 4294901760
        %v5871 = vsub.f32 %v5802, %v5870
        %v5872 = vand.u32 %v5871, 4294901760
        %v5873 = vsub.f32 %v5871, %v5872
        %v5874 = vand.u32 %v5873, 4294901760
        %5875 = vmatmul.mubr.f32.gmra.mrb[0].mxu0 %v5874
        %v5876 = vpop.f32.mrb[0].mxu0
        %v5877 = vadd.f32 0.0, %v5876
        %v5878 = vpop.f32.mrb[0].mxu0
        %5879 = vdwg.mxu0
        %5880 = vmatprep.subr.mxu0 0.0
        %v5881 = vand.u32 %v2138, 4294901760
        %v5882 = vsub.f32 %v2138, %v5881
        %v5883 = vand.u32 %v5882, 4294901760
        %v5884 = vsub.f32 %v5882, %v5883
        %v5885 = vand.u32 %v5884, 4294901760
        %5886 = vmatpush1.msra.mxu0 %v5885
        %5887 = vmatprep.subr.mxu0 0.0
        %5888 = vmatpush1.msra.mxu0 0.0
        %5889 = vmatprep.subr.mxu0 0.0
        %5890 = vmatpush1.msra.mxu0 0.0
        %5891 = vmatprep.subr.mxu0 0.0
        %5892 = vmatpush1.msra.mxu0 0.0
        %5893 = vmatprep.subr.mxu0 0.0
        %5894 = vmatpush1.msra.mxu0 0.0
        %5895 = vmatprep.subr.mxu0 0.0
        %5896 = vmatpush1.msra.mxu0 0.0
        %5897 = vmatprep.subr.mxu0 0.0
        %5898 = vmatpush1.msra.mxu0 0.0
        %5899 = vmatprep.subr.mxu0 0.0
        %5900 = vmatpush1.msra.mxu0 0.0
        %5901 = vmatprep.subr.mxu0 0.0
        %5902 = vmatpush1.msra.mxu0 0.0
        %5903 = vmatprep.subr.mxu0 0.0
        %5904 = vmatpush1.msra.mxu0 0.0
        %5905 = vmatprep.subr.mxu0 0.0
        %5906 = vmatpush1.msra.mxu0 0.0
        %5907 = vmatprep.subr.mxu0 0.0
        %5908 = vmatpush1.msra.mxu0 0.0
        %5909 = vmatprep.subr.mxu0 0.0
        %5910 = vmatpush1.msra.mxu0 0.0
        %5911 = vmatprep.subr.mxu0 0.0
        %5912 = vmatpush1.msra.mxu0 0.0
        %5913 = vmatprep.subr.mxu0 0.0
        %5914 = vmatpush1.msra.mxu0 0.0
        %5915 = vmatprep.subr.mxu0 0.0
        %5916 = vmatpush1.msra.mxu0 0.0
        %5917 = vmatprep.subr.mxu0 0.0
        %5918 = vmatpush1.msra.mxu0 0.0
        %5919 = vmatprep.subr.mxu0 0.0
        %5920 = vmatpush1.msra.mxu0 0.0
        %5921 = vmatprep.subr.mxu0 0.0
        %5922 = vmatpush1.msra.mxu0 0.0
        %5923 = vmatprep.subr.mxu0 0.0
        %5924 = vmatpush1.msra.mxu0 0.0
        %5925 = vmatprep.subr.mxu0 0.0
        %5926 = vmatpush1.msra.mxu0 0.0
        %5927 = vmatprep.subr.mxu0 0.0
        %5928 = vmatpush1.msra.mxu0 0.0
        %5929 = vmatprep.subr.mxu0 0.0
        %5930 = vmatpush1.msra.mxu0 0.0
        %5931 = vmatprep.subr.mxu0 0.0
        %5932 = vmatpush1.msra.mxu0 0.0
        %5933 = vmatprep.subr.mxu0 0.0
        %5934 = vmatpush1.msra.mxu0 0.0
        %5935 = vmatprep.subr.mxu0 0.0
        %5936 = vmatpush1.msra.mxu0 0.0
        %5937 = vmatprep.subr.mxu0 0.0
        %5938 = vmatpush1.msra.mxu0 0.0
        %5939 = vmatprep.subr.mxu0 0.0
        %5940 = vmatpush1.msra.mxu0 0.0
        %5941 = vmatprep.subr.mxu0 0.0
        %5942 = vmatpush1.msra.mxu0 0.0
        %5943 = vmatprep.subr.mxu0 0.0
        %5944 = vmatpush1.msra.mxu0 0.0
        %5945 = vmatprep.subr.mxu0 0.0
        %5946 = vmatpush1.msra.mxu0 0.0
        %5947 = vmatprep.subr.mxu0 0.0
        %5948 = vmatpush1.msra.mxu0 0.0
        %5949 = vmatprep.mubr.f32.mxu0 0.0
        %v5950 = vand.u32 %v5802, 4294901760
        %5951 = vmatmul.mubr.f32.gmra.mrb[0].mxu0 %v5950
        %v5952 = vpop.f32.mrb[0].mxu0
        %v5953 = vadd.f32 %v5877, %v5952
        %v5954 = vpop.f32.mrb[0].mxu0
        %5955 = vdwg.mxu0
        %5956 = vmatprep.subr.mxu0 0.0
        %v5957 = vand.u32 %v2138, 4294901760
        %v5958 = vsub.f32 %v2138, %v5957
        %5959 = vmatpush1.msra.mxu0 %v5958
        %5960 = vmatprep.subr.mxu0 0.0
        %5961 = vmatpush1.msra.mxu0 0.0
        %5962 = vmatprep.subr.mxu0 0.0
        %5963 = vmatpush1.msra.mxu0 0.0
        %5964 = vmatprep.subr.mxu0 0.0
        %5965 = vmatpush1.msra.mxu0 0.0
        %5966 = vmatprep.subr.mxu0 0.0
        %5967 = vmatpush1.msra.mxu0 0.0
        %5968 = vmatprep.subr.mxu0 0.0
        %5969 = vmatpush1.msra.mxu0 0.0
        %5970 = vmatprep.subr.mxu0 0.0
        %5971 = vmatpush1.msra.mxu0 0.0
        %5972 = vmatprep.subr.mxu0 0.0
        %5973 = vmatpush1.msra.mxu0 0.0
        %5974 = vmatprep.subr.mxu0 0.0
        %5975 = vmatpush1.msra.mxu0 0.0
        %5976 = vmatprep.subr.mxu0 0.0
        %5977 = vmatpush1.msra.mxu0 0.0
        %5978 = vmatprep.subr.mxu0 0.0
        %5979 = vmatpush1.msra.mxu0 0.0
        %5980 = vmatprep.subr.mxu0 0.0
        %5981 = vmatpush1.msra.mxu0 0.0
        %5982 = vmatprep.subr.mxu0 0.0
        %5983 = vmatpush1.msra.mxu0 0.0
        %5984 = vmatprep.subr.mxu0 0.0
        %5985 = vmatpush1.msra.mxu0 0.0
        %5986 = vmatprep.subr.mxu0 0.0
        %5987 = vmatpush1.msra.mxu0 0.0
        %5988 = vmatprep.subr.mxu0 0.0
        %5989 = vmatpush1.msra.mxu0 0.0
        %5990 = vmatprep.subr.mxu0 0.0
        %5991 = vmatpush1.msra.mxu0 0.0
        %5992 = vmatprep.subr.mxu0 0.0
        %5993 = vmatpush1.msra.mxu0 0.0
        %5994 = vmatprep.subr.mxu0 0.0
        %5995 = vmatpush1.msra.mxu0 0.0
        %5996 = vmatprep.subr.mxu0 0.0
        %5997 = vmatpush1.msra.mxu0 0.0
        %5998 = vmatprep.subr.mxu0 0.0
        %5999 = vmatpush1.msra.mxu0 0.0
        %6000 = vmatprep.subr.mxu0 0.0
        %6001 = vmatpush1.msra.mxu0 0.0
        %6002 = vmatprep.subr.mxu0 0.0
        %6003 = vmatpush1.msra.mxu0 0.0
        %6004 = vmatprep.subr.mxu0 0.0
        %6005 = vmatpush1.msra.mxu0 0.0
        %6006 = vmatprep.subr.mxu0 0.0
        %6007 = vmatpush1.msra.mxu0 0.0
        %6008 = vmatprep.subr.mxu0 0.0
        %6009 = vmatpush1.msra.mxu0 0.0
        %6010 = vmatprep.subr.mxu0 0.0
        %6011 = vmatpush1.msra.mxu0 0.0
        %6012 = vmatprep.subr.mxu0 0.0
        %6013 = vmatpush1.msra.mxu0 0.0
        %6014 = vmatprep.subr.mxu0 0.0
        %6015 = vmatpush1.msra.mxu0 0.0
        %6016 = vmatprep.subr.mxu0 0.0
        %6017 = vmatpush1.msra.mxu0 0.0
        %6018 = vmatprep.subr.mxu0 0.0
        %6019 = vmatpush1.msra.mxu0 0.0
        %6020 = vmatprep.subr.mxu0 0.0
        %6021 = vmatpush1.msra.mxu0 0.0
        %6022 = vmatprep.mubr.f32.mxu0 0.0
        %v6023 = vand.u32 %v5802, 4294901760
        %v6024 = vsub.f32 %v5802, %v6023
        %6025 = vmatmul.mubr.f32.gmra.mrb[0].mxu0 %v6024
        %v6026 = vpop.f32.mrb[0].mxu0
        %v6027 = vadd.f32 %v5953, %v6026
        %v6028 = vpop.f32.mrb[0].mxu0
        %6029 = vdwg.mxu0
        %6030 = vmatprep.subr.mxu0 0.0
        %v6031 = vand.u32 %v2138, 4294901760
        %6032 = vmatpush1.msra.mxu0 %v6031
        %6033 = vmatprep.subr.mxu0 0.0
        %6034 = vmatpush1.msra.mxu0 0.0
        %6035 = vmatprep.subr.mxu0 0.0
        %6036 = vmatpush1.msra.mxu0 0.0
        %6037 = vmatprep.subr.mxu0 0.0
        %6038 = vmatpush1.msra.mxu0 0.0
        %6039 = vmatprep.subr.mxu0 0.0
        %6040 = vmatpush1.msra.mxu0 0.0
        %6041 = vmatprep.subr.mxu0 0.0
        %6042 = vmatpush1.msra.mxu0 0.0
        %6043 = vmatprep.subr.mxu0 0.0
        %6044 = vmatpush1.msra.mxu0 0.0
        %6045 = vmatprep.subr.mxu0 0.0
        %6046 = vmatpush1.msra.mxu0 0.0
        %6047 = vmatprep.subr.mxu0 0.0
        %6048 = vmatpush1.msra.mxu0 0.0
        %6049 = vmatprep.subr.mxu0 0.0
        %6050 = vmatpush1.msra.mxu0 0.0
        %6051 = vmatprep.subr.mxu0 0.0
        %6052 = vmatpush1.msra.mxu0 0.0
        %6053 = vmatprep.subr.mxu0 0.0
        %6054 = vmatpush1.msra.mxu0 0.0
        %6055 = vmatprep.subr.mxu0 0.0
        %6056 = vmatpush1.msra.mxu0 0.0
        %6057 = vmatprep.subr.mxu0 0.0
        %6058 = vmatpush1.msra.mxu0 0.0
        %6059 = vmatprep.subr.mxu0 0.0
        %6060 = vmatpush1.msra.mxu0 0.0
        %6061 = vmatprep.subr.mxu0 0.0
        %6062 = vmatpush1.msra.mxu0 0.0
        %6063 = vmatprep.subr.mxu0 0.0
        %6064 = vmatpush1.msra.mxu0 0.0
        %6065 = vmatprep.subr.mxu0 0.0
        %6066 = vmatpush1.msra.mxu0 0.0
        %6067 = vmatprep.subr.mxu0 0.0
        %6068 = vmatpush1.msra.mxu0 0.0
        %6069 = vmatprep.subr.mxu0 0.0
        %6070 = vmatpush1.msra.mxu0 0.0
        %6071 = vmatprep.subr.mxu0 0.0
        %6072 = vmatpush1.msra.mxu0 0.0
        %6073 = vmatprep.subr.mxu0 0.0
        %6074 = vmatpush1.msra.mxu0 0.0
        %6075 = vmatprep.subr.mxu0 0.0
        %6076 = vmatpush1.msra.mxu0 0.0
        %6077 = vmatprep.subr.mxu0 0.0
        %6078 = vmatpush1.msra.mxu0 0.0
        %6079 = vmatprep.subr.mxu0 0.0
        %6080 = vmatpush1.msra.mxu0 0.0
        %6081 = vmatprep.subr.mxu0 0.0
        %6082 = vmatpush1.msra.mxu0 0.0
        %6083 = vmatprep.subr.mxu0 0.0
        %6084 = vmatpush1.msra.mxu0 0.0
        %6085 = vmatprep.subr.mxu0 0.0
        %6086 = vmatpush1.msra.mxu0 0.0
        %6087 = vmatprep.subr.mxu0 0.0
        %6088 = vmatpush1.msra.mxu0 0.0
        %6089 = vmatprep.subr.mxu0 0.0
        %6090 = vmatpush1.msra.mxu0 0.0
        %6091 = vmatprep.subr.mxu0 0.0
        %6092 = vmatpush1.msra.mxu0 0.0
        %6093 = vmatprep.subr.mxu0 0.0
        %6094 = vmatpush1.msra.mxu0 0.0
        %6095 = vmatprep.mubr.f32.mxu0 0.0
        %v6096 = vand.u32 %v5802, 4294901760
        %v6097 = vsub.f32 %v5802, %v6096
        %v6098 = vand.u32 %v6097, 4294901760
        %6099 = vmatmul.mubr.f32.gmra.mrb[0].mxu0 %v6098
        %v6100 = vpop.f32.mrb[0].mxu0
        %v6101 = vadd.f32 %v6027, %v6100
        %v6102 = vpop.f32.mrb[0].mxu0
        %6103 = vdwg.mxu0
        %6104 = vmatprep.subr.mxu0 0.0
        %v6105 = vand.u32 %v2138, 4294901760
        %v6106 = vsub.f32 %v2138, %v6105
        %v6107 = vand.u32 %v6106, 4294901760
        %6108 = vmatpush1.msra.mxu0 %v6107
        %6109 = vmatprep.subr.mxu0 0.0
        %6110 = vmatpush1.msra.mxu0 0.0
        %6111 = vmatprep.subr.mxu0 0.0
        %6112 = vmatpush1.msra.mxu0 0.0
        %6113 = vmatprep.subr.mxu0 0.0
        %6114 = vmatpush1.msra.mxu0 0.0
        %6115 = vmatprep.subr.mxu0 0.0
        %6116 = vmatpush1.msra.mxu0 0.0
        %6117 = vmatprep.subr.mxu0 0.0
        %6118 = vmatpush1.msra.mxu0 0.0
        %6119 = vmatprep.subr.mxu0 0.0
        %6120 = vmatpush1.msra.mxu0 0.0
        %6121 = vmatprep.subr.mxu0 0.0
        %6122 = vmatpush1.msra.mxu0 0.0
        %6123 = vmatprep.subr.mxu0 0.0
        %6124 = vmatpush1.msra.mxu0 0.0
        %6125 = vmatprep.subr.mxu0 0.0
        %6126 = vmatpush1.msra.mxu0 0.0
        %6127 = vmatprep.subr.mxu0 0.0
        %6128 = vmatpush1.msra.mxu0 0.0
        %6129 = vmatprep.subr.mxu0 0.0
        %6130 = vmatpush1.msra.mxu0 0.0
        %6131 = vmatprep.subr.mxu0 0.0
        %6132 = vmatpush1.msra.mxu0 0.0
        %6133 = vmatprep.subr.mxu0 0.0
        %6134 = vmatpush1.msra.mxu0 0.0
        %6135 = vmatprep.subr.mxu0 0.0
        %6136 = vmatpush1.msra.mxu0 0.0
        %6137 = vmatprep.subr.mxu0 0.0
        %6138 = vmatpush1.msra.mxu0 0.0
        %6139 = vmatprep.subr.mxu0 0.0
        %6140 = vmatpush1.msra.mxu0 0.0
        %6141 = vmatprep.subr.mxu0 0.0
        %6142 = vmatpush1.msra.mxu0 0.0
        %6143 = vmatprep.subr.mxu0 0.0
        %6144 = vmatpush1.msra.mxu0 0.0
        %6145 = vmatprep.subr.mxu0 0.0
        %6146 = vmatpush1.msra.mxu0 0.0
        %6147 = vmatprep.subr.mxu0 0.0
        %6148 = vmatpush1.msra.mxu0 0.0
        %6149 = vmatprep.subr.mxu0 0.0
        %6150 = vmatpush1.msra.mxu0 0.0
        %6151 = vmatprep.subr.mxu0 0.0
        %6152 = vmatpush1.msra.mxu0 0.0
        %6153 = vmatprep.subr.mxu0 0.0
        %6154 = vmatpush1.msra.mxu0 0.0
        %6155 = vmatprep.subr.mxu0 0.0
        %6156 = vmatpush1.msra.mxu0 0.0
        %6157 = vmatprep.subr.mxu0 0.0
        %6158 = vmatpush1.msra.mxu0 0.0
        %6159 = vmatprep.subr.mxu0 0.0
        %6160 = vmatpush1.msra.mxu0 0.0
        %6161 = vmatprep.subr.mxu0 0.0
        %6162 = vmatpush1.msra.mxu0 0.0
        %6163 = vmatprep.subr.mxu0 0.0
        %6164 = vmatpush1.msra.mxu0 0.0
        %6165 = vmatprep.subr.mxu0 0.0
        %6166 = vmatpush1.msra.mxu0 0.0
        %6167 = vmatprep.subr.mxu0 0.0
        %6168 = vmatpush1.msra.mxu0 0.0
        %6169 = vmatprep.subr.mxu0 0.0
        %6170 = vmatpush1.msra.mxu0 0.0
        %6171 = vmatprep.mubr.f32.mxu0 0.0
        %v6172 = vand.u32 %v5802, 4294901760
        %6173 = vmatmul.mubr.f32.gmra.mrb[0].mxu0 %v6172
        %v6174 = vpop.f32.mrb[0].mxu0
        %v6175 = vadd.f32 %v6101, %v6174
        %v6176 = vpop.f32.mrb[0].mxu0
        %6177 = vdwg.mxu0
        %6178 = vmatprep.subr.mxu0 0.0
        %v6179 = vand.u32 %v2138, 4294901760
        %6180 = vmatpush1.msra.mxu0 %v6179
        %6181 = vmatprep.subr.mxu0 0.0
        %6182 = vmatpush1.msra.mxu0 0.0
        %6183 = vmatprep.subr.mxu0 0.0
        %6184 = vmatpush1.msra.mxu0 0.0
        %6185 = vmatprep.subr.mxu0 0.0
        %6186 = vmatpush1.msra.mxu0 0.0
        %6187 = vmatprep.subr.mxu0 0.0
        %6188 = vmatpush1.msra.mxu0 0.0
        %6189 = vmatprep.subr.mxu0 0.0
        %6190 = vmatpush1.msra.mxu0 0.0
        %6191 = vmatprep.subr.mxu0 0.0
        %6192 = vmatpush1.msra.mxu0 0.0
        %6193 = vmatprep.subr.mxu0 0.0
        %6194 = vmatpush1.msra.mxu0 0.0
        %6195 = vmatprep.subr.mxu0 0.0
        %6196 = vmatpush1.msra.mxu0 0.0
        %6197 = vmatprep.subr.mxu0 0.0
        %6198 = vmatpush1.msra.mxu0 0.0
        %6199 = vmatprep.subr.mxu0 0.0
        %6200 = vmatpush1.msra.mxu0 0.0
        %6201 = vmatprep.subr.mxu0 0.0
        %6202 = vmatpush1.msra.mxu0 0.0
        %6203 = vmatprep.subr.mxu0 0.0
        %6204 = vmatpush1.msra.mxu0 0.0
        %6205 = vmatprep.subr.mxu0 0.0
        %6206 = vmatpush1.msra.mxu0 0.0
        %6207 = vmatprep.subr.mxu0 0.0
        %6208 = vmatpush1.msra.mxu0 0.0
        %6209 = vmatprep.subr.mxu0 0.0
        %6210 = vmatpush1.msra.mxu0 0.0
        %6211 = vmatprep.subr.mxu0 0.0
        %6212 = vmatpush1.msra.mxu0 0.0
        %6213 = vmatprep.subr.mxu0 0.0
        %6214 = vmatpush1.msra.mxu0 0.0
        %6215 = vmatprep.subr.mxu0 0.0
        %6216 = vmatpush1.msra.mxu0 0.0
        %6217 = vmatprep.subr.mxu0 0.0
        %6218 = vmatpush1.msra.mxu0 0.0
        %6219 = vmatprep.subr.mxu0 0.0
        %6220 = vmatpush1.msra.mxu0 0.0
        %6221 = vmatprep.subr.mxu0 0.0
        %6222 = vmatpush1.msra.mxu0 0.0
        %6223 = vmatprep.subr.mxu0 0.0
        %6224 = vmatpush1.msra.mxu0 0.0
        %6225 = vmatprep.subr.mxu0 0.0
        %6226 = vmatpush1.msra.mxu0 0.0
        %6227 = vmatprep.subr.mxu0 0.0
        %6228 = vmatpush1.msra.mxu0 0.0
        %6229 = vmatprep.subr.mxu0 0.0
        %6230 = vmatpush1.msra.mxu0 0.0
        %6231 = vmatprep.subr.mxu0 0.0
        %6232 = vmatpush1.msra.mxu0 0.0
        %6233 = vmatprep.subr.mxu0 0.0
        %6234 = vmatpush1.msra.mxu0 0.0
        %6235 = vmatprep.subr.mxu0 0.0
        %6236 = vmatpush1.msra.mxu0 0.0
        %6237 = vmatprep.subr.mxu0 0.0
        %6238 = vmatpush1.msra.mxu0 0.0
        %6239 = vmatprep.subr.mxu0 0.0
        %6240 = vmatpush1.msra.mxu0 0.0
        %6241 = vmatprep.subr.mxu0 0.0
        %6242 = vmatpush1.msra.mxu0 0.0
        %6243 = vmatprep.mubr.f32.mxu0 0.0
        %v6244 = vand.u32 %v5802, 4294901760
        %6245 = vmatmul.mubr.f32.gmra.mrb[0].mxu0 %v6244
        %v6246 = vpop.f32.mrb[0].mxu0
        %v6247 = vadd.f32 %v6175, %v6246
        %v6248 = vpop.f32.mrb[0].mxu0
        %6249 = vdwg.mxu0
        %v6250 = vadd.f32 %v4880, %v6247
        %6251 = vrot.lane.b32.xlu0 %v1128, 104
        %v6252 = vpop.permute.xlu0 %6251
        %6253 = vrot.lane.b32.xlu0 %v1628, 104
        %v6254 = vpop.permute.xlu0 %6253
        %v6255 = vsel %vm2146, %v6252, 0
        %v6257 = vsel %vm2146, %v6254, 0
        %6259 = vmatprep.subr.mxu0 0.0
        %v6260 = vand.u32 %v6257, 4294901760
        %6261 = vmatpush1.xpose.msra.mxu0 %v6260
        %6262 = vmatprep.subr.mxu0 0.0
        %6263 = vmatpush1.xpose.msra.mxu0 0.0
        %6264 = vmatprep.subr.mxu0 0.0
        %6265 = vmatpush1.xpose.msra.mxu0 0.0
        %6266 = vmatprep.subr.mxu0 0.0
        %6267 = vmatpush1.xpose.msra.mxu0 0.0
        %6268 = vmatprep.subr.mxu0 0.0
        %6269 = vmatpush1.xpose.msra.mxu0 0.0
        %6270 = vmatprep.subr.mxu0 0.0
        %6271 = vmatpush1.xpose.msra.mxu0 0.0
        %6272 = vmatprep.subr.mxu0 0.0
        %6273 = vmatpush1.xpose.msra.mxu0 0.0
        %6274 = vmatprep.subr.mxu0 0.0
        %6275 = vmatpush1.xpose.msra.mxu0 0.0
        %6276 = vmatprep.subr.mxu0 0.0
        %6277 = vmatpush1.xpose.msra.mxu0 0.0
        %6278 = vmatprep.subr.mxu0 0.0
        %6279 = vmatpush1.xpose.msra.mxu0 0.0
        %6280 = vmatprep.subr.mxu0 0.0
        %6281 = vmatpush1.xpose.msra.mxu0 0.0
        %6282 = vmatprep.subr.mxu0 0.0
        %6283 = vmatpush1.xpose.msra.mxu0 0.0
        %6284 = vmatprep.subr.mxu0 0.0
        %6285 = vmatpush1.xpose.msra.mxu0 0.0
        %6286 = vmatprep.subr.mxu0 0.0
        %6287 = vmatpush1.xpose.msra.mxu0 0.0
        %6288 = vmatprep.subr.mxu0 0.0
        %6289 = vmatpush1.xpose.msra.mxu0 0.0
        %6290 = vmatprep.subr.mxu0 0.0
        %6291 = vmatpush1.xpose.msra.mxu0 0.0
        %6292 = vmatprep.subr.mxu0 0.0
        %6293 = vmatpush1.xpose.msra.mxu0 0.0
        %6294 = vmatprep.subr.mxu0 0.0
        %6295 = vmatpush1.xpose.msra.mxu0 0.0
        %6296 = vmatprep.subr.mxu0 0.0
        %6297 = vmatpush1.xpose.msra.mxu0 0.0
        %6298 = vmatprep.subr.mxu0 0.0
        %6299 = vmatpush1.xpose.msra.mxu0 0.0
        %6300 = vmatprep.subr.mxu0 0.0
        %6301 = vmatpush1.xpose.msra.mxu0 0.0
        %6302 = vmatprep.subr.mxu0 0.0
        %6303 = vmatpush1.xpose.msra.mxu0 0.0
        %6304 = vmatprep.subr.mxu0 0.0
        %6305 = vmatpush1.xpose.msra.mxu0 0.0
        %6306 = vmatprep.subr.mxu0 0.0
        %6307 = vmatpush1.xpose.msra.mxu0 0.0
        %6308 = vmatprep.subr.mxu0 0.0
        %6309 = vmatpush1.xpose.msra.mxu0 0.0
        %6310 = vmatprep.subr.mxu0 0.0
        %6311 = vmatpush1.xpose.msra.mxu0 0.0
        %6312 = vmatprep.subr.mxu0 0.0
        %6313 = vmatpush1.xpose.msra.mxu0 0.0
        %6314 = vmatprep.subr.mxu0 0.0
        %6315 = vmatpush1.xpose.msra.mxu0 0.0
        %6316 = vmatprep.subr.mxu0 0.0
        %6317 = vmatpush1.xpose.msra.mxu0 0.0
        %6318 = vmatprep.subr.mxu0 0.0
        %6319 = vmatpush1.xpose.msra.mxu0 0.0
        %6320 = vmatprep.subr.mxu0 0.0
        %6321 = vmatpush1.xpose.msra.mxu0 0.0
        %6322 = vmatprep.subr.mxu0 0.0
        %6323 = vmatpush1.xpose.msra.mxu0 0.0
        %6324 = vmatprep.mubr.f32.mxu0 0.0
        %v6325 = vand.u32 %v6255, 4294901760
        %v6326 = vsub.f32 %v6255, %v6325
        %v6327 = vand.u32 %v6326, 4294901760
        %v6328 = vsub.f32 %v6326, %v6327
        %v6329 = vand.u32 %v6328, 4294901760
        %6330 = vmatmul.mubr.f32.gmra.mrb[0].mxu0 %v6329
        %v6331 = vpop.f32.mrb[0].mxu0
        %v6332 = vadd.f32 %v2144, %v6331
        %v6333 = vpop.f32.mrb[0].mxu0
        %6334 = vdwg.mxu0
        %6335 = vmatprep.subr.mxu0 0.0
        %v6336 = vand.u32 %v6257, 4294901760
        %v6337 = vsub.f32 %v6257, %v6336
        %v6338 = vand.u32 %v6337, 4294901760
        %v6339 = vsub.f32 %v6337, %v6338
        %v6340 = vand.u32 %v6339, 4294901760
        %6341 = vmatpush1.xpose.msra.mxu0 %v6340
        %6342 = vmatprep.subr.mxu0 0.0
        %6343 = vmatpush1.xpose.msra.mxu0 0.0
        %6344 = vmatprep.subr.mxu0 0.0
        %6345 = vmatpush1.xpose.msra.mxu0 0.0
        %6346 = vmatprep.subr.mxu0 0.0
        %6347 = vmatpush1.xpose.msra.mxu0 0.0
        %6348 = vmatprep.subr.mxu0 0.0
        %6349 = vmatpush1.xpose.msra.mxu0 0.0
        %6350 = vmatprep.subr.mxu0 0.0
        %6351 = vmatpush1.xpose.msra.mxu0 0.0
        %6352 = vmatprep.subr.mxu0 0.0
        %6353 = vmatpush1.xpose.msra.mxu0 0.0
        %6354 = vmatprep.subr.mxu0 0.0
        %6355 = vmatpush1.xpose.msra.mxu0 0.0
        %6356 = vmatprep.subr.mxu0 0.0
        %6357 = vmatpush1.xpose.msra.mxu0 0.0
        %6358 = vmatprep.subr.mxu0 0.0
        %6359 = vmatpush1.xpose.msra.mxu0 0.0
        %6360 = vmatprep.subr.mxu0 0.0
        %6361 = vmatpush1.xpose.msra.mxu0 0.0
        %6362 = vmatprep.subr.mxu0 0.0
        %6363 = vmatpush1.xpose.msra.mxu0 0.0
        %6364 = vmatprep.subr.mxu0 0.0
        %6365 = vmatpush1.xpose.msra.mxu0 0.0
        %6366 = vmatprep.subr.mxu0 0.0
        %6367 = vmatpush1.xpose.msra.mxu0 0.0
        %6368 = vmatprep.subr.mxu0 0.0
        %6369 = vmatpush1.xpose.msra.mxu0 0.0
        %6370 = vmatprep.subr.mxu0 0.0
        %6371 = vmatpush1.xpose.msra.mxu0 0.0
        %6372 = vmatprep.subr.mxu0 0.0
        %6373 = vmatpush1.xpose.msra.mxu0 0.0
        %6374 = vmatprep.subr.mxu0 0.0
        %6375 = vmatpush1.xpose.msra.mxu0 0.0
        %6376 = vmatprep.subr.mxu0 0.0
        %6377 = vmatpush1.xpose.msra.mxu0 0.0
        %6378 = vmatprep.subr.mxu0 0.0
        %6379 = vmatpush1.xpose.msra.mxu0 0.0
        %6380 = vmatprep.subr.mxu0 0.0
        %6381 = vmatpush1.xpose.msra.mxu0 0.0
        %6382 = vmatprep.subr.mxu0 0.0
        %6383 = vmatpush1.xpose.msra.mxu0 0.0
        %6384 = vmatprep.subr.mxu0 0.0
        %6385 = vmatpush1.xpose.msra.mxu0 0.0
        %6386 = vmatprep.subr.mxu0 0.0
        %6387 = vmatpush1.xpose.msra.mxu0 0.0
        %6388 = vmatprep.subr.mxu0 0.0
        %6389 = vmatpush1.xpose.msra.mxu0 0.0
        %6390 = vmatprep.subr.mxu0 0.0
        %6391 = vmatpush1.xpose.msra.mxu0 0.0
        %6392 = vmatprep.subr.mxu0 0.0
        %6393 = vmatpush1.xpose.msra.mxu0 0.0
        %6394 = vmatprep.subr.mxu0 0.0
        %6395 = vmatpush1.xpose.msra.mxu0 0.0
        %6396 = vmatprep.subr.mxu0 0.0
        %6397 = vmatpush1.xpose.msra.mxu0 0.0
        %6398 = vmatprep.subr.mxu0 0.0
        %6399 = vmatpush1.xpose.msra.mxu0 0.0
        %6400 = vmatprep.subr.mxu0 0.0
        %6401 = vmatpush1.xpose.msra.mxu0 0.0
        %6402 = vmatprep.subr.mxu0 0.0
        %6403 = vmatpush1.xpose.msra.mxu0 0.0
        %6404 = vmatprep.mubr.f32.mxu0 0.0
        %v6405 = vand.u32 %v6255, 4294901760
        %6406 = vmatmul.mubr.f32.gmra.mrb[0].mxu0 %v6405
        %v6407 = vpop.f32.mrb[0].mxu0
        %v6408 = vadd.f32 %v6332, %v6407
        %v6409 = vpop.f32.mrb[0].mxu0
        %6410 = vdwg.mxu0
        %6411 = vmatprep.subr.mxu0 0.0
        %v6412 = vand.u32 %v6257, 4294901760
        %v6413 = vsub.f32 %v6257, %v6412
        %6414 = vmatpush1.xpose.msra.mxu0 %v6413
        %6415 = vmatprep.subr.mxu0 0.0
        %6416 = vmatpush1.xpose.msra.mxu0 0.0
        %6417 = vmatprep.subr.mxu0 0.0
        %6418 = vmatpush1.xpose.msra.mxu0 0.0
        %6419 = vmatprep.subr.mxu0 0.0
        %6420 = vmatpush1.xpose.msra.mxu0 0.0
        %6421 = vmatprep.subr.mxu0 0.0
        %6422 = vmatpush1.xpose.msra.mxu0 0.0
        %6423 = vmatprep.subr.mxu0 0.0
        %6424 = vmatpush1.xpose.msra.mxu0 0.0
        %6425 = vmatprep.subr.mxu0 0.0
        %6426 = vmatpush1.xpose.msra.mxu0 0.0
        %6427 = vmatprep.subr.mxu0 0.0
        %6428 = vmatpush1.xpose.msra.mxu0 0.0
        %6429 = vmatprep.subr.mxu0 0.0
        %6430 = vmatpush1.xpose.msra.mxu0 0.0
        %6431 = vmatprep.subr.mxu0 0.0
        %6432 = vmatpush1.xpose.msra.mxu0 0.0
        %6433 = vmatprep.subr.mxu0 0.0
        %6434 = vmatpush1.xpose.msra.mxu0 0.0
        %6435 = vmatprep.subr.mxu0 0.0
        %6436 = vmatpush1.xpose.msra.mxu0 0.0
        %6437 = vmatprep.subr.mxu0 0.0
        %6438 = vmatpush1.xpose.msra.mxu0 0.0
        %6439 = vmatprep.subr.mxu0 0.0
        %6440 = vmatpush1.xpose.msra.mxu0 0.0
        %6441 = vmatprep.subr.mxu0 0.0
        %6442 = vmatpush1.xpose.msra.mxu0 0.0
        %6443 = vmatprep.subr.mxu0 0.0
        %6444 = vmatpush1.xpose.msra.mxu0 0.0
        %6445 = vmatprep.subr.mxu0 0.0
        %6446 = vmatpush1.xpose.msra.mxu0 0.0
        %6447 = vmatprep.subr.mxu0 0.0
        %6448 = vmatpush1.xpose.msra.mxu0 0.0
        %6449 = vmatprep.subr.mxu0 0.0
        %6450 = vmatpush1.xpose.msra.mxu0 0.0
        %6451 = vmatprep.subr.mxu0 0.0
        %6452 = vmatpush1.xpose.msra.mxu0 0.0
        %6453 = vmatprep.subr.mxu0 0.0
        %6454 = vmatpush1.xpose.msra.mxu0 0.0
        %6455 = vmatprep.subr.mxu0 0.0
        %6456 = vmatpush1.xpose.msra.mxu0 0.0
        %6457 = vmatprep.subr.mxu0 0.0
        %6458 = vmatpush1.xpose.msra.mxu0 0.0
        %6459 = vmatprep.subr.mxu0 0.0
        %6460 = vmatpush1.xpose.msra.mxu0 0.0
        %6461 = vmatprep.subr.mxu0 0.0
        %6462 = vmatpush1.xpose.msra.mxu0 0.0
        %6463 = vmatprep.subr.mxu0 0.0
        %6464 = vmatpush1.xpose.msra.mxu0 0.0
        %6465 = vmatprep.subr.mxu0 0.0
        %6466 = vmatpush1.xpose.msra.mxu0 0.0
        %6467 = vmatprep.subr.mxu0 0.0
        %6468 = vmatpush1.xpose.msra.mxu0 0.0
        %6469 = vmatprep.subr.mxu0 0.0
        %6470 = vmatpush1.xpose.msra.mxu0 0.0
        %6471 = vmatprep.subr.mxu0 0.0
        %6472 = vmatpush1.xpose.msra.mxu0 0.0
        %6473 = vmatprep.subr.mxu0 0.0
        %6474 = vmatpush1.xpose.msra.mxu0 0.0
        %6475 = vmatprep.subr.mxu0 0.0
        %6476 = vmatpush1.xpose.msra.mxu0 0.0
        %6477 = vmatprep.mubr.f32.mxu0 0.0
        %v6478 = vand.u32 %v6255, 4294901760
        %v6479 = vsub.f32 %v6255, %v6478
        %6480 = vmatmul.mubr.f32.gmra.mrb[0].mxu0 %v6479
        %v6481 = vpop.f32.mrb[0].mxu0
        %v6482 = vadd.f32 %v6408, %v6481
        %v6483 = vpop.f32.mrb[0].mxu0
        %6484 = vdwg.mxu0
        %6485 = vmatprep.subr.mxu0 0.0
        %v6486 = vand.u32 %v6257, 4294901760
        %6487 = vmatpush1.xpose.msra.mxu0 %v6486
        %6488 = vmatprep.subr.mxu0 0.0
        %6489 = vmatpush1.xpose.msra.mxu0 0.0
        %6490 = vmatprep.subr.mxu0 0.0
        %6491 = vmatpush1.xpose.msra.mxu0 0.0
        %6492 = vmatprep.subr.mxu0 0.0
        %6493 = vmatpush1.xpose.msra.mxu0 0.0
        %6494 = vmatprep.subr.mxu0 0.0
        %6495 = vmatpush1.xpose.msra.mxu0 0.0
        %6496 = vmatprep.subr.mxu0 0.0
        %6497 = vmatpush1.xpose.msra.mxu0 0.0
        %6498 = vmatprep.subr.mxu0 0.0
        %6499 = vmatpush1.xpose.msra.mxu0 0.0
        %6500 = vmatprep.subr.mxu0 0.0
        %6501 = vmatpush1.xpose.msra.mxu0 0.0
        %6502 = vmatprep.subr.mxu0 0.0
        %6503 = vmatpush1.xpose.msra.mxu0 0.0
        %6504 = vmatprep.subr.mxu0 0.0
        %6505 = vmatpush1.xpose.msra.mxu0 0.0
        %6506 = vmatprep.subr.mxu0 0.0
        %6507 = vmatpush1.xpose.msra.mxu0 0.0
        %6508 = vmatprep.subr.mxu0 0.0
        %6509 = vmatpush1.xpose.msra.mxu0 0.0
        %6510 = vmatprep.subr.mxu0 0.0
        %6511 = vmatpush1.xpose.msra.mxu0 0.0
        %6512 = vmatprep.subr.mxu0 0.0
        %6513 = vmatpush1.xpose.msra.mxu0 0.0
        %6514 = vmatprep.subr.mxu0 0.0
        %6515 = vmatpush1.xpose.msra.mxu0 0.0
        %6516 = vmatprep.subr.mxu0 0.0
        %6517 = vmatpush1.xpose.msra.mxu0 0.0
        %6518 = vmatprep.subr.mxu0 0.0
        %6519 = vmatpush1.xpose.msra.mxu0 0.0
        %6520 = vmatprep.subr.mxu0 0.0
        %6521 = vmatpush1.xpose.msra.mxu0 0.0
        %6522 = vmatprep.subr.mxu0 0.0
        %6523 = vmatpush1.xpose.msra.mxu0 0.0
        %6524 = vmatprep.subr.mxu0 0.0
        %6525 = vmatpush1.xpose.msra.mxu0 0.0
        %6526 = vmatprep.subr.mxu0 0.0
        %6527 = vmatpush1.xpose.msra.mxu0 0.0
        %6528 = vmatprep.subr.mxu0 0.0
        %6529 = vmatpush1.xpose.msra.mxu0 0.0
        %6530 = vmatprep.subr.mxu0 0.0
        %6531 = vmatpush1.xpose.msra.mxu0 0.0
        %6532 = vmatprep.subr.mxu0 0.0
        %6533 = vmatpush1.xpose.msra.mxu0 0.0
        %6534 = vmatprep.subr.mxu0 0.0
        %6535 = vmatpush1.xpose.msra.mxu0 0.0
        %6536 = vmatprep.subr.mxu0 0.0
        %6537 = vmatpush1.xpose.msra.mxu0 0.0
        %6538 = vmatprep.subr.mxu0 0.0
        %6539 = vmatpush1.xpose.msra.mxu0 0.0
        %6540 = vmatprep.subr.mxu0 0.0
        %6541 = vmatpush1.xpose.msra.mxu0 0.0
        %6542 = vmatprep.subr.mxu0 0.0
        %6543 = vmatpush1.xpose.msra.mxu0 0.0
        %6544 = vmatprep.subr.mxu0 0.0
        %6545 = vmatpush1.xpose.msra.mxu0 0.0
        %6546 = vmatprep.subr.mxu0 0.0
        %6547 = vmatpush1.xpose.msra.mxu0 0.0
        %6548 = vmatprep.subr.mxu0 0.0
        %6549 = vmatpush1.xpose.msra.mxu0 0.0
        %6550 = vmatprep.mubr.f32.mxu0 0.0
        %v6551 = vand.u32 %v6255, 4294901760
        %v6552 = vsub.f32 %v6255, %v6551
        %v6553 = vand.u32 %v6552, 4294901760
        %6554 = vmatmul.mubr.f32.gmra.mrb[0].mxu0 %v6553
        %v6555 = vpop.f32.mrb[0].mxu0
        %v6556 = vadd.f32 %v6482, %v6555
        %v6557 = vpop.f32.mrb[0].mxu0
        %6558 = vdwg.mxu0
        %6559 = vmatprep.subr.mxu0 0.0
        %v6560 = vand.u32 %v6257, 4294901760
        %v6561 = vsub.f32 %v6257, %v6560
        %v6562 = vand.u32 %v6561, 4294901760
        %6563 = vmatpush1.xpose.msra.mxu0 %v6562
        %6564 = vmatprep.subr.mxu0 0.0
        %6565 = vmatpush1.xpose.msra.mxu0 0.0
        %6566 = vmatprep.subr.mxu0 0.0
        %6567 = vmatpush1.xpose.msra.mxu0 0.0
        %6568 = vmatprep.subr.mxu0 0.0
        %6569 = vmatpush1.xpose.msra.mxu0 0.0
        %6570 = vmatprep.subr.mxu0 0.0
        %6571 = vmatpush1.xpose.msra.mxu0 0.0
        %6572 = vmatprep.subr.mxu0 0.0
        %6573 = vmatpush1.xpose.msra.mxu0 0.0
        %6574 = vmatprep.subr.mxu0 0.0
        %6575 = vmatpush1.xpose.msra.mxu0 0.0
        %6576 = vmatprep.subr.mxu0 0.0
        %6577 = vmatpush1.xpose.msra.mxu0 0.0
        %6578 = vmatprep.subr.mxu0 0.0
        %6579 = vmatpush1.xpose.msra.mxu0 0.0
        %6580 = vmatprep.subr.mxu0 0.0
        %6581 = vmatpush1.xpose.msra.mxu0 0.0
        %6582 = vmatprep.subr.mxu0 0.0
        %6583 = vmatpush1.xpose.msra.mxu0 0.0
        %6584 = vmatprep.subr.mxu0 0.0
        %6585 = vmatpush1.xpose.msra.mxu0 0.0
        %6586 = vmatprep.subr.mxu0 0.0
        %6587 = vmatpush1.xpose.msra.mxu0 0.0
        %6588 = vmatprep.subr.mxu0 0.0
        %6589 = vmatpush1.xpose.msra.mxu0 0.0
        %6590 = vmatprep.subr.mxu0 0.0
        %6591 = vmatpush1.xpose.msra.mxu0 0.0
        %6592 = vmatprep.subr.mxu0 0.0
        %6593 = vmatpush1.xpose.msra.mxu0 0.0
        %6594 = vmatprep.subr.mxu0 0.0
        %6595 = vmatpush1.xpose.msra.mxu0 0.0
        %6596 = vmatprep.subr.mxu0 0.0
        %6597 = vmatpush1.xpose.msra.mxu0 0.0
        %6598 = vmatprep.subr.mxu0 0.0
        %6599 = vmatpush1.xpose.msra.mxu0 0.0
        %6600 = vmatprep.subr.mxu0 0.0
        %6601 = vmatpush1.xpose.msra.mxu0 0.0
        %6602 = vmatprep.subr.mxu0 0.0
        %6603 = vmatpush1.xpose.msra.mxu0 0.0
        %6604 = vmatprep.subr.mxu0 0.0
        %6605 = vmatpush1.xpose.msra.mxu0 0.0
        %6606 = vmatprep.subr.mxu0 0.0
        %6607 = vmatpush1.xpose.msra.mxu0 0.0
        %6608 = vmatprep.subr.mxu0 0.0
        %6609 = vmatpush1.xpose.msra.mxu0 0.0
        %6610 = vmatprep.subr.mxu0 0.0
        %6611 = vmatpush1.xpose.msra.mxu0 0.0
        %6612 = vmatprep.subr.mxu0 0.0
        %6613 = vmatpush1.xpose.msra.mxu0 0.0
        %6614 = vmatprep.subr.mxu0 0.0
        %6615 = vmatpush1.xpose.msra.mxu0 0.0
        %6616 = vmatprep.subr.mxu0 0.0
        %6617 = vmatpush1.xpose.msra.mxu0 0.0
        %6618 = vmatprep.subr.mxu0 0.0
        %6619 = vmatpush1.xpose.msra.mxu0 0.0
        %6620 = vmatprep.subr.mxu0 0.0
        %6621 = vmatpush1.xpose.msra.mxu0 0.0
        %6622 = vmatprep.subr.mxu0 0.0
        %6623 = vmatpush1.xpose.msra.mxu0 0.0
        %6624 = vmatprep.subr.mxu0 0.0
        %6625 = vmatpush1.xpose.msra.mxu0 0.0
        %6626 = vmatprep.mubr.f32.mxu0 0.0
        %v6627 = vand.u32 %v6255, 4294901760
        %6628 = vmatmul.mubr.f32.gmra.mrb[0].mxu0 %v6627
        %v6629 = vpop.f32.mrb[0].mxu0
        %v6630 = vadd.f32 %v6556, %v6629
        %v6631 = vpop.f32.mrb[0].mxu0
        %6632 = vdwg.mxu0
        %6633 = vmatprep.subr.mxu0 0.0
        %v6634 = vand.u32 %v6257, 4294901760
        %6635 = vmatpush1.xpose.msra.mxu0 %v6634
        %6636 = vmatprep.subr.mxu0 0.0
        %6637 = vmatpush1.xpose.msra.mxu0 0.0
        %6638 = vmatprep.subr.mxu0 0.0
        %6639 = vmatpush1.xpose.msra.mxu0 0.0
        %6640 = vmatprep.subr.mxu0 0.0
        %6641 = vmatpush1.xpose.msra.mxu0 0.0
        %6642 = vmatprep.subr.mxu0 0.0
        %6643 = vmatpush1.xpose.msra.mxu0 0.0
        %6644 = vmatprep.subr.mxu0 0.0
        %6645 = vmatpush1.xpose.msra.mxu0 0.0
        %6646 = vmatprep.subr.mxu0 0.0
        %6647 = vmatpush1.xpose.msra.mxu0 0.0
        %6648 = vmatprep.subr.mxu0 0.0
        %6649 = vmatpush1.xpose.msra.mxu0 0.0
        %6650 = vmatprep.subr.mxu0 0.0
        %6651 = vmatpush1.xpose.msra.mxu0 0.0
        %6652 = vmatprep.subr.mxu0 0.0
        %6653 = vmatpush1.xpose.msra.mxu0 0.0
        %6654 = vmatprep.subr.mxu0 0.0
        %6655 = vmatpush1.xpose.msra.mxu0 0.0
        %6656 = vmatprep.subr.mxu0 0.0
        %6657 = vmatpush1.xpose.msra.mxu0 0.0
        %6658 = vmatprep.subr.mxu0 0.0
        %6659 = vmatpush1.xpose.msra.mxu0 0.0
        %6660 = vmatprep.subr.mxu0 0.0
        %6661 = vmatpush1.xpose.msra.mxu0 0.0
        %6662 = vmatprep.subr.mxu0 0.0
        %6663 = vmatpush1.xpose.msra.mxu0 0.0
        %6664 = vmatprep.subr.mxu0 0.0
        %6665 = vmatpush1.xpose.msra.mxu0 0.0
        %6666 = vmatprep.subr.mxu0 0.0
        %6667 = vmatpush1.xpose.msra.mxu0 0.0
        %6668 = vmatprep.subr.mxu0 0.0
        %6669 = vmatpush1.xpose.msra.mxu0 0.0
        %6670 = vmatprep.subr.mxu0 0.0
        %6671 = vmatpush1.xpose.msra.mxu0 0.0
        %6672 = vmatprep.subr.mxu0 0.0
        %6673 = vmatpush1.xpose.msra.mxu0 0.0
        %6674 = vmatprep.subr.mxu0 0.0
        %6675 = vmatpush1.xpose.msra.mxu0 0.0
        %6676 = vmatprep.subr.mxu0 0.0
        %6677 = vmatpush1.xpose.msra.mxu0 0.0
        %6678 = vmatprep.subr.mxu0 0.0
        %6679 = vmatpush1.xpose.msra.mxu0 0.0
        %6680 = vmatprep.subr.mxu0 0.0
        %6681 = vmatpush1.xpose.msra.mxu0 0.0
        %6682 = vmatprep.subr.mxu0 0.0
        %6683 = vmatpush1.xpose.msra.mxu0 0.0
        %6684 = vmatprep.subr.mxu0 0.0
        %6685 = vmatpush1.xpose.msra.mxu0 0.0
        %6686 = vmatprep.subr.mxu0 0.0
        %6687 = vmatpush1.xpose.msra.mxu0 0.0
        %6688 = vmatprep.subr.mxu0 0.0
        %6689 = vmatpush1.xpose.msra.mxu0 0.0
        %6690 = vmatprep.subr.mxu0 0.0
        %6691 = vmatpush1.xpose.msra.mxu0 0.0
        %6692 = vmatprep.subr.mxu0 0.0
        %6693 = vmatpush1.xpose.msra.mxu0 0.0
        %6694 = vmatprep.subr.mxu0 0.0
        %6695 = vmatpush1.xpose.msra.mxu0 0.0
        %6696 = vmatprep.subr.mxu0 0.0
        %6697 = vmatpush1.xpose.msra.mxu0 0.0
        %6698 = vmatprep.mubr.f32.mxu0 0.0
        %v6699 = vand.u32 %v6255, 4294901760
        %6700 = vmatmul.mubr.f32.gmra.mrb[0].mxu0 %v6699
        %v6701 = vpop.f32.mrb[0].mxu0
        %v6702 = vadd.f32 %v6630, %v6701
        %v6703 = vpop.f32.mrb[0].mxu0
        %6704 = vdwg.mxu0
        %v6705 = vsel %vm2146, %v6702, -inf
        %6706 = vmax.xlane.f32.xlu0 %v6705
        %v6707 = vpop.xlane.xlu0 %6706
        %v6708 = vsub.f32 %v6702, %v6707
        %v6709 = vmul.f32 %v6708, 1.442695
        %v6710 = vpow.pop %v6709
        %v6711 = vsel %vm2146, %v6710, 0.0
        %6712 = vadd.xlane.f32.xlu0 %v6711
        %v6713 = vpop.xlane.xlu0 %6712
        %v6714 = vrcp.pop %v6713
        %v6715 = vmul.f32 %v6710, %v6714
        %v6716 = vsel %vm2615, 0.0, %v6715
        %6717 = vrot.lane.b32.xlu0 %v2128, 104
        %v6718 = vpop.permute.xlu0 %6717
        %v6721 = vsel %vm2146, %v6716, 0
        %6723 = vmatprep.subr.mxu0 0.0
        %v6724 = vand.u32 %v6718, 4294901760
        %6725 = vmatpush1.msra.mxu0 %v6724
        %6726 = vmatprep.subr.mxu0 0.0
        %6727 = vmatpush1.msra.mxu0 0.0
        %6728 = vmatprep.subr.mxu0 0.0
        %6729 = vmatpush1.msra.mxu0 0.0
        %6730 = vmatprep.subr.mxu0 0.0
        %6731 = vmatpush1.msra.mxu0 0.0
        %6732 = vmatprep.subr.mxu0 0.0
        %6733 = vmatpush1.msra.mxu0 0.0
        %6734 = vmatprep.subr.mxu0 0.0
        %6735 = vmatpush1.msra.mxu0 0.0
        %6736 = vmatprep.subr.mxu0 0.0
        %6737 = vmatpush1.msra.mxu0 0.0
        %6738 = vmatprep.subr.mxu0 0.0
        %6739 = vmatpush1.msra.mxu0 0.0
        %6740 = vmatprep.subr.mxu0 0.0
        %6741 = vmatpush1.msra.mxu0 0.0
        %6742 = vmatprep.subr.mxu0 0.0
        %6743 = vmatpush1.msra.mxu0 0.0
        %6744 = vmatprep.subr.mxu0 0.0
        %6745 = vmatpush1.msra.mxu0 0.0
        %6746 = vmatprep.subr.mxu0 0.0
        %6747 = vmatpush1.msra.mxu0 0.0
        %6748 = vmatprep.subr.mxu0 0.0
        %6749 = vmatpush1.msra.mxu0 0.0
        %6750 = vmatprep.subr.mxu0 0.0
        %6751 = vmatpush1.msra.mxu0 0.0
        %6752 = vmatprep.subr.mxu0 0.0
        %6753 = vmatpush1.msra.mxu0 0.0
        %6754 = vmatprep.subr.mxu0 0.0
        %6755 = vmatpush1.msra.mxu0 0.0
        %6756 = vmatprep.subr.mxu0 0.0
        %6757 = vmatpush1.msra.mxu0 0.0
        %6758 = vmatprep.subr.mxu0 0.0
        %6759 = vmatpush1.msra.mxu0 0.0
        %6760 = vmatprep.subr.mxu0 0.0
        %6761 = vmatpush1.msra.mxu0 0.0
        %6762 = vmatprep.subr.mxu0 0.0
        %6763 = vmatpush1.msra.mxu0 0.0
        %6764 = vmatprep.subr.mxu0 0.0
        %6765 = vmatpush1.msra.mxu0 0.0
        %6766 = vmatprep.subr.mxu0 0.0
        %6767 = vmatpush1.msra.mxu0 0.0
        %6768 = vmatprep.subr.mxu0 0.0
        %6769 = vmatpush1.msra.mxu0 0.0
        %6770 = vmatprep.subr.mxu0 0.0
        %6771 = vmatpush1.msra.mxu0 0.0
        %6772 = vmatprep.subr.mxu0 0.0
        %6773 = vmatpush1.msra.mxu0 0.0
        %6774 = vmatprep.subr.mxu0 0.0
        %6775 = vmatpush1.msra.mxu0 0.0
        %6776 = vmatprep.subr.mxu0 0.0
        %6777 = vmatpush1.msra.mxu0 0.0
        %6778 = vmatprep.subr.mxu0 0.0
        %6779 = vmatpush1.msra.mxu0 0.0
        %6780 = vmatprep.subr.mxu0 0.0
        %6781 = vmatpush1.msra.mxu0 0.0
        %6782 = vmatprep.subr.mxu0 0.0
        %6783 = vmatpush1.msra.mxu0 0.0
        %6784 = vmatprep.subr.mxu0 0.0
        %6785 = vmatpush1.msra.mxu0 0.0
        %6786 = vmatprep.subr.mxu0 0.0
        %6787 = vmatpush1.msra.mxu0 0.0
        %6788 = vmatprep.mubr.f32.mxu0 0.0
        %v6789 = vand.u32 %v6721, 4294901760
        %v6790 = vsub.f32 %v6721, %v6789
        %v6791 = vand.u32 %v6790, 4294901760
        %v6792 = vsub.f32 %v6790, %v6791
        %v6793 = vand.u32 %v6792, 4294901760
        %6794 = vmatmul.mubr.f32.gmra.mrb[0].mxu0 %v6793
        %v6795 = vpop.f32.mrb[0].mxu0
        %v6796 = vadd.f32 0.0, %v6795
        %v6797 = vpop.f32.mrb[0].mxu0
        %6798 = vdwg.mxu0
        %6799 = vmatprep.subr.mxu0 0.0
        %v6800 = vand.u32 %v6718, 4294901760
        %v6801 = vsub.f32 %v6718, %v6800
        %v6802 = vand.u32 %v6801, 4294901760
        %v6803 = vsub.f32 %v6801, %v6802
        %v6804 = vand.u32 %v6803, 4294901760
        %6805 = vmatpush1.msra.mxu0 %v6804
        %6806 = vmatprep.subr.mxu0 0.0
        %6807 = vmatpush1.msra.mxu0 0.0
        %6808 = vmatprep.subr.mxu0 0.0
        %6809 = vmatpush1.msra.mxu0 0.0
        %6810 = vmatprep.subr.mxu0 0.0
        %6811 = vmatpush1.msra.mxu0 0.0
        %6812 = vmatprep.subr.mxu0 0.0
        %6813 = vmatpush1.msra.mxu0 0.0
        %6814 = vmatprep.subr.mxu0 0.0
        %6815 = vmatpush1.msra.mxu0 0.0
        %6816 = vmatprep.subr.mxu0 0.0
        %6817 = vmatpush1.msra.mxu0 0.0
        %6818 = vmatprep.subr.mxu0 0.0
        %6819 = vmatpush1.msra.mxu0 0.0
        %6820 = vmatprep.subr.mxu0 0.0
        %6821 = vmatpush1.msra.mxu0 0.0
        %6822 = vmatprep.subr.mxu0 0.0
        %6823 = vmatpush1.msra.mxu0 0.0
        %6824 = vmatprep.subr.mxu0 0.0
        %6825 = vmatpush1.msra.mxu0 0.0
        %6826 = vmatprep.subr.mxu0 0.0
        %6827 = vmatpush1.msra.mxu0 0.0
        %6828 = vmatprep.subr.mxu0 0.0
        %6829 = vmatpush1.msra.mxu0 0.0
        %6830 = vmatprep.subr.mxu0 0.0
        %6831 = vmatpush1.msra.mxu0 0.0
        %6832 = vmatprep.subr.mxu0 0.0
        %6833 = vmatpush1.msra.mxu0 0.0
        %6834 = vmatprep.subr.mxu0 0.0
        %6835 = vmatpush1.msra.mxu0 0.0
        %6836 = vmatprep.subr.mxu0 0.0
        %6837 = vmatpush1.msra.mxu0 0.0
        %6838 = vmatprep.subr.mxu0 0.0
        %6839 = vmatpush1.msra.mxu0 0.0
        %6840 = vmatprep.subr.mxu0 0.0
        %6841 = vmatpush1.msra.mxu0 0.0
        %6842 = vmatprep.subr.mxu0 0.0
        %6843 = vmatpush1.msra.mxu0 0.0
        %6844 = vmatprep.subr.mxu0 0.0
        %6845 = vmatpush1.msra.mxu0 0.0
        %6846 = vmatprep.subr.mxu0 0.0
        %6847 = vmatpush1.msra.mxu0 0.0
        %6848 = vmatprep.subr.mxu0 0.0
        %6849 = vmatpush1.msra.mxu0 0.0
        %6850 = vmatprep.subr.mxu0 0.0
        %6851 = vmatpush1.msra.mxu0 0.0
        %6852 = vmatprep.subr.mxu0 0.0
        %6853 = vmatpush1.msra.mxu0 0.0
        %6854 = vmatprep.subr.mxu0 0.0
        %6855 = vmatpush1.msra.mxu0 0.0
        %6856 = vmatprep.subr.mxu0 0.0
        %6857 = vmatpush1.msra.mxu0 0.0
        %6858 = vmatprep.subr.mxu0 0.0
        %6859 = vmatpush1.msra.mxu0 0.0
        %6860 = vmatprep.subr.mxu0 0.0
        %6861 = vmatpush1.msra.mxu0 0.0
        %6862 = vmatprep.subr.mxu0 0.0
        %6863 = vmatpush1.msra.mxu0 0.0
        %6864 = vmatprep.subr.mxu0 0.0
        %6865 = vmatpush1.msra.mxu0 0.0
        %6866 = vmatprep.subr.mxu0 0.0
        %6867 = vmatpush1.msra.mxu0 0.0
        %6868 = vmatprep.mubr.f32.mxu0 0.0
        %v6869 = vand.u32 %v6721, 4294901760
        %6870 = vmatmul.mubr.f32.gmra.mrb[0].mxu0 %v6869
        %v6871 = vpop.f32.mrb[0].mxu0
        %v6872 = vadd.f32 %v6796, %v6871
        %v6873 = vpop.f32.mrb[0].mxu0
        %6874 = vdwg.mxu0
        %6875 = vmatprep.subr.mxu0 0.0
        %v6876 = vand.u32 %v6718, 4294901760
        %v6877 = vsub.f32 %v6718, %v6876
        %6878 = vmatpush1.msra.mxu0 %v6877
        %6879 = vmatprep.subr.mxu0 0.0
        %6880 = vmatpush1.msra.mxu0 0.0
        %6881 = vmatprep.subr.mxu0 0.0
        %6882 = vmatpush1.msra.mxu0 0.0
        %6883 = vmatprep.subr.mxu0 0.0
        %6884 = vmatpush1.msra.mxu0 0.0
        %6885 = vmatprep.subr.mxu0 0.0
        %6886 = vmatpush1.msra.mxu0 0.0
        %6887 = vmatprep.subr.mxu0 0.0
        %6888 = vmatpush1.msra.mxu0 0.0
        %6889 = vmatprep.subr.mxu0 0.0
        %6890 = vmatpush1.msra.mxu0 0.0
        %6891 = vmatprep.subr.mxu0 0.0
        %6892 = vmatpush1.msra.mxu0 0.0
        %6893 = vmatprep.subr.mxu0 0.0
        %6894 = vmatpush1.msra.mxu0 0.0
        %6895 = vmatprep.subr.mxu0 0.0
        %6896 = vmatpush1.msra.mxu0 0.0
        %6897 = vmatprep.subr.mxu0 0.0
        %6898 = vmatpush1.msra.mxu0 0.0
        %6899 = vmatprep.subr.mxu0 0.0
        %6900 = vmatpush1.msra.mxu0 0.0
        %6901 = vmatprep.subr.mxu0 0.0
        %6902 = vmatpush1.msra.mxu0 0.0
        %6903 = vmatprep.subr.mxu0 0.0
        %6904 = vmatpush1.msra.mxu0 0.0
        %6905 = vmatprep.subr.mxu0 0.0
        %6906 = vmatpush1.msra.mxu0 0.0
        %6907 = vmatprep.subr.mxu0 0.0
        %6908 = vmatpush1.msra.mxu0 0.0
        %6909 = vmatprep.subr.mxu0 0.0
        %6910 = vmatpush1.msra.mxu0 0.0
        %6911 = vmatprep.subr.mxu0 0.0
        %6912 = vmatpush1.msra.mxu0 0.0
        %6913 = vmatprep.subr.mxu0 0.0
        %6914 = vmatpush1.msra.mxu0 0.0
        %6915 = vmatprep.subr.mxu0 0.0
        %6916 = vmatpush1.msra.mxu0 0.0
        %6917 = vmatprep.subr.mxu0 0.0
        %6918 = vmatpush1.msra.mxu0 0.0
        %6919 = vmatprep.subr.mxu0 0.0
        %6920 = vmatpush1.msra.mxu0 0.0
        %6921 = vmatprep.subr.mxu0 0.0
        %6922 = vmatpush1.msra.mxu0 0.0
        %6923 = vmatprep.subr.mxu0 0.0
        %6924 = vmatpush1.msra.mxu0 0.0
        %6925 = vmatprep.subr.mxu0 0.0
        %6926 = vmatpush1.msra.mxu0 0.0
        %6927 = vmatprep.subr.mxu0 0.0
        %6928 = vmatpush1.msra.mxu0 0.0
        %6929 = vmatprep.subr.mxu0 0.0
        %6930 = vmatpush1.msra.mxu0 0.0
        %6931 = vmatprep.subr.mxu0 0.0
        %6932 = vmatpush1.msra.mxu0 0.0
        %6933 = vmatprep.subr.mxu0 0.0
        %6934 = vmatpush1.msra.mxu0 0.0
        %6935 = vmatprep.subr.mxu0 0.0
        %6936 = vmatpush1.msra.mxu0 0.0
        %6937 = vmatprep.subr.mxu0 0.0
        %6938 = vmatpush1.msra.mxu0 0.0
        %6939 = vmatprep.subr.mxu0 0.0
        %6940 = vmatpush1.msra.mxu0 0.0
        %6941 = vmatprep.mubr.f32.mxu0 0.0
        %v6942 = vand.u32 %v6721, 4294901760
        %v6943 = vsub.f32 %v6721, %v6942
        %6944 = vmatmul.mubr.f32.gmra.mrb[0].mxu0 %v6943
        %v6945 = vpop.f32.mrb[0].mxu0
        %v6946 = vadd.f32 %v6872, %v6945
        %v6947 = vpop.f32.mrb[0].mxu0
        %6948 = vdwg.mxu0
        %6949 = vmatprep.subr.mxu0 0.0
        %v6950 = vand.u32 %v6718, 4294901760
        %6951 = vmatpush1.msra.mxu0 %v6950
        %6952 = vmatprep.subr.mxu0 0.0
        %6953 = vmatpush1.msra.mxu0 0.0
        %6954 = vmatprep.subr.mxu0 0.0
        %6955 = vmatpush1.msra.mxu0 0.0
        %6956 = vmatprep.subr.mxu0 0.0
        %6957 = vmatpush1.msra.mxu0 0.0
        %6958 = vmatprep.subr.mxu0 0.0
        %6959 = vmatpush1.msra.mxu0 0.0
        %6960 = vmatprep.subr.mxu0 0.0
        %6961 = vmatpush1.msra.mxu0 0.0
        %6962 = vmatprep.subr.mxu0 0.0
        %6963 = vmatpush1.msra.mxu0 0.0
        %6964 = vmatprep.subr.mxu0 0.0
        %6965 = vmatpush1.msra.mxu0 0.0
        %6966 = vmatprep.subr.mxu0 0.0
        %6967 = vmatpush1.msra.mxu0 0.0
        %6968 = vmatprep.subr.mxu0 0.0
        %6969 = vmatpush1.msra.mxu0 0.0
        %6970 = vmatprep.subr.mxu0 0.0
        %6971 = vmatpush1.msra.mxu0 0.0
        %6972 = vmatprep.subr.mxu0 0.0
        %6973 = vmatpush1.msra.mxu0 0.0
        %6974 = vmatprep.subr.mxu0 0.0
        %6975 = vmatpush1.msra.mxu0 0.0
        %6976 = vmatprep.subr.mxu0 0.0
        %6977 = vmatpush1.msra.mxu0 0.0
        %6978 = vmatprep.subr.mxu0 0.0
        %6979 = vmatpush1.msra.mxu0 0.0
        %6980 = vmatprep.subr.mxu0 0.0
        %6981 = vmatpush1.msra.mxu0 0.0
        %6982 = vmatprep.subr.mxu0 0.0
        %6983 = vmatpush1.msra.mxu0 0.0
        %6984 = vmatprep.subr.mxu0 0.0
        %6985 = vmatpush1.msra.mxu0 0.0
        %6986 = vmatprep.subr.mxu0 0.0
        %6987 = vmatpush1.msra.mxu0 0.0
        %6988 = vmatprep.subr.mxu0 0.0
        %6989 = vmatpush1.msra.mxu0 0.0
        %6990 = vmatprep.subr.mxu0 0.0
        %6991 = vmatpush1.msra.mxu0 0.0
        %6992 = vmatprep.subr.mxu0 0.0
        %6993 = vmatpush1.msra.mxu0 0.0
        %6994 = vmatprep.subr.mxu0 0.0
        %6995 = vmatpush1.msra.mxu0 0.0
        %6996 = vmatprep.subr.mxu0 0.0
        %6997 = vmatpush1.msra.mxu0 0.0
        %6998 = vmatprep.subr.mxu0 0.0
        %6999 = vmatpush1.msra.mxu0 0.0
        %7000 = vmatprep.subr.mxu0 0.0
        %7001 = vmatpush1.msra.mxu0 0.0
        %7002 = vmatprep.subr.mxu0 0.0
        %7003 = vmatpush1.msra.mxu0 0.0
        %7004 = vmatprep.subr.mxu0 0.0
        %7005 = vmatpush1.msra.mxu0 0.0
        %7006 = vmatprep.subr.mxu0 0.0
        %7007 = vmatpush1.msra.mxu0 0.0
        %7008 = vmatprep.subr.mxu0 0.0
        %7009 = vmatpush1.msra.mxu0 0.0
        %7010 = vmatprep.subr.mxu0 0.0
        %7011 = vmatpush1.msra.mxu0 0.0
        %7012 = vmatprep.subr.mxu0 0.0
        %7013 = vmatpush1.msra.mxu0 0.0
        %7014 = vmatprep.mubr.f32.mxu0 0.0
        %v7015 = vand.u32 %v6721, 4294901760
        %v7016 = vsub.f32 %v6721, %v7015
        %v7017 = vand.u32 %v7016, 4294901760
        %7018 = vmatmul.mubr.f32.gmra.mrb[0].mxu0 %v7017
        %v7019 = vpop.f32.mrb[0].mxu0
        %v7020 = vadd.f32 %v6946, %v7019
        %v7021 = vpop.f32.mrb[0].mxu0
        %7022 = vdwg.mxu0
        %7023 = vmatprep.subr.mxu0 0.0
        %v7024 = vand.u32 %v6718, 4294901760
        %v7025 = vsub.f32 %v6718, %v7024
        %v7026 = vand.u32 %v7025, 4294901760
        %7027 = vmatpush1.msra.mxu0 %v7026
        %7028 = vmatprep.subr.mxu0 0.0
        %7029 = vmatpush1.msra.mxu0 0.0
        %7030 = vmatprep.subr.mxu0 0.0
        %7031 = vmatpush1.msra.mxu0 0.0
        %7032 = vmatprep.subr.mxu0 0.0
        %7033 = vmatpush1.msra.mxu0 0.0
        %7034 = vmatprep.subr.mxu0 0.0
        %7035 = vmatpush1.msra.mxu0 0.0
        %7036 = vmatprep.subr.mxu0 0.0
        %7037 = vmatpush1.msra.mxu0 0.0
        %7038 = vmatprep.subr.mxu0 0.0
        %7039 = vmatpush1.msra.mxu0 0.0
        %7040 = vmatprep.subr.mxu0 0.0
        %7041 = vmatpush1.msra.mxu0 0.0
        %7042 = vmatprep.subr.mxu0 0.0
        %7043 = vmatpush1.msra.mxu0 0.0
        %7044 = vmatprep.subr.mxu0 0.0
        %7045 = vmatpush1.msra.mxu0 0.0
        %7046 = vmatprep.subr.mxu0 0.0
        %7047 = vmatpush1.msra.mxu0 0.0
        %7048 = vmatprep.subr.mxu0 0.0
        %7049 = vmatpush1.msra.mxu0 0.0
        %7050 = vmatprep.subr.mxu0 0.0
        %7051 = vmatpush1.msra.mxu0 0.0
        %7052 = vmatprep.subr.mxu0 0.0
        %7053 = vmatpush1.msra.mxu0 0.0
        %7054 = vmatprep.subr.mxu0 0.0
        %7055 = vmatpush1.msra.mxu0 0.0
        %7056 = vmatprep.subr.mxu0 0.0
        %7057 = vmatpush1.msra.mxu0 0.0
        %7058 = vmatprep.subr.mxu0 0.0
        %7059 = vmatpush1.msra.mxu0 0.0
        %7060 = vmatprep.subr.mxu0 0.0
        %7061 = vmatpush1.msra.mxu0 0.0
        %7062 = vmatprep.subr.mxu0 0.0
        %7063 = vmatpush1.msra.mxu0 0.0
        %7064 = vmatprep.subr.mxu0 0.0
        %7065 = vmatpush1.msra.mxu0 0.0
        %7066 = vmatprep.subr.mxu0 0.0
        %7067 = vmatpush1.msra.mxu0 0.0
        %7068 = vmatprep.subr.mxu0 0.0
        %7069 = vmatpush1.msra.mxu0 0.0
        %7070 = vmatprep.subr.mxu0 0.0
        %7071 = vmatpush1.msra.mxu0 0.0
        %7072 = vmatprep.subr.mxu0 0.0
        %7073 = vmatpush1.msra.mxu0 0.0
        %7074 = vmatprep.subr.mxu0 0.0
        %7075 = vmatpush1.msra.mxu0 0.0
        %7076 = vmatprep.subr.mxu0 0.0
        %7077 = vmatpush1.msra.mxu0 0.0
        %7078 = vmatprep.subr.mxu0 0.0
        %7079 = vmatpush1.msra.mxu0 0.0
        %7080 = vmatprep.subr.mxu0 0.0
        %7081 = vmatpush1.msra.mxu0 0.0
        %7082 = vmatprep.subr.mxu0 0.0
        %7083 = vmatpush1.msra.mxu0 0.0
        %7084 = vmatprep.subr.mxu0 0.0
        %7085 = vmatpush1.msra.mxu0 0.0
        %7086 = vmatprep.subr.mxu0 0.0
        %7087 = vmatpush1.msra.mxu0 0.0
        %7088 = vmatprep.subr.mxu0 0.0
        %7089 = vmatpush1.msra.mxu0 0.0
        %7090 = vmatprep.mubr.f32.mxu0 0.0
        %v7091 = vand.u32 %v6721, 4294901760
        %7092 = vmatmul.mubr.f32.gmra.mrb[0].mxu0 %v7091
        %v7093 = vpop.f32.mrb[0].mxu0
        %v7094 = vadd.f32 %v7020, %v7093
        %v7095 = vpop.f32.mrb[0].mxu0
        %7096 = vdwg.mxu0
        %7097 = vmatprep.subr.mxu0 0.0
        %v7098 = vand.u32 %v6718, 4294901760
        %7099 = vmatpush1.msra.mxu0 %v7098
        %7100 = vmatprep.subr.mxu0 0.0
        %7101 = vmatpush1.msra.mxu0 0.0
        %7102 = vmatprep.subr.mxu0 0.0
        %7103 = vmatpush1.msra.mxu0 0.0
        %7104 = vmatprep.subr.mxu0 0.0
        %7105 = vmatpush1.msra.mxu0 0.0
        %7106 = vmatprep.subr.mxu0 0.0
        %7107 = vmatpush1.msra.mxu0 0.0
        %7108 = vmatprep.subr.mxu0 0.0
        %7109 = vmatpush1.msra.mxu0 0.0
        %7110 = vmatprep.subr.mxu0 0.0
        %7111 = vmatpush1.msra.mxu0 0.0
        %7112 = vmatprep.subr.mxu0 0.0
        %7113 = vmatpush1.msra.mxu0 0.0
        %7114 = vmatprep.subr.mxu0 0.0
        %7115 = vmatpush1.msra.mxu0 0.0
        %7116 = vmatprep.subr.mxu0 0.0
        %7117 = vmatpush1.msra.mxu0 0.0
        %7118 = vmatprep.subr.mxu0 0.0
        %7119 = vmatpush1.msra.mxu0 0.0
        %7120 = vmatprep.subr.mxu0 0.0
        %7121 = vmatpush1.msra.mxu0 0.0
        %7122 = vmatprep.subr.mxu0 0.0
        %7123 = vmatpush1.msra.mxu0 0.0
        %7124 = vmatprep.subr.mxu0 0.0
        %7125 = vmatpush1.msra.mxu0 0.0
        %7126 = vmatprep.subr.mxu0 0.0
        %7127 = vmatpush1.msra.mxu0 0.0
        %7128 = vmatprep.subr.mxu0 0.0
        %7129 = vmatpush1.msra.mxu0 0.0
        %7130 = vmatprep.subr.mxu0 0.0
        %7131 = vmatpush1.msra.mxu0 0.0
        %7132 = vmatprep.subr.mxu0 0.0
        %7133 = vmatpush1.msra.mxu0 0.0
        %7134 = vmatprep.subr.mxu0 0.0
        %7135 = vmatpush1.msra.mxu0 0.0
        %7136 = vmatprep.subr.mxu0 0.0
        %7137 = vmatpush1.msra.mxu0 0.0
        %7138 = vmatprep.subr.mxu0 0.0
        %7139 = vmatpush1.msra.mxu0 0.0
        %7140 = vmatprep.subr.mxu0 0.0
        %7141 = vmatpush1.msra.mxu0 0.0
        %7142 = vmatprep.subr.mxu0 0.0
        %7143 = vmatpush1.msra.mxu0 0.0
        %7144 = vmatprep.subr.mxu0 0.0
        %7145 = vmatpush1.msra.mxu0 0.0
        %7146 = vmatprep.subr.mxu0 0.0
        %7147 = vmatpush1.msra.mxu0 0.0
        %7148 = vmatprep.subr.mxu0 0.0
        %7149 = vmatpush1.msra.mxu0 0.0
        %7150 = vmatprep.subr.mxu0 0.0
        %7151 = vmatpush1.msra.mxu0 0.0
        %7152 = vmatprep.subr.mxu0 0.0
        %7153 = vmatpush1.msra.mxu0 0.0
        %7154 = vmatprep.subr.mxu0 0.0
        %7155 = vmatpush1.msra.mxu0 0.0
        %7156 = vmatprep.subr.mxu0 0.0
        %7157 = vmatpush1.msra.mxu0 0.0
        %7158 = vmatprep.subr.mxu0 0.0
        %7159 = vmatpush1.msra.mxu0 0.0
        %7160 = vmatprep.subr.mxu0 0.0
        %7161 = vmatpush1.msra.mxu0 0.0
        %7162 = vmatprep.mubr.f32.mxu0 0.0
        %v7163 = vand.u32 %v6721, 4294901760
        %7164 = vmatmul.mubr.f32.gmra.mrb[0].mxu0 %v7163
        %v7165 = vpop.f32.mrb[0].mxu0
        %v7166 = vadd.f32 %v7094, %v7165
        %v7167 = vpop.f32.mrb[0].mxu0
        %7168 = vdwg.mxu0
        %v7170 = vsel %vm2146, %v7166, 0
        %7172 = vmatprep.subr.mxu0 0.0
        %v7173 = vand.u32 %v2139, 4294901760
        %7174 = vmatpush1.msra.mxu0 %v7173
        %7175 = vmatprep.subr.mxu0 0.0
        %7176 = vmatpush1.msra.mxu0 0.0
        %7177 = vmatprep.subr.mxu0 0.0
        %7178 = vmatpush1.msra.mxu0 0.0
        %7179 = vmatprep.subr.mxu0 0.0
        %7180 = vmatpush1.msra.mxu0 0.0
        %7181 = vmatprep.subr.mxu0 0.0
        %7182 = vmatpush1.msra.mxu0 0.0
        %7183 = vmatprep.subr.mxu0 0.0
        %7184 = vmatpush1.msra.mxu0 0.0
        %7185 = vmatprep.subr.mxu0 0.0
        %7186 = vmatpush1.msra.mxu0 0.0
        %7187 = vmatprep.subr.mxu0 0.0
        %7188 = vmatpush1.msra.mxu0 0.0
        %7189 = vmatprep.subr.mxu0 0.0
        %7190 = vmatpush1.msra.mxu0 0.0
        %7191 = vmatprep.subr.mxu0 0.0
        %7192 = vmatpush1.msra.mxu0 0.0
        %7193 = vmatprep.subr.mxu0 0.0
        %7194 = vmatpush1.msra.mxu0 0.0
        %7195 = vmatprep.subr.mxu0 0.0
        %7196 = vmatpush1.msra.mxu0 0.0
        %7197 = vmatprep.subr.mxu0 0.0
        %7198 = vmatpush1.msra.mxu0 0.0
        %7199 = vmatprep.subr.mxu0 0.0
        %7200 = vmatpush1.msra.mxu0 0.0
        %7201 = vmatprep.subr.mxu0 0.0
        %7202 = vmatpush1.msra.mxu0 0.0
        %7203 = vmatprep.subr.mxu0 0.0
        %7204 = vmatpush1.msra.mxu0 0.0
        %7205 = vmatprep.subr.mxu0 0.0
        %7206 = vmatpush1.msra.mxu0 0.0
        %7207 = vmatprep.subr.mxu0 0.0
        %7208 = vmatpush1.msra.mxu0 0.0
        %7209 = vmatprep.subr.mxu0 0.0
        %7210 = vmatpush1.msra.mxu0 0.0
        %7211 = vmatprep.subr.mxu0 0.0
        %7212 = vmatpush1.msra.mxu0 0.0
        %7213 = vmatprep.subr.mxu0 0.0
        %7214 = vmatpush1.msra.mxu0 0.0
        %7215 = vmatprep.subr.mxu0 0.0
        %7216 = vmatpush1.msra.mxu0 0.0
        %7217 = vmatprep.subr.mxu0 0.0
        %7218 = vmatpush1.msra.mxu0 0.0
        %7219 = vmatprep.subr.mxu0 0.0
        %7220 = vmatpush1.msra.mxu0 0.0
        %7221 = vmatprep.subr.mxu0 0.0
        %7222 = vmatpush1.msra.mxu0 0.0
        %7223 = vmatprep.subr.mxu0 0.0
        %7224 = vmatpush1.msra.mxu0 0.0
        %7225 = vmatprep.subr.mxu0 0.0
        %7226 = vmatpush1.msra.mxu0 0.0
        %7227 = vmatprep.subr.mxu0 0.0
        %7228 = vmatpush1.msra.mxu0 0.0
        %7229 = vmatprep.subr.mxu0 0.0
        %7230 = vmatpush1.msra.mxu0 0.0
        %7231 = vmatprep.subr.mxu0 0.0
        %7232 = vmatpush1.msra.mxu0 0.0
        %7233 = vmatprep.subr.mxu0 0.0
        %7234 = vmatpush1.msra.mxu0 0.0
        %7235 = vmatprep.subr.mxu0 0.0
        %7236 = vmatpush1.msra.mxu0 0.0
        %7237 = vmatprep.mubr.f32.mxu0 0.0
        %v7238 = vand.u32 %v7170, 4294901760
        %v7239 = vsub.f32 %v7170, %v7238
        %v7240 = vand.u32 %v7239, 4294901760
        %v7241 = vsub.f32 %v7239, %v7240
        %v7242 = vand.u32 %v7241, 4294901760
        %7243 = vmatmul.mubr.f32.gmra.mrb[0].mxu0 %v7242
        %v7244 = vpop.f32.mrb[0].mxu0
        %v7245 = vadd.f32 0.0, %v7244
        %v7246 = vpop.f32.mrb[0].mxu0
        %7247 = vdwg.mxu0
        %7248 = vmatprep.subr.mxu0 0.0
        %v7249 = vand.u32 %v2139, 4294901760
        %v7250 = vsub.f32 %v2139, %v7249
        %v7251 = vand.u32 %v7250, 4294901760
        %v7252 = vsub.f32 %v7250, %v7251
        %v7253 = vand.u32 %v7252, 4294901760
        %7254 = vmatpush1.msra.mxu0 %v7253
        %7255 = vmatprep.subr.mxu0 0.0
        %7256 = vmatpush1.msra.mxu0 0.0
        %7257 = vmatprep.subr.mxu0 0.0
        %7258 = vmatpush1.msra.mxu0 0.0
        %7259 = vmatprep.subr.mxu0 0.0
        %7260 = vmatpush1.msra.mxu0 0.0
        %7261 = vmatprep.subr.mxu0 0.0
        %7262 = vmatpush1.msra.mxu0 0.0
        %7263 = vmatprep.subr.mxu0 0.0
        %7264 = vmatpush1.msra.mxu0 0.0
        %7265 = vmatprep.subr.mxu0 0.0
        %7266 = vmatpush1.msra.mxu0 0.0
        %7267 = vmatprep.subr.mxu0 0.0
        %7268 = vmatpush1.msra.mxu0 0.0
        %7269 = vmatprep.subr.mxu0 0.0
        %7270 = vmatpush1.msra.mxu0 0.0
        %7271 = vmatprep.subr.mxu0 0.0
        %7272 = vmatpush1.msra.mxu0 0.0
        %7273 = vmatprep.subr.mxu0 0.0
        %7274 = vmatpush1.msra.mxu0 0.0
        %7275 = vmatprep.subr.mxu0 0.0
        %7276 = vmatpush1.msra.mxu0 0.0
        %7277 = vmatprep.subr.mxu0 0.0
        %7278 = vmatpush1.msra.mxu0 0.0
        %7279 = vmatprep.subr.mxu0 0.0
        %7280 = vmatpush1.msra.mxu0 0.0
        %7281 = vmatprep.subr.mxu0 0.0
        %7282 = vmatpush1.msra.mxu0 0.0
        %7283 = vmatprep.subr.mxu0 0.0
        %7284 = vmatpush1.msra.mxu0 0.0
        %7285 = vmatprep.subr.mxu0 0.0
        %7286 = vmatpush1.msra.mxu0 0.0
        %7287 = vmatprep.subr.mxu0 0.0
        %7288 = vmatpush1.msra.mxu0 0.0
        %7289 = vmatprep.subr.mxu0 0.0
        %7290 = vmatpush1.msra.mxu0 0.0
        %7291 = vmatprep.subr.mxu0 0.0
        %7292 = vmatpush1.msra.mxu0 0.0
        %7293 = vmatprep.subr.mxu0 0.0
        %7294 = vmatpush1.msra.mxu0 0.0
        %7295 = vmatprep.subr.mxu0 0.0
        %7296 = vmatpush1.msra.mxu0 0.0
        %7297 = vmatprep.subr.mxu0 0.0
        %7298 = vmatpush1.msra.mxu0 0.0
        %7299 = vmatprep.subr.mxu0 0.0
        %7300 = vmatpush1.msra.mxu0 0.0
        %7301 = vmatprep.subr.mxu0 0.0
        %7302 = vmatpush1.msra.mxu0 0.0
        %7303 = vmatprep.subr.mxu0 0.0
        %7304 = vmatpush1.msra.mxu0 0.0
        %7305 = vmatprep.subr.mxu0 0.0
        %7306 = vmatpush1.msra.mxu0 0.0
        %7307 = vmatprep.subr.mxu0 0.0
        %7308 = vmatpush1.msra.mxu0 0.0
        %7309 = vmatprep.subr.mxu0 0.0
        %7310 = vmatpush1.msra.mxu0 0.0
        %7311 = vmatprep.subr.mxu0 0.0
        %7312 = vmatpush1.msra.mxu0 0.0
        %7313 = vmatprep.subr.mxu0 0.0
        %7314 = vmatpush1.msra.mxu0 0.0
        %7315 = vmatprep.subr.mxu0 0.0
        %7316 = vmatpush1.msra.mxu0 0.0
        %7317 = vmatprep.mubr.f32.mxu0 0.0
        %v7318 = vand.u32 %v7170, 4294901760
        %7319 = vmatmul.mubr.f32.gmra.mrb[0].mxu0 %v7318
        %v7320 = vpop.f32.mrb[0].mxu0
        %v7321 = vadd.f32 %v7245, %v7320
        %v7322 = vpop.f32.mrb[0].mxu0
        %7323 = vdwg.mxu0
        %7324 = vmatprep.subr.mxu0 0.0
        %v7325 = vand.u32 %v2139, 4294901760
        %v7326 = vsub.f32 %v2139, %v7325
        %7327 = vmatpush1.msra.mxu0 %v7326
        %7328 = vmatprep.subr.mxu0 0.0
        %7329 = vmatpush1.msra.mxu0 0.0
        %7330 = vmatprep.subr.mxu0 0.0
        %7331 = vmatpush1.msra.mxu0 0.0
        %7332 = vmatprep.subr.mxu0 0.0
        %7333 = vmatpush1.msra.mxu0 0.0
        %7334 = vmatprep.subr.mxu0 0.0
        %7335 = vmatpush1.msra.mxu0 0.0
        %7336 = vmatprep.subr.mxu0 0.0
        %7337 = vmatpush1.msra.mxu0 0.0
        %7338 = vmatprep.subr.mxu0 0.0
        %7339 = vmatpush1.msra.mxu0 0.0
        %7340 = vmatprep.subr.mxu0 0.0
        %7341 = vmatpush1.msra.mxu0 0.0
        %7342 = vmatprep.subr.mxu0 0.0
        %7343 = vmatpush1.msra.mxu0 0.0
        %7344 = vmatprep.subr.mxu0 0.0
        %7345 = vmatpush1.msra.mxu0 0.0
        %7346 = vmatprep.subr.mxu0 0.0
        %7347 = vmatpush1.msra.mxu0 0.0
        %7348 = vmatprep.subr.mxu0 0.0
        %7349 = vmatpush1.msra.mxu0 0.0
        %7350 = vmatprep.subr.mxu0 0.0
        %7351 = vmatpush1.msra.mxu0 0.0
        %7352 = vmatprep.subr.mxu0 0.0
        %7353 = vmatpush1.msra.mxu0 0.0
        %7354 = vmatprep.subr.mxu0 0.0
        %7355 = vmatpush1.msra.mxu0 0.0
        %7356 = vmatprep.subr.mxu0 0.0
        %7357 = vmatpush1.msra.mxu0 0.0
        %7358 = vmatprep.subr.mxu0 0.0
        %7359 = vmatpush1.msra.mxu0 0.0
        %7360 = vmatprep.subr.mxu0 0.0
        %7361 = vmatpush1.msra.mxu0 0.0
        %7362 = vmatprep.subr.mxu0 0.0
        %7363 = vmatpush1.msra.mxu0 0.0
        %7364 = vmatprep.subr.mxu0 0.0
        %7365 = vmatpush1.msra.mxu0 0.0
        %7366 = vmatprep.subr.mxu0 0.0
        %7367 = vmatpush1.msra.mxu0 0.0
        %7368 = vmatprep.subr.mxu0 0.0
        %7369 = vmatpush1.msra.mxu0 0.0
        %7370 = vmatprep.subr.mxu0 0.0
        %7371 = vmatpush1.msra.mxu0 0.0
        %7372 = vmatprep.subr.mxu0 0.0
        %7373 = vmatpush1.msra.mxu0 0.0
        %7374 = vmatprep.subr.mxu0 0.0
        %7375 = vmatpush1.msra.mxu0 0.0
        %7376 = vmatprep.subr.mxu0 0.0
        %7377 = vmatpush1.msra.mxu0 0.0
        %7378 = vmatprep.subr.mxu0 0.0
        %7379 = vmatpush1.msra.mxu0 0.0
        %7380 = vmatprep.subr.mxu0 0.0
        %7381 = vmatpush1.msra.mxu0 0.0
        %7382 = vmatprep.subr.mxu0 0.0
        %7383 = vmatpush1.msra.mxu0 0.0
        %7384 = vmatprep.subr.mxu0 0.0
        %7385 = vmatpush1.msra.mxu0 0.0
        %7386 = vmatprep.subr.mxu0 0.0
        %7387 = vmatpush1.msra.mxu0 0.0
        %7388 = vmatprep.subr.mxu0 0.0
        %7389 = vmatpush1.msra.mxu0 0.0
        %7390 = vmatprep.mubr.f32.mxu0 0.0
        %v7391 = vand.u32 %v7170, 4294901760
        %v7392 = vsub.f32 %v7170, %v7391
        %7393 = vmatmul.mubr.f32.gmra.mrb[0].mxu0 %v7392
        %v7394 = vpop.f32.mrb[0].mxu0
        %v7395 = vadd.f32 %v7321, %v7394
        %v7396 = vpop.f32.mrb[0].mxu0
        %7397 = vdwg.mxu0
        %7398 = vmatprep.subr.mxu0 0.0
        %v7399 = vand.u32 %v2139, 4294901760
        %7400 = vmatpush1.msra.mxu0 %v7399
        %7401 = vmatprep.subr.mxu0 0.0
        %7402 = vmatpush1.msra.mxu0 0.0
        %7403 = vmatprep.subr.mxu0 0.0
        %7404 = vmatpush1.msra.mxu0 0.0
        %7405 = vmatprep.subr.mxu0 0.0
        %7406 = vmatpush1.msra.mxu0 0.0
        %7407 = vmatprep.subr.mxu0 0.0
        %7408 = vmatpush1.msra.mxu0 0.0
        %7409 = vmatprep.subr.mxu0 0.0
        %7410 = vmatpush1.msra.mxu0 0.0
        %7411 = vmatprep.subr.mxu0 0.0
        %7412 = vmatpush1.msra.mxu0 0.0
        %7413 = vmatprep.subr.mxu0 0.0
        %7414 = vmatpush1.msra.mxu0 0.0
        %7415 = vmatprep.subr.mxu0 0.0
        %7416 = vmatpush1.msra.mxu0 0.0
        %7417 = vmatprep.subr.mxu0 0.0
        %7418 = vmatpush1.msra.mxu0 0.0
        %7419 = vmatprep.subr.mxu0 0.0
        %7420 = vmatpush1.msra.mxu0 0.0
        %7421 = vmatprep.subr.mxu0 0.0
        %7422 = vmatpush1.msra.mxu0 0.0
        %7423 = vmatprep.subr.mxu0 0.0
        %7424 = vmatpush1.msra.mxu0 0.0
        %7425 = vmatprep.subr.mxu0 0.0
        %7426 = vmatpush1.msra.mxu0 0.0
        %7427 = vmatprep.subr.mxu0 0.0
        %7428 = vmatpush1.msra.mxu0 0.0
        %7429 = vmatprep.subr.mxu0 0.0
        %7430 = vmatpush1.msra.mxu0 0.0
        %7431 = vmatprep.subr.mxu0 0.0
        %7432 = vmatpush1.msra.mxu0 0.0
        %7433 = vmatprep.subr.mxu0 0.0
        %7434 = vmatpush1.msra.mxu0 0.0
        %7435 = vmatprep.subr.mxu0 0.0
        %7436 = vmatpush1.msra.mxu0 0.0
        %7437 = vmatprep.subr.mxu0 0.0
        %7438 = vmatpush1.msra.mxu0 0.0
        %7439 = vmatprep.subr.mxu0 0.0
        %7440 = vmatpush1.msra.mxu0 0.0
        %7441 = vmatprep.subr.mxu0 0.0
        %7442 = vmatpush1.msra.mxu0 0.0
        %7443 = vmatprep.subr.mxu0 0.0
        %7444 = vmatpush1.msra.mxu0 0.0
        %7445 = vmatprep.subr.mxu0 0.0
        %7446 = vmatpush1.msra.mxu0 0.0
        %7447 = vmatprep.subr.mxu0 0.0
        %7448 = vmatpush1.msra.mxu0 0.0
        %7449 = vmatprep.subr.mxu0 0.0
        %7450 = vmatpush1.msra.mxu0 0.0
        %7451 = vmatprep.subr.mxu0 0.0
        %7452 = vmatpush1.msra.mxu0 0.0
        %7453 = vmatprep.subr.mxu0 0.0
        %7454 = vmatpush1.msra.mxu0 0.0
        %7455 = vmatprep.subr.mxu0 0.0
        %7456 = vmatpush1.msra.mxu0 0.0
        %7457 = vmatprep.subr.mxu0 0.0
        %7458 = vmatpush1.msra.mxu0 0.0
        %7459 = vmatprep.subr.mxu0 0.0
        %7460 = vmatpush1.msra.mxu0 0.0
        %7461 = vmatprep.subr.mxu0 0.0
        %7462 = vmatpush1.msra.mxu0 0.0
        %7463 = vmatprep.mubr.f32.mxu0 0.0
        %v7464 = vand.u32 %v7170, 4294901760
        %v7465 = vsub.f32 %v7170, %v7464
        %v7466 = vand.u32 %v7465, 4294901760
        %7467 = vmatmul.mubr.f32.gmra.mrb[0].mxu0 %v7466
        %v7468 = vpop.f32.mrb[0].mxu0
        %v7469 = vadd.f32 %v7395, %v7468
        %v7470 = vpop.f32.mrb[0].mxu0
        %7471 = vdwg.mxu0
        %7472 = vmatprep.subr.mxu0 0.0
        %v7473 = vand.u32 %v2139, 4294901760
        %v7474 = vsub.f32 %v2139, %v7473
        %v7475 = vand.u32 %v7474, 4294901760
        %7476 = vmatpush1.msra.mxu0 %v7475
        %7477 = vmatprep.subr.mxu0 0.0
        %7478 = vmatpush1.msra.mxu0 0.0
        %7479 = vmatprep.subr.mxu0 0.0
        %7480 = vmatpush1.msra.mxu0 0.0
        %7481 = vmatprep.subr.mxu0 0.0
        %7482 = vmatpush1.msra.mxu0 0.0
        %7483 = vmatprep.subr.mxu0 0.0
        %7484 = vmatpush1.msra.mxu0 0.0
        %7485 = vmatprep.subr.mxu0 0.0
        %7486 = vmatpush1.msra.mxu0 0.0
        %7487 = vmatprep.subr.mxu0 0.0
        %7488 = vmatpush1.msra.mxu0 0.0
        %7489 = vmatprep.subr.mxu0 0.0
        %7490 = vmatpush1.msra.mxu0 0.0
        %7491 = vmatprep.subr.mxu0 0.0
        %7492 = vmatpush1.msra.mxu0 0.0
        %7493 = vmatprep.subr.mxu0 0.0
        %7494 = vmatpush1.msra.mxu0 0.0
        %7495 = vmatprep.subr.mxu0 0.0
        %7496 = vmatpush1.msra.mxu0 0.0
        %7497 = vmatprep.subr.mxu0 0.0
        %7498 = vmatpush1.msra.mxu0 0.0
        %7499 = vmatprep.subr.mxu0 0.0
        %7500 = vmatpush1.msra.mxu0 0.0
        %7501 = vmatprep.subr.mxu0 0.0
        %7502 = vmatpush1.msra.mxu0 0.0
        %7503 = vmatprep.subr.mxu0 0.0
        %7504 = vmatpush1.msra.mxu0 0.0
        %7505 = vmatprep.subr.mxu0 0.0
        %7506 = vmatpush1.msra.mxu0 0.0
        %7507 = vmatprep.subr.mxu0 0.0
        %7508 = vmatpush1.msra.mxu0 0.0
        %7509 = vmatprep.subr.mxu0 0.0
        %7510 = vmatpush1.msra.mxu0 0.0
        %7511 = vmatprep.subr.mxu0 0.0
        %7512 = vmatpush1.msra.mxu0 0.0
        %7513 = vmatprep.subr.mxu0 0.0
        %7514 = vmatpush1.msra.mxu0 0.0
        %7515 = vmatprep.subr.mxu0 0.0
        %7516 = vmatpush1.msra.mxu0 0.0
        %7517 = vmatprep.subr.mxu0 0.0
        %7518 = vmatpush1.msra.mxu0 0.0
        %7519 = vmatprep.subr.mxu0 0.0
        %7520 = vmatpush1.msra.mxu0 0.0
        %7521 = vmatprep.subr.mxu0 0.0
        %7522 = vmatpush1.msra.mxu0 0.0
        %7523 = vmatprep.subr.mxu0 0.0
        %7524 = vmatpush1.msra.mxu0 0.0
        %7525 = vmatprep.subr.mxu0 0.0
        %7526 = vmatpush1.msra.mxu0 0.0
        %7527 = vmatprep.subr.mxu0 0.0
        %7528 = vmatpush1.msra.mxu0 0.0
        %7529 = vmatprep.subr.mxu0 0.0
        %7530 = vmatpush1.msra.mxu0 0.0
        %7531 = vmatprep.subr.mxu0 0.0
        %7532 = vmatpush1.msra.mxu0 0.0
        %7533 = vmatprep.subr.mxu0 0.0
        %7534 = vmatpush1.msra.mxu0 0.0
        %7535 = vmatprep.subr.mxu0 0.0
        %7536 = vmatpush1.msra.mxu0 0.0
        %7537 = vmatprep.subr.mxu0 0.0
        %7538 = vmatpush1.msra.mxu0 0.0
        %7539 = vmatprep.mubr.f32.mxu0 0.0
        %v7540 = vand.u32 %v7170, 4294901760
        %7541 = vmatmul.mubr.f32.gmra.mrb[0].mxu0 %v7540
        %v7542 = vpop.f32.mrb[0].mxu0
        %v7543 = vadd.f32 %v7469, %v7542
        %v7544 = vpop.f32.mrb[0].mxu0
        %7545 = vdwg.mxu0
        %7546 = vmatprep.subr.mxu0 0.0
        %v7547 = vand.u32 %v2139, 4294901760
        %7548 = vmatpush1.msra.mxu0 %v7547
        %7549 = vmatprep.subr.mxu0 0.0
        %7550 = vmatpush1.msra.mxu0 0.0
        %7551 = vmatprep.subr.mxu0 0.0
        %7552 = vmatpush1.msra.mxu0 0.0
        %7553 = vmatprep.subr.mxu0 0.0
        %7554 = vmatpush1.msra.mxu0 0.0
        %7555 = vmatprep.subr.mxu0 0.0
        %7556 = vmatpush1.msra.mxu0 0.0
        %7557 = vmatprep.subr.mxu0 0.0
        %7558 = vmatpush1.msra.mxu0 0.0
        %7559 = vmatprep.subr.mxu0 0.0
        %7560 = vmatpush1.msra.mxu0 0.0
        %7561 = vmatprep.subr.mxu0 0.0
        %7562 = vmatpush1.msra.mxu0 0.0
        %7563 = vmatprep.subr.mxu0 0.0
        %7564 = vmatpush1.msra.mxu0 0.0
        %7565 = vmatprep.subr.mxu0 0.0
        %7566 = vmatpush1.msra.mxu0 0.0
        %7567 = vmatprep.subr.mxu0 0.0
        %7568 = vmatpush1.msra.mxu0 0.0
        %7569 = vmatprep.subr.mxu0 0.0
        %7570 = vmatpush1.msra.mxu0 0.0
        %7571 = vmatprep.subr.mxu0 0.0
        %7572 = vmatpush1.msra.mxu0 0.0
        %7573 = vmatprep.subr.mxu0 0.0
        %7574 = vmatpush1.msra.mxu0 0.0
        %7575 = vmatprep.subr.mxu0 0.0
        %7576 = vmatpush1.msra.mxu0 0.0
        %7577 = vmatprep.subr.mxu0 0.0
        %7578 = vmatpush1.msra.mxu0 0.0
        %7579 = vmatprep.subr.mxu0 0.0
        %7580 = vmatpush1.msra.mxu0 0.0
        %7581 = vmatprep.subr.mxu0 0.0
        %7582 = vmatpush1.msra.mxu0 0.0
        %7583 = vmatprep.subr.mxu0 0.0
        %7584 = vmatpush1.msra.mxu0 0.0
        %7585 = vmatprep.subr.mxu0 0.0
        %7586 = vmatpush1.msra.mxu0 0.0
        %7587 = vmatprep.subr.mxu0 0.0
        %7588 = vmatpush1.msra.mxu0 0.0
        %7589 = vmatprep.subr.mxu0 0.0
        %7590 = vmatpush1.msra.mxu0 0.0
        %7591 = vmatprep.subr.mxu0 0.0
        %7592 = vmatpush1.msra.mxu0 0.0
        %7593 = vmatprep.subr.mxu0 0.0
        %7594 = vmatpush1.msra.mxu0 0.0
        %7595 = vmatprep.subr.mxu0 0.0
        %7596 = vmatpush1.msra.mxu0 0.0
        %7597 = vmatprep.subr.mxu0 0.0
        %7598 = vmatpush1.msra.mxu0 0.0
        %7599 = vmatprep.subr.mxu0 0.0
        %7600 = vmatpush1.msra.mxu0 0.0
        %7601 = vmatprep.subr.mxu0 0.0
        %7602 = vmatpush1.msra.mxu0 0.0
        %7603 = vmatprep.subr.mxu0 0.0
        %7604 = vmatpush1.msra.mxu0 0.0
        %7605 = vmatprep.subr.mxu0 0.0
        %7606 = vmatpush1.msra.mxu0 0.0
        %7607 = vmatprep.subr.mxu0 0.0
        %7608 = vmatpush1.msra.mxu0 0.0
        %7609 = vmatprep.subr.mxu0 0.0
        %7610 = vmatpush1.msra.mxu0 0.0
        %7611 = vmatprep.mubr.f32.mxu0 0.0
        %v7612 = vand.u32 %v7170, 4294901760
        %7613 = vmatmul.mubr.f32.gmra.mrb[0].mxu0 %v7612
        %v7614 = vpop.f32.mrb[0].mxu0
        %v7615 = vadd.f32 %v7543, %v7614
        %v7616 = vpop.f32.mrb[0].mxu0
        %7617 = vdwg.mxu0
        %v7618 = vadd.f32 %v6250, %v7615
        %v7619 = vld [vmem:[%s11] sm:$0x1]
        %v7621 = vlaneseq
        %v7622 = vshrl.u32 %v7621, 7
        %v7623 = vsub.s32 0, %v7622
        %v7624 = vrot.slane %v7619, %v7623
        %v7626 = vadd.f32 %v7618, %v7624
        %7627 = vst.msk [vmem:[%s612] sm:$0xff] %vm642, %v7626
        %s7628 = sand.u32 %s320, 1
        %s7629 = scalar_lea.sflag [#allocation4], %s7628
        %s7630 = sand.u32 %s320, 1
        %s7631 = smul.addr %s7630, 8
        %s7632 = scalar_lea.vmem [#allocation13], %s7631
        %s7633 = sand.u32 %s40, 1
        %s7634 = scalar_lea.sflag [#allocation15], %s7633
        %s7635 = sand.u32 %s346, 1
        %s7636 = smul.addr %s7635, 8
        %s7637 = scalar_lea.vmem [#allocation14], %s7636
        %s7638 = sand.u32 %s40, 1
        %s7639 = scalar_lea.sflag [#allocation15], %s7638
        %s7640 = sand.u32 %s372, 1
        %s7641 = smul.addr %s7640, 8
        %s7642 = scalar_lea.vmem [#allocation16], %s7641
        // Predicated region
        $region93: #{tpu_custom_call.1} parent=67 // pred_check
          %p7643 = pneg %p330
        $region94: #{tpu_custom_call.1} parent=67 // pred_check_branch
          %7645 = sbr.rel (%p7643) target = $region96
        $region95: #{tpu_custom_call.1} parent=67 // pred_region
          %s7647 = ssub.s32 128, 128
          %7648 = vsyncadd %s7629, %s7647
          %s7649 = smul.addr %s40, 128
          %s7650 = scalar_lea.hbm %s12, %s7649
          %s7652 = sshll.u32 %s7632, 4
          %s7653 = int_to_ptr.vmem [resolvable:$true] %s7652
          %7655 = dma.vmem_to_hbm [thread:$0]  %s7653, 128, %s7650, %s7629
        $region96: #{tpu_custom_call.1} parent=67 // pred_fallthru
          _
        // Predicated region
        $region97: #{tpu_custom_call.1} parent=67 // pred_check
          %p7656 = pneg %p356
        $region98: #{tpu_custom_call.1} parent=67 // pred_check_branch
          %7658 = sbr.rel (%p7656) target = $region100
        $region99: #{tpu_custom_call.1} parent=67 // pred_region
          %s7660 = ssub.s32 128, 128
          %7661 = vsyncadd %s7634, %s7660
          %s7662 = smul.addr %s40, 128
          %s7663 = scalar_lea.hbm %s13, %s7662
          %s7665 = sshll.u32 %s7637, 4
          %s7666 = int_to_ptr.vmem [resolvable:$true] %s7665
          %7668 = dma.vmem_to_hbm [thread:$0]  %s7666, 128, %s7663, %s7634
        $region100: #{tpu_custom_call.1} parent=67 // pred_fallthru
          _
        // Predicated region
        $region101: #{tpu_custom_call.1} parent=67 // pred_check
          %p7669 = pneg %p382
        $region102: #{tpu_custom_call.1} parent=67 // pred_check_branch
          %7671 = sbr.rel (%p7669) target = $region104
        $region103: #{tpu_custom_call.1} parent=67 // pred_region
          %s7673 = ssub.s32 128, 128
          %7674 = vsyncadd %s7639, %s7673
          %s7675 = smul.addr %s40, 128
          %s7676 = scalar_lea.hbm %s14, %s7675
          %s7678 = sshll.u32 %s7642, 4
          %s7679 = int_to_ptr.vmem [resolvable:$true] %s7678
          %7681 = dma.vmem_to_hbm [thread:$0]  %s7679, 128, %s7676, %s7639
        $region104: #{tpu_custom_call.1} parent=67 // pred_fallthru
          _
      $region68: #{tpu_custom_call.1} parent=5 // pred_fallthru
        _
      %p7682 = scmp.le.s32.totalorder 2, %s35
      // Predicated region
      $region105: #{tpu_custom_call.1} parent=5 // pred_check
        %p7683 = pneg %p7682
      $region106: #{tpu_custom_call.1} parent=5 // pred_check_branch
        %7685 = sbr.rel (%p7683) target = $region108
      $region107: #{tpu_custom_call.1} parent=5 // pred_region
        %s7686 = ssub.s32 %s35, 2
        // Predicated region
        $region109: #{tpu_custom_call.1} parent=107 // pred_check
          %p7687 = pneg %p336
        $region110: #{tpu_custom_call.1} parent=107 // pred_check_branch
          %7689 = sbr.rel (%p7687) target = $region112
        $region111: #{tpu_custom_call.1} parent=107 // pred_region
          %s7690 = sand.u32 %s321, 1
          %s7691 = scalar_lea.sflag [#allocation4], %s7690
          %s7692 = sand.u32 %s321, 1
          %s7693 = smul.addr %s7692, 8
          %s7694 = scalar_lea.vmem [#allocation13], %s7693
          %7695 = dma.done %s7691, 128
        $region112: #{tpu_custom_call.1} parent=107 // pred_fallthru
          _
        // Predicated region
        $region113: #{tpu_custom_call.1} parent=107 // pred_check
          %p7696 = pneg %p362
        $region114: #{tpu_custom_call.1} parent=107 // pred_check_branch
          %7698 = sbr.rel (%p7696) target = $region116
        $region115: #{tpu_custom_call.1} parent=107 // pred_region
          %s7699 = sand.u32 %s41, 1
          %s7700 = scalar_lea.sflag [#allocation15], %s7699
          %s7701 = sand.u32 %s347, 1
          %s7702 = smul.addr %s7701, 8
          %s7703 = scalar_lea.vmem [#allocation14], %s7702
          %7704 = dma.done %s7700, 128
        $region116: #{tpu_custom_call.1} parent=107 // pred_fallthru
          _
        // Predicated region
        $region117: #{tpu_custom_call.1} parent=107 // pred_check
          %p7705 = pneg %p388
        $region118: #{tpu_custom_call.1} parent=107 // pred_check_branch
          %7707 = sbr.rel (%p7705) target = $region120
        $region119: #{tpu_custom_call.1} parent=107 // pred_region
          %s7708 = sand.u32 %s41, 1
          %s7709 = scalar_lea.sflag [#allocation15], %s7708
          %s7710 = sand.u32 %s373, 1
          %s7711 = smul.addr %s7710, 8
          %s7712 = scalar_lea.vmem [#allocation16], %s7711
          %7713 = dma.done %s7709, 128
        $region120: #{tpu_custom_call.1} parent=107 // pred_fallthru
          _
      $region108: #{tpu_custom_call.1} parent=5 // pred_fallthru
        _
    $region6: #{tpu_custom_call.1} parent=1 // loop_footer
      %s39 = sadd.s32 1, %s35
    $region7: #{tpu_custom_call.1} parent=1 // loop_footer_branch
      %34 = sbr.rel target = $region3
    $region8: #{tpu_custom_call.1} parent=1 // loop_exit
      _
    %7714 = vsyncpa [#allocation3], 1
    %s7715 = scalar_lea.sflag [#allocation3], 1
    %7716 = vsyncpa %s7715, 1
    %7717 = vsyncpa [#allocation6], 1
    %s7718 = scalar_lea.sflag [#allocation6], 1
    %7719 = vsyncpa %s7718, 1
    %7720 = vsyncpa [#allocation9], 1
    %7721 = vsyncpa [#allocation12], 1
    %7722 = vsyncpa [#allocation4], 1
    %s7723 = scalar_lea.sflag [#allocation4], 1
    %7724 = vsyncpa %s7723, 1
    %7725 = vsyncpa [#allocation15], 1
    %s7726 = scalar_lea.sflag [#allocation15], 1
    %7727 = vsyncpa %s7726, 1

</llo_original>
